<compile_context>
chip_gen: v6e
topology: v6e:2x2x1
jax: 0.10.0
libtpu: 0.0.40
codegen_flags: <defaults>
</compile_context>

<pallas_src>
import functools

import jax
import jax.numpy as jnp
import numpy as np
from jax.experimental import pallas as pl
from jax.experimental.pallas import tpu as pltpu


# --------------------------------------------------------------------------
# helpers
# --------------------------------------------------------------------------

def _swap01(x):
    """(i, j, k) -> (j, i, k): major-dim swap, lane dim untouched."""
    if hasattr(pltpu, "einshape"):
        return pltpu.einshape("ijk->jik", x)
    return jnp.swapaxes(x, 0, 1)


def _lrelu(v):
    return jnp.where(v > 0, v, 0.2 * v)


# Row ordering used for the layer-1 output: odd spatial indices first, then even.
# With a padding of 1, odd/even output rows map to the two parity planes of the padded
# activation, so the parity split becomes a plain leading-dim reshape in the kernel.
_PARITY_ORDER = tuple(range(1, 16, 2)) + tuple(range(0, 16, 2))


# --------------------------------------------------------------------------
# fused Pallas kernel
# --------------------------------------------------------------------------

def _fused_kernel(x1_ref, w1_ref, w2_ref, w3_ref, g2_ref, b2_ref,
                  g3_ref, b3_ref, w4_ref, out_ref,
                  z1p_ref, lhs2_ref, z2p_ref, lhs3_ref, *, batch):
    B = batch

    # ---------------- layer 1: conv(3->64, k4 s2 p1) + LeakyReLU ----------------
    # Single MXU matmul: M = B*256, K = N = 128 (channels zero-padded to lane width).
    y1 = jnp.dot(x1_ref[...], w1_ref[...], preferred_element_type=jnp.float32)
    a1 = _lrelu(y1)                                             # (B*256, 128) f32

    # Zero ONLY the padding halo of the parity-split buffer (interior is overwritten).
    z1p_ref[0:2, :, 0:1, :, :] = jnp.zeros((2, B, 1, 9, 128), jnp.bfloat16)
    z1p_ref[2:4, :, 8:9, :, :] = jnp.zeros((2, B, 1, 9, 128), jnp.bfloat16)
    for p in (0, 2):
        z1p_ref[p, :, :, 0:1, :] = jnp.zeros((B, 9, 1, 128), jnp.bfloat16)
    for p in (1, 3):
        z1p_ref[p, :, :, 8:9, :] = jnp.zeros((B, 9, 1, 128), jnp.bfloat16)

    # Host pre-ordered the rows as (b, h-parity, h-rank, w-parity, w-rank), so each
    # parity plane is a leading-dim slice (no in-kernel deinterleave).
    # plane index = 2*h_parity + w_parity of the PADDED coordinate.
    a1r = a1.reshape(B, 2, 8, 16, 128)
    for hb in range(2):                          # hb=0: odd output rows, hb=1: even
        sub = a1r[:, hb].reshape(B, 8, 2, 8, 128)
        for wb in range(2):
            piece = sub[:, :, wb].astype(jnp.bfloat16)          # (B, 8, 8, 128)
            hq0, wq0 = 1 - hb, 1 - wb
            z1p_ref[hb * 2 + wb, :, hq0:hq0 + 8, wq0:wq0 + 8, :] = piece

    # ---------------- layer 2: conv(64->128, k4 s2 p1) + BN + LeakyReLU ----------------
    # Matmul-ready LHS: one aligned 128-lane block write per conv tap (16 total).
    for kh in range(4):
        for kw in range(4):
            p = (kh & 1) * 2 + (kw & 1)
            hq0, wq0 = kh >> 1, kw >> 1
            t = kh * 4 + kw
            lhs2_ref[:, :, :, t * 128:(t + 1) * 128] = \
                z1p_ref[p, :, hq0:hq0 + 8, wq0:wq0 + 8, :]

    y2 = jnp.dot(lhs2_ref[...].reshape(B * 64, 2048), w2_ref[...],
                 preferred_element_type=jnp.float32)            # (B*64, 128), one dot
    # BatchNorm2d (training-mode batch stats, biased var, eps 1e-5) + LeakyReLU (f32)
    m2 = jnp.mean(y2, axis=0, keepdims=True)
    d2 = y2 - m2
    v2 = jnp.mean(d2 * d2, axis=0, keepdims=True)
    a2 = _lrelu(d2 * jax.lax.rsqrt(v2 + 1e-5) * g2_ref[...] + b2_ref[...])

    # Halo-only zero fill of the layer-2 parity-split staging buffer.
    z2p_ref[0:2, :, 0:1, :, :] = jnp.zeros((2, B, 1, 5, 128), jnp.bfloat16)
    z2p_ref[2:4, :, 4:5, :, :] = jnp.zeros((2, B, 1, 5, 128), jnp.bfloat16)
    for p in (0, 2):
        z2p_ref[p, :, :, 0:1, :] = jnp.zeros((B, 5, 1, 128), jnp.bfloat16)
    for p in (1, 3):
        z2p_ref[p, :, :, 4:5, :] = jnp.zeros((B, 5, 1, 128), jnp.bfloat16)

    # Parity-split a2 (rows are (b, h2, w2)); one major-dim swap puts w2 in a leading
    # dim so the stride-2 split is a leading-dim reshape (no strided sublane access).
    a2t = _swap01(a2.reshape(B * 8, 8, 128))                    # (w2, b*h2, c)
    a2s = a2t.reshape(4, 2, B * 8, 128)                         # w2 = 2*wq + wpar
    for wpar in range(2):
        v = _swap01(a2s[:, wpar])                               # (b*h2, wq, c)
        v = v.reshape(B, 4, 2, 4, 128)                          # h2 = 2*hq + hpar
        for hpar in range(2):
            u = v[:, :, hpar].astype(jnp.bfloat16)              # (B, 4, 4, 128)
            plane = (1 - hpar) * 2 + (1 - wpar)
            hq0, wq0 = hpar, wpar
            z2p_ref[plane, :, hq0:hq0 + 4, wq0:wq0 + 4, :] = u

    # ---------------- layer 3: conv(128->256, k4 s2 p1) + BN + LeakyReLU ----------------
    for kh in range(4):
        for kw in range(4):
            p = (kh & 1) * 2 + (kw & 1)
            hq0, wq0 = kh >> 1, kw >> 1
            t = kh * 4 + kw
            lhs3_ref[:, :, :, t * 128:(t + 1) * 128] = \
                z2p_ref[p, :, hq0:hq0 + 4, wq0:wq0 + 4, :]

    y3 = jnp.dot(lhs3_ref[...].reshape(B * 16, 2048), w3_ref[...],
                 preferred_element_type=jnp.float32)            # (B*16, 256), one dot
    m3 = jnp.mean(y3, axis=0, keepdims=True)
    d3 = y3 - m3
    v3 = jnp.mean(d3 * d3, axis=0, keepdims=True)
    a3 = _lrelu(d3 * jax.lax.rsqrt(v3 + 1e-5) * g3_ref[...] + b3_ref[...])

    # ---------------- layer 4: conv(256->1, k4 s1 p0) + sigmoid (vectorized over batch) ---
    prod = a3.reshape(B, 16, 256) * w4_ref[...].reshape(1, 16, 256)
    logit = jnp.sum(jnp.sum(prod, axis=1), axis=1, keepdims=True)     # (B, 1)
    e = jnp.exp(-jnp.abs(logit))                                      # stable sigmoid
    prob = jnp.where(logit >= 0, 1.0 / (1.0 + e), e / (1.0 + e))
    out_ref[...] = prob + jnp.zeros((B, 128), jnp.float32)            # lane-dense store


# --------------------------------------------------------------------------
# host glue: one-time weight re-layout (NumPy) + pallas_call wrapper
# --------------------------------------------------------------------------

def prep_params(p):
    """Pure-NumPy weight re-layout. Call ONCE and reuse across forward passes."""
    w1 = np.asarray(p["w1"], np.float32)            # (64, 3, 4, 4)
    w2 = np.asarray(p["w2"], np.float32)            # (128, 64, 4, 4)
    w3 = np.asarray(p["w3"], np.float32)            # (256, 128, 4, 4)
    w4 = np.asarray(p["w4"], np.float32)            # (1, 256, 4, 4)

    # layer 1: rows = (kh, kw, cin padded 3->8), cols = cout padded 64->128
    w1m = np.zeros((4, 4, 8, 128), np.float32)
    w1m[:, :, :3, :64] = np.transpose(w1, (2, 3, 1, 0))
    w1m = w1m.reshape(128, 128)

    # layer 2: rows = (kh, kw, cin padded 64->128), cols = cout 128
    w2m = np.zeros((4, 4, 128, 128), np.float32)
    w2m[:, :, :64, :] = np.transpose(w2, (2, 3, 1, 0))
    w2m = w2m.reshape(2048, 128)

    # layer 3: rows = (kh, kw, cin=128), cols = cout 256
    w3m = np.transpose(w3, (2, 3, 1, 0)).reshape(2048, 256)

    # layer 4: rows = (h, w), cols = cin 256
    w4m = np.transpose(w4[0], (1, 2, 0)).reshape(16, 256)

    return {
        "w1m": jnp.asarray(w1m, jnp.bfloat16),
        "w2m": jnp.asarray(w2m, jnp.bfloat16),
        "w3m": jnp.asarray(w3m, jnp.bfloat16),
        "w4m": jnp.asarray(w4m, jnp.float32),
        "g2": jnp.asarray(np.asarray(p["g2"], np.float32).reshape(1, 128)),
        "b2": jnp.asarray(np.asarray(p["b2"], np.float32).reshape(1, 128)),
        "g3": jnp.asarray(np.asarray(p["g3"], np.float32).reshape(1, 256)),
        "b3": jnp.asarray(np.asarray(p["b3"], np.float32).reshape(1, 256)),
    }


@jax.jit
def discriminador_forward(x_nchw, prepped):
    """Forward of Discriminador(canales_img=3, tamano_img=32) as one fused TPU kernel."""
    B = x_nchw.shape[0]
    x = jnp.transpose(x_nchw, (0, 2, 3, 1)).astype(jnp.float32)          # NCHW -> NHWC
    x = jnp.pad(x, ((0, 0), (1, 1), (1, 1), (0, 8 - x.shape[-1])))       # p=1, Cin 3->8
    taps = [x[:, kh:kh + 32:2, kw:kw + 32:2, :]
            for kh in range(4) for kw in range(4)]                        # host im2col (layer 1)
    patches = jnp.stack(taps, axis=3)                                     # (B,16,16,16,8)
    order = jnp.asarray(_PARITY_ORDER, jnp.int32)
    patches = jnp.take(jnp.take(patches, order, axis=1), order, axis=2)   # parity row order
    x1 = patches.reshape(B * 256, 128).astype(jnp.bfloat16)

    probs = pl.pallas_call(
        functools.partial(_fused_kernel, batch=B),
        out_shape=jax.ShapeDtypeStruct((B, 128), jnp.float32),
        in_specs=[pl.BlockSpec(memory_space=pltpu.MemorySpace.VMEM)] * 9,
        out_specs=pl.BlockSpec(memory_space=pltpu.MemorySpace.VMEM),
        scratch_shapes=[
            pltpu.VMEM((4, B, 9, 9, 128), jnp.bfloat16),   # layer-1 act, parity-split, padded
            pltpu.VMEM((B, 8, 8, 2048), jnp.bfloat16),     # layer-2 matmul-ready LHS
            pltpu.VMEM((4, B, 5, 5, 128), jnp.bfloat16),   # layer-2 act, parity-split, padded
            pltpu.VMEM((B, 4, 4, 2048), jnp.bfloat16),     # layer-3 matmul-ready LHS
        ],
    )(x1, prepped["w1m"], prepped["w2m"], prepped["w3m"],
      prepped["g2"], prepped["b2"], prepped["g3"], prepped["b3"], prepped["w4m"])
    return probs[:, :1].reshape(B, 1, 1, 1)


# --------------------------------------------------------------------------
# pure-JAX reference (same bf16-operand / f32-accumulate convention)
# --------------------------------------------------------------------------

def _ref_forward(x, params):
    def conv(x, w, s, p, bf16=True):
        if bf16:
            x = x.astype(jnp.bfloat16)
            w = w.astype(jnp.bfloat16)
        return jax.lax.conv_general_dilated(
            x, w, (s, s), ((p, p), (p, p)),
            dimension_numbers=("NCHW", "OIHW", "NCHW"),
            preferred_element_type=jnp.float32)

    def bn(x, g, b):
        mean = jnp.mean(x, axis=(0, 2, 3), keepdims=True)
        var = jnp.mean((x - mean) ** 2, axis=(0, 2, 3), keepdims=True)
        xn = (x - mean) * jax.lax.rsqrt(var + 1e-5)
        return xn * g[None, :, None, None] + b[None, :, None, None]

    lrelu = lambda v: jnp.where(v > 0, v, 0.2 * v)
    x = lrelu(conv(x, params["w1"], 2, 1))
    x = lrelu(bn(conv(x, params["w2"], 2, 1), params["g2"], params["b2"]))
    x = lrelu(bn(conv(x, params["w3"], 2, 1), params["g3"], params["b3"]))
    return jax.nn.sigmoid(conv(x, params["w4"], 1, 0, bf16=False))


# --------------------------------------------------------------------------
# main
# --------------------------------------------------------------------------

def _init_params(key):
    ks = jax.random.split(key, 4)
    return {
        "w1": 0.02 * jax.random.normal(ks[0], (64, 3, 4, 4), jnp.float32),
        "w2": 0.02 * jax.random.normal(ks[1], (128, 64, 4, 4), jnp.float32),
        "w3": 0.02 * jax.random.normal(ks[2], (256, 128, 4, 4), jnp.float32),
        "w4": 0.02 * jax.random.normal(ks[3], (1, 256, 4, 4), jnp.float32),
        "g2": jnp.ones((128,), jnp.float32), "b2": jnp.zeros((128,), jnp.float32),
        "g3": jnp.ones((256,), jnp.float32), "b3": jnp.zeros((256,), jnp.float32),
    }


if __name__ == "__main__":
    key = jax.random.PRNGKey(0)
    pkey, xkey = jax.random.split(key)
    params = _init_params(pkey)

    # One-time (host/NumPy) weight re-layout, reused for every forward call.
    prepped = prep_params(params)

    # Discriminador(canales_img=3, tamano_img=32), batch=2
    x = jax.random.normal(xkey, (2, 3, 32, 32), jnp.float32)

    out = jax.block_until_ready(discriminador_forward(x, prepped))
    assert out.shape == (2, 1, 1, 1), out.shape

    ref = jax.block_until_ready(_ref_forward(x, params))
    if not np.allclose(np.asarray(out), np.asarray(ref), atol=1e-2, rtol=1e-2):
        raise SystemExit("mismatch vs reference")

    print("KERNEL_OK")
</pallas_src>

<mosaic_0001>
module attributes {stable_mosaic.version = 11 : i64} {
  func.func @_fused_kernel(%arg0: memref<512x128xbf16, #tpu.memory_space<vmem>>, %arg1: memref<128x128xbf16, #tpu.memory_space<vmem>>, %arg2: memref<2048x128xbf16, #tpu.memory_space<vmem>>, %arg3: memref<2048x256xbf16, #tpu.memory_space<vmem>>, %arg4: memref<1x128xf32, #tpu.memory_space<vmem>>, %arg5: memref<1x128xf32, #tpu.memory_space<vmem>>, %arg6: memref<1x256xf32, #tpu.memory_space<vmem>>, %arg7: memref<1x256xf32, #tpu.memory_space<vmem>>, %arg8: memref<16x256xf32, #tpu.memory_space<vmem>>, %arg9: memref<2x128xf32, #tpu.memory_space<vmem>>, %arg10: memref<4x2x9x9x128xbf16, #tpu.memory_space<vmem>>, %arg11: memref<2x8x8x2048xbf16, #tpu.memory_space<vmem>>, %arg12: memref<4x2x5x5x128xbf16, #tpu.memory_space<vmem>>, %arg13: memref<2x4x4x2048xbf16, #tpu.memory_space<vmem>>) attributes {dimension_semantics = [], scalar_prefetch = 0 : i64, scratch_operands = 4 : i64, tpu.core_type = #tpu.core_type<tc>} {
    %c0 = arith.constant 0 : index
    %c0_0 = arith.constant 0 : index
    %0 = vector.load %arg0[%c0, %c0_0] : memref<512x128xbf16, #tpu.memory_space<vmem>>, vector<512x128xbf16>
    %c0_1 = arith.constant 0 : index
    %c0_2 = arith.constant 0 : index
    %1 = vector.load %arg1[%c0_1, %c0_2] : memref<128x128xbf16, #tpu.memory_space<vmem>>, vector<128x128xbf16>
    %cst = arith.constant dense<0.000000e+00> : vector<512x128xf32>
    %2 = tpu.matmul %0, %1, %cst {dimension_numbers = #tpu.dot_dimension_numbers<[1], [0], [0], [1], [0, 0, 1, 1], [], []>} : vector<512x128xbf16>, vector<128x128xbf16>, vector<512x128xf32> -> vector<512x128xf32>
    %cst_3 = arith.constant 0.000000e+00 : f32
    %3 = vector.broadcast %cst_3 : f32 to vector<512x128xf32>
    %4 = arith.cmpf ogt, %2, %3 : vector<512x128xf32>
    %cst_4 = arith.constant 2.000000e-01 : f32
    %5 = vector.broadcast %cst_4 : f32 to vector<512x128xf32>
    %6 = arith.mulf %5, %2 : vector<512x128xf32>
    %7 = arith.select %4, %2, %6 : vector<512x128xi1>, vector<512x128xf32>
    %cst_5 = arith.constant 0.000000e+00 : bf16
    %8 = vector.broadcast %cst_5 : bf16 to vector<2x2x1x9x128xbf16>
    %c0_6 = arith.constant 0 : index
    %c0_7 = arith.constant 0 : index
    %c0_8 = arith.constant 0 : index
    %c0_9 = arith.constant 0 : index
    %c0_10 = arith.constant 0 : index
    %9 = vector.load %arg10[%c0_6, %c0_7, %c0_8, %c0_9, %c0_10] : memref<4x2x9x9x128xbf16, #tpu.memory_space<vmem>>, vector<2x2x1x9x128xbf16>
    tpu.vector_store %arg10[%c0_6, %c0_7, %c0_8, %c0_9, %c0_10], %8 {strides = array<i32>} : memref<4x2x9x9x128xbf16, #tpu.memory_space<vmem>>, vector<2x2x1x9x128xbf16>,
    %cst_11 = arith.constant 0.000000e+00 : bf16
    %10 = vector.broadcast %cst_11 : bf16 to vector<2x2x1x9x128xbf16>
    %c2 = arith.constant 2 : index
    %c0_12 = arith.constant 0 : index
    %c8 = arith.constant 8 : index
    %c0_13 = arith.constant 0 : index
    %c0_14 = arith.constant 0 : index
    %11 = vector.load %arg10[%c2, %c0_12, %c8, %c0_13, %c0_14] : memref<4x2x9x9x128xbf16, #tpu.memory_space<vmem>>, vector<2x2x1x9x128xbf16>
    tpu.vector_store %arg10[%c2, %c0_12, %c8, %c0_13, %c0_14], %10 {strides = array<i32>} : memref<4x2x9x9x128xbf16, #tpu.memory_space<vmem>>, vector<2x2x1x9x128xbf16>,
    %cst_15 = arith.constant 0.000000e+00 : bf16
    %12 = vector.broadcast %cst_15 : bf16 to vector<2x9x1x128xbf16>
    %c0_16 = arith.constant 0 : index
    %c0_17 = arith.constant 0 : index
    %c0_18 = arith.constant 0 : index
    %c0_19 = arith.constant 0 : index
    %c0_20 = arith.constant 0 : index
    %13 = vector.load %arg10[%c0_16, %c0_17, %c0_18, %c0_19, %c0_20] : memref<4x2x9x9x128xbf16, #tpu.memory_space<vmem>>, vector<1x2x9x1x128xbf16>
    %14 = vector.shape_cast %13 : vector<1x2x9x1x128xbf16> to vector<2x9x1x128xbf16>
    %15 = vector.shape_cast %12 : vector<2x9x1x128xbf16> to vector<1x2x9x1x128xbf16>
    tpu.vector_store %arg10[%c0_16, %c0_17, %c0_18, %c0_19, %c0_20], %15 {strides = array<i32>} : memref<4x2x9x9x128xbf16, #tpu.memory_space<vmem>>, vector<1x2x9x1x128xbf16>,
    %cst_21 = arith.constant 0.000000e+00 : bf16
    %16 = vector.broadcast %cst_21 : bf16 to vector<2x9x1x128xbf16>
    %c2_22 = arith.constant 2 : index
    %c0_23 = arith.constant 0 : index
    %c0_24 = arith.constant 0 : index
    %c0_25 = arith.constant 0 : index
    %c0_26 = arith.constant 0 : index
    %17 = vector.load %arg10[%c2_22, %c0_23, %c0_24, %c0_25, %c0_26] : memref<4x2x9x9x128xbf16, #tpu.memory_space<vmem>>, vector<1x2x9x1x128xbf16>
    %18 = vector.shape_cast %17 : vector<1x2x9x1x128xbf16> to vector<2x9x1x128xbf16>
    %19 = vector.shape_cast %16 : vector<2x9x1x128xbf16> to vector<1x2x9x1x128xbf16>
    tpu.vector_store %arg10[%c2_22, %c0_23, %c0_24, %c0_25, %c0_26], %19 {strides = array<i32>} : memref<4x2x9x9x128xbf16, #tpu.memory_space<vmem>>, vector<1x2x9x1x128xbf16>,
    %cst_27 = arith.constant 0.000000e+00 : bf16
    %20 = vector.broadcast %cst_27 : bf16 to vector<2x9x1x128xbf16>
    %c1 = arith.constant 1 : index
    %c0_28 = arith.constant 0 : index
    %c0_29 = arith.constant 0 : index
    %c8_30 = arith.constant 8 : index
    %c0_31 = arith.constant 0 : index
    %21 = vector.load %arg10[%c1, %c0_28, %c0_29, %c8_30, %c0_31] : memref<4x2x9x9x128xbf16, #tpu.memory_space<vmem>>, vector<1x2x9x1x128xbf16>
    %22 = vector.shape_cast %21 : vector<1x2x9x1x128xbf16> to vector<2x9x1x128xbf16>
    %23 = vector.shape_cast %20 : vector<2x9x1x128xbf16> to vector<1x2x9x1x128xbf16>
    tpu.vector_store %arg10[%c1, %c0_28, %c0_29, %c8_30, %c0_31], %23 {strides = array<i32>} : memref<4x2x9x9x128xbf16, #tpu.memory_space<vmem>>, vector<1x2x9x1x128xbf16>,
    %cst_32 = arith.constant 0.000000e+00 : bf16
    %24 = vector.broadcast %cst_32 : bf16 to vector<2x9x1x128xbf16>
    %c3 = arith.constant 3 : index
    %c0_33 = arith.constant 0 : index
    %c0_34 = arith.constant 0 : index
    %c8_35 = arith.constant 8 : index
    %c0_36 = arith.constant 0 : index
    %25 = vector.load %arg10[%c3, %c0_33, %c0_34, %c8_35, %c0_36] : memref<4x2x9x9x128xbf16, #tpu.memory_space<vmem>>, vector<1x2x9x1x128xbf16>
    %26 = vector.shape_cast %25 : vector<1x2x9x1x128xbf16> to vector<2x9x1x128xbf16>
    %27 = vector.shape_cast %24 : vector<2x9x1x128xbf16> to vector<1x2x9x1x128xbf16>
    tpu.vector_store %arg10[%c3, %c0_33, %c0_34, %c8_35, %c0_36], %27 {strides = array<i32>} : memref<4x2x9x9x128xbf16, #tpu.memory_space<vmem>>, vector<1x2x9x1x128xbf16>,
    %28 = vector.shape_cast %7 : vector<512x128xf32> to vector<2x2x8x16x128xf32>
    %29 = vector.extract_strided_slice %28 {offsets = [0, 0, 0, 0, 0], sizes = [2, 1, 8, 16, 128], strides = [1, 1, 1, 1, 1]} : vector<2x2x8x16x128xf32> to vector<2x1x8x16x128xf32>
    %30 = vector.shape_cast %29 : vector<2x1x8x16x128xf32> to vector<2x8x16x128xf32>
    %31 = vector.shape_cast %30 : vector<2x8x16x128xf32> to vector<2x8x2x8x128xf32>
    %32 = vector.extract_strided_slice %31 {offsets = [0, 0, 0, 0, 0], sizes = [2, 8, 1, 8, 128], strides = [1, 1, 1, 1, 1]} : vector<2x8x2x8x128xf32> to vector<2x8x1x8x128xf32>
    %33 = vector.shape_cast %32 : vector<2x8x1x8x128xf32> to vector<2x8x8x128xf32>
    %34 = arith.truncf %33 : vector<2x8x8x128xf32> to vector<2x8x8x128xbf16>
    %c0_37 = arith.constant 0 : index
    %c0_38 = arith.constant 0 : index
    %c1_39 = arith.constant 1 : index
    %c1_40 = arith.constant 1 : index
    %c0_41 = arith.constant 0 : index
    %35 = vector.load %arg10[%c0_37, %c0_38, %c1_39, %c1_40, %c0_41] : memref<4x2x9x9x128xbf16, #tpu.memory_space<vmem>>, vector<1x2x8x8x128xbf16>
    %36 = vector.shape_cast %35 : vector<1x2x8x8x128xbf16> to vector<2x8x8x128xbf16>
    %37 = vector.shape_cast %34 : vector<2x8x8x128xbf16> to vector<1x2x8x8x128xbf16>
    tpu.vector_store %arg10[%c0_37, %c0_38, %c1_39, %c1_40, %c0_41], %37 {strides = array<i32>} : memref<4x2x9x9x128xbf16, #tpu.memory_space<vmem>>, vector<1x2x8x8x128xbf16>,
    %38 = vector.extract_strided_slice %31 {offsets = [0, 0, 1, 0, 0], sizes = [2, 8, 1, 8, 128], strides = [1, 1, 1, 1, 1]} : vector<2x8x2x8x128xf32> to vector<2x8x1x8x128xf32>
    %39 = vector.shape_cast %38 : vector<2x8x1x8x128xf32> to vector<2x8x8x128xf32>
    %40 = arith.truncf %39 : vector<2x8x8x128xf32> to vector<2x8x8x128xbf16>
    %c1_42 = arith.constant 1 : index
    %c0_43 = arith.constant 0 : index
    %c1_44 = arith.constant 1 : index
    %c0_45 = arith.constant 0 : index
    %c0_46 = arith.constant 0 : index
    %41 = vector.load %arg10[%c1_42, %c0_43, %c1_44, %c0_45, %c0_46] : memref<4x2x9x9x128xbf16, #tpu.memory_space<vmem>>, vector<1x2x8x8x128xbf16>
    %42 = vector.shape_cast %41 : vector<1x2x8x8x128xbf16> to vector<2x8x8x128xbf16>
    %43 = vector.shape_cast %40 : vector<2x8x8x128xbf16> to vector<1x2x8x8x128xbf16>
    tpu.vector_store %arg10[%c1_42, %c0_43, %c1_44, %c0_45, %c0_46], %43 {strides = array<i32>} : memref<4x2x9x9x128xbf16, #tpu.memory_space<vmem>>, vector<1x2x8x8x128xbf16>,
    %44 = vector.extract_strided_slice %28 {offsets = [0, 1, 0, 0, 0], sizes = [2, 1, 8, 16, 128], strides = [1, 1, 1, 1, 1]} : vector<2x2x8x16x128xf32> to vector<2x1x8x16x128xf32>
    %45 = vector.shape_cast %44 : vector<2x1x8x16x128xf32> to vector<2x8x16x128xf32>
    %46 = vector.shape_cast %45 : vector<2x8x16x128xf32> to vector<2x8x2x8x128xf32>
    %47 = vector.extract_strided_slice %46 {offsets = [0, 0, 0, 0, 0], sizes = [2, 8, 1, 8, 128], strides = [1, 1, 1, 1, 1]} : vector<2x8x2x8x128xf32> to vector<2x8x1x8x128xf32>
    %48 = vector.shape_cast %47 : vector<2x8x1x8x128xf32> to vector<2x8x8x128xf32>
    %49 = arith.truncf %48 : vector<2x8x8x128xf32> to vector<2x8x8x128xbf16>
    %c2_47 = arith.constant 2 : index
    %c0_48 = arith.constant 0 : index
    %c0_49 = arith.constant 0 : index
    %c1_50 = arith.constant 1 : index
    %c0_51 = arith.constant 0 : index
    %50 = vector.load %arg10[%c2_47, %c0_48, %c0_49, %c1_50, %c0_51] : memref<4x2x9x9x128xbf16, #tpu.memory_space<vmem>>, vector<1x2x8x8x128xbf16>
    %51 = vector.shape_cast %50 : vector<1x2x8x8x128xbf16> to vector<2x8x8x128xbf16>
    %52 = vector.shape_cast %49 : vector<2x8x8x128xbf16> to vector<1x2x8x8x128xbf16>
    tpu.vector_store %arg10[%c2_47, %c0_48, %c0_49, %c1_50, %c0_51], %52 {strides = array<i32>} : memref<4x2x9x9x128xbf16, #tpu.memory_space<vmem>>, vector<1x2x8x8x128xbf16>,
    %53 = vector.extract_strided_slice %46 {offsets = [0, 0, 1, 0, 0], sizes = [2, 8, 1, 8, 128], strides = [1, 1, 1, 1, 1]} : vector<2x8x2x8x128xf32> to vector<2x8x1x8x128xf32>
    %54 = vector.shape_cast %53 : vector<2x8x1x8x128xf32> to vector<2x8x8x128xf32>
    %55 = arith.truncf %54 : vector<2x8x8x128xf32> to vector<2x8x8x128xbf16>
    %c3_52 = arith.constant 3 : index
    %c0_53 = arith.constant 0 : index
    %c0_54 = arith.constant 0 : index
    %c0_55 = arith.constant 0 : index
    %c0_56 = arith.constant 0 : index
    %56 = vector.load %arg10[%c3_52, %c0_53, %c0_54, %c0_55, %c0_56] : memref<4x2x9x9x128xbf16, #tpu.memory_space<vmem>>, vector<1x2x8x8x128xbf16>
    %57 = vector.shape_cast %56 : vector<1x2x8x8x128xbf16> to vector<2x8x8x128xbf16>
    %58 = vector.shape_cast %55 : vector<2x8x8x128xbf16> to vector<1x2x8x8x128xbf16>
    tpu.vector_store %arg10[%c3_52, %c0_53, %c0_54, %c0_55, %c0_56], %58 {strides = array<i32>} : memref<4x2x9x9x128xbf16, #tpu.memory_space<vmem>>, vector<1x2x8x8x128xbf16>,
    %c0_57 = arith.constant 0 : index
    %c0_58 = arith.constant 0 : index
    %c0_59 = arith.constant 0 : index
    %c0_60 = arith.constant 0 : index
    %c0_61 = arith.constant 0 : index
    %59 = vector.load %arg10[%c0_57, %c0_58, %c0_59, %c0_60, %c0_61] : memref<4x2x9x9x128xbf16, #tpu.memory_space<vmem>>, vector<1x2x8x8x128xbf16>
    %60 = vector.shape_cast %59 : vector<1x2x8x8x128xbf16> to vector<2x8x8x128xbf16>
    %c0_62 = arith.constant 0 : index
    %c0_63 = arith.constant 0 : index
    %c0_64 = arith.constant 0 : index
    %c0_65 = arith.constant 0 : index
    %61 = vector.load %arg11[%c0_62, %c0_63, %c0_64, %c0_65] : memref<2x8x8x2048xbf16, #tpu.memory_space<vmem>>, vector<2x8x8x128xbf16>
    tpu.vector_store %arg11[%c0_62, %c0_63, %c0_64, %c0_65], %60 {strides = array<i32>} : memref<2x8x8x2048xbf16, #tpu.memory_space<vmem>>, vector<2x8x8x128xbf16>,
    %c1_66 = arith.constant 1 : index
    %c0_67 = arith.constant 0 : index
    %c0_68 = arith.constant 0 : index
    %c0_69 = arith.constant 0 : index
    %c0_70 = arith.constant 0 : index
    %62 = vector.load %arg10[%c1_66, %c0_67, %c0_68, %c0_69, %c0_70] : memref<4x2x9x9x128xbf16, #tpu.memory_space<vmem>>, vector<1x2x8x8x128xbf16>
    %63 = vector.shape_cast %62 : vector<1x2x8x8x128xbf16> to vector<2x8x8x128xbf16>
    %c0_71 = arith.constant 0 : index
    %c0_72 = arith.constant 0 : index
    %c0_73 = arith.constant 0 : index
    %c128 = arith.constant 128 : index
    %64 = vector.load %arg11[%c0_71, %c0_72, %c0_73, %c128] : memref<2x8x8x2048xbf16, #tpu.memory_space<vmem>>, vector<2x8x8x128xbf16>
    tpu.vector_store %arg11[%c0_71, %c0_72, %c0_73, %c128], %63 {strides = array<i32>} : memref<2x8x8x2048xbf16, #tpu.memory_space<vmem>>, vector<2x8x8x128xbf16>,
    %c0_74 = arith.constant 0 : index
    %c0_75 = arith.constant 0 : index
    %c0_76 = arith.constant 0 : index
    %c1_77 = arith.constant 1 : index
    %c0_78 = arith.constant 0 : index
    %65 = vector.load %arg10[%c0_74, %c0_75, %c0_76, %c1_77, %c0_78] : memref<4x2x9x9x128xbf16, #tpu.memory_space<vmem>>, vector<1x2x8x8x128xbf16>
    %66 = vector.shape_cast %65 : vector<1x2x8x8x128xbf16> to vector<2x8x8x128xbf16>
    %c0_79 = arith.constant 0 : index
    %c0_80 = arith.constant 0 : index
    %c0_81 = arith.constant 0 : index
    %c256 = arith.constant 256 : index
    %67 = vector.load %arg11[%c0_79, %c0_80, %c0_81, %c256] : memref<2x8x8x2048xbf16, #tpu.memory_space<vmem>>, vector<2x8x8x128xbf16>
    tpu.vector_store %arg11[%c0_79, %c0_80, %c0_81, %c256], %66 {strides = array<i32>} : memref<2x8x8x2048xbf16, #tpu.memory_space<vmem>>, vector<2x8x8x128xbf16>,
    %c1_82 = arith.constant 1 : index
    %c0_83 = arith.constant 0 : index
    %c0_84 = arith.constant 0 : index
    %c1_85 = arith.constant 1 : index
    %c0_86 = arith.constant 0 : index
    %68 = vector.load %arg10[%c1_82, %c0_83, %c0_84, %c1_85, %c0_86] : memref<4x2x9x9x128xbf16, #tpu.memory_space<vmem>>, vector<1x2x8x8x128xbf16>
    %69 = vector.shape_cast %68 : vector<1x2x8x8x128xbf16> to vector<2x8x8x128xbf16>
    %c0_87 = arith.constant 0 : index
    %c0_88 = arith.constant 0 : index
    %c0_89 = arith.constant 0 : index
    %c384 = arith.constant 384 : index
    %70 = vector.load %arg11[%c0_87, %c0_88, %c0_89, %c384] : memref<2x8x8x2048xbf16, #tpu.memory_space<vmem>>, vector<2x8x8x128xbf16>
    tpu.vector_store %arg11[%c0_87, %c0_88, %c0_89, %c384], %69 {strides = array<i32>} : memref<2x8x8x2048xbf16, #tpu.memory_space<vmem>>, vector<2x8x8x128xbf16>,
    %c2_90 = arith.constant 2 : index
    %c0_91 = arith.constant 0 : index
    %c0_92 = arith.constant 0 : index
    %c0_93 = arith.constant 0 : index
    %c0_94 = arith.constant 0 : index
    %71 = vector.load %arg10[%c2_90, %c0_91, %c0_92, %c0_93, %c0_94] : memref<4x2x9x9x128xbf16, #tpu.memory_space<vmem>>, vector<1x2x8x8x128xbf16>
    %72 = vector.shape_cast %71 : vector<1x2x8x8x128xbf16> to vector<2x8x8x128xbf16>
    %c0_95 = arith.constant 0 : index
    %c0_96 = arith.constant 0 : index
    %c0_97 = arith.constant 0 : index
    %c512 = arith.constant 512 : index
    %73 = vector.load %arg11[%c0_95, %c0_96, %c0_97, %c512] : memref<2x8x8x2048xbf16, #tpu.memory_space<vmem>>, vector<2x8x8x128xbf16>
    tpu.vector_store %arg11[%c0_95, %c0_96, %c0_97, %c512], %72 {strides = array<i32>} : memref<2x8x8x2048xbf16, #tpu.memory_space<vmem>>, vector<2x8x8x128xbf16>,
    %c3_98 = arith.constant 3 : index
    %c0_99 = arith.constant 0 : index
    %c0_100 = arith.constant 0 : index
    %c0_101 = arith.constant 0 : index
    %c0_102 = arith.constant 0 : index
    %74 = vector.load %arg10[%c3_98, %c0_99, %c0_100, %c0_101, %c0_102] : memref<4x2x9x9x128xbf16, #tpu.memory_space<vmem>>, vector<1x2x8x8x128xbf16>
    %75 = vector.shape_cast %74 : vector<1x2x8x8x128xbf16> to vector<2x8x8x128xbf16>
    %c0_103 = arith.constant 0 : index
    %c0_104 = arith.constant 0 : index
    %c0_105 = arith.constant 0 : index
    %c640 = arith.constant 640 : index
    %76 = vector.load %arg11[%c0_103, %c0_104, %c0_105, %c640] : memref<2x8x8x2048xbf16, #tpu.memory_space<vmem>>, vector<2x8x8x128xbf16>
    tpu.vector_store %arg11[%c0_103, %c0_104, %c0_105, %c640], %75 {strides = array<i32>} : memref<2x8x8x2048xbf16, #tpu.memory_space<vmem>>, vector<2x8x8x128xbf16>,
    %c2_106 = arith.constant 2 : index
    %c0_107 = arith.constant 0 : index
    %c0_108 = arith.constant 0 : index
    %c1_109 = arith.constant 1 : index
    %c0_110 = arith.constant 0 : index
    %77 = vector.load %arg10[%c2_106, %c0_107, %c0_108, %c1_109, %c0_110] : memref<4x2x9x9x128xbf16, #tpu.memory_space<vmem>>, vector<1x2x8x8x128xbf16>
    %78 = vector.shape_cast %77 : vector<1x2x8x8x128xbf16> to vector<2x8x8x128xbf16>
    %c0_111 = arith.constant 0 : index
    %c0_112 = arith.constant 0 : index
    %c0_113 = arith.constant 0 : index
    %c768 = arith.constant 768 : index
    %79 = vector.load %arg11[%c0_111, %c0_112, %c0_113, %c768] : memref<2x8x8x2048xbf16, #tpu.memory_space<vmem>>, vector<2x8x8x128xbf16>
    tpu.vector_store %arg11[%c0_111, %c0_112, %c0_113, %c768], %78 {strides = array<i32>} : memref<2x8x8x2048xbf16, #tpu.memory_space<vmem>>, vector<2x8x8x128xbf16>,
    %c3_114 = arith.constant 3 : index
    %c0_115 = arith.constant 0 : index
    %c0_116 = arith.constant 0 : index
    %c1_117 = arith.constant 1 : index
    %c0_118 = arith.constant 0 : index
    %80 = vector.load %arg10[%c3_114, %c0_115, %c0_116, %c1_117, %c0_118] : memref<4x2x9x9x128xbf16, #tpu.memory_space<vmem>>, vector<1x2x8x8x128xbf16>
    %81 = vector.shape_cast %80 : vector<1x2x8x8x128xbf16> to vector<2x8x8x128xbf16>
    %c0_119 = arith.constant 0 : index
    %c0_120 = arith.constant 0 : index
    %c0_121 = arith.constant 0 : index
    %c896 = arith.constant 896 : index
    %82 = vector.load %arg11[%c0_119, %c0_120, %c0_121, %c896] : memref<2x8x8x2048xbf16, #tpu.memory_space<vmem>>, vector<2x8x8x128xbf16>
    tpu.vector_store %arg11[%c0_119, %c0_120, %c0_121, %c896], %81 {strides = array<i32>} : memref<2x8x8x2048xbf16, #tpu.memory_space<vmem>>, vector<2x8x8x128xbf16>,
    %c0_122 = arith.constant 0 : index
    %c0_123 = arith.constant 0 : index
    %c1_124 = arith.constant 1 : index
    %c0_125 = arith.constant 0 : index
    %c0_126 = arith.constant 0 : index
    %83 = vector.load %arg10[%c0_122, %c0_123, %c1_124, %c0_125, %c0_126] : memref<4x2x9x9x128xbf16, #tpu.memory_space<vmem>>, vector<1x2x8x8x128xbf16>
    %84 = vector.shape_cast %83 : vector<1x2x8x8x128xbf16> to vector<2x8x8x128xbf16>
    %c0_127 = arith.constant 0 : index
    %c0_128 = arith.constant 0 : index
    %c0_129 = arith.constant 0 : index
    %c1024 = arith.constant 1024 : index
    %85 = vector.load %arg11[%c0_127, %c0_128, %c0_129, %c1024] : memref<2x8x8x2048xbf16, #tpu.memory_space<vmem>>, vector<2x8x8x128xbf16>
    tpu.vector_store %arg11[%c0_127, %c0_128, %c0_129, %c1024], %84 {strides = array<i32>} : memref<2x8x8x2048xbf16, #tpu.memory_space<vmem>>, vector<2x8x8x128xbf16>,
    %c1_130 = arith.constant 1 : index
    %c0_131 = arith.constant 0 : index
    %c1_132 = arith.constant 1 : index
    %c0_133 = arith.constant 0 : index
    %c0_134 = arith.constant 0 : index
    %86 = vector.load %arg10[%c1_130, %c0_131, %c1_132, %c0_133, %c0_134] : memref<4x2x9x9x128xbf16, #tpu.memory_space<vmem>>, vector<1x2x8x8x128xbf16>
    %87 = vector.shape_cast %86 : vector<1x2x8x8x128xbf16> to vector<2x8x8x128xbf16>
    %c0_135 = arith.constant 0 : index
    %c0_136 = arith.constant 0 : index
    %c0_137 = arith.constant 0 : index
    %c1152 = arith.constant 1152 : index
    %88 = vector.load %arg11[%c0_135, %c0_136, %c0_137, %c1152] : memref<2x8x8x2048xbf16, #tpu.memory_space<vmem>>, vector<2x8x8x128xbf16>
    tpu.vector_store %arg11[%c0_135, %c0_136, %c0_137, %c1152], %87 {strides = array<i32>} : memref<2x8x8x2048xbf16, #tpu.memory_space<vmem>>, vector<2x8x8x128xbf16>,
    %c0_138 = arith.constant 0 : index
    %c0_139 = arith.constant 0 : index
    %c1_140 = arith.constant 1 : index
    %c1_141 = arith.constant 1 : index
    %c0_142 = arith.constant 0 : index
    %89 = vector.load %arg10[%c0_138, %c0_139, %c1_140, %c1_141, %c0_142] : memref<4x2x9x9x128xbf16, #tpu.memory_space<vmem>>, vector<1x2x8x8x128xbf16>
    %90 = vector.shape_cast %89 : vector<1x2x8x8x128xbf16> to vector<2x8x8x128xbf16>
    %c0_143 = arith.constant 0 : index
    %c0_144 = arith.constant 0 : index
    %c0_145 = arith.constant 0 : index
    %c1280 = arith.constant 1280 : index
    %91 = vector.load %arg11[%c0_143, %c0_144, %c0_145, %c1280] : memref<2x8x8x2048xbf16, #tpu.memory_space<vmem>>, vector<2x8x8x128xbf16>
    tpu.vector_store %arg11[%c0_143, %c0_144, %c0_145, %c1280], %90 {strides = array<i32>} : memref<2x8x8x2048xbf16, #tpu.memory_space<vmem>>, vector<2x8x8x128xbf16>,
    %c1_146 = arith.constant 1 : index
    %c0_147 = arith.constant 0 : index
    %c1_148 = arith.constant 1 : index
    %c1_149 = arith.constant 1 : index
    %c0_150 = arith.constant 0 : index
    %92 = vector.load %arg10[%c1_146, %c0_147, %c1_148, %c1_149, %c0_150] : memref<4x2x9x9x128xbf16, #tpu.memory_space<vmem>>, vector<1x2x8x8x128xbf16>
    %93 = vector.shape_cast %92 : vector<1x2x8x8x128xbf16> to vector<2x8x8x128xbf16>
    %c0_151 = arith.constant 0 : index
    %c0_152 = arith.constant 0 : index
    %c0_153 = arith.constant 0 : index
    %c1408 = arith.constant 1408 : index
    %94 = vector.load %arg11[%c0_151, %c0_152, %c0_153, %c1408] : memref<2x8x8x2048xbf16, #tpu.memory_space<vmem>>, vector<2x8x8x128xbf16>
    tpu.vector_store %arg11[%c0_151, %c0_152, %c0_153, %c1408], %93 {strides = array<i32>} : memref<2x8x8x2048xbf16, #tpu.memory_space<vmem>>, vector<2x8x8x128xbf16>,
    %c2_154 = arith.constant 2 : index
    %c0_155 = arith.constant 0 : index
    %c1_156 = arith.constant 1 : index
    %c0_157 = arith.constant 0 : index
    %c0_158 = arith.constant 0 : index
    %95 = vector.load %arg10[%c2_154, %c0_155, %c1_156, %c0_157, %c0_158] : memref<4x2x9x9x128xbf16, #tpu.memory_space<vmem>>, vector<1x2x8x8x128xbf16>
    %96 = vector.shape_cast %95 : vector<1x2x8x8x128xbf16> to vector<2x8x8x128xbf16>
    %c0_159 = arith.constant 0 : index
    %c0_160 = arith.constant 0 : index
    %c0_161 = arith.constant 0 : index
    %c1536 = arith.constant 1536 : index
    %97 = vector.load %arg11[%c0_159, %c0_160, %c0_161, %c1536] : memref<2x8x8x2048xbf16, #tpu.memory_space<vmem>>, vector<2x8x8x128xbf16>
    tpu.vector_store %arg11[%c0_159, %c0_160, %c0_161, %c1536], %96 {strides = array<i32>} : memref<2x8x8x2048xbf16, #tpu.memory_space<vmem>>, vector<2x8x8x128xbf16>,
    %c3_162 = arith.constant 3 : index
    %c0_163 = arith.constant 0 : index
    %c1_164 = arith.constant 1 : index
    %c0_165 = arith.constant 0 : index
    %c0_166 = arith.constant 0 : index
    %98 = vector.load %arg10[%c3_162, %c0_163, %c1_164, %c0_165, %c0_166] : memref<4x2x9x9x128xbf16, #tpu.memory_space<vmem>>, vector<1x2x8x8x128xbf16>
    %99 = vector.shape_cast %98 : vector<1x2x8x8x128xbf16> to vector<2x8x8x128xbf16>
    %c0_167 = arith.constant 0 : index
    %c0_168 = arith.constant 0 : index
    %c0_169 = arith.constant 0 : index
    %c1664 = arith.constant 1664 : index
    %100 = vector.load %arg11[%c0_167, %c0_168, %c0_169, %c1664] : memref<2x8x8x2048xbf16, #tpu.memory_space<vmem>>, vector<2x8x8x128xbf16>
    tpu.vector_store %arg11[%c0_167, %c0_168, %c0_169, %c1664], %99 {strides = array<i32>} : memref<2x8x8x2048xbf16, #tpu.memory_space<vmem>>, vector<2x8x8x128xbf16>,
    %c2_170 = arith.constant 2 : index
    %c0_171 = arith.constant 0 : index
    %c1_172 = arith.constant 1 : index
    %c1_173 = arith.constant 1 : index
    %c0_174 = arith.constant 0 : index
    %101 = vector.load %arg10[%c2_170, %c0_171, %c1_172, %c1_173, %c0_174] : memref<4x2x9x9x128xbf16, #tpu.memory_space<vmem>>, vector<1x2x8x8x128xbf16>
    %102 = vector.shape_cast %101 : vector<1x2x8x8x128xbf16> to vector<2x8x8x128xbf16>
    %c0_175 = arith.constant 0 : index
    %c0_176 = arith.constant 0 : index
    %c0_177 = arith.constant 0 : index
    %c1792 = arith.constant 1792 : index
    %103 = vector.load %arg11[%c0_175, %c0_176, %c0_177, %c1792] : memref<2x8x8x2048xbf16, #tpu.memory_space<vmem>>, vector<2x8x8x128xbf16>
    tpu.vector_store %arg11[%c0_175, %c0_176, %c0_177, %c1792], %102 {strides = array<i32>} : memref<2x8x8x2048xbf16, #tpu.memory_space<vmem>>, vector<2x8x8x128xbf16>,
    %c3_178 = arith.constant 3 : index
    %c0_179 = arith.constant 0 : index
    %c1_180 = arith.constant 1 : index
    %c1_181 = arith.constant 1 : index
    %c0_182 = arith.constant 0 : index
    %104 = vector.load %arg10[%c3_178, %c0_179, %c1_180, %c1_181, %c0_182] : memref<4x2x9x9x128xbf16, #tpu.memory_space<vmem>>, vector<1x2x8x8x128xbf16>
    %105 = vector.shape_cast %104 : vector<1x2x8x8x128xbf16> to vector<2x8x8x128xbf16>
    %c0_183 = arith.constant 0 : index
    %c0_184 = arith.constant 0 : index
    %c0_185 = arith.constant 0 : index
    %c1920 = arith.constant 1920 : index
    %106 = vector.load %arg11[%c0_183, %c0_184, %c0_185, %c1920] : memref<2x8x8x2048xbf16, #tpu.memory_space<vmem>>, vector<2x8x8x128xbf16>
    tpu.vector_store %arg11[%c0_183, %c0_184, %c0_185, %c1920], %105 {strides = array<i32>} : memref<2x8x8x2048xbf16, #tpu.memory_space<vmem>>, vector<2x8x8x128xbf16>,
    %c0_186 = arith.constant 0 : index
    %c0_187 = arith.constant 0 : index
    %c0_188 = arith.constant 0 : index
    %c0_189 = arith.constant 0 : index
    %107 = vector.load %arg11[%c0_186, %c0_187, %c0_188, %c0_189] : memref<2x8x8x2048xbf16, #tpu.memory_space<vmem>>, vector<2x8x8x2048xbf16>
    %108 = vector.shape_cast %107 : vector<2x8x8x2048xbf16> to vector<128x2048xbf16>
    %c0_190 = arith.constant 0 : index
    %c0_191 = arith.constant 0 : index
    %109 = vector.load %arg2[%c0_190, %c0_191] : memref<2048x128xbf16, #tpu.memory_space<vmem>>, vector<2048x128xbf16>
    %cst_192 = arith.constant dense<0.000000e+00> : vector<128x128xf32>
    %110 = tpu.matmul %108, %109, %cst_192 {dimension_numbers = #tpu.dot_dimension_numbers<[1], [0], [0], [1], [0, 0, 1, 1], [], []>} : vector<128x2048xbf16>, vector<2048x128xbf16>, vector<128x128xf32> -> vector<128x128xf32>
    %cst_193 = arith.constant dense<0.000000e+00> : vector<128xf32>
    %111 = vector.multi_reduction <add>, %110, %cst_193 [0] : vector<128x128xf32> to vector<128xf32>
    %112 = vector.shape_cast %111 : vector<128xf32> to vector<1x128xf32>
    %cst_194 = arith.constant 1.280000e+02 : f32
    %113 = vector.broadcast %cst_194 : f32 to vector<1x128xf32>
    %114 = arith.divf %112, %113 : vector<1x128xf32>
    %115 = vector.broadcast %114 : vector<1x128xf32> to vector<128x128xf32>
    %116 = arith.subf %110, %115 : vector<128x128xf32>
    %117 = arith.mulf %116, %116 : vector<128x128xf32>
    %cst_195 = arith.constant dense<0.000000e+00> : vector<128xf32>
    %118 = vector.multi_reduction <add>, %117, %cst_195 [0] : vector<128x128xf32> to vector<128xf32>
    %119 = vector.shape_cast %118 : vector<128xf32> to vector<1x128xf32>
    %cst_196 = arith.constant 1.280000e+02 : f32
    %120 = vector.broadcast %cst_196 : f32 to vector<1x128xf32>
    %121 = arith.divf %119, %120 : vector<1x128xf32>
    %cst_197 = arith.constant 9.99999974E-6 : f32
    %122 = vector.broadcast %cst_197 : f32 to vector<1x128xf32>
    %123 = arith.addf %121, %122 : vector<1x128xf32>
    %124 = math.rsqrt %123 : vector<1x128xf32>
    %125 = vector.broadcast %124 : vector<1x128xf32> to vector<128x128xf32>
    %126 = arith.mulf %116, %125 : vector<128x128xf32>
    %c0_198 = arith.constant 0 : index
    %c0_199 = arith.constant 0 : index
    %127 = vector.load %arg4[%c0_198, %c0_199] : memref<1x128xf32, #tpu.memory_space<vmem>>, vector<1x128xf32>
    %128 = vector.broadcast %127 : vector<1x128xf32> to vector<128x128xf32>
    %129 = arith.mulf %126, %128 : vector<128x128xf32>
    %c0_200 = arith.constant 0 : index
    %c0_201 = arith.constant 0 : index
    %130 = vector.load %arg5[%c0_200, %c0_201] : memref<1x128xf32, #tpu.memory_space<vmem>>, vector<1x128xf32>
    %131 = vector.broadcast %130 : vector<1x128xf32> to vector<128x128xf32>
    %132 = arith.addf %129, %131 : vector<128x128xf32>
    %cst_202 = arith.constant 0.000000e+00 : f32
    %133 = vector.broadcast %cst_202 : f32 to vector<128x128xf32>
    %134 = arith.cmpf ogt, %132, %133 : vector<128x128xf32>
    %cst_203 = arith.constant 2.000000e-01 : f32
    %135 = vector.broadcast %cst_203 : f32 to vector<128x128xf32>
    %136 = arith.mulf %135, %132 : vector<128x128xf32>
    %137 = arith.select %134, %132, %136 : vector<128x128xi1>, vector<128x128xf32>
    %cst_204 = arith.constant 0.000000e+00 : bf16
    %138 = vector.broadcast %cst_204 : bf16 to vector<2x2x1x5x128xbf16>
    %c0_205 = arith.constant 0 : index
    %c0_206 = arith.constant 0 : index
    %c0_207 = arith.constant 0 : index
    %c0_208 = arith.constant 0 : index
    %c0_209 = arith.constant 0 : index
    %139 = vector.load %arg12[%c0_205, %c0_206, %c0_207, %c0_208, %c0_209] : memref<4x2x5x5x128xbf16, #tpu.memory_space<vmem>>, vector<2x2x1x5x128xbf16>
    tpu.vector_store %arg12[%c0_205, %c0_206, %c0_207, %c0_208, %c0_209], %138 {strides = array<i32>} : memref<4x2x5x5x128xbf16, #tpu.memory_space<vmem>>, vector<2x2x1x5x128xbf16>,
    %cst_210 = arith.constant 0.000000e+00 : bf16
    %140 = vector.broadcast %cst_210 : bf16 to vector<2x2x1x5x128xbf16>
    %c2_211 = arith.constant 2 : index
    %c0_212 = arith.constant 0 : index
    %c4 = arith.constant 4 : index
    %c0_213 = arith.constant 0 : index
    %c0_214 = arith.constant 0 : index
    %141 = vector.load %arg12[%c2_211, %c0_212, %c4, %c0_213, %c0_214] : memref<4x2x5x5x128xbf16, #tpu.memory_space<vmem>>, vector<2x2x1x5x128xbf16>
    tpu.vector_store %arg12[%c2_211, %c0_212, %c4, %c0_213, %c0_214], %140 {strides = array<i32>} : memref<4x2x5x5x128xbf16, #tpu.memory_space<vmem>>, vector<2x2x1x5x128xbf16>,
    %cst_215 = arith.constant 0.000000e+00 : bf16
    %142 = vector.broadcast %cst_215 : bf16 to vector<2x5x1x128xbf16>
    %c0_216 = arith.constant 0 : index
    %c0_217 = arith.constant 0 : index
    %c0_218 = arith.constant 0 : index
    %c0_219 = arith.constant 0 : index
    %c0_220 = arith.constant 0 : index
    %143 = vector.load %arg12[%c0_216, %c0_217, %c0_218, %c0_219, %c0_220] : memref<4x2x5x5x128xbf16, #tpu.memory_space<vmem>>, vector<1x2x5x1x128xbf16>
    %144 = vector.shape_cast %143 : vector<1x2x5x1x128xbf16> to vector<2x5x1x128xbf16>
    %145 = vector.shape_cast %142 : vector<2x5x1x128xbf16> to vector<1x2x5x1x128xbf16>
    tpu.vector_store %arg12[%c0_216, %c0_217, %c0_218, %c0_219, %c0_220], %145 {strides = array<i32>} : memref<4x2x5x5x128xbf16, #tpu.memory_space<vmem>>, vector<1x2x5x1x128xbf16>,
    %cst_221 = arith.constant 0.000000e+00 : bf16
    %146 = vector.broadcast %cst_221 : bf16 to vector<2x5x1x128xbf16>
    %c2_222 = arith.constant 2 : index
    %c0_223 = arith.constant 0 : index
    %c0_224 = arith.constant 0 : index
    %c0_225 = arith.constant 0 : index
    %c0_226 = arith.constant 0 : index
    %147 = vector.load %arg12[%c2_222, %c0_223, %c0_224, %c0_225, %c0_226] : memref<4x2x5x5x128xbf16, #tpu.memory_space<vmem>>, vector<1x2x5x1x128xbf16>
    %148 = vector.shape_cast %147 : vector<1x2x5x1x128xbf16> to vector<2x5x1x128xbf16>
    %149 = vector.shape_cast %146 : vector<2x5x1x128xbf16> to vector<1x2x5x1x128xbf16>
    tpu.vector_store %arg12[%c2_222, %c0_223, %c0_224, %c0_225, %c0_226], %149 {strides = array<i32>} : memref<4x2x5x5x128xbf16, #tpu.memory_space<vmem>>, vector<1x2x5x1x128xbf16>,
    %cst_227 = arith.constant 0.000000e+00 : bf16
    %150 = vector.broadcast %cst_227 : bf16 to vector<2x5x1x128xbf16>
    %c1_228 = arith.constant 1 : index
    %c0_229 = arith.constant 0 : index
    %c0_230 = arith.constant 0 : index
    %c4_231 = arith.constant 4 : index
    %c0_232 = arith.constant 0 : index
    %151 = vector.load %arg12[%c1_228, %c0_229, %c0_230, %c4_231, %c0_232] : memref<4x2x5x5x128xbf16, #tpu.memory_space<vmem>>, vector<1x2x5x1x128xbf16>
    %152 = vector.shape_cast %151 : vector<1x2x5x1x128xbf16> to vector<2x5x1x128xbf16>
    %153 = vector.shape_cast %150 : vector<2x5x1x128xbf16> to vector<1x2x5x1x128xbf16>
    tpu.vector_store %arg12[%c1_228, %c0_229, %c0_230, %c4_231, %c0_232], %153 {strides = array<i32>} : memref<4x2x5x5x128xbf16, #tpu.memory_space<vmem>>, vector<1x2x5x1x128xbf16>,
    %cst_233 = arith.constant 0.000000e+00 : bf16
    %154 = vector.broadcast %cst_233 : bf16 to vector<2x5x1x128xbf16>
    %c3_234 = arith.constant 3 : index
    %c0_235 = arith.constant 0 : index
    %c0_236 = arith.constant 0 : index
    %c4_237 = arith.constant 4 : index
    %c0_238 = arith.constant 0 : index
    %155 = vector.load %arg12[%c3_234, %c0_235, %c0_236, %c4_237, %c0_238] : memref<4x2x5x5x128xbf16, #tpu.memory_space<vmem>>, vector<1x2x5x1x128xbf16>
    %156 = vector.shape_cast %155 : vector<1x2x5x1x128xbf16> to vector<2x5x1x128xbf16>
    %157 = vector.shape_cast %154 : vector<2x5x1x128xbf16> to vector<1x2x5x1x128xbf16>
    tpu.vector_store %arg12[%c3_234, %c0_235, %c0_236, %c4_237, %c0_238], %157 {strides = array<i32>} : memref<4x2x5x5x128xbf16, #tpu.memory_space<vmem>>, vector<1x2x5x1x128xbf16>,
    %158 = vector.shape_cast %137 : vector<128x128xf32> to vector<16x8x128xf32>
    %159 = tpu.transpose %158, [1, 0, 2] : vector<16x8x128xf32> -> vector<8x16x128xf32>
    %160 = vector.shape_cast %159 : vector<8x16x128xf32> to vector<4x2x16x128xf32>
    %161 = vector.extract_strided_slice %160 {offsets = [0, 0, 0, 0], sizes = [4, 1, 16, 128], strides = [1, 1, 1, 1]} : vector<4x2x16x128xf32> to vector<4x1x16x128xf32>
    %162 = vector.shape_cast %161 : vector<4x1x16x128xf32> to vector<4x16x128xf32>
    %163 = tpu.transpose %162, [1, 0, 2] : vector<4x16x128xf32> -> vector<16x4x128xf32>
    %164 = vector.shape_cast %163 : vector<16x4x128xf32> to vector<2x4x2x4x128xf32>
    %165 = vector.extract_strided_slice %164 {offsets = [0, 0, 0, 0, 0], sizes = [2, 4, 1, 4, 128], strides = [1, 1, 1, 1, 1]} : vector<2x4x2x4x128xf32> to vector<2x4x1x4x128xf32>
    %166 = vector.shape_cast %165 : vector<2x4x1x4x128xf32> to vector<2x4x4x128xf32>
    %167 = arith.truncf %166 : vector<2x4x4x128xf32> to vector<2x4x4x128xbf16>
    %c3_239 = arith.constant 3 : index
    %c0_240 = arith.constant 0 : index
    %c0_241 = arith.constant 0 : index
    %c0_242 = arith.constant 0 : index
    %c0_243 = arith.constant 0 : index
    %168 = vector.load %arg12[%c3_239, %c0_240, %c0_241, %c0_242, %c0_243] : memref<4x2x5x5x128xbf16, #tpu.memory_space<vmem>>, vector<1x2x4x4x128xbf16>
    %169 = vector.shape_cast %168 : vector<1x2x4x4x128xbf16> to vector<2x4x4x128xbf16>
    %170 = vector.shape_cast %167 : vector<2x4x4x128xbf16> to vector<1x2x4x4x128xbf16>
    tpu.vector_store %arg12[%c3_239, %c0_240, %c0_241, %c0_242, %c0_243], %170 {strides = array<i32>} : memref<4x2x5x5x128xbf16, #tpu.memory_space<vmem>>, vector<1x2x4x4x128xbf16>,
    %171 = vector.extract_strided_slice %164 {offsets = [0, 0, 1, 0, 0], sizes = [2, 4, 1, 4, 128], strides = [1, 1, 1, 1, 1]} : vector<2x4x2x4x128xf32> to vector<2x4x1x4x128xf32>
    %172 = vector.shape_cast %171 : vector<2x4x1x4x128xf32> to vector<2x4x4x128xf32>
    %173 = arith.truncf %172 : vector<2x4x4x128xf32> to vector<2x4x4x128xbf16>
    %c1_244 = arith.constant 1 : index
    %c0_245 = arith.constant 0 : index
    %c1_246 = arith.constant 1 : index
    %c0_247 = arith.constant 0 : index
    %c0_248 = arith.constant 0 : index
    %174 = vector.load %arg12[%c1_244, %c0_245, %c1_246, %c0_247, %c0_248] : memref<4x2x5x5x128xbf16, #tpu.memory_space<vmem>>, vector<1x2x4x4x128xbf16>
    %175 = vector.shape_cast %174 : vector<1x2x4x4x128xbf16> to vector<2x4x4x128xbf16>
    %176 = vector.shape_cast %173 : vector<2x4x4x128xbf16> to vector<1x2x4x4x128xbf16>
    tpu.vector_store %arg12[%c1_244, %c0_245, %c1_246, %c0_247, %c0_248], %176 {strides = array<i32>} : memref<4x2x5x5x128xbf16, #tpu.memory_space<vmem>>, vector<1x2x4x4x128xbf16>,
    %177 = vector.extract_strided_slice %160 {offsets = [0, 1, 0, 0], sizes = [4, 1, 16, 128], strides = [1, 1, 1, 1]} : vector<4x2x16x128xf32> to vector<4x1x16x128xf32>
    %178 = vector.shape_cast %177 : vector<4x1x16x128xf32> to vector<4x16x128xf32>
    %179 = tpu.transpose %178, [1, 0, 2] : vector<4x16x128xf32> -> vector<16x4x128xf32>
    %180 = vector.shape_cast %179 : vector<16x4x128xf32> to vector<2x4x2x4x128xf32>
    %181 = vector.extract_strided_slice %180 {offsets = [0, 0, 0, 0, 0], sizes = [2, 4, 1, 4, 128], strides = [1, 1, 1, 1, 1]} : vector<2x4x2x4x128xf32> to vector<2x4x1x4x128xf32>
    %182 = vector.shape_cast %181 : vector<2x4x1x4x128xf32> to vector<2x4x4x128xf32>
    %183 = arith.truncf %182 : vector<2x4x4x128xf32> to vector<2x4x4x128xbf16>
    %c2_249 = arith.constant 2 : index
    %c0_250 = arith.constant 0 : index
    %c0_251 = arith.constant 0 : index
    %c1_252 = arith.constant 1 : index
    %c0_253 = arith.constant 0 : index
    %184 = vector.load %arg12[%c2_249, %c0_250, %c0_251, %c1_252, %c0_253] : memref<4x2x5x5x128xbf16, #tpu.memory_space<vmem>>, vector<1x2x4x4x128xbf16>
    %185 = vector.shape_cast %184 : vector<1x2x4x4x128xbf16> to vector<2x4x4x128xbf16>
    %186 = vector.shape_cast %183 : vector<2x4x4x128xbf16> to vector<1x2x4x4x128xbf16>
    tpu.vector_store %arg12[%c2_249, %c0_250, %c0_251, %c1_252, %c0_253], %186 {strides = array<i32>} : memref<4x2x5x5x128xbf16, #tpu.memory_space<vmem>>, vector<1x2x4x4x128xbf16>,
    %187 = vector.extract_strided_slice %180 {offsets = [0, 0, 1, 0, 0], sizes = [2, 4, 1, 4, 128], strides = [1, 1, 1, 1, 1]} : vector<2x4x2x4x128xf32> to vector<2x4x1x4x128xf32>
    %188 = vector.shape_cast %187 : vector<2x4x1x4x128xf32> to vector<2x4x4x128xf32>
    %189 = arith.truncf %188 : vector<2x4x4x128xf32> to vector<2x4x4x128xbf16>
    %c0_254 = arith.constant 0 : index
    %c0_255 = arith.constant 0 : index
    %c1_256 = arith.constant 1 : index
    %c1_257 = arith.constant 1 : index
    %c0_258 = arith.constant 0 : index
    %190 = vector.load %arg12[%c0_254, %c0_255, %c1_256, %c1_257, %c0_258] : memref<4x2x5x5x128xbf16, #tpu.memory_space<vmem>>, vector<1x2x4x4x128xbf16>
    %191 = vector.shape_cast %190 : vector<1x2x4x4x128xbf16> to vector<2x4x4x128xbf16>
    %192 = vector.shape_cast %189 : vector<2x4x4x128xbf16> to vector<1x2x4x4x128xbf16>
    tpu.vector_store %arg12[%c0_254, %c0_255, %c1_256, %c1_257, %c0_258], %192 {strides = array<i32>} : memref<4x2x5x5x128xbf16, #tpu.memory_space<vmem>>, vector<1x2x4x4x128xbf16>,
    %c0_259 = arith.constant 0 : index
    %c0_260 = arith.constant 0 : index
    %c0_261 = arith.constant 0 : index
    %c0_262 = arith.constant 0 : index
    %c0_263 = arith.constant 0 : index
    %193 = vector.load %arg12[%c0_259, %c0_260, %c0_261, %c0_262, %c0_263] : memref<4x2x5x5x128xbf16, #tpu.memory_space<vmem>>, vector<1x2x4x4x128xbf16>
    %194 = vector.shape_cast %193 : vector<1x2x4x4x128xbf16> to vector<2x4x4x128xbf16>
    %c0_264 = arith.constant 0 : index
    %c0_265 = arith.constant 0 : index
    %c0_266 = arith.constant 0 : index
    %c0_267 = arith.constant 0 : index
    %195 = vector.load %arg13[%c0_264, %c0_265, %c0_266, %c0_267] : memref<2x4x4x2048xbf16, #tpu.memory_space<vmem>>, vector<2x4x4x128xbf16>
    tpu.vector_store %arg13[%c0_264, %c0_265, %c0_266, %c0_267], %194 {strides = array<i32>} : memref<2x4x4x2048xbf16, #tpu.memory_space<vmem>>, vector<2x4x4x128xbf16>,
    %c1_268 = arith.constant 1 : index
    %c0_269 = arith.constant 0 : index
    %c0_270 = arith.constant 0 : index
    %c0_271 = arith.constant 0 : index
    %c0_272 = arith.constant 0 : index
    %196 = vector.load %arg12[%c1_268, %c0_269, %c0_270, %c0_271, %c0_272] : memref<4x2x5x5x128xbf16, #tpu.memory_space<vmem>>, vector<1x2x4x4x128xbf16>
    %197 = vector.shape_cast %196 : vector<1x2x4x4x128xbf16> to vector<2x4x4x128xbf16>
    %c0_273 = arith.constant 0 : index
    %c0_274 = arith.constant 0 : index
    %c0_275 = arith.constant 0 : index
    %c128_276 = arith.constant 128 : index
    %198 = vector.load %arg13[%c0_273, %c0_274, %c0_275, %c128_276] : memref<2x4x4x2048xbf16, #tpu.memory_space<vmem>>, vector<2x4x4x128xbf16>
    tpu.vector_store %arg13[%c0_273, %c0_274, %c0_275, %c128_276], %197 {strides = array<i32>} : memref<2x4x4x2048xbf16, #tpu.memory_space<vmem>>, vector<2x4x4x128xbf16>,
    %c0_277 = arith.constant 0 : index
    %c0_278 = arith.constant 0 : index
    %c0_279 = arith.constant 0 : index
    %c1_280 = arith.constant 1 : index
    %c0_281 = arith.constant 0 : index
    %199 = vector.load %arg12[%c0_277, %c0_278, %c0_279, %c1_280, %c0_281] : memref<4x2x5x5x128xbf16, #tpu.memory_space<vmem>>, vector<1x2x4x4x128xbf16>
    %200 = vector.shape_cast %199 : vector<1x2x4x4x128xbf16> to vector<2x4x4x128xbf16>
    %c0_282 = arith.constant 0 : index
    %c0_283 = arith.constant 0 : index
    %c0_284 = arith.constant 0 : index
    %c256_285 = arith.constant 256 : index
    %201 = vector.load %arg13[%c0_282, %c0_283, %c0_284, %c256_285] : memref<2x4x4x2048xbf16, #tpu.memory_space<vmem>>, vector<2x4x4x128xbf16>
    tpu.vector_store %arg13[%c0_282, %c0_283, %c0_284, %c256_285], %200 {strides = array<i32>} : memref<2x4x4x2048xbf16, #tpu.memory_space<vmem>>, vector<2x4x4x128xbf16>,
    %c1_286 = arith.constant 1 : index
    %c0_287 = arith.constant 0 : index
    %c0_288 = arith.constant 0 : index
    %c1_289 = arith.constant 1 : index
    %c0_290 = arith.constant 0 : index
    %202 = vector.load %arg12[%c1_286, %c0_287, %c0_288, %c1_289, %c0_290] : memref<4x2x5x5x128xbf16, #tpu.memory_space<vmem>>, vector<1x2x4x4x128xbf16>
    %203 = vector.shape_cast %202 : vector<1x2x4x4x128xbf16> to vector<2x4x4x128xbf16>
    %c0_291 = arith.constant 0 : index
    %c0_292 = arith.constant 0 : index
    %c0_293 = arith.constant 0 : index
    %c384_294 = arith.constant 384 : index
    %204 = vector.load %arg13[%c0_291, %c0_292, %c0_293, %c384_294] : memref<2x4x4x2048xbf16, #tpu.memory_space<vmem>>, vector<2x4x4x128xbf16>
    tpu.vector_store %arg13[%c0_291, %c0_292, %c0_293, %c384_294], %203 {strides = array<i32>} : memref<2x4x4x2048xbf16, #tpu.memory_space<vmem>>, vector<2x4x4x128xbf16>,
    %c2_295 = arith.constant 2 : index
    %c0_296 = arith.constant 0 : index
    %c0_297 = arith.constant 0 : index
    %c0_298 = arith.constant 0 : index
    %c0_299 = arith.constant 0 : index
    %205 = vector.load %arg12[%c2_295, %c0_296, %c0_297, %c0_298, %c0_299] : memref<4x2x5x5x128xbf16, #tpu.memory_space<vmem>>, vector<1x2x4x4x128xbf16>
    %206 = vector.shape_cast %205 : vector<1x2x4x4x128xbf16> to vector<2x4x4x128xbf16>
    %c0_300 = arith.constant 0 : index
    %c0_301 = arith.constant 0 : index
    %c0_302 = arith.constant 0 : index
    %c512_303 = arith.constant 512 : index
    %207 = vector.load %arg13[%c0_300, %c0_301, %c0_302, %c512_303] : memref<2x4x4x2048xbf16, #tpu.memory_space<vmem>>, vector<2x4x4x128xbf16>
    tpu.vector_store %arg13[%c0_300, %c0_301, %c0_302, %c512_303], %206 {strides = array<i32>} : memref<2x4x4x2048xbf16, #tpu.memory_space<vmem>>, vector<2x4x4x128xbf16>,
    %c3_304 = arith.constant 3 : index
    %c0_305 = arith.constant 0 : index
    %c0_306 = arith.constant 0 : index
    %c0_307 = arith.constant 0 : index
    %c0_308 = arith.constant 0 : index
    %208 = vector.load %arg12[%c3_304, %c0_305, %c0_306, %c0_307, %c0_308] : memref<4x2x5x5x128xbf16, #tpu.memory_space<vmem>>, vector<1x2x4x4x128xbf16>
    %209 = vector.shape_cast %208 : vector<1x2x4x4x128xbf16> to vector<2x4x4x128xbf16>
    %c0_309 = arith.constant 0 : index
    %c0_310 = arith.constant 0 : index
    %c0_311 = arith.constant 0 : index
    %c640_312 = arith.constant 640 : index
    %210 = vector.load %arg13[%c0_309, %c0_310, %c0_311, %c640_312] : memref<2x4x4x2048xbf16, #tpu.memory_space<vmem>>, vector<2x4x4x128xbf16>
    tpu.vector_store %arg13[%c0_309, %c0_310, %c0_311, %c640_312], %209 {strides = array<i32>} : memref<2x4x4x2048xbf16, #tpu.memory_space<vmem>>, vector<2x4x4x128xbf16>,
    %c2_313 = arith.constant 2 : index
    %c0_314 = arith.constant 0 : index
    %c0_315 = arith.constant 0 : index
    %c1_316 = arith.constant 1 : index
    %c0_317 = arith.constant 0 : index
    %211 = vector.load %arg12[%c2_313, %c0_314, %c0_315, %c1_316, %c0_317] : memref<4x2x5x5x128xbf16, #tpu.memory_space<vmem>>, vector<1x2x4x4x128xbf16>
    %212 = vector.shape_cast %211 : vector<1x2x4x4x128xbf16> to vector<2x4x4x128xbf16>
    %c0_318 = arith.constant 0 : index
    %c0_319 = arith.constant 0 : index
    %c0_320 = arith.constant 0 : index
    %c768_321 = arith.constant 768 : index
    %213 = vector.load %arg13[%c0_318, %c0_319, %c0_320, %c768_321] : memref<2x4x4x2048xbf16, #tpu.memory_space<vmem>>, vector<2x4x4x128xbf16>
    tpu.vector_store %arg13[%c0_318, %c0_319, %c0_320, %c768_321], %212 {strides = array<i32>} : memref<2x4x4x2048xbf16, #tpu.memory_space<vmem>>, vector<2x4x4x128xbf16>,
    %c3_322 = arith.constant 3 : index
    %c0_323 = arith.constant 0 : index
    %c0_324 = arith.constant 0 : index
    %c1_325 = arith.constant 1 : index
    %c0_326 = arith.constant 0 : index
    %214 = vector.load %arg12[%c3_322, %c0_323, %c0_324, %c1_325, %c0_326] : memref<4x2x5x5x128xbf16, #tpu.memory_space<vmem>>, vector<1x2x4x4x128xbf16>
    %215 = vector.shape_cast %214 : vector<1x2x4x4x128xbf16> to vector<2x4x4x128xbf16>
    %c0_327 = arith.constant 0 : index
    %c0_328 = arith.constant 0 : index
    %c0_329 = arith.constant 0 : index
    %c896_330 = arith.constant 896 : index
    %216 = vector.load %arg13[%c0_327, %c0_328, %c0_329, %c896_330] : memref<2x4x4x2048xbf16, #tpu.memory_space<vmem>>, vector<2x4x4x128xbf16>
    tpu.vector_store %arg13[%c0_327, %c0_328, %c0_329, %c896_330], %215 {strides = array<i32>} : memref<2x4x4x2048xbf16, #tpu.memory_space<vmem>>, vector<2x4x4x128xbf16>,
    %c0_331 = arith.constant 0 : index
    %c0_332 = arith.constant 0 : index
    %c1_333 = arith.constant 1 : index
    %c0_334 = arith.constant 0 : index
    %c0_335 = arith.constant 0 : index
    %217 = vector.load %arg12[%c0_331, %c0_332, %c1_333, %c0_334, %c0_335] : memref<4x2x5x5x128xbf16, #tpu.memory_space<vmem>>, vector<1x2x4x4x128xbf16>
    %218 = vector.shape_cast %217 : vector<1x2x4x4x128xbf16> to vector<2x4x4x128xbf16>
    %c0_336 = arith.constant 0 : index
    %c0_337 = arith.constant 0 : index
    %c0_338 = arith.constant 0 : index
    %c1024_339 = arith.constant 1024 : index
    %219 = vector.load %arg13[%c0_336, %c0_337, %c0_338, %c1024_339] : memref<2x4x4x2048xbf16, #tpu.memory_space<vmem>>, vector<2x4x4x128xbf16>
    tpu.vector_store %arg13[%c0_336, %c0_337, %c0_338, %c1024_339], %218 {strides = array<i32>} : memref<2x4x4x2048xbf16, #tpu.memory_space<vmem>>, vector<2x4x4x128xbf16>,
    %c1_340 = arith.constant 1 : index
    %c0_341 = arith.constant 0 : index
    %c1_342 = arith.constant 1 : index
    %c0_343 = arith.constant 0 : index
    %c0_344 = arith.constant 0 : index
    %220 = vector.load %arg12[%c1_340, %c0_341, %c1_342, %c0_343, %c0_344] : memref<4x2x5x5x128xbf16, #tpu.memory_space<vmem>>, vector<1x2x4x4x128xbf16>
    %221 = vector.shape_cast %220 : vector<1x2x4x4x128xbf16> to vector<2x4x4x128xbf16>
    %c0_345 = arith.constant 0 : index
    %c0_346 = arith.constant 0 : index
    %c0_347 = arith.constant 0 : index
    %c1152_348 = arith.constant 1152 : index
    %222 = vector.load %arg13[%c0_345, %c0_346, %c0_347, %c1152_348] : memref<2x4x4x2048xbf16, #tpu.memory_space<vmem>>, vector<2x4x4x128xbf16>
    tpu.vector_store %arg13[%c0_345, %c0_346, %c0_347, %c1152_348], %221 {strides = array<i32>} : memref<2x4x4x2048xbf16, #tpu.memory_space<vmem>>, vector<2x4x4x128xbf16>,
    %c0_349 = arith.constant 0 : index
    %c0_350 = arith.constant 0 : index
    %c1_351 = arith.constant 1 : index
    %c1_352 = arith.constant 1 : index
    %c0_353 = arith.constant 0 : index
    %223 = vector.load %arg12[%c0_349, %c0_350, %c1_351, %c1_352, %c0_353] : memref<4x2x5x5x128xbf16, #tpu.memory_space<vmem>>, vector<1x2x4x4x128xbf16>
    %224 = vector.shape_cast %223 : vector<1x2x4x4x128xbf16> to vector<2x4x4x128xbf16>
    %c0_354 = arith.constant 0 : index
    %c0_355 = arith.constant 0 : index
    %c0_356 = arith.constant 0 : index
    %c1280_357 = arith.constant 1280 : index
    %225 = vector.load %arg13[%c0_354, %c0_355, %c0_356, %c1280_357] : memref<2x4x4x2048xbf16, #tpu.memory_space<vmem>>, vector<2x4x4x128xbf16>
    tpu.vector_store %arg13[%c0_354, %c0_355, %c0_356, %c1280_357], %224 {strides = array<i32>} : memref<2x4x4x2048xbf16, #tpu.memory_space<vmem>>, vector<2x4x4x128xbf16>,
    %c1_358 = arith.constant 1 : index
    %c0_359 = arith.constant 0 : index
    %c1_360 = arith.constant 1 : index
    %c1_361 = arith.constant 1 : index
    %c0_362 = arith.constant 0 : index
    %226 = vector.load %arg12[%c1_358, %c0_359, %c1_360, %c1_361, %c0_362] : memref<4x2x5x5x128xbf16, #tpu.memory_space<vmem>>, vector<1x2x4x4x128xbf16>
    %227 = vector.shape_cast %226 : vector<1x2x4x4x128xbf16> to vector<2x4x4x128xbf16>
    %c0_363 = arith.constant 0 : index
    %c0_364 = arith.constant 0 : index
    %c0_365 = arith.constant 0 : index
    %c1408_366 = arith.constant 1408 : index
    %228 = vector.load %arg13[%c0_363, %c0_364, %c0_365, %c1408_366] : memref<2x4x4x2048xbf16, #tpu.memory_space<vmem>>, vector<2x4x4x128xbf16>
    tpu.vector_store %arg13[%c0_363, %c0_364, %c0_365, %c1408_366], %227 {strides = array<i32>} : memref<2x4x4x2048xbf16, #tpu.memory_space<vmem>>, vector<2x4x4x128xbf16>,
    %c2_367 = arith.constant 2 : index
    %c0_368 = arith.constant 0 : index
    %c1_369 = arith.constant 1 : index
    %c0_370 = arith.constant 0 : index
    %c0_371 = arith.constant 0 : index
    %229 = vector.load %arg12[%c2_367, %c0_368, %c1_369, %c0_370, %c0_371] : memref<4x2x5x5x128xbf16, #tpu.memory_space<vmem>>, vector<1x2x4x4x128xbf16>
    %230 = vector.shape_cast %229 : vector<1x2x4x4x128xbf16> to vector<2x4x4x128xbf16>
    %c0_372 = arith.constant 0 : index
    %c0_373 = arith.constant 0 : index
    %c0_374 = arith.constant 0 : index
    %c1536_375 = arith.constant 1536 : index
    %231 = vector.load %arg13[%c0_372, %c0_373, %c0_374, %c1536_375] : memref<2x4x4x2048xbf16, #tpu.memory_space<vmem>>, vector<2x4x4x128xbf16>
    tpu.vector_store %arg13[%c0_372, %c0_373, %c0_374, %c1536_375], %230 {strides = array<i32>} : memref<2x4x4x2048xbf16, #tpu.memory_space<vmem>>, vector<2x4x4x128xbf16>,
    %c3_376 = arith.constant 3 : index
    %c0_377 = arith.constant 0 : index
    %c1_378 = arith.constant 1 : index
    %c0_379 = arith.constant 0 : index
    %c0_380 = arith.constant 0 : index
    %232 = vector.load %arg12[%c3_376, %c0_377, %c1_378, %c0_379, %c0_380] : memref<4x2x5x5x128xbf16, #tpu.memory_space<vmem>>, vector<1x2x4x4x128xbf16>
    %233 = vector.shape_cast %232 : vector<1x2x4x4x128xbf16> to vector<2x4x4x128xbf16>
    %c0_381 = arith.constant 0 : index
    %c0_382 = arith.constant 0 : index
    %c0_383 = arith.constant 0 : index
    %c1664_384 = arith.constant 1664 : index
    %234 = vector.load %arg13[%c0_381, %c0_382, %c0_383, %c1664_384] : memref<2x4x4x2048xbf16, #tpu.memory_space<vmem>>, vector<2x4x4x128xbf16>
    tpu.vector_store %arg13[%c0_381, %c0_382, %c0_383, %c1664_384], %233 {strides = array<i32>} : memref<2x4x4x2048xbf16, #tpu.memory_space<vmem>>, vector<2x4x4x128xbf16>,
    %c2_385 = arith.constant 2 : index
    %c0_386 = arith.constant 0 : index
    %c1_387 = arith.constant 1 : index
    %c1_388 = arith.constant 1 : index
    %c0_389 = arith.constant 0 : index
    %235 = vector.load %arg12[%c2_385, %c0_386, %c1_387, %c1_388, %c0_389] : memref<4x2x5x5x128xbf16, #tpu.memory_space<vmem>>, vector<1x2x4x4x128xbf16>
    %236 = vector.shape_cast %235 : vector<1x2x4x4x128xbf16> to vector<2x4x4x128xbf16>
    %c0_390 = arith.constant 0 : index
    %c0_391 = arith.constant 0 : index
    %c0_392 = arith.constant 0 : index
    %c1792_393 = arith.constant 1792 : index
    %237 = vector.load %arg13[%c0_390, %c0_391, %c0_392, %c1792_393] : memref<2x4x4x2048xbf16, #tpu.memory_space<vmem>>, vector<2x4x4x128xbf16>
    tpu.vector_store %arg13[%c0_390, %c0_391, %c0_392, %c1792_393], %236 {strides = array<i32>} : memref<2x4x4x2048xbf16, #tpu.memory_space<vmem>>, vector<2x4x4x128xbf16>,
    %c3_394 = arith.constant 3 : index
    %c0_395 = arith.constant 0 : index
    %c1_396 = arith.constant 1 : index
    %c1_397 = arith.constant 1 : index
    %c0_398 = arith.constant 0 : index
    %238 = vector.load %arg12[%c3_394, %c0_395, %c1_396, %c1_397, %c0_398] : memref<4x2x5x5x128xbf16, #tpu.memory_space<vmem>>, vector<1x2x4x4x128xbf16>
    %239 = vector.shape_cast %238 : vector<1x2x4x4x128xbf16> to vector<2x4x4x128xbf16>
    %c0_399 = arith.constant 0 : index
    %c0_400 = arith.constant 0 : index
    %c0_401 = arith.constant 0 : index
    %c1920_402 = arith.constant 1920 : index
    %240 = vector.load %arg13[%c0_399, %c0_400, %c0_401, %c1920_402] : memref<2x4x4x2048xbf16, #tpu.memory_space<vmem>>, vector<2x4x4x128xbf16>
    tpu.vector_store %arg13[%c0_399, %c0_400, %c0_401, %c1920_402], %239 {strides = array<i32>} : memref<2x4x4x2048xbf16, #tpu.memory_space<vmem>>, vector<2x4x4x128xbf16>,
    %c0_403 = arith.constant 0 : index
    %c0_404 = arith.constant 0 : index
    %c0_405 = arith.constant 0 : index
    %c0_406 = arith.constant 0 : index
    %241 = vector.load %arg13[%c0_403, %c0_404, %c0_405, %c0_406] : memref<2x4x4x2048xbf16, #tpu.memory_space<vmem>>, vector<2x4x4x2048xbf16>
    %242 = vector.shape_cast %241 : vector<2x4x4x2048xbf16> to vector<32x2048xbf16>
    %c0_407 = arith.constant 0 : index
    %c0_408 = arith.constant 0 : index
    %243 = vector.load %arg3[%c0_407, %c0_408] : memref<2048x256xbf16, #tpu.memory_space<vmem>>, vector<2048x256xbf16>
    %cst_409 = arith.constant dense<0.000000e+00> : vector<32x256xf32>
    %244 = tpu.matmul %242, %243, %cst_409 {dimension_numbers = #tpu.dot_dimension_numbers<[1], [0], [0], [1], [0, 0, 1, 1], [], []>} : vector<32x2048xbf16>, vector<2048x256xbf16>, vector<32x256xf32> -> vector<32x256xf32>
    %cst_410 = arith.constant dense<0.000000e+00> : vector<256xf32>
    %245 = vector.multi_reduction <add>, %244, %cst_410 [0] : vector<32x256xf32> to vector<256xf32>
    %246 = vector.shape_cast %245 : vector<256xf32> to vector<1x256xf32>
    %cst_411 = arith.constant 3.200000e+01 : f32
    %247 = vector.broadcast %cst_411 : f32 to vector<1x256xf32>
    %248 = arith.divf %246, %247 : vector<1x256xf32>
    %249 = vector.broadcast %248 : vector<1x256xf32> to vector<32x256xf32>
    %250 = arith.subf %244, %249 : vector<32x256xf32>
    %251 = arith.mulf %250, %250 : vector<32x256xf32>
    %cst_412 = arith.constant dense<0.000000e+00> : vector<256xf32>
    %252 = vector.multi_reduction <add>, %251, %cst_412 [0] : vector<32x256xf32> to vector<256xf32>
    %253 = vector.shape_cast %252 : vector<256xf32> to vector<1x256xf32>
    %cst_413 = arith.constant 3.200000e+01 : f32
    %254 = vector.broadcast %cst_413 : f32 to vector<1x256xf32>
    %255 = arith.divf %253, %254 : vector<1x256xf32>
    %cst_414 = arith.constant 9.99999974E-6 : f32
    %256 = vector.broadcast %cst_414 : f32 to vector<1x256xf32>
    %257 = arith.addf %255, %256 : vector<1x256xf32>
    %258 = math.rsqrt %257 : vector<1x256xf32>
    %259 = vector.broadcast %258 : vector<1x256xf32> to vector<32x256xf32>
    %260 = arith.mulf %250, %259 : vector<32x256xf32>
    %c0_415 = arith.constant 0 : index
    %c0_416 = arith.constant 0 : index
    %261 = vector.load %arg6[%c0_415, %c0_416] : memref<1x256xf32, #tpu.memory_space<vmem>>, vector<1x256xf32>
    %262 = vector.broadcast %261 : vector<1x256xf32> to vector<32x256xf32>
    %263 = arith.mulf %260, %262 : vector<32x256xf32>
    %c0_417 = arith.constant 0 : index
    %c0_418 = arith.constant 0 : index
    %264 = vector.load %arg7[%c0_417, %c0_418] : memref<1x256xf32, #tpu.memory_space<vmem>>, vector<1x256xf32>
    %265 = vector.broadcast %264 : vector<1x256xf32> to vector<32x256xf32>
    %266 = arith.addf %263, %265 : vector<32x256xf32>
    %cst_419 = arith.constant 0.000000e+00 : f32
    %267 = vector.broadcast %cst_419 : f32 to vector<32x256xf32>
    %268 = arith.cmpf ogt, %266, %267 : vector<32x256xf32>
    %cst_420 = arith.constant 2.000000e-01 : f32
    %269 = vector.broadcast %cst_420 : f32 to vector<32x256xf32>
    %270 = arith.mulf %269, %266 : vector<32x256xf32>
    %271 = arith.select %268, %266, %270 : vector<32x256xi1>, vector<32x256xf32>
    %272 = vector.shape_cast %271 : vector<32x256xf32> to vector<2x16x256xf32>
    %c0_421 = arith.constant 0 : index
    %c0_422 = arith.constant 0 : index
    %273 = vector.load %arg8[%c0_421, %c0_422] : memref<16x256xf32, #tpu.memory_space<vmem>>, vector<16x256xf32>
    %274 = vector.shape_cast %273 : vector<16x256xf32> to vector<1x16x256xf32>
    %275 = vector.broadcast %274 : vector<1x16x256xf32> to vector<2x16x256xf32>
    %276 = arith.mulf %272, %275 : vector<2x16x256xf32>
    %cst_423 = arith.constant dense<0.000000e+00> : vector<2x256xf32>
    %277 = vector.multi_reduction <add>, %276, %cst_423 [1] : vector<2x16x256xf32> to vector<2x256xf32>
    %cst_424 = arith.constant dense<0.000000e+00> : vector<2xf32>
    %278 = vector.multi_reduction <add>, %277, %cst_424 [1] : vector<2x256xf32> to vector<2xf32>
    %279 = vector.shape_cast %278 : vector<2xf32> to vector<2x1xf32>
    %280 = math.absf %279 : vector<2x1xf32>
    %cst_425 = arith.constant 0.000000e+00 : f32
    %281 = vector.broadcast %cst_425 : f32 to vector<2x1xf32>
    %282 = arith.subf %281, %280 : vector<2x1xf32>
    %283 = math.exp %282 : vector<2x1xf32>
    %cst_426 = arith.constant 0.000000e+00 : f32
    %284 = vector.broadcast %cst_426 : f32 to vector<2x1xf32>
    %285 = arith.cmpf oge, %279, %284 : vector<2x1xf32>
    %cst_427 = arith.constant 1.000000e+00 : f32
    %286 = vector.broadcast %cst_427 : f32 to vector<2x1xf32>
    %287 = arith.addf %286, %283 : vector<2x1xf32>
    %cst_428 = arith.constant 1.000000e+00 : f32
    %288 = vector.broadcast %cst_428 : f32 to vector<2x1xf32>
    %289 = arith.divf %288, %287 : vector<2x1xf32>
    %cst_429 = arith.constant 1.000000e+00 : f32
    %290 = vector.broadcast %cst_429 : f32 to vector<2x1xf32>
    %291 = arith.addf %290, %283 : vector<2x1xf32>
    %292 = arith.divf %283, %291 : vector<2x1xf32>
    %293 = arith.select %285, %289, %292 : vector<2x1xi1>, vector<2x1xf32>
    %cst_430 = arith.constant 0.000000e+00 : f32
    %294 = vector.broadcast %cst_430 : f32 to vector<2x128xf32>
    %295 = vector.broadcast %293 : vector<2x1xf32> to vector<2x128xf32>
    %296 = arith.addf %295, %294 : vector<2x128xf32>
    %c0_431 = arith.constant 0 : index
    %c0_432 = arith.constant 0 : index
    %297 = vector.load %arg9[%c0_431, %c0_432] : memref<2x128xf32, #tpu.memory_space<vmem>>, vector<2x128xf32>
    tpu.vector_store %arg9[%c0_431, %c0_432], %296 {strides = array<i32>} : memref<2x128xf32, #tpu.memory_space<vmem>>, vector<2x128xf32>,
    return
  }
}

</mosaic_0001>

<llo_original>
// kernel: discriminador_forward.1
$region0: #{discriminador_forward.1}
  #allocation0 [shape = 'u32[]', space=smem, size = 0x4, offset = 0x4, fixed_abs, tag = 'smem constant byte address 0x4 - core index']
  #allocation1 [shape = 'u32[144,128]{1,0:T(1,128)}', space=vmem, size = 0x12000, scoped, tag = 'internal scratch']
  #allocation2 [shape = 'bf16[4,2,9,9,128]{4,3,2,1,0:T(8,128)(2,1)}', space=vmem, size = 0x48000, scoped, tag = 'scratch operand']
  #allocation3 [shape = 'bf16[2,8,8,2048]{3,2,1,0:T(8,128)(2,1)}', space=vmem, size = 0x80000, scoped, tag = 'scratch operand']
  #allocation4 [shape = 'bf16[4,2,5,5,128]{4,3,2,1,0:T(8,128)(2,1)}', space=vmem, size = 0x14000, scoped, tag = 'scratch operand']
  #allocation5 [shape = 'bf16[2,4,4,2048]{3,2,1,0:T(4,128)(2,1)}', space=vmem, size = 0x20000, scoped, tag = 'scratch operand']
  %s0 = inlined_call_operand.vmem [shape: bf16[512,128], index: 0, kind: input, shape index: {}]
  %s1 = inlined_call_operand.vmem [shape: bf16[128,128], index: 1, kind: input, shape index: {}]
  %s2 = inlined_call_operand.vmem [shape: bf16[2048,128], index: 2, kind: input, shape index: {}]
  %s3 = inlined_call_operand.vmem [shape: bf16[2048,256], index: 3, kind: input, shape index: {}]
  %s4 = inlined_call_operand.vmem [shape: f32[1,128], index: 4, kind: input, shape index: {}]
  %s5 = inlined_call_operand.vmem [shape: f32[1,128], index: 5, kind: input, shape index: {}]
  %s6 = inlined_call_operand.vmem [shape: f32[1,256], index: 6, kind: input, shape index: {}]
  %s7 = inlined_call_operand.vmem [shape: f32[1,256], index: 7, kind: input, shape index: {}]
  %s8 = inlined_call_operand.vmem [shape: f32[16,256], index: 8, kind: input, shape index: {}]
  %s9 = inlined_call_operand.vmem [shape: f32[2,128], index: 9, kind: output, shape index: {}]
  %s10 = sld [smem:[#allocation0]]
  $region46: #{discriminador_forward.1} parent=0
    _
  %s12 = ssub.s32 1, %s10
  %s13 = scalar_select 0, %s12, %s10
  // Predicated region
  $region2: #{discriminador_forward.1} parent=0 // pred_check
    _
  $region3: #{discriminador_forward.1} parent=0 // pred_check_branch
    %15 = sbr.rel (0) target = $region5
  $region4: #{discriminador_forward.1} parent=0 // pred_region
    _
  $region5: #{discriminador_forward.1} parent=0 // pred_fallthru
    _
  // Predicated region
  $region6: #{discriminador_forward.1} parent=0 // pred_check
    _
  $region7: #{discriminador_forward.1} parent=0 // pred_check_branch
    %17 = sbr.rel (0) target = $region9
  $region8: #{discriminador_forward.1} parent=0 // pred_region
    _
  $region9: #{discriminador_forward.1} parent=0 // pred_fallthru
    _
  // Predicated region
  $region10: #{discriminador_forward.1} parent=0 // pred_check
    _
  $region11: #{discriminador_forward.1} parent=0 // pred_check_branch
    %19 = sbr.rel (0) target = $region13
  $region12: #{discriminador_forward.1} parent=0 // pred_region
    _
  $region13: #{discriminador_forward.1} parent=0 // pred_fallthru
    _
  // Predicated region
  $region14: #{discriminador_forward.1} parent=0 // pred_check
    _
  $region15: #{discriminador_forward.1} parent=0 // pred_check_branch
    %21 = sbr.rel (0) target = $region17
  $region16: #{discriminador_forward.1} parent=0 // pred_region
    _
  $region17: #{discriminador_forward.1} parent=0 // pred_fallthru
    _
  // Predicated region
  $region18: #{discriminador_forward.1} parent=0 // pred_check
    _
  $region19: #{discriminador_forward.1} parent=0 // pred_check_branch
    %23 = sbr.rel (0) target = $region21
  $region20: #{discriminador_forward.1} parent=0 // pred_region
    _
  $region21: #{discriminador_forward.1} parent=0 // pred_fallthru
    _
  // Predicated region
  $region22: #{discriminador_forward.1} parent=0 // pred_check
    _
  $region23: #{discriminador_forward.1} parent=0 // pred_check_branch
    %25 = sbr.rel (0) target = $region25
  $region24: #{discriminador_forward.1} parent=0 // pred_region
    _
  $region25: #{discriminador_forward.1} parent=0 // pred_fallthru
    _
  // Predicated region
  $region26: #{discriminador_forward.1} parent=0 // pred_check
    _
  $region27: #{discriminador_forward.1} parent=0 // pred_check_branch
    %27 = sbr.rel (0) target = $region29
  $region28: #{discriminador_forward.1} parent=0 // pred_region
    _
  $region29: #{discriminador_forward.1} parent=0 // pred_fallthru
    _
  // Predicated region
  $region30: #{discriminador_forward.1} parent=0 // pred_check
    _
  $region31: #{discriminador_forward.1} parent=0 // pred_check_branch
    %29 = sbr.rel (0) target = $region33
  $region32: #{discriminador_forward.1} parent=0 // pred_region
    _
  $region33: #{discriminador_forward.1} parent=0 // pred_fallthru
    _
  // Predicated region
  $region34: #{discriminador_forward.1} parent=0 // pred_check
    _
  $region35: #{discriminador_forward.1} parent=0 // pred_check_branch
    %31 = sbr.rel (0) target = $region37
  $region36: #{discriminador_forward.1} parent=0 // pred_region
    _
  $region37: #{discriminador_forward.1} parent=0 // pred_fallthru
    _
  %v33 = vld [vmem:[%s0] sm:$0xf]
  %v34 = vld [vmem:[%s0 + $0x4] sm:$0xf]
  %v35 = vld [vmem:[%s0 + $0x8] sm:$0xf]
  %v36 = vld [vmem:[%s0 + $0xc] sm:$0xf]
  %v37 = vld [vmem:[%s0 + $0x10] sm:$0xf]
  %v38 = vld [vmem:[%s0 + $0x14] sm:$0xf]
  %v39 = vld [vmem:[%s0 + $0x18] sm:$0xf]
  %v40 = vld [vmem:[%s0 + $0x1c] sm:$0xf]
  %v41 = vld [vmem:[%s0 + $0x20] sm:$0xf]
  %v42 = vld [vmem:[%s0 + $0x24] sm:$0xf]
  %v43 = vld [vmem:[%s0 + $0x28] sm:$0xf]
  %v44 = vld [vmem:[%s0 + $0x2c] sm:$0xf]
  %v45 = vld [vmem:[%s0 + $0x30] sm:$0xf]
  %v46 = vld [vmem:[%s0 + $0x34] sm:$0xf]
  %v47 = vld [vmem:[%s0 + $0x38] sm:$0xf]
  %v48 = vld [vmem:[%s0 + $0x3c] sm:$0xf]
  %v49 = vld [vmem:[%s0 + $0x40] sm:$0xf]
  %v50 = vld [vmem:[%s0 + $0x44] sm:$0xf]
  %v51 = vld [vmem:[%s0 + $0x48] sm:$0xf]
  %v52 = vld [vmem:[%s0 + $0x4c] sm:$0xf]
  %v53 = vld [vmem:[%s0 + $0x50] sm:$0xf]
  %v54 = vld [vmem:[%s0 + $0x54] sm:$0xf]
  %v55 = vld [vmem:[%s0 + $0x58] sm:$0xf]
  %v56 = vld [vmem:[%s0 + $0x5c] sm:$0xf]
  %v57 = vld [vmem:[%s0 + $0x60] sm:$0xf]
  %v58 = vld [vmem:[%s0 + $0x64] sm:$0xf]
  %v59 = vld [vmem:[%s0 + $0x68] sm:$0xf]
  %v60 = vld [vmem:[%s0 + $0x6c] sm:$0xf]
  %v61 = vld [vmem:[%s0 + $0x70] sm:$0xf]
  %v62 = vld [vmem:[%s0 + $0x74] sm:$0xf]
  %v63 = vld [vmem:[%s0 + $0x78] sm:$0xf]
  %v64 = vld [vmem:[%s0 + $0x7c] sm:$0xf]
  %v65 = vld [vmem:[%s0 + $0x80] sm:$0xf]
  %v66 = vld [vmem:[%s0 + $0x84] sm:$0xf]
  %v67 = vld [vmem:[%s0 + $0x88] sm:$0xf]
  %v68 = vld [vmem:[%s0 + $0x8c] sm:$0xf]
  %v69 = vld [vmem:[%s0 + $0x90] sm:$0xf]
  %v70 = vld [vmem:[%s0 + $0x94] sm:$0xf]
  %v71 = vld [vmem:[%s0 + $0x98] sm:$0xf]
  %v72 = vld [vmem:[%s0 + $0x9c] sm:$0xf]
  %v73 = vld [vmem:[%s0 + $0xa0] sm:$0xf]
  %v74 = vld [vmem:[%s0 + $0xa4] sm:$0xf]
  %v75 = vld [vmem:[%s0 + $0xa8] sm:$0xf]
  %v76 = vld [vmem:[%s0 + $0xac] sm:$0xf]
  %v77 = vld [vmem:[%s0 + $0xb0] sm:$0xf]
  %v78 = vld [vmem:[%s0 + $0xb4] sm:$0xf]
  %v79 = vld [vmem:[%s0 + $0xb8] sm:$0xf]
  %v80 = vld [vmem:[%s0 + $0xbc] sm:$0xf]
  %v81 = vld [vmem:[%s0 + $0xc0] sm:$0xf]
  %v82 = vld [vmem:[%s0 + $0xc4] sm:$0xf]
  %v83 = vld [vmem:[%s0 + $0xc8] sm:$0xf]
  %v84 = vld [vmem:[%s0 + $0xcc] sm:$0xf]
  %v85 = vld [vmem:[%s0 + $0xd0] sm:$0xf]
  %v86 = vld [vmem:[%s0 + $0xd4] sm:$0xf]
  %v87 = vld [vmem:[%s0 + $0xd8] sm:$0xf]
  %v88 = vld [vmem:[%s0 + $0xdc] sm:$0xf]
  %v89 = vld [vmem:[%s0 + $0xe0] sm:$0xf]
  %v90 = vld [vmem:[%s0 + $0xe4] sm:$0xf]
  %v91 = vld [vmem:[%s0 + $0xe8] sm:$0xf]
  %v92 = vld [vmem:[%s0 + $0xec] sm:$0xf]
  %v93 = vld [vmem:[%s0 + $0xf0] sm:$0xf]
  %v94 = vld [vmem:[%s0 + $0xf4] sm:$0xf]
  %v95 = vld [vmem:[%s0 + $0xf8] sm:$0xf]
  %v96 = vld [vmem:[%s0 + $0xfc] sm:$0xf]
  %v97 = vld [vmem:[%s1] sm:$0xf]
  %v98 = vld [vmem:[%s1 + $0x4] sm:$0xf]
  %v99 = vld [vmem:[%s1 + $0x8] sm:$0xf]
  %v100 = vld [vmem:[%s1 + $0xc] sm:$0xf]
  %v101 = vld [vmem:[%s1 + $0x10] sm:$0xf]
  %v102 = vld [vmem:[%s1 + $0x14] sm:$0xf]
  %v103 = vld [vmem:[%s1 + $0x18] sm:$0xf]
  %v104 = vld [vmem:[%s1 + $0x1c] sm:$0xf]
  %v105 = vld [vmem:[%s1 + $0x20] sm:$0xf]
  %v106 = vld [vmem:[%s1 + $0x24] sm:$0xf]
  %v107 = vld [vmem:[%s1 + $0x28] sm:$0xf]
  %v108 = vld [vmem:[%s1 + $0x2c] sm:$0xf]
  %v109 = vld [vmem:[%s1 + $0x30] sm:$0xf]
  %v110 = vld [vmem:[%s1 + $0x34] sm:$0xf]
  %v111 = vld [vmem:[%s1 + $0x38] sm:$0xf]
  %v112 = vld [vmem:[%s1 + $0x3c] sm:$0xf]
  %v177 = vunpack.c.l.b16 %v33
  %v178 = vunpack.c.l.b16 %v34
  %v179 = vunpack.c.l.b16 %v35
  %v180 = vunpack.c.l.b16 %v36
  %v181 = vunpack.c.l.b16 %v37
  %v182 = vunpack.c.l.b16 %v38
  %v183 = vunpack.c.l.b16 %v39
  %v184 = vunpack.c.l.b16 %v40
  %v185 = vunpack.c.l.b16 %v41
  %v186 = vunpack.c.l.b16 %v42
  %v187 = vunpack.c.l.b16 %v43
  %v188 = vunpack.c.l.b16 %v44
  %v189 = vunpack.c.l.b16 %v45
  %v190 = vunpack.c.l.b16 %v46
  %v191 = vunpack.c.l.b16 %v47
  %v192 = vunpack.c.l.b16 %v48
  %v193 = vunpack.c.l.b16 %v49
  %v194 = vunpack.c.l.b16 %v50
  %v195 = vunpack.c.l.b16 %v51
  %v196 = vunpack.c.l.b16 %v52
  %v197 = vunpack.c.l.b16 %v53
  %v198 = vunpack.c.l.b16 %v54
  %v199 = vunpack.c.l.b16 %v55
  %v200 = vunpack.c.l.b16 %v56
  %v201 = vunpack.c.l.b16 %v57
  %v202 = vunpack.c.l.b16 %v58
  %v203 = vunpack.c.l.b16 %v59
  %v204 = vunpack.c.l.b16 %v60
  %v205 = vunpack.c.l.b16 %v61
  %v206 = vunpack.c.l.b16 %v62
  %v207 = vunpack.c.l.b16 %v63
  %v208 = vunpack.c.l.b16 %v64
  %v209 = vunpack.c.l.b16 %v65
  %v210 = vunpack.c.l.b16 %v66
  %v211 = vunpack.c.l.b16 %v67
  %v212 = vunpack.c.l.b16 %v68
  %v213 = vunpack.c.l.b16 %v69
  %v214 = vunpack.c.l.b16 %v70
  %v215 = vunpack.c.l.b16 %v71
  %v216 = vunpack.c.l.b16 %v72
  %v217 = vunpack.c.l.b16 %v73
  %v218 = vunpack.c.l.b16 %v74
  %v219 = vunpack.c.l.b16 %v75
  %v220 = vunpack.c.l.b16 %v76
  %v221 = vunpack.c.l.b16 %v77
  %v222 = vunpack.c.l.b16 %v78
  %v223 = vunpack.c.l.b16 %v79
  %v224 = vunpack.c.l.b16 %v80
  %v225 = vunpack.c.l.b16 %v81
  %v226 = vunpack.c.l.b16 %v82
  %v227 = vunpack.c.l.b16 %v83
  %v228 = vunpack.c.l.b16 %v84
  %v229 = vunpack.c.l.b16 %v85
  %v230 = vunpack.c.l.b16 %v86
  %v231 = vunpack.c.l.b16 %v87
  %v232 = vunpack.c.l.b16 %v88
  %v233 = vunpack.c.l.b16 %v89
  %v234 = vunpack.c.l.b16 %v90
  %v235 = vunpack.c.l.b16 %v91
  %v236 = vunpack.c.l.b16 %v92
  %v237 = vunpack.c.l.b16 %v93
  %v238 = vunpack.c.l.b16 %v94
  %v239 = vunpack.c.l.b16 %v95
  %v240 = vunpack.c.l.b16 %v96
  %v241 = vpack.c.b16 %v178, %v177
  %v242 = vpack.c.b16 %v180, %v179
  %v243 = vpack.c.b16 %v182, %v181
  %v244 = vpack.c.b16 %v184, %v183
  %v245 = vpack.c.b16 %v186, %v185
  %v246 = vpack.c.b16 %v188, %v187
  %v247 = vpack.c.b16 %v190, %v189
  %v248 = vpack.c.b16 %v192, %v191
  %v249 = vpack.c.b16 %v194, %v193
  %v250 = vpack.c.b16 %v196, %v195
  %v251 = vpack.c.b16 %v198, %v197
  %v252 = vpack.c.b16 %v200, %v199
  %v253 = vpack.c.b16 %v202, %v201
  %v254 = vpack.c.b16 %v204, %v203
  %v255 = vpack.c.b16 %v206, %v205
  %v256 = vpack.c.b16 %v208, %v207
  %v257 = vpack.c.b16 %v210, %v209
  %v258 = vpack.c.b16 %v212, %v211
  %v259 = vpack.c.b16 %v214, %v213
  %v260 = vpack.c.b16 %v216, %v215
  %v261 = vpack.c.b16 %v218, %v217
  %v262 = vpack.c.b16 %v220, %v219
  %v263 = vpack.c.b16 %v222, %v221
  %v264 = vpack.c.b16 %v224, %v223
  %v265 = vpack.c.b16 %v226, %v225
  %v266 = vpack.c.b16 %v228, %v227
  %v267 = vpack.c.b16 %v230, %v229
  %v268 = vpack.c.b16 %v232, %v231
  %v269 = vpack.c.b16 %v234, %v233
  %v270 = vpack.c.b16 %v236, %v235
  %v271 = vpack.c.b16 %v238, %v237
  %v272 = vpack.c.b16 %v240, %v239
  %v321 = vunpack.c.l.b16 %v97
  %v322 = vunpack.c.l.b16 %v98
  %v323 = vunpack.c.l.b16 %v99
  %v324 = vunpack.c.l.b16 %v100
  %v325 = vunpack.c.l.b16 %v101
  %v326 = vunpack.c.l.b16 %v102
  %v327 = vunpack.c.l.b16 %v103
  %v328 = vunpack.c.l.b16 %v104
  %v329 = vunpack.c.l.b16 %v105
  %v330 = vunpack.c.l.b16 %v106
  %v331 = vunpack.c.l.b16 %v107
  %v332 = vunpack.c.l.b16 %v108
  %v333 = vunpack.c.l.b16 %v109
  %v334 = vunpack.c.l.b16 %v110
  %v335 = vunpack.c.l.b16 %v111
  %v336 = vunpack.c.l.b16 %v112
  %v337 = vpack.c.b16 %v322, %v321
  %v338 = vpack.c.b16 %v324, %v323
  %v339 = vpack.c.b16 %v326, %v325
  %v340 = vpack.c.b16 %v328, %v327
  %v341 = vpack.c.b16 %v330, %v329
  %v342 = vpack.c.b16 %v332, %v331
  %v343 = vpack.c.b16 %v334, %v333
  %v344 = vpack.c.b16 %v336, %v335
  %353 = vmatprep.subr.bf16.mxu0 0
  %354 = vmatpush1.bf16.msra.mxu0 %v344
  %355 = vmatprep.subr.bf16.mxu0 0
  %356 = vmatpush1.bf16.msra.mxu0 %v343
  %357 = vmatprep.subr.bf16.mxu0 0
  %358 = vmatpush1.bf16.msra.mxu0 %v342
  %359 = vmatprep.subr.bf16.mxu0 0
  %360 = vmatpush1.bf16.msra.mxu0 %v341
  %361 = vmatprep.subr.bf16.mxu0 0
  %362 = vmatpush1.bf16.msra.mxu0 %v340
  %363 = vmatprep.subr.bf16.mxu0 0
  %364 = vmatpush1.bf16.msra.mxu0 %v339
  %365 = vmatprep.subr.bf16.mxu0 0
  %366 = vmatpush1.bf16.msra.mxu0 %v338
  %367 = vmatprep.subr.bf16.mxu0 0
  %368 = vmatpush1.bf16.msra.mxu0 %v337
  %369 = vmatprep.subr.bf16.mxu0 0
  %370 = vmatpush2.bf16.msra.mxu0 0
  %371 = vmatprep.subr.bf16.mxu0 0
  %372 = vmatpush2.bf16.msra.mxu0 0
  %373 = vmatprep.subr.bf16.mxu0 0
  %374 = vmatpush2.bf16.msra.mxu0 0
  %375 = vmatprep.subr.bf16.mxu0 0
  %376 = vmatpush2.bf16.msra.mxu0 0
  %377 = vmatprep.subr.bf16.mxu0 0
  %378 = vmatpush2.bf16.msra.mxu0 0
  %379 = vmatprep.subr.bf16.mxu0 0
  %380 = vmatpush2.bf16.msra.mxu0 0
  %381 = vmatprep.subr.bf16.mxu0 0
  %382 = vmatpush2.bf16.msra.mxu0 0
  %383 = vmatprep.subr.bf16.mxu0 0
  %384 = vmatpush2.bf16.msra.mxu0 0
  %385 = vmatprep.mubr.bf16.mxu0 0
  %386 = vmatmul.mubr.bf16.gmra.mxu0 %v241
  %v387 = vpop.f32.mrf.mxu0
  %v388 = vadd.f32 0.0, %v387
  %v389 = vpop.f32.mrf.mxu0
  %v390 = vpop.f32.mrf.mxu0
  %v391 = vadd.f32 0.0, %v390
  %v392 = vpop.f32.mrf.mxu0
  %393 = vmatprep.mubr.bf16.mxu0 0
  %394 = vmatmul.mubr.bf16.gmra.mxu0 %v242
  %v395 = vpop.f32.mrf.mxu0
  %v396 = vadd.f32 0.0, %v395
  %v397 = vpop.f32.mrf.mxu0
  %v398 = vpop.f32.mrf.mxu0
  %v399 = vadd.f32 0.0, %v398
  %v400 = vpop.f32.mrf.mxu0
  %401 = vmatprep.mubr.bf16.mxu0 0
  %402 = vmatmul.mubr.bf16.gmra.mxu0 %v243
  %v403 = vpop.f32.mrf.mxu0
  %v404 = vadd.f32 0.0, %v403
  %v405 = vpop.f32.mrf.mxu0
  %v406 = vpop.f32.mrf.mxu0
  %v407 = vadd.f32 0.0, %v406
  %v408 = vpop.f32.mrf.mxu0
  %409 = vmatprep.mubr.bf16.mxu0 0
  %410 = vmatmul.mubr.bf16.gmra.mxu0 %v244
  %v411 = vpop.f32.mrf.mxu0
  %v412 = vadd.f32 0.0, %v411
  %v413 = vpop.f32.mrf.mxu0
  %v414 = vpop.f32.mrf.mxu0
  %v415 = vadd.f32 0.0, %v414
  %v416 = vpop.f32.mrf.mxu0
  %417 = vmatprep.mubr.bf16.mxu0 0
  %418 = vmatmul.mubr.bf16.gmra.mxu0 %v245
  %v419 = vpop.f32.mrf.mxu0
  %v420 = vadd.f32 0.0, %v419
  %v421 = vpop.f32.mrf.mxu0
  %v422 = vpop.f32.mrf.mxu0
  %v423 = vadd.f32 0.0, %v422
  %v424 = vpop.f32.mrf.mxu0
  %425 = vmatprep.mubr.bf16.mxu0 0
  %426 = vmatmul.mubr.bf16.gmra.mxu0 %v246
  %v427 = vpop.f32.mrf.mxu0
  %v428 = vadd.f32 0.0, %v427
  %v429 = vpop.f32.mrf.mxu0
  %v430 = vpop.f32.mrf.mxu0
  %v431 = vadd.f32 0.0, %v430
  %v432 = vpop.f32.mrf.mxu0
  %433 = vmatprep.mubr.bf16.mxu0 0
  %434 = vmatmul.mubr.bf16.gmra.mxu0 %v247
  %v435 = vpop.f32.mrf.mxu0
  %v436 = vadd.f32 0.0, %v435
  %v437 = vpop.f32.mrf.mxu0
  %v438 = vpop.f32.mrf.mxu0
  %v439 = vadd.f32 0.0, %v438
  %v440 = vpop.f32.mrf.mxu0
  %441 = vmatprep.mubr.bf16.mxu0 0
  %442 = vmatmul.mubr.bf16.gmra.mxu0 %v248
  %v443 = vpop.f32.mrf.mxu0
  %v444 = vadd.f32 0.0, %v443
  %v445 = vpop.f32.mrf.mxu0
  %v446 = vpop.f32.mrf.mxu0
  %v447 = vadd.f32 0.0, %v446
  %v448 = vpop.f32.mrf.mxu0
  %449 = vmatprep.mubr.bf16.mxu0 0
  %450 = vmatmul.mubr.bf16.gmra.mxu0 %v249
  %v451 = vpop.f32.mrf.mxu0
  %v452 = vadd.f32 0.0, %v451
  %v453 = vpop.f32.mrf.mxu0
  %v454 = vpop.f32.mrf.mxu0
  %v455 = vadd.f32 0.0, %v454
  %v456 = vpop.f32.mrf.mxu0
  %457 = vmatprep.mubr.bf16.mxu0 0
  %458 = vmatmul.mubr.bf16.gmra.mxu0 %v250
  %v459 = vpop.f32.mrf.mxu0
  %v460 = vadd.f32 0.0, %v459
  %v461 = vpop.f32.mrf.mxu0
  %v462 = vpop.f32.mrf.mxu0
  %v463 = vadd.f32 0.0, %v462
  %v464 = vpop.f32.mrf.mxu0
  %465 = vmatprep.mubr.bf16.mxu0 0
  %466 = vmatmul.mubr.bf16.gmra.mxu0 %v251
  %v467 = vpop.f32.mrf.mxu0
  %v468 = vadd.f32 0.0, %v467
  %v469 = vpop.f32.mrf.mxu0
  %v470 = vpop.f32.mrf.mxu0
  %v471 = vadd.f32 0.0, %v470
  %v472 = vpop.f32.mrf.mxu0
  %473 = vmatprep.mubr.bf16.mxu0 0
  %474 = vmatmul.mubr.bf16.gmra.mxu0 %v252
  %v475 = vpop.f32.mrf.mxu0
  %v476 = vadd.f32 0.0, %v475
  %v477 = vpop.f32.mrf.mxu0
  %v478 = vpop.f32.mrf.mxu0
  %v479 = vadd.f32 0.0, %v478
  %v480 = vpop.f32.mrf.mxu0
  %481 = vmatprep.mubr.bf16.mxu0 0
  %482 = vmatmul.mubr.bf16.gmra.mxu0 %v253
  %v483 = vpop.f32.mrf.mxu0
  %v484 = vadd.f32 0.0, %v483
  %v485 = vpop.f32.mrf.mxu0
  %v486 = vpop.f32.mrf.mxu0
  %v487 = vadd.f32 0.0, %v486
  %v488 = vpop.f32.mrf.mxu0
  %489 = vmatprep.mubr.bf16.mxu0 0
  %490 = vmatmul.mubr.bf16.gmra.mxu0 %v254
  %v491 = vpop.f32.mrf.mxu0
  %v492 = vadd.f32 0.0, %v491
  %v493 = vpop.f32.mrf.mxu0
  %v494 = vpop.f32.mrf.mxu0
  %v495 = vadd.f32 0.0, %v494
  %v496 = vpop.f32.mrf.mxu0
  %497 = vmatprep.mubr.bf16.mxu0 0
  %498 = vmatmul.mubr.bf16.gmra.mxu0 %v255
  %v499 = vpop.f32.mrf.mxu0
  %v500 = vadd.f32 0.0, %v499
  %v501 = vpop.f32.mrf.mxu0
  %v502 = vpop.f32.mrf.mxu0
  %v503 = vadd.f32 0.0, %v502
  %v504 = vpop.f32.mrf.mxu0
  %505 = vmatprep.mubr.bf16.mxu0 0
  %506 = vmatmul.mubr.bf16.gmra.mxu0 %v256
  %v507 = vpop.f32.mrf.mxu0
  %v508 = vadd.f32 0.0, %v507
  %v509 = vpop.f32.mrf.mxu0
  %v510 = vpop.f32.mrf.mxu0
  %v511 = vadd.f32 0.0, %v510
  %v512 = vpop.f32.mrf.mxu0
  %513 = vmatprep.mubr.bf16.mxu0 0
  %514 = vmatmul.mubr.bf16.gmra.mxu0 %v257
  %v515 = vpop.f32.mrf.mxu0
  %v516 = vadd.f32 0.0, %v515
  %v517 = vpop.f32.mrf.mxu0
  %v518 = vpop.f32.mrf.mxu0
  %v519 = vadd.f32 0.0, %v518
  %v520 = vpop.f32.mrf.mxu0
  %521 = vmatprep.mubr.bf16.mxu0 0
  %522 = vmatmul.mubr.bf16.gmra.mxu0 %v258
  %v523 = vpop.f32.mrf.mxu0
  %v524 = vadd.f32 0.0, %v523
  %v525 = vpop.f32.mrf.mxu0
  %v526 = vpop.f32.mrf.mxu0
  %v527 = vadd.f32 0.0, %v526
  %v528 = vpop.f32.mrf.mxu0
  %529 = vmatprep.mubr.bf16.mxu0 0
  %530 = vmatmul.mubr.bf16.gmra.mxu0 %v259
  %v531 = vpop.f32.mrf.mxu0
  %v532 = vadd.f32 0.0, %v531
  %v533 = vpop.f32.mrf.mxu0
  %v534 = vpop.f32.mrf.mxu0
  %v535 = vadd.f32 0.0, %v534
  %v536 = vpop.f32.mrf.mxu0
  %537 = vmatprep.mubr.bf16.mxu0 0
  %538 = vmatmul.mubr.bf16.gmra.mxu0 %v260
  %v539 = vpop.f32.mrf.mxu0
  %v540 = vadd.f32 0.0, %v539
  %v541 = vpop.f32.mrf.mxu0
  %v542 = vpop.f32.mrf.mxu0
  %v543 = vadd.f32 0.0, %v542
  %v544 = vpop.f32.mrf.mxu0
  %545 = vmatprep.mubr.bf16.mxu0 0
  %546 = vmatmul.mubr.bf16.gmra.mxu0 %v261
  %v547 = vpop.f32.mrf.mxu0
  %v548 = vadd.f32 0.0, %v547
  %v549 = vpop.f32.mrf.mxu0
  %v550 = vpop.f32.mrf.mxu0
  %v551 = vadd.f32 0.0, %v550
  %v552 = vpop.f32.mrf.mxu0
  %553 = vmatprep.mubr.bf16.mxu0 0
  %554 = vmatmul.mubr.bf16.gmra.mxu0 %v262
  %v555 = vpop.f32.mrf.mxu0
  %v556 = vadd.f32 0.0, %v555
  %v557 = vpop.f32.mrf.mxu0
  %v558 = vpop.f32.mrf.mxu0
  %v559 = vadd.f32 0.0, %v558
  %v560 = vpop.f32.mrf.mxu0
  %561 = vmatprep.mubr.bf16.mxu0 0
  %562 = vmatmul.mubr.bf16.gmra.mxu0 %v263
  %v563 = vpop.f32.mrf.mxu0
  %v564 = vadd.f32 0.0, %v563
  %v565 = vpop.f32.mrf.mxu0
  %v566 = vpop.f32.mrf.mxu0
  %v567 = vadd.f32 0.0, %v566
  %v568 = vpop.f32.mrf.mxu0
  %569 = vmatprep.mubr.bf16.mxu0 0
  %570 = vmatmul.mubr.bf16.gmra.mxu0 %v264
  %v571 = vpop.f32.mrf.mxu0
  %v572 = vadd.f32 0.0, %v571
  %v573 = vpop.f32.mrf.mxu0
  %v574 = vpop.f32.mrf.mxu0
  %v575 = vadd.f32 0.0, %v574
  %v576 = vpop.f32.mrf.mxu0
  %577 = vmatprep.mubr.bf16.mxu0 0
  %578 = vmatmul.mubr.bf16.gmra.mxu0 %v265
  %v579 = vpop.f32.mrf.mxu0
  %v580 = vadd.f32 0.0, %v579
  %v581 = vpop.f32.mrf.mxu0
  %v582 = vpop.f32.mrf.mxu0
  %v583 = vadd.f32 0.0, %v582
  %v584 = vpop.f32.mrf.mxu0
  %585 = vmatprep.mubr.bf16.mxu0 0
  %586 = vmatmul.mubr.bf16.gmra.mxu0 %v266
  %v587 = vpop.f32.mrf.mxu0
  %v588 = vadd.f32 0.0, %v587
  %v589 = vpop.f32.mrf.mxu0
  %v590 = vpop.f32.mrf.mxu0
  %v591 = vadd.f32 0.0, %v590
  %v592 = vpop.f32.mrf.mxu0
  %593 = vmatprep.mubr.bf16.mxu0 0
  %594 = vmatmul.mubr.bf16.gmra.mxu0 %v267
  %v595 = vpop.f32.mrf.mxu0
  %v596 = vadd.f32 0.0, %v595
  %v597 = vpop.f32.mrf.mxu0
  %v598 = vpop.f32.mrf.mxu0
  %v599 = vadd.f32 0.0, %v598
  %v600 = vpop.f32.mrf.mxu0
  %601 = vmatprep.mubr.bf16.mxu0 0
  %602 = vmatmul.mubr.bf16.gmra.mxu0 %v268
  %v603 = vpop.f32.mrf.mxu0
  %v604 = vadd.f32 0.0, %v603
  %v605 = vpop.f32.mrf.mxu0
  %v606 = vpop.f32.mrf.mxu0
  %v607 = vadd.f32 0.0, %v606
  %v608 = vpop.f32.mrf.mxu0
  %609 = vmatprep.mubr.bf16.mxu0 0
  %610 = vmatmul.mubr.bf16.gmra.mxu0 %v269
  %v611 = vpop.f32.mrf.mxu0
  %v612 = vadd.f32 0.0, %v611
  %v613 = vpop.f32.mrf.mxu0
  %v614 = vpop.f32.mrf.mxu0
  %v615 = vadd.f32 0.0, %v614
  %v616 = vpop.f32.mrf.mxu0
  %617 = vmatprep.mubr.bf16.mxu0 0
  %618 = vmatmul.mubr.bf16.gmra.mxu0 %v270
  %v619 = vpop.f32.mrf.mxu0
  %v620 = vadd.f32 0.0, %v619
  %v621 = vpop.f32.mrf.mxu0
  %v622 = vpop.f32.mrf.mxu0
  %v623 = vadd.f32 0.0, %v622
  %v624 = vpop.f32.mrf.mxu0
  %625 = vmatprep.mubr.bf16.mxu0 0
  %626 = vmatmul.mubr.bf16.gmra.mxu0 %v271
  %v627 = vpop.f32.mrf.mxu0
  %v628 = vadd.f32 0.0, %v627
  %v629 = vpop.f32.mrf.mxu0
  %v630 = vpop.f32.mrf.mxu0
  %v631 = vadd.f32 0.0, %v630
  %v632 = vpop.f32.mrf.mxu0
  %633 = vmatprep.mubr.bf16.mxu0 0
  %634 = vmatmul.mubr.bf16.gmra.mxu0 %v272
  %v635 = vpop.f32.mrf.mxu0
  %v636 = vadd.f32 0.0, %v635
  %v637 = vpop.f32.mrf.mxu0
  %v638 = vpop.f32.mrf.mxu0
  %v639 = vadd.f32 0.0, %v638
  %v640 = vpop.f32.mrf.mxu0
  %641 = vdwg.mxu0
  %vm642 = vcmp.gt.f32.partialorder %v388, 0.0
  %vm643 = vcmp.gt.f32.partialorder %v391, 0.0
  %vm644 = vcmp.gt.f32.partialorder %v396, 0.0
  %vm645 = vcmp.gt.f32.partialorder %v399, 0.0
  %vm646 = vcmp.gt.f32.partialorder %v404, 0.0
  %vm647 = vcmp.gt.f32.partialorder %v407, 0.0
  %vm648 = vcmp.gt.f32.partialorder %v412, 0.0
  %vm649 = vcmp.gt.f32.partialorder %v415, 0.0
  %vm650 = vcmp.gt.f32.partialorder %v420, 0.0
  %vm651 = vcmp.gt.f32.partialorder %v423, 0.0
  %vm652 = vcmp.gt.f32.partialorder %v428, 0.0
  %vm653 = vcmp.gt.f32.partialorder %v431, 0.0
  %vm654 = vcmp.gt.f32.partialorder %v436, 0.0
  %vm655 = vcmp.gt.f32.partialorder %v439, 0.0
  %vm656 = vcmp.gt.f32.partialorder %v444, 0.0
  %vm657 = vcmp.gt.f32.partialorder %v447, 0.0
  %vm658 = vcmp.gt.f32.partialorder %v452, 0.0
  %vm659 = vcmp.gt.f32.partialorder %v455, 0.0
  %vm660 = vcmp.gt.f32.partialorder %v460, 0.0
  %vm661 = vcmp.gt.f32.partialorder %v463, 0.0
  %vm662 = vcmp.gt.f32.partialorder %v468, 0.0
  %vm663 = vcmp.gt.f32.partialorder %v471, 0.0
  %vm664 = vcmp.gt.f32.partialorder %v476, 0.0
  %vm665 = vcmp.gt.f32.partialorder %v479, 0.0
  %vm666 = vcmp.gt.f32.partialorder %v484, 0.0
  %vm667 = vcmp.gt.f32.partialorder %v487, 0.0
  %vm668 = vcmp.gt.f32.partialorder %v492, 0.0
  %vm669 = vcmp.gt.f32.partialorder %v495, 0.0
  %vm670 = vcmp.gt.f32.partialorder %v500, 0.0
  %vm671 = vcmp.gt.f32.partialorder %v503, 0.0
  %vm672 = vcmp.gt.f32.partialorder %v508, 0.0
  %vm673 = vcmp.gt.f32.partialorder %v511, 0.0
  %vm674 = vcmp.gt.f32.partialorder %v516, 0.0
  %vm675 = vcmp.gt.f32.partialorder %v519, 0.0
  %vm676 = vcmp.gt.f32.partialorder %v524, 0.0
  %vm677 = vcmp.gt.f32.partialorder %v527, 0.0
  %vm678 = vcmp.gt.f32.partialorder %v532, 0.0
  %vm679 = vcmp.gt.f32.partialorder %v535, 0.0
  %vm680 = vcmp.gt.f32.partialorder %v540, 0.0
  %vm681 = vcmp.gt.f32.partialorder %v543, 0.0
  %vm682 = vcmp.gt.f32.partialorder %v548, 0.0
  %vm683 = vcmp.gt.f32.partialorder %v551, 0.0
  %vm684 = vcmp.gt.f32.partialorder %v556, 0.0
  %vm685 = vcmp.gt.f32.partialorder %v559, 0.0
  %vm686 = vcmp.gt.f32.partialorder %v564, 0.0
  %vm687 = vcmp.gt.f32.partialorder %v567, 0.0
  %vm688 = vcmp.gt.f32.partialorder %v572, 0.0
  %vm689 = vcmp.gt.f32.partialorder %v575, 0.0
  %vm690 = vcmp.gt.f32.partialorder %v580, 0.0
  %vm691 = vcmp.gt.f32.partialorder %v583, 0.0
  %vm692 = vcmp.gt.f32.partialorder %v588, 0.0
  %vm693 = vcmp.gt.f32.partialorder %v591, 0.0
  %vm694 = vcmp.gt.f32.partialorder %v596, 0.0
  %vm695 = vcmp.gt.f32.partialorder %v599, 0.0
  %vm696 = vcmp.gt.f32.partialorder %v604, 0.0
  %vm697 = vcmp.gt.f32.partialorder %v607, 0.0
  %vm698 = vcmp.gt.f32.partialorder %v612, 0.0
  %vm699 = vcmp.gt.f32.partialorder %v615, 0.0
  %vm700 = vcmp.gt.f32.partialorder %v620, 0.0
  %vm701 = vcmp.gt.f32.partialorder %v623, 0.0
  %vm702 = vcmp.gt.f32.partialorder %v628, 0.0
  %vm703 = vcmp.gt.f32.partialorder %v631, 0.0
  %vm704 = vcmp.gt.f32.partialorder %v636, 0.0
  %vm705 = vcmp.gt.f32.partialorder %v639, 0.0
  %v706 = vmul.f32 %v388, 0.2
  %v707 = vmul.f32 %v391, 0.2
  %v708 = vmul.f32 %v396, 0.2
  %v709 = vmul.f32 %v399, 0.2
  %v710 = vmul.f32 %v404, 0.2
  %v711 = vmul.f32 %v407, 0.2
  %v712 = vmul.f32 %v412, 0.2
  %v713 = vmul.f32 %v415, 0.2
  %v714 = vmul.f32 %v420, 0.2
  %v715 = vmul.f32 %v423, 0.2
  %v716 = vmul.f32 %v428, 0.2
  %v717 = vmul.f32 %v431, 0.2
  %v718 = vmul.f32 %v436, 0.2
  %v719 = vmul.f32 %v439, 0.2
  %v720 = vmul.f32 %v444, 0.2
  %v721 = vmul.f32 %v447, 0.2
  %v722 = vmul.f32 %v452, 0.2
  %v723 = vmul.f32 %v455, 0.2
  %v724 = vmul.f32 %v460, 0.2
  %v725 = vmul.f32 %v463, 0.2
  %v726 = vmul.f32 %v468, 0.2
  %v727 = vmul.f32 %v471, 0.2
  %v728 = vmul.f32 %v476, 0.2
  %v729 = vmul.f32 %v479, 0.2
  %v730 = vmul.f32 %v484, 0.2
  %v731 = vmul.f32 %v487, 0.2
  %v732 = vmul.f32 %v492, 0.2
  %v733 = vmul.f32 %v495, 0.2
  %v734 = vmul.f32 %v500, 0.2
  %v735 = vmul.f32 %v503, 0.2
  %v736 = vmul.f32 %v508, 0.2
  %v737 = vmul.f32 %v511, 0.2
  %v738 = vmul.f32 %v516, 0.2
  %v739 = vmul.f32 %v519, 0.2
  %v740 = vmul.f32 %v524, 0.2
  %v741 = vmul.f32 %v527, 0.2
  %v742 = vmul.f32 %v532, 0.2
  %v743 = vmul.f32 %v535, 0.2
  %v744 = vmul.f32 %v540, 0.2
  %v745 = vmul.f32 %v543, 0.2
  %v746 = vmul.f32 %v548, 0.2
  %v747 = vmul.f32 %v551, 0.2
  %v748 = vmul.f32 %v556, 0.2
  %v749 = vmul.f32 %v559, 0.2
  %v750 = vmul.f32 %v564, 0.2
  %v751 = vmul.f32 %v567, 0.2
  %v752 = vmul.f32 %v572, 0.2
  %v753 = vmul.f32 %v575, 0.2
  %v754 = vmul.f32 %v580, 0.2
  %v755 = vmul.f32 %v583, 0.2
  %v756 = vmul.f32 %v588, 0.2
  %v757 = vmul.f32 %v591, 0.2
  %v758 = vmul.f32 %v596, 0.2
  %v759 = vmul.f32 %v599, 0.2
  %v760 = vmul.f32 %v604, 0.2
  %v761 = vmul.f32 %v607, 0.2
  %v762 = vmul.f32 %v612, 0.2
  %v763 = vmul.f32 %v615, 0.2
  %v764 = vmul.f32 %v620, 0.2
  %v765 = vmul.f32 %v623, 0.2
  %v766 = vmul.f32 %v628, 0.2
  %v767 = vmul.f32 %v631, 0.2
  %v768 = vmul.f32 %v636, 0.2
  %v769 = vmul.f32 %v639, 0.2
  %v770 = vsel %vm642, %v388, %v706
  %v771 = vsel %vm643, %v391, %v707
  %v772 = vsel %vm644, %v396, %v708
  %v773 = vsel %vm645, %v399, %v709
  %v774 = vsel %vm646, %v404, %v710
  %v775 = vsel %vm647, %v407, %v711
  %v776 = vsel %vm648, %v412, %v712
  %v777 = vsel %vm649, %v415, %v713
  %v778 = vsel %vm650, %v420, %v714
  %v779 = vsel %vm651, %v423, %v715
  %v780 = vsel %vm652, %v428, %v716
  %v781 = vsel %vm653, %v431, %v717
  %v782 = vsel %vm654, %v436, %v718
  %v783 = vsel %vm655, %v439, %v719
  %v784 = vsel %vm656, %v444, %v720
  %v785 = vsel %vm657, %v447, %v721
  %v786 = vsel %vm658, %v452, %v722
  %v787 = vsel %vm659, %v455, %v723
  %v788 = vsel %vm660, %v460, %v724
  %v789 = vsel %vm661, %v463, %v725
  %v790 = vsel %vm662, %v468, %v726
  %v791 = vsel %vm663, %v471, %v727
  %v792 = vsel %vm664, %v476, %v728
  %v793 = vsel %vm665, %v479, %v729
  %v794 = vsel %vm666, %v484, %v730
  %v795 = vsel %vm667, %v487, %v731
  %v796 = vsel %vm668, %v492, %v732
  %v797 = vsel %vm669, %v495, %v733
  %v798 = vsel %vm670, %v500, %v734
  %v799 = vsel %vm671, %v503, %v735
  %v800 = vsel %vm672, %v508, %v736
  %v801 = vsel %vm673, %v511, %v737
  %v802 = vsel %vm674, %v516, %v738
  %v803 = vsel %vm675, %v519, %v739
  %v804 = vsel %vm676, %v524, %v740
  %v805 = vsel %vm677, %v527, %v741
  %v806 = vsel %vm678, %v532, %v742
  %v807 = vsel %vm679, %v535, %v743
  %v808 = vsel %vm680, %v540, %v744
  %v809 = vsel %vm681, %v543, %v745
  %v810 = vsel %vm682, %v548, %v746
  %v811 = vsel %vm683, %v551, %v747
  %v812 = vsel %vm684, %v556, %v748
  %v813 = vsel %vm685, %v559, %v749
  %v814 = vsel %vm686, %v564, %v750
  %v815 = vsel %vm687, %v567, %v751
  %v816 = vsel %vm688, %v572, %v752
  %v817 = vsel %vm689, %v575, %v753
  %v818 = vsel %vm690, %v580, %v754
  %v819 = vsel %vm691, %v583, %v755
  %v820 = vsel %vm692, %v588, %v756
  %v821 = vsel %vm693, %v591, %v757
  %v822 = vsel %vm694, %v596, %v758
  %v823 = vsel %vm695, %v599, %v759
  %v824 = vsel %vm696, %v604, %v760
  %v825 = vsel %vm697, %v607, %v761
  %v826 = vsel %vm698, %v612, %v762
  %v827 = vsel %vm699, %v615, %v763
  %v828 = vsel %vm700, %v620, %v764
  %v829 = vsel %vm701, %v623, %v765
  %v830 = vsel %vm702, %v628, %v766
  %v831 = vsel %vm703, %v631, %v767
  %v832 = vsel %vm704, %v636, %v768
  %v833 = vsel %vm705, %v639, %v769
  %834 = vst [vmem:[#allocation2] sm:$0xf] 0
  %vm835 = vcmask 1040384
  %vm836 = vsmask.f32 256
  %vm837 = vmand %vm835, %vm836
  %v838 = vld [vmem:[#allocation2 + $0x4] sm:$0x1]
  %v839 = vsel %vm837, 0, %v838
  %840 = vst [vmem:[#allocation2 + $0x4] sm:$0x1] %v839
  %841 = vst [vmem:[#allocation2 + $0x48] sm:$0xf] 0
  %v842 = vld [vmem:[#allocation2 + $0x4c] sm:$0x1]
  %v843 = vsel %vm837, 0, %v842
  %844 = vst [vmem:[#allocation2 + $0x4c] sm:$0x1] %v843
  %845 = vst [vmem:[#allocation2 + $0x90] sm:$0xf] 0
  %v846 = vld [vmem:[#allocation2 + $0x94] sm:$0x1]
  %v847 = vsel %vm837, 0, %v846
  %848 = vst [vmem:[#allocation2 + $0x94] sm:$0x1] %v847
  %849 = vst [vmem:[#allocation2 + $0xd8] sm:$0xf] 0
  %v850 = vld [vmem:[#allocation2 + $0xdc] sm:$0x1]
  %v851 = vsel %vm837, 0, %v850
  %852 = vst [vmem:[#allocation2 + $0xdc] sm:$0x1] %v851
  %s853 = scalar_lea.vmem [#allocation2], 352
  %854 = vst [vmem:[%s853] sm:$0xf] 0
  %v855 = vld [vmem:[%s853 + $0x4] sm:$0x1]
  %v856 = vsel %vm837, 0, %v855
  %857 = vst [vmem:[%s853 + $0x4] sm:$0x1] %v856
  %858 = vst [vmem:[%s853 + $0x48] sm:$0xf] 0
  %v859 = vld [vmem:[%s853 + $0x4c] sm:$0x1]
  %v860 = vsel %vm837, 0, %v859
  %861 = vst [vmem:[%s853 + $0x4c] sm:$0x1] %v860
  %862 = vst [vmem:[%s853 + $0x90] sm:$0xf] 0
  %v863 = vld [vmem:[%s853 + $0x94] sm:$0x1]
  %v864 = vsel %vm837, 0, %v863
  %865 = vst [vmem:[%s853 + $0x94] sm:$0x1] %v864
  %866 = vst [vmem:[%s853 + $0xd8] sm:$0xf] 0
  %v867 = vld [vmem:[%s853 + $0xdc] sm:$0x1]
  %v868 = vsel %vm837, 0, %v867
  %869 = vst [vmem:[%s853 + $0xdc] sm:$0x1] %v868
  %v870 = vld [vmem:[#allocation2] sm:$0x1]
  %v871 = vsel %vm837, 0, %v870
  %872 = vst [vmem:[#allocation2] sm:$0x1] %v871
  %v873 = vld [vmem:[#allocation2 + $0x8] sm:$0x1]
  %v874 = vsel %vm837, 0, %v873
  %875 = vst [vmem:[#allocation2 + $0x8] sm:$0x1] %v874
  %v876 = vld [vmem:[#allocation2 + $0x10] sm:$0x1]
  %v877 = vsel %vm837, 0, %v876
  %878 = vst [vmem:[#allocation2 + $0x10] sm:$0x1] %v877
  %v879 = vld [vmem:[#allocation2 + $0x18] sm:$0x1]
  %v880 = vsel %vm837, 0, %v879
  %881 = vst [vmem:[#allocation2 + $0x18] sm:$0x1] %v880
  %v882 = vld [vmem:[#allocation2 + $0x20] sm:$0x1]
  %v883 = vsel %vm837, 0, %v882
  %884 = vst [vmem:[#allocation2 + $0x20] sm:$0x1] %v883
  %v885 = vld [vmem:[#allocation2 + $0x28] sm:$0x1]
  %v886 = vsel %vm837, 0, %v885
  %887 = vst [vmem:[#allocation2 + $0x28] sm:$0x1] %v886
  %v888 = vld [vmem:[#allocation2 + $0x30] sm:$0x1]
  %v889 = vsel %vm837, 0, %v888
  %890 = vst [vmem:[#allocation2 + $0x30] sm:$0x1] %v889
  %v891 = vld [vmem:[#allocation2 + $0x38] sm:$0x1]
  %v892 = vsel %vm837, 0, %v891
  %893 = vst [vmem:[#allocation2 + $0x38] sm:$0x1] %v892
  %v894 = vld [vmem:[#allocation2 + $0x40] sm:$0x1]
  %v895 = vsel %vm837, 0, %v894
  %896 = vst [vmem:[#allocation2 + $0x40] sm:$0x1] %v895
  %v897 = vld [vmem:[#allocation2 + $0x48] sm:$0x1]
  %v898 = vsel %vm837, 0, %v897
  %899 = vst [vmem:[#allocation2 + $0x48] sm:$0x1] %v898
  %v900 = vld [vmem:[#allocation2 + $0x50] sm:$0x1]
  %v901 = vsel %vm837, 0, %v900
  %902 = vst [vmem:[#allocation2 + $0x50] sm:$0x1] %v901
  %v903 = vld [vmem:[#allocation2 + $0x58] sm:$0x1]
  %v904 = vsel %vm837, 0, %v903
  %905 = vst [vmem:[#allocation2 + $0x58] sm:$0x1] %v904
  %v906 = vld [vmem:[#allocation2 + $0x60] sm:$0x1]
  %v907 = vsel %vm837, 0, %v906
  %908 = vst [vmem:[#allocation2 + $0x60] sm:$0x1] %v907
  %v909 = vld [vmem:[#allocation2 + $0x68] sm:$0x1]
  %v910 = vsel %vm837, 0, %v909
  %911 = vst [vmem:[#allocation2 + $0x68] sm:$0x1] %v910
  %v912 = vld [vmem:[#allocation2 + $0x70] sm:$0x1]
  %v913 = vsel %vm837, 0, %v912
  %914 = vst [vmem:[#allocation2 + $0x70] sm:$0x1] %v913
  %v915 = vld [vmem:[#allocation2 + $0x78] sm:$0x1]
  %v916 = vsel %vm837, 0, %v915
  %917 = vst [vmem:[#allocation2 + $0x78] sm:$0x1] %v916
  %v918 = vld [vmem:[#allocation2 + $0x80] sm:$0x1]
  %v919 = vsel %vm837, 0, %v918
  %920 = vst [vmem:[#allocation2 + $0x80] sm:$0x1] %v919
  %v921 = vld [vmem:[#allocation2 + $0x88] sm:$0x1]
  %v922 = vsel %vm837, 0, %v921
  %923 = vst [vmem:[#allocation2 + $0x88] sm:$0x1] %v922
  %s924 = scalar_lea.vmem [#allocation2], 288
  %v925 = vld [vmem:[%s924] sm:$0x1]
  %v926 = vsel %vm837, 0, %v925
  %927 = vst [vmem:[%s924] sm:$0x1] %v926
  %v928 = vld [vmem:[%s924 + $0x8] sm:$0x1]
  %v929 = vsel %vm837, 0, %v928
  %930 = vst [vmem:[%s924 + $0x8] sm:$0x1] %v929
  %v931 = vld [vmem:[%s924 + $0x10] sm:$0x1]
  %v932 = vsel %vm837, 0, %v931
  %933 = vst [vmem:[%s924 + $0x10] sm:$0x1] %v932
  %v934 = vld [vmem:[%s924 + $0x18] sm:$0x1]
  %v935 = vsel %vm837, 0, %v934
  %936 = vst [vmem:[%s924 + $0x18] sm:$0x1] %v935
  %v937 = vld [vmem:[%s924 + $0x20] sm:$0x1]
  %v938 = vsel %vm837, 0, %v937
  %939 = vst [vmem:[%s924 + $0x20] sm:$0x1] %v938
  %v940 = vld [vmem:[%s924 + $0x28] sm:$0x1]
  %v941 = vsel %vm837, 0, %v940
  %942 = vst [vmem:[%s924 + $0x28] sm:$0x1] %v941
  %v943 = vld [vmem:[%s924 + $0x30] sm:$0x1]
  %v944 = vsel %vm837, 0, %v943
  %945 = vst [vmem:[%s924 + $0x30] sm:$0x1] %v944
  %v946 = vld [vmem:[%s924 + $0x38] sm:$0x1]
  %v947 = vsel %vm837, 0, %v946
  %948 = vst [vmem:[%s924 + $0x38] sm:$0x1] %v947
  %v949 = vld [vmem:[%s924 + $0x40] sm:$0x1]
  %v950 = vsel %vm837, 0, %v949
  %951 = vst [vmem:[%s924 + $0x40] sm:$0x1] %v950
  %v952 = vld [vmem:[%s924 + $0x48] sm:$0x1]
  %v953 = vsel %vm837, 0, %v952
  %954 = vst [vmem:[%s924 + $0x48] sm:$0x1] %v953
  %v955 = vld [vmem:[%s924 + $0x50] sm:$0x1]
  %v956 = vsel %vm837, 0, %v955
  %957 = vst [vmem:[%s924 + $0x50] sm:$0x1] %v956
  %v958 = vld [vmem:[%s924 + $0x58] sm:$0x1]
  %v959 = vsel %vm837, 0, %v958
  %960 = vst [vmem:[%s924 + $0x58] sm:$0x1] %v959
  %v961 = vld [vmem:[%s924 + $0x60] sm:$0x1]
  %v962 = vsel %vm837, 0, %v961
  %963 = vst [vmem:[%s924 + $0x60] sm:$0x1] %v962
  %v964 = vld [vmem:[%s924 + $0x68] sm:$0x1]
  %v965 = vsel %vm837, 0, %v964
  %966 = vst [vmem:[%s924 + $0x68] sm:$0x1] %v965
  %v967 = vld [vmem:[%s924 + $0x70] sm:$0x1]
  %v968 = vsel %vm837, 0, %v967
  %969 = vst [vmem:[%s924 + $0x70] sm:$0x1] %v968
  %v970 = vld [vmem:[%s924 + $0x78] sm:$0x1]
  %v971 = vsel %vm837, 0, %v970
  %972 = vst [vmem:[%s924 + $0x78] sm:$0x1] %v971
  %v973 = vld [vmem:[%s924 + $0x80] sm:$0x1]
  %v974 = vsel %vm837, 0, %v973
  %975 = vst [vmem:[%s924 + $0x80] sm:$0x1] %v974
  %v976 = vld [vmem:[%s924 + $0x88] sm:$0x1]
  %v977 = vsel %vm837, 0, %v976
  %978 = vst [vmem:[%s924 + $0x88] sm:$0x1] %v977
  %s979 = scalar_lea.vmem [#allocation2], 144
  %v980 = vld [vmem:[%s979 + $0x4] sm:$0x1]
  %v981 = vsel %vm837, 0, %v980
  %982 = vst [vmem:[%s979 + $0x4] sm:$0x1] %v981
  %v983 = vld [vmem:[%s979 + $0xc] sm:$0x1]
  %v984 = vsel %vm837, 0, %v983
  %985 = vst [vmem:[%s979 + $0xc] sm:$0x1] %v984
  %v986 = vld [vmem:[%s979 + $0x14] sm:$0x1]
  %v987 = vsel %vm837, 0, %v986
  %988 = vst [vmem:[%s979 + $0x14] sm:$0x1] %v987
  %v989 = vld [vmem:[%s979 + $0x1c] sm:$0x1]
  %v990 = vsel %vm837, 0, %v989
  %991 = vst [vmem:[%s979 + $0x1c] sm:$0x1] %v990
  %v992 = vld [vmem:[%s979 + $0x24] sm:$0x1]
  %v993 = vsel %vm837, 0, %v992
  %994 = vst [vmem:[%s979 + $0x24] sm:$0x1] %v993
  %v995 = vld [vmem:[%s979 + $0x2c] sm:$0x1]
  %v996 = vsel %vm837, 0, %v995
  %997 = vst [vmem:[%s979 + $0x2c] sm:$0x1] %v996
  %v998 = vld [vmem:[%s979 + $0x34] sm:$0x1]
  %v999 = vsel %vm837, 0, %v998
  %1000 = vst [vmem:[%s979 + $0x34] sm:$0x1] %v999
  %v1001 = vld [vmem:[%s979 + $0x3c] sm:$0x1]
  %v1002 = vsel %vm837, 0, %v1001
  %1003 = vst [vmem:[%s979 + $0x3c] sm:$0x1] %v1002
  %v1004 = vld [vmem:[%s979 + $0x44] sm:$0x1]
  %v1005 = vsel %vm837, 0, %v1004
  %1006 = vst [vmem:[%s979 + $0x44] sm:$0x1] %v1005
  %v1007 = vld [vmem:[%s979 + $0x4c] sm:$0x1]
  %v1008 = vsel %vm837, 0, %v1007
  %1009 = vst [vmem:[%s979 + $0x4c] sm:$0x1] %v1008
  %v1010 = vld [vmem:[%s979 + $0x54] sm:$0x1]
  %v1011 = vsel %vm837, 0, %v1010
  %1012 = vst [vmem:[%s979 + $0x54] sm:$0x1] %v1011
  %v1013 = vld [vmem:[%s979 + $0x5c] sm:$0x1]
  %v1014 = vsel %vm837, 0, %v1013
  %1015 = vst [vmem:[%s979 + $0x5c] sm:$0x1] %v1014
  %v1016 = vld [vmem:[%s979 + $0x64] sm:$0x1]
  %v1017 = vsel %vm837, 0, %v1016
  %1018 = vst [vmem:[%s979 + $0x64] sm:$0x1] %v1017
  %v1019 = vld [vmem:[%s979 + $0x6c] sm:$0x1]
  %v1020 = vsel %vm837, 0, %v1019
  %1021 = vst [vmem:[%s979 + $0x6c] sm:$0x1] %v1020
  %v1022 = vld [vmem:[%s979 + $0x74] sm:$0x1]
  %v1023 = vsel %vm837, 0, %v1022
  %1024 = vst [vmem:[%s979 + $0x74] sm:$0x1] %v1023
  %v1025 = vld [vmem:[%s979 + $0x7c] sm:$0x1]
  %v1026 = vsel %vm837, 0, %v1025
  %1027 = vst [vmem:[%s979 + $0x7c] sm:$0x1] %v1026
  %v1028 = vld [vmem:[%s979 + $0x84] sm:$0x1]
  %v1029 = vsel %vm837, 0, %v1028
  %1030 = vst [vmem:[%s979 + $0x84] sm:$0x1] %v1029
  %v1031 = vld [vmem:[%s979 + $0x8c] sm:$0x1]
  %v1032 = vsel %vm837, 0, %v1031
  %1033 = vst [vmem:[%s979 + $0x8c] sm:$0x1] %v1032
  %s1034 = scalar_lea.vmem [#allocation2], 432
  %v1035 = vld [vmem:[%s1034 + $0x4] sm:$0x1]
  %v1036 = vsel %vm837, 0, %v1035
  %1037 = vst [vmem:[%s1034 + $0x4] sm:$0x1] %v1036
  %v1038 = vld [vmem:[%s1034 + $0xc] sm:$0x1]
  %v1039 = vsel %vm837, 0, %v1038
  %1040 = vst [vmem:[%s1034 + $0xc] sm:$0x1] %v1039
  %v1041 = vld [vmem:[%s1034 + $0x14] sm:$0x1]
  %v1042 = vsel %vm837, 0, %v1041
  %1043 = vst [vmem:[%s1034 + $0x14] sm:$0x1] %v1042
  %v1044 = vld [vmem:[%s1034 + $0x1c] sm:$0x1]
  %v1045 = vsel %vm837, 0, %v1044
  %1046 = vst [vmem:[%s1034 + $0x1c] sm:$0x1] %v1045
  %v1047 = vld [vmem:[%s1034 + $0x24] sm:$0x1]
  %v1048 = vsel %vm837, 0, %v1047
  %1049 = vst [vmem:[%s1034 + $0x24] sm:$0x1] %v1048
  %v1050 = vld [vmem:[%s1034 + $0x2c] sm:$0x1]
  %v1051 = vsel %vm837, 0, %v1050
  %1052 = vst [vmem:[%s1034 + $0x2c] sm:$0x1] %v1051
  %v1053 = vld [vmem:[%s1034 + $0x34] sm:$0x1]
  %v1054 = vsel %vm837, 0, %v1053
  %1055 = vst [vmem:[%s1034 + $0x34] sm:$0x1] %v1054
  %v1056 = vld [vmem:[%s1034 + $0x3c] sm:$0x1]
  %v1057 = vsel %vm837, 0, %v1056
  %1058 = vst [vmem:[%s1034 + $0x3c] sm:$0x1] %v1057
  %v1059 = vld [vmem:[%s1034 + $0x44] sm:$0x1]
  %v1060 = vsel %vm837, 0, %v1059
  %1061 = vst [vmem:[%s1034 + $0x44] sm:$0x1] %v1060
  %v1062 = vld [vmem:[%s1034 + $0x4c] sm:$0x1]
  %v1063 = vsel %vm837, 0, %v1062
  %1064 = vst [vmem:[%s1034 + $0x4c] sm:$0x1] %v1063
  %v1065 = vld [vmem:[%s1034 + $0x54] sm:$0x1]
  %v1066 = vsel %vm837, 0, %v1065
  %1067 = vst [vmem:[%s1034 + $0x54] sm:$0x1] %v1066
  %v1068 = vld [vmem:[%s1034 + $0x5c] sm:$0x1]
  %v1069 = vsel %vm837, 0, %v1068
  %1070 = vst [vmem:[%s1034 + $0x5c] sm:$0x1] %v1069
  %v1071 = vld [vmem:[%s1034 + $0x64] sm:$0x1]
  %v1072 = vsel %vm837, 0, %v1071
  %1073 = vst [vmem:[%s1034 + $0x64] sm:$0x1] %v1072
  %v1074 = vld [vmem:[%s1034 + $0x6c] sm:$0x1]
  %v1075 = vsel %vm837, 0, %v1074
  %1076 = vst [vmem:[%s1034 + $0x6c] sm:$0x1] %v1075
  %v1077 = vld [vmem:[%s1034 + $0x74] sm:$0x1]
  %v1078 = vsel %vm837, 0, %v1077
  %1079 = vst [vmem:[%s1034 + $0x74] sm:$0x1] %v1078
  %v1080 = vld [vmem:[%s1034 + $0x7c] sm:$0x1]
  %v1081 = vsel %vm837, 0, %v1080
  %1082 = vst [vmem:[%s1034 + $0x7c] sm:$0x1] %v1081
  %v1083 = vld [vmem:[%s1034 + $0x84] sm:$0x1]
  %v1084 = vsel %vm837, 0, %v1083
  %1085 = vst [vmem:[%s1034 + $0x84] sm:$0x1] %v1084
  %v1086 = vld [vmem:[%s1034 + $0x8c] sm:$0x1]
  %v1087 = vsel %vm837, 0, %v1086
  %1088 = vst [vmem:[%s1034 + $0x8c] sm:$0x1] %v1087
  %v1089 = vpack.c.bf16 %v770, %v770
  %v1090 = vpack.c.bf16 %v772, %v772
  %v1091 = vpack.c.bf16 %v774, %v774
  %v1092 = vpack.c.bf16 %v776, %v776
  %v1093 = vpack.c.bf16 %v778, %v778
  %v1094 = vpack.c.bf16 %v780, %v780
  %v1095 = vpack.c.bf16 %v782, %v782
  %v1096 = vpack.c.bf16 %v784, %v784
  %v1097 = vpack.c.bf16 %v802, %v802
  %v1098 = vpack.c.bf16 %v804, %v804
  %v1099 = vpack.c.bf16 %v806, %v806
  %v1100 = vpack.c.bf16 %v808, %v808
  %v1101 = vpack.c.bf16 %v810, %v810
  %v1102 = vpack.c.bf16 %v812, %v812
  %v1103 = vpack.c.bf16 %v814, %v814
  %v1104 = vpack.c.bf16 %v816, %v816
  %v1121 = vunpack.c.l.b16 %v1089
  %v1122 = vunpack.c.l.b16 %v1090
  %v1123 = vunpack.c.l.b16 %v1091
  %v1124 = vunpack.c.l.b16 %v1092
  %v1125 = vunpack.c.l.b16 %v1093
  %v1126 = vunpack.c.l.b16 %v1094
  %v1127 = vunpack.c.l.b16 %v1095
  %v1128 = vunpack.c.l.b16 %v1096
  %v1129 = vunpack.c.l.b16 %v1097
  %v1130 = vunpack.c.l.b16 %v1098
  %v1131 = vunpack.c.l.b16 %v1099
  %v1132 = vunpack.c.l.b16 %v1100
  %v1133 = vunpack.c.l.b16 %v1101
  %v1134 = vunpack.c.l.b16 %v1102
  %v1135 = vunpack.c.l.b16 %v1103
  %v1136 = vunpack.c.l.b16 %v1104
  %v1137 = vpack.c.b16 %v1121, %v1121
  %v1138 = vpack.c.b16 %v1122, %v1122
  %v1139 = vpack.c.b16 %v1123, %v1123
  %v1140 = vpack.c.b16 %v1124, %v1124
  %v1141 = vpack.c.b16 %v1125, %v1125
  %v1142 = vpack.c.b16 %v1126, %v1126
  %v1143 = vpack.c.b16 %v1127, %v1127
  %v1144 = vpack.c.b16 %v1128, %v1128
  %v1145 = vpack.c.b16 %v1129, %v1129
  %v1146 = vpack.c.b16 %v1130, %v1130
  %v1147 = vpack.c.b16 %v1131, %v1131
  %v1148 = vpack.c.b16 %v1132, %v1132
  %v1149 = vpack.c.b16 %v1133, %v1133
  %v1150 = vpack.c.b16 %v1134, %v1134
  %v1151 = vpack.c.b16 %v1135, %v1135
  %v1152 = vpack.c.b16 %v1136, %v1136
  %v1154 = vshrl.u32 %v1137, 16
  %v1156 = vrot.slane %v1154, 7
  %v1157 = vshll.u32 %v1137, 16
  %v1159 = vor.u32 %v1156, %v1157
  %v1160 = vrot.slane %v1156, 4
  %v1162 = vshrl.u32 %v1138, 16
  %v1164 = vrot.slane %v1162, 7
  %v1165 = vshll.u32 %v1138, 16
  %v1167 = vor.u32 %v1164, %v1165
  %v1168 = vrot.slane %v1164, 4
  %v1170 = vshrl.u32 %v1139, 16
  %v1172 = vrot.slane %v1170, 7
  %v1173 = vshll.u32 %v1139, 16
  %v1175 = vor.u32 %v1172, %v1173
  %v1176 = vrot.slane %v1172, 4
  %v1178 = vshrl.u32 %v1140, 16
  %v1180 = vrot.slane %v1178, 7
  %v1181 = vshll.u32 %v1140, 16
  %v1183 = vor.u32 %v1180, %v1181
  %v1184 = vrot.slane %v1180, 4
  %v1186 = vshrl.u32 %v1141, 16
  %v1188 = vrot.slane %v1186, 7
  %v1189 = vshll.u32 %v1141, 16
  %v1191 = vor.u32 %v1188, %v1189
  %v1192 = vrot.slane %v1188, 4
  %v1194 = vshrl.u32 %v1142, 16
  %v1196 = vrot.slane %v1194, 7
  %v1197 = vshll.u32 %v1142, 16
  %v1199 = vor.u32 %v1196, %v1197
  %v1200 = vrot.slane %v1196, 4
  %v1202 = vshrl.u32 %v1143, 16
  %v1204 = vrot.slane %v1202, 7
  %v1205 = vshll.u32 %v1143, 16
  %v1207 = vor.u32 %v1204, %v1205
  %v1208 = vrot.slane %v1204, 4
  %v1210 = vshrl.u32 %v1144, 16
  %v1212 = vrot.slane %v1210, 7
  %v1213 = vshll.u32 %v1144, 16
  %v1215 = vor.u32 %v1212, %v1213
  %v1216 = vrot.slane %v1212, 4
  %v1218 = vshrl.u32 %v1145, 16
  %v1220 = vrot.slane %v1218, 7
  %v1221 = vshll.u32 %v1145, 16
  %v1223 = vor.u32 %v1220, %v1221
  %v1224 = vrot.slane %v1220, 4
  %v1226 = vshrl.u32 %v1146, 16
  %v1228 = vrot.slane %v1226, 7
  %v1229 = vshll.u32 %v1146, 16
  %v1231 = vor.u32 %v1228, %v1229
  %v1232 = vrot.slane %v1228, 4
  %v1234 = vshrl.u32 %v1147, 16
  %v1236 = vrot.slane %v1234, 7
  %v1237 = vshll.u32 %v1147, 16
  %v1239 = vor.u32 %v1236, %v1237
  %v1240 = vrot.slane %v1236, 4
  %v1242 = vshrl.u32 %v1148, 16
  %v1244 = vrot.slane %v1242, 7
  %v1245 = vshll.u32 %v1148, 16
  %v1247 = vor.u32 %v1244, %v1245
  %v1248 = vrot.slane %v1244, 4
  %v1250 = vshrl.u32 %v1149, 16
  %v1252 = vrot.slane %v1250, 7
  %v1253 = vshll.u32 %v1149, 16
  %v1255 = vor.u32 %v1252, %v1253
  %v1256 = vrot.slane %v1252, 4
  %v1258 = vshrl.u32 %v1150, 16
  %v1260 = vrot.slane %v1258, 7
  %v1261 = vshll.u32 %v1150, 16
  %v1263 = vor.u32 %v1260, %v1261
  %v1264 = vrot.slane %v1260, 4
  %v1266 = vshrl.u32 %v1151, 16
  %v1268 = vrot.slane %v1266, 7
  %v1269 = vshll.u32 %v1151, 16
  %v1271 = vor.u32 %v1268, %v1269
  %v1272 = vrot.slane %v1268, 4
  %v1274 = vshrl.u32 %v1152, 16
  %v1276 = vrot.slane %v1274, 7
  %v1277 = vshll.u32 %v1152, 16
  %v1279 = vor.u32 %v1276, %v1277
  %v1280 = vrot.slane %v1276, 4
  %s1313 = scalar_lea.vmem [#allocation2], 8
  %vm1314 = vcmask 1043456
  %vm1315 = vsmask.f32 7938
  %vm1316 = vmand %vm1314, %vm1315
  %v1317 = vld [vmem:[%s1313] sm:$0xf]
  %v1318 = vsel %vm1316, %v1159, %v1317
  %1319 = vst [vmem:[%s1313] sm:$0xf] %v1318
  %v1320 = vld [vmem:[%s1313 + $0x4] sm:$0x1]
  %v1321 = vsel %vm837, %v1160, %v1320
  %1322 = vst [vmem:[%s1313 + $0x4] sm:$0x1] %v1321
  %v1323 = vld [vmem:[%s1313 + $0x8] sm:$0xf]
  %v1324 = vsel %vm1316, %v1167, %v1323
  %1325 = vst [vmem:[%s1313 + $0x8] sm:$0xf] %v1324
  %v1326 = vld [vmem:[%s1313 + $0xc] sm:$0x1]
  %v1327 = vsel %vm837, %v1168, %v1326
  %1328 = vst [vmem:[%s1313 + $0xc] sm:$0x1] %v1327
  %v1329 = vld [vmem:[%s1313 + $0x10] sm:$0xf]
  %v1330 = vsel %vm1316, %v1175, %v1329
  %1331 = vst [vmem:[%s1313 + $0x10] sm:$0xf] %v1330
  %v1332 = vld [vmem:[%s1313 + $0x14] sm:$0x1]
  %v1333 = vsel %vm837, %v1176, %v1332
  %1334 = vst [vmem:[%s1313 + $0x14] sm:$0x1] %v1333
  %v1335 = vld [vmem:[%s1313 + $0x18] sm:$0xf]
  %v1336 = vsel %vm1316, %v1183, %v1335
  %1337 = vst [vmem:[%s1313 + $0x18] sm:$0xf] %v1336
  %v1338 = vld [vmem:[%s1313 + $0x1c] sm:$0x1]
  %v1339 = vsel %vm837, %v1184, %v1338
  %1340 = vst [vmem:[%s1313 + $0x1c] sm:$0x1] %v1339
  %v1341 = vld [vmem:[%s1313 + $0x20] sm:$0xf]
  %v1342 = vsel %vm1316, %v1191, %v1341
  %1343 = vst [vmem:[%s1313 + $0x20] sm:$0xf] %v1342
  %v1344 = vld [vmem:[%s1313 + $0x24] sm:$0x1]
  %v1345 = vsel %vm837, %v1192, %v1344
  %1346 = vst [vmem:[%s1313 + $0x24] sm:$0x1] %v1345
  %v1347 = vld [vmem:[%s1313 + $0x28] sm:$0xf]
  %v1348 = vsel %vm1316, %v1199, %v1347
  %1349 = vst [vmem:[%s1313 + $0x28] sm:$0xf] %v1348
  %v1350 = vld [vmem:[%s1313 + $0x2c] sm:$0x1]
  %v1351 = vsel %vm837, %v1200, %v1350
  %1352 = vst [vmem:[%s1313 + $0x2c] sm:$0x1] %v1351
  %v1353 = vld [vmem:[%s1313 + $0x30] sm:$0xf]
  %v1354 = vsel %vm1316, %v1207, %v1353
  %1355 = vst [vmem:[%s1313 + $0x30] sm:$0xf] %v1354
  %v1356 = vld [vmem:[%s1313 + $0x34] sm:$0x1]
  %v1357 = vsel %vm837, %v1208, %v1356
  %1358 = vst [vmem:[%s1313 + $0x34] sm:$0x1] %v1357
  %v1359 = vld [vmem:[%s1313 + $0x38] sm:$0xf]
  %v1360 = vsel %vm1316, %v1215, %v1359
  %1361 = vst [vmem:[%s1313 + $0x38] sm:$0xf] %v1360
  %v1362 = vld [vmem:[%s1313 + $0x3c] sm:$0x1]
  %v1363 = vsel %vm837, %v1216, %v1362
  %1364 = vst [vmem:[%s1313 + $0x3c] sm:$0x1] %v1363
  %v1365 = vld [vmem:[%s1313 + $0x48] sm:$0xf]
  %v1366 = vsel %vm1316, %v1223, %v1365
  %1367 = vst [vmem:[%s1313 + $0x48] sm:$0xf] %v1366
  %v1368 = vld [vmem:[%s1313 + $0x4c] sm:$0x1]
  %v1369 = vsel %vm837, %v1224, %v1368
  %1370 = vst [vmem:[%s1313 + $0x4c] sm:$0x1] %v1369
  %v1371 = vld [vmem:[%s1313 + $0x50] sm:$0xf]
  %v1372 = vsel %vm1316, %v1231, %v1371
  %1373 = vst [vmem:[%s1313 + $0x50] sm:$0xf] %v1372
  %v1374 = vld [vmem:[%s1313 + $0x54] sm:$0x1]
  %v1375 = vsel %vm837, %v1232, %v1374
  %1376 = vst [vmem:[%s1313 + $0x54] sm:$0x1] %v1375
  %v1377 = vld [vmem:[%s1313 + $0x58] sm:$0xf]
  %v1378 = vsel %vm1316, %v1239, %v1377
  %1379 = vst [vmem:[%s1313 + $0x58] sm:$0xf] %v1378
  %v1380 = vld [vmem:[%s1313 + $0x5c] sm:$0x1]
  %v1381 = vsel %vm837, %v1240, %v1380
  %1382 = vst [vmem:[%s1313 + $0x5c] sm:$0x1] %v1381
  %v1383 = vld [vmem:[%s1313 + $0x60] sm:$0xf]
  %v1384 = vsel %vm1316, %v1247, %v1383
  %1385 = vst [vmem:[%s1313 + $0x60] sm:$0xf] %v1384
  %v1386 = vld [vmem:[%s1313 + $0x64] sm:$0x1]
  %v1387 = vsel %vm837, %v1248, %v1386
  %1388 = vst [vmem:[%s1313 + $0x64] sm:$0x1] %v1387
  %v1389 = vld [vmem:[%s1313 + $0x68] sm:$0xf]
  %v1390 = vsel %vm1316, %v1255, %v1389
  %1391 = vst [vmem:[%s1313 + $0x68] sm:$0xf] %v1390
  %v1392 = vld [vmem:[%s1313 + $0x6c] sm:$0x1]
  %v1393 = vsel %vm837, %v1256, %v1392
  %1394 = vst [vmem:[%s1313 + $0x6c] sm:$0x1] %v1393
  %v1395 = vld [vmem:[%s1313 + $0x70] sm:$0xf]
  %v1396 = vsel %vm1316, %v1263, %v1395
  %1397 = vst [vmem:[%s1313 + $0x70] sm:$0xf] %v1396
  %v1398 = vld [vmem:[%s1313 + $0x74] sm:$0x1]
  %v1399 = vsel %vm837, %v1264, %v1398
  %1400 = vst [vmem:[%s1313 + $0x74] sm:$0x1] %v1399
  %v1401 = vld [vmem:[%s1313 + $0x78] sm:$0xf]
  %v1402 = vsel %vm1316, %v1271, %v1401
  %1403 = vst [vmem:[%s1313 + $0x78] sm:$0xf] %v1402
  %v1404 = vld [vmem:[%s1313 + $0x7c] sm:$0x1]
  %v1405 = vsel %vm837, %v1272, %v1404
  %1406 = vst [vmem:[%s1313 + $0x7c] sm:$0x1] %v1405
  %v1407 = vld [vmem:[%s1313 + $0x80] sm:$0xf]
  %v1408 = vsel %vm1316, %v1279, %v1407
  %1409 = vst [vmem:[%s1313 + $0x80] sm:$0xf] %v1408
  %v1410 = vld [vmem:[%s1313 + $0x84] sm:$0x1]
  %v1411 = vsel %vm837, %v1280, %v1410
  %1412 = vst [vmem:[%s1313 + $0x84] sm:$0x1] %v1411
  %v1413 = vpack.c.bf16 %v771, %v771
  %v1414 = vpack.c.bf16 %v773, %v773
  %v1415 = vpack.c.bf16 %v775, %v775
  %v1416 = vpack.c.bf16 %v777, %v777
  %v1417 = vpack.c.bf16 %v779, %v779
  %v1418 = vpack.c.bf16 %v781, %v781
  %v1419 = vpack.c.bf16 %v783, %v783
  %v1420 = vpack.c.bf16 %v785, %v785
  %v1421 = vpack.c.bf16 %v803, %v803
  %v1422 = vpack.c.bf16 %v805, %v805
  %v1423 = vpack.c.bf16 %v807, %v807
  %v1424 = vpack.c.bf16 %v809, %v809
  %v1425 = vpack.c.bf16 %v811, %v811
  %v1426 = vpack.c.bf16 %v813, %v813
  %v1427 = vpack.c.bf16 %v815, %v815
  %v1428 = vpack.c.bf16 %v817, %v817
  %s1429 = scalar_lea.vmem [#allocation2], 152
  %1430 = vst [vmem:[%s1429] sm:$0xf] %v1413
  %1431 = vst [vmem:[%s1429 + $0x8] sm:$0xf] %v1414
  %1432 = vst [vmem:[%s1429 + $0x10] sm:$0xf] %v1415
  %1433 = vst [vmem:[%s1429 + $0x18] sm:$0xf] %v1416
  %1434 = vst [vmem:[%s1429 + $0x20] sm:$0xf] %v1417
  %1435 = vst [vmem:[%s1429 + $0x28] sm:$0xf] %v1418
  %1436 = vst [vmem:[%s1429 + $0x30] sm:$0xf] %v1419
  %1437 = vst [vmem:[%s1429 + $0x38] sm:$0xf] %v1420
  %1438 = vst [vmem:[%s1429 + $0x48] sm:$0xf] %v1421
  %1439 = vst [vmem:[%s1429 + $0x50] sm:$0xf] %v1422
  %1440 = vst [vmem:[%s1429 + $0x58] sm:$0xf] %v1423
  %1441 = vst [vmem:[%s1429 + $0x60] sm:$0xf] %v1424
  %1442 = vst [vmem:[%s1429 + $0x68] sm:$0xf] %v1425
  %1443 = vst [vmem:[%s1429 + $0x70] sm:$0xf] %v1426
  %1444 = vst [vmem:[%s1429 + $0x78] sm:$0xf] %v1427
  %1445 = vst [vmem:[%s1429 + $0x80] sm:$0xf] %v1428
  %v1446 = vpack.c.bf16 %v786, %v786
  %v1447 = vpack.c.bf16 %v788, %v788
  %v1448 = vpack.c.bf16 %v790, %v790
  %v1449 = vpack.c.bf16 %v792, %v792
  %v1450 = vpack.c.bf16 %v794, %v794
  %v1451 = vpack.c.bf16 %v796, %v796
  %v1452 = vpack.c.bf16 %v798, %v798
  %v1453 = vpack.c.bf16 %v800, %v800
  %v1454 = vpack.c.bf16 %v818, %v818
  %v1455 = vpack.c.bf16 %v820, %v820
  %v1456 = vpack.c.bf16 %v822, %v822
  %v1457 = vpack.c.bf16 %v824, %v824
  %v1458 = vpack.c.bf16 %v826, %v826
  %v1459 = vpack.c.bf16 %v828, %v828
  %v1460 = vpack.c.bf16 %v830, %v830
  %v1461 = vpack.c.bf16 %v832, %v832
  %v1478 = vunpack.c.l.b16 %v1446
  %v1479 = vunpack.c.l.b16 %v1447
  %v1480 = vunpack.c.l.b16 %v1448
  %v1481 = vunpack.c.l.b16 %v1449
  %v1482 = vunpack.c.l.b16 %v1450
  %v1483 = vunpack.c.l.b16 %v1451
  %v1484 = vunpack.c.l.b16 %v1452
  %v1485 = vunpack.c.l.b16 %v1453
  %v1486 = vunpack.c.l.b16 %v1454
  %v1487 = vunpack.c.l.b16 %v1455
  %v1488 = vunpack.c.l.b16 %v1456
  %v1489 = vunpack.c.l.b16 %v1457
  %v1490 = vunpack.c.l.b16 %v1458
  %v1491 = vunpack.c.l.b16 %v1459
  %v1492 = vunpack.c.l.b16 %v1460
  %v1493 = vunpack.c.l.b16 %v1461
  %v1494 = vpack.c.b16 %v1478, %v1478
  %v1495 = vpack.c.b16 %v1479, %v1479
  %v1496 = vpack.c.b16 %v1480, %v1480
  %v1497 = vpack.c.b16 %v1481, %v1481
  %v1498 = vpack.c.b16 %v1482, %v1482
  %v1499 = vpack.c.b16 %v1483, %v1483
  %v1500 = vpack.c.b16 %v1484, %v1484
  %v1501 = vpack.c.b16 %v1485, %v1485
  %v1502 = vpack.c.b16 %v1486, %v1486
  %v1503 = vpack.c.b16 %v1487, %v1487
  %v1504 = vpack.c.b16 %v1488, %v1488
  %v1505 = vpack.c.b16 %v1489, %v1489
  %v1506 = vpack.c.b16 %v1490, %v1490
  %v1507 = vpack.c.b16 %v1491, %v1491
  %v1508 = vpack.c.b16 %v1492, %v1492
  %v1509 = vpack.c.b16 %v1493, %v1493
  %v1511 = vshrl.u32 %v1494, 16
  %v1513 = vrot.slane %v1511, 7
  %v1514 = vshll.u32 %v1494, 16
  %v1516 = vor.u32 %v1513, %v1514
  %v1517 = vrot.slane %v1513, 4
  %v1519 = vshrl.u32 %v1495, 16
  %v1521 = vrot.slane %v1519, 7
  %v1522 = vshll.u32 %v1495, 16
  %v1524 = vor.u32 %v1521, %v1522
  %v1525 = vrot.slane %v1521, 4
  %v1527 = vshrl.u32 %v1496, 16
  %v1529 = vrot.slane %v1527, 7
  %v1530 = vshll.u32 %v1496, 16
  %v1532 = vor.u32 %v1529, %v1530
  %v1533 = vrot.slane %v1529, 4
  %v1535 = vshrl.u32 %v1497, 16
  %v1537 = vrot.slane %v1535, 7
  %v1538 = vshll.u32 %v1497, 16
  %v1540 = vor.u32 %v1537, %v1538
  %v1541 = vrot.slane %v1537, 4
  %v1543 = vshrl.u32 %v1498, 16
  %v1545 = vrot.slane %v1543, 7
  %v1546 = vshll.u32 %v1498, 16
  %v1548 = vor.u32 %v1545, %v1546
  %v1549 = vrot.slane %v1545, 4
  %v1551 = vshrl.u32 %v1499, 16
  %v1553 = vrot.slane %v1551, 7
  %v1554 = vshll.u32 %v1499, 16
  %v1556 = vor.u32 %v1553, %v1554
  %v1557 = vrot.slane %v1553, 4
  %v1559 = vshrl.u32 %v1500, 16
  %v1561 = vrot.slane %v1559, 7
  %v1562 = vshll.u32 %v1500, 16
  %v1564 = vor.u32 %v1561, %v1562
  %v1565 = vrot.slane %v1561, 4
  %v1567 = vshrl.u32 %v1501, 16
  %v1569 = vrot.slane %v1567, 7
  %v1570 = vshll.u32 %v1501, 16
  %v1572 = vor.u32 %v1569, %v1570
  %v1573 = vrot.slane %v1569, 4
  %v1575 = vshrl.u32 %v1502, 16
  %v1577 = vrot.slane %v1575, 7
  %v1578 = vshll.u32 %v1502, 16
  %v1580 = vor.u32 %v1577, %v1578
  %v1581 = vrot.slane %v1577, 4
  %v1583 = vshrl.u32 %v1503, 16
  %v1585 = vrot.slane %v1583, 7
  %v1586 = vshll.u32 %v1503, 16
  %v1588 = vor.u32 %v1585, %v1586
  %v1589 = vrot.slane %v1585, 4
  %v1591 = vshrl.u32 %v1504, 16
  %v1593 = vrot.slane %v1591, 7
  %v1594 = vshll.u32 %v1504, 16
  %v1596 = vor.u32 %v1593, %v1594
  %v1597 = vrot.slane %v1593, 4
  %v1599 = vshrl.u32 %v1505, 16
  %v1601 = vrot.slane %v1599, 7
  %v1602 = vshll.u32 %v1505, 16
  %v1604 = vor.u32 %v1601, %v1602
  %v1605 = vrot.slane %v1601, 4
  %v1607 = vshrl.u32 %v1506, 16
  %v1609 = vrot.slane %v1607, 7
  %v1610 = vshll.u32 %v1506, 16
  %v1612 = vor.u32 %v1609, %v1610
  %v1613 = vrot.slane %v1609, 4
  %v1615 = vshrl.u32 %v1507, 16
  %v1617 = vrot.slane %v1615, 7
  %v1618 = vshll.u32 %v1507, 16
  %v1620 = vor.u32 %v1617, %v1618
  %v1621 = vrot.slane %v1617, 4
  %v1623 = vshrl.u32 %v1508, 16
  %v1625 = vrot.slane %v1623, 7
  %v1626 = vshll.u32 %v1508, 16
  %v1628 = vor.u32 %v1625, %v1626
  %v1629 = vrot.slane %v1625, 4
  %v1631 = vshrl.u32 %v1509, 16
  %v1633 = vrot.slane %v1631, 7
  %v1634 = vshll.u32 %v1509, 16
  %v1636 = vor.u32 %v1633, %v1634
  %v1637 = vrot.slane %v1633, 4
  %v1670 = vld [vmem:[%s924] sm:$0xf]
  %v1671 = vsel %vm1316, %v1516, %v1670
  %1672 = vst [vmem:[%s924] sm:$0xf] %v1671
  %v1673 = vld [vmem:[%s924 + $0x4] sm:$0x1]
  %v1674 = vsel %vm837, %v1517, %v1673
  %1675 = vst [vmem:[%s924 + $0x4] sm:$0x1] %v1674
  %v1676 = vld [vmem:[%s924 + $0x8] sm:$0xf]
  %v1677 = vsel %vm1316, %v1524, %v1676
  %1678 = vst [vmem:[%s924 + $0x8] sm:$0xf] %v1677
  %v1679 = vld [vmem:[%s924 + $0xc] sm:$0x1]
  %v1680 = vsel %vm837, %v1525, %v1679
  %1681 = vst [vmem:[%s924 + $0xc] sm:$0x1] %v1680
  %v1682 = vld [vmem:[%s924 + $0x10] sm:$0xf]
  %v1683 = vsel %vm1316, %v1532, %v1682
  %1684 = vst [vmem:[%s924 + $0x10] sm:$0xf] %v1683
  %v1685 = vld [vmem:[%s924 + $0x14] sm:$0x1]
  %v1686 = vsel %vm837, %v1533, %v1685
  %1687 = vst [vmem:[%s924 + $0x14] sm:$0x1] %v1686
  %v1688 = vld [vmem:[%s924 + $0x18] sm:$0xf]
  %v1689 = vsel %vm1316, %v1540, %v1688
  %1690 = vst [vmem:[%s924 + $0x18] sm:$0xf] %v1689
  %v1691 = vld [vmem:[%s924 + $0x1c] sm:$0x1]
  %v1692 = vsel %vm837, %v1541, %v1691
  %1693 = vst [vmem:[%s924 + $0x1c] sm:$0x1] %v1692
  %v1694 = vld [vmem:[%s924 + $0x20] sm:$0xf]
  %v1695 = vsel %vm1316, %v1548, %v1694
  %1696 = vst [vmem:[%s924 + $0x20] sm:$0xf] %v1695
  %v1697 = vld [vmem:[%s924 + $0x24] sm:$0x1]
  %v1698 = vsel %vm837, %v1549, %v1697
  %1699 = vst [vmem:[%s924 + $0x24] sm:$0x1] %v1698
  %v1700 = vld [vmem:[%s924 + $0x28] sm:$0xf]
  %v1701 = vsel %vm1316, %v1556, %v1700
  %1702 = vst [vmem:[%s924 + $0x28] sm:$0xf] %v1701
  %v1703 = vld [vmem:[%s924 + $0x2c] sm:$0x1]
  %v1704 = vsel %vm837, %v1557, %v1703
  %1705 = vst [vmem:[%s924 + $0x2c] sm:$0x1] %v1704
  %v1706 = vld [vmem:[%s924 + $0x30] sm:$0xf]
  %v1707 = vsel %vm1316, %v1564, %v1706
  %1708 = vst [vmem:[%s924 + $0x30] sm:$0xf] %v1707
  %v1709 = vld [vmem:[%s924 + $0x34] sm:$0x1]
  %v1710 = vsel %vm837, %v1565, %v1709
  %1711 = vst [vmem:[%s924 + $0x34] sm:$0x1] %v1710
  %v1712 = vld [vmem:[%s924 + $0x38] sm:$0xf]
  %v1713 = vsel %vm1316, %v1572, %v1712
  %1714 = vst [vmem:[%s924 + $0x38] sm:$0xf] %v1713
  %v1715 = vld [vmem:[%s924 + $0x3c] sm:$0x1]
  %v1716 = vsel %vm837, %v1573, %v1715
  %1717 = vst [vmem:[%s924 + $0x3c] sm:$0x1] %v1716
  %v1718 = vld [vmem:[%s924 + $0x48] sm:$0xf]
  %v1719 = vsel %vm1316, %v1580, %v1718
  %1720 = vst [vmem:[%s924 + $0x48] sm:$0xf] %v1719
  %v1721 = vld [vmem:[%s924 + $0x4c] sm:$0x1]
  %v1722 = vsel %vm837, %v1581, %v1721
  %1723 = vst [vmem:[%s924 + $0x4c] sm:$0x1] %v1722
  %v1724 = vld [vmem:[%s924 + $0x50] sm:$0xf]
  %v1725 = vsel %vm1316, %v1588, %v1724
  %1726 = vst [vmem:[%s924 + $0x50] sm:$0xf] %v1725
  %v1727 = vld [vmem:[%s924 + $0x54] sm:$0x1]
  %v1728 = vsel %vm837, %v1589, %v1727
  %1729 = vst [vmem:[%s924 + $0x54] sm:$0x1] %v1728
  %v1730 = vld [vmem:[%s924 + $0x58] sm:$0xf]
  %v1731 = vsel %vm1316, %v1596, %v1730
  %1732 = vst [vmem:[%s924 + $0x58] sm:$0xf] %v1731
  %v1733 = vld [vmem:[%s924 + $0x5c] sm:$0x1]
  %v1734 = vsel %vm837, %v1597, %v1733
  %1735 = vst [vmem:[%s924 + $0x5c] sm:$0x1] %v1734
  %v1736 = vld [vmem:[%s924 + $0x60] sm:$0xf]
  %v1737 = vsel %vm1316, %v1604, %v1736
  %1738 = vst [vmem:[%s924 + $0x60] sm:$0xf] %v1737
  %v1739 = vld [vmem:[%s924 + $0x64] sm:$0x1]
  %v1740 = vsel %vm837, %v1605, %v1739
  %1741 = vst [vmem:[%s924 + $0x64] sm:$0x1] %v1740
  %v1742 = vld [vmem:[%s924 + $0x68] sm:$0xf]
  %v1743 = vsel %vm1316, %v1612, %v1742
  %1744 = vst [vmem:[%s924 + $0x68] sm:$0xf] %v1743
  %v1745 = vld [vmem:[%s924 + $0x6c] sm:$0x1]
  %v1746 = vsel %vm837, %v1613, %v1745
  %1747 = vst [vmem:[%s924 + $0x6c] sm:$0x1] %v1746
  %v1748 = vld [vmem:[%s924 + $0x70] sm:$0xf]
  %v1749 = vsel %vm1316, %v1620, %v1748
  %1750 = vst [vmem:[%s924 + $0x70] sm:$0xf] %v1749
  %v1751 = vld [vmem:[%s924 + $0x74] sm:$0x1]
  %v1752 = vsel %vm837, %v1621, %v1751
  %1753 = vst [vmem:[%s924 + $0x74] sm:$0x1] %v1752
  %v1754 = vld [vmem:[%s924 + $0x78] sm:$0xf]
  %v1755 = vsel %vm1316, %v1628, %v1754
  %1756 = vst [vmem:[%s924 + $0x78] sm:$0xf] %v1755
  %v1757 = vld [vmem:[%s924 + $0x7c] sm:$0x1]
  %v1758 = vsel %vm837, %v1629, %v1757
  %1759 = vst [vmem:[%s924 + $0x7c] sm:$0x1] %v1758
  %v1760 = vld [vmem:[%s924 + $0x80] sm:$0xf]
  %v1761 = vsel %vm1316, %v1636, %v1760
  %1762 = vst [vmem:[%s924 + $0x80] sm:$0xf] %v1761
  %v1763 = vld [vmem:[%s924 + $0x84] sm:$0x1]
  %v1764 = vsel %vm837, %v1637, %v1763
  %1765 = vst [vmem:[%s924 + $0x84] sm:$0x1] %v1764
  %v1766 = vpack.c.bf16 %v787, %v787
  %v1767 = vpack.c.bf16 %v789, %v789
  %v1768 = vpack.c.bf16 %v791, %v791
  %v1769 = vpack.c.bf16 %v793, %v793
  %v1770 = vpack.c.bf16 %v795, %v795
  %v1771 = vpack.c.bf16 %v797, %v797
  %v1772 = vpack.c.bf16 %v799, %v799
  %v1773 = vpack.c.bf16 %v801, %v801
  %v1774 = vpack.c.bf16 %v819, %v819
  %v1775 = vpack.c.bf16 %v821, %v821
  %v1776 = vpack.c.bf16 %v823, %v823
  %v1777 = vpack.c.bf16 %v825, %v825
  %v1778 = vpack.c.bf16 %v827, %v827
  %v1779 = vpack.c.bf16 %v829, %v829
  %v1780 = vpack.c.bf16 %v831, %v831
  %v1781 = vpack.c.bf16 %v833, %v833
  %1782 = vst [vmem:[%s1034] sm:$0xf] %v1766
  %1783 = vst [vmem:[%s1034 + $0x8] sm:$0xf] %v1767
  %1784 = vst [vmem:[%s1034 + $0x10] sm:$0xf] %v1768
  %1785 = vst [vmem:[%s1034 + $0x18] sm:$0xf] %v1769
  %1786 = vst [vmem:[%s1034 + $0x20] sm:$0xf] %v1770
  %1787 = vst [vmem:[%s1034 + $0x28] sm:$0xf] %v1771
  %1788 = vst [vmem:[%s1034 + $0x30] sm:$0xf] %v1772
  %1789 = vst [vmem:[%s1034 + $0x38] sm:$0xf] %v1773
  %1790 = vst [vmem:[%s1034 + $0x48] sm:$0xf] %v1774
  %1791 = vst [vmem:[%s1034 + $0x50] sm:$0xf] %v1775
  %1792 = vst [vmem:[%s1034 + $0x58] sm:$0xf] %v1776
  %1793 = vst [vmem:[%s1034 + $0x60] sm:$0xf] %v1777
  %1794 = vst [vmem:[%s1034 + $0x68] sm:$0xf] %v1778
  %1795 = vst [vmem:[%s1034 + $0x70] sm:$0xf] %v1779
  %1796 = vst [vmem:[%s1034 + $0x78] sm:$0xf] %v1780
  %1797 = vst [vmem:[%s1034 + $0x80] sm:$0xf] %v1781
  %v1798 = vld [vmem:[#allocation2] sm:$0xf]
  %v1799 = vld [vmem:[#allocation2 + $0x8] sm:$0xf]
  %v1800 = vld [vmem:[#allocation2 + $0x10] sm:$0xf]
  %v1801 = vld [vmem:[#allocation2 + $0x18] sm:$0xf]
  %v1802 = vld [vmem:[#allocation2 + $0x20] sm:$0xf]
  %v1803 = vld [vmem:[#allocation2 + $0x28] sm:$0xf]
  %v1804 = vld [vmem:[#allocation2 + $0x30] sm:$0xf]
  %v1805 = vld [vmem:[#allocation2 + $0x38] sm:$0xf]
  %v1806 = vld [vmem:[#allocation2 + $0x48] sm:$0xf]
  %v1807 = vld [vmem:[#allocation2 + $0x50] sm:$0xf]
  %v1808 = vld [vmem:[#allocation2 + $0x58] sm:$0xf]
  %v1809 = vld [vmem:[#allocation2 + $0x60] sm:$0xf]
  %v1810 = vld [vmem:[#allocation2 + $0x68] sm:$0xf]
  %v1811 = vld [vmem:[#allocation2 + $0x70] sm:$0xf]
  %v1812 = vld [vmem:[#allocation2 + $0x78] sm:$0xf]
  %v1813 = vld [vmem:[#allocation2 + $0x80] sm:$0xf]
  %1814 = vst [vmem:[#allocation3] sm:$0xf] %v1798
  %1815 = vst [vmem:[#allocation3 + $0x40] sm:$0xf] %v1799
  %1816 = vst [vmem:[#allocation3 + $0x80] sm:$0xf] %v1800
  %1817 = vst [vmem:[#allocation3 + $0xc0] sm:$0xf] %v1801
  %1818 = vst [vmem:[#allocation3 + $0x100] sm:$0xf] %v1802
  %1819 = vst [vmem:[#allocation3 + $0x140] sm:$0xf] %v1803
  %1820 = vst [vmem:[#allocation3 + $0x180] sm:$0xf] %v1804
  %1821 = vst [vmem:[#allocation3 + $0x1c0] sm:$0xf] %v1805
  %1822 = vst [vmem:[#allocation3 + $0x200] sm:$0xf] %v1806
  %1823 = vst [vmem:[#allocation3 + $0x240] sm:$0xf] %v1807
  %1824 = vst [vmem:[#allocation3 + $0x280] sm:$0xf] %v1808
  %1825 = vst [vmem:[#allocation3 + $0x2c0] sm:$0xf] %v1809
  %1826 = vst [vmem:[#allocation3 + $0x300] sm:$0xf] %v1810
  %1827 = vst [vmem:[#allocation3 + $0x340] sm:$0xf] %v1811
  %1828 = vst [vmem:[#allocation3 + $0x380] sm:$0xf] %v1812
  %1829 = vst [vmem:[#allocation3 + $0x3c0] sm:$0xf] %v1813
  %v1830 = vld [vmem:[%s979] sm:$0xf]
  %v1831 = vld [vmem:[%s979 + $0x8] sm:$0xf]
  %v1832 = vld [vmem:[%s979 + $0x10] sm:$0xf]
  %v1833 = vld [vmem:[%s979 + $0x18] sm:$0xf]
  %v1834 = vld [vmem:[%s979 + $0x20] sm:$0xf]
  %v1835 = vld [vmem:[%s979 + $0x28] sm:$0xf]
  %v1836 = vld [vmem:[%s979 + $0x30] sm:$0xf]
  %v1837 = vld [vmem:[%s979 + $0x38] sm:$0xf]
  %v1838 = vld [vmem:[%s979 + $0x48] sm:$0xf]
  %v1839 = vld [vmem:[%s979 + $0x50] sm:$0xf]
  %v1840 = vld [vmem:[%s979 + $0x58] sm:$0xf]
  %v1841 = vld [vmem:[%s979 + $0x60] sm:$0xf]
  %v1842 = vld [vmem:[%s979 + $0x68] sm:$0xf]
  %v1843 = vld [vmem:[%s979 + $0x70] sm:$0xf]
  %v1844 = vld [vmem:[%s979 + $0x78] sm:$0xf]
  %v1845 = vld [vmem:[%s979 + $0x80] sm:$0xf]
  %1846 = vst [vmem:[#allocation3 + $0x4] sm:$0xf] %v1830
  %1847 = vst [vmem:[#allocation3 + $0x44] sm:$0xf] %v1831
  %1848 = vst [vmem:[#allocation3 + $0x84] sm:$0xf] %v1832
  %1849 = vst [vmem:[#allocation3 + $0xc4] sm:$0xf] %v1833
  %1850 = vst [vmem:[#allocation3 + $0x104] sm:$0xf] %v1834
  %1851 = vst [vmem:[#allocation3 + $0x144] sm:$0xf] %v1835
  %1852 = vst [vmem:[#allocation3 + $0x184] sm:$0xf] %v1836
  %1853 = vst [vmem:[#allocation3 + $0x1c4] sm:$0xf] %v1837
  %1854 = vst [vmem:[#allocation3 + $0x204] sm:$0xf] %v1838
  %1855 = vst [vmem:[#allocation3 + $0x244] sm:$0xf] %v1839
  %1856 = vst [vmem:[#allocation3 + $0x284] sm:$0xf] %v1840
  %1857 = vst [vmem:[#allocation3 + $0x2c4] sm:$0xf] %v1841
  %1858 = vst [vmem:[#allocation3 + $0x304] sm:$0xf] %v1842
  %1859 = vst [vmem:[#allocation3 + $0x344] sm:$0xf] %v1843
  %1860 = vst [vmem:[#allocation3 + $0x384] sm:$0xf] %v1844
  %1861 = vst [vmem:[#allocation3 + $0x3c4] sm:$0xf] %v1845
  %v1862 = vld [vmem:[#allocation2] sm:$0xf]
  %v1863 = vld [vmem:[#allocation2 + $0x4] sm:$0x1]
  %v1864 = vld [vmem:[#allocation2 + $0x8] sm:$0xf]
  %v1865 = vld [vmem:[#allocation2 + $0xc] sm:$0x1]
  %v1866 = vld [vmem:[#allocation2 + $0x10] sm:$0xf]
  %v1867 = vld [vmem:[#allocation2 + $0x14] sm:$0x1]
  %v1868 = vld [vmem:[#allocation2 + $0x18] sm:$0xf]
  %v1869 = vld [vmem:[#allocation2 + $0x1c] sm:$0x1]
  %v1870 = vld [vmem:[#allocation2 + $0x20] sm:$0xf]
  %v1871 = vld [vmem:[#allocation2 + $0x24] sm:$0x1]
  %v1872 = vld [vmem:[#allocation2 + $0x28] sm:$0xf]
  %v1873 = vld [vmem:[#allocation2 + $0x2c] sm:$0x1]
  %v1874 = vld [vmem:[#allocation2 + $0x30] sm:$0xf]
  %v1875 = vld [vmem:[#allocation2 + $0x34] sm:$0x1]
  %v1876 = vld [vmem:[#allocation2 + $0x38] sm:$0xf]
  %v1877 = vld [vmem:[#allocation2 + $0x3c] sm:$0x1]
  %v1878 = vld [vmem:[#allocation2 + $0x48] sm:$0xf]
  %v1879 = vld [vmem:[#allocation2 + $0x4c] sm:$0x1]
  %v1880 = vld [vmem:[#allocation2 + $0x50] sm:$0xf]
  %v1881 = vld [vmem:[#allocation2 + $0x54] sm:$0x1]
  %v1882 = vld [vmem:[#allocation2 + $0x58] sm:$0xf]
  %v1883 = vld [vmem:[#allocation2 + $0x5c] sm:$0x1]
  %v1884 = vld [vmem:[#allocation2 + $0x60] sm:$0xf]
  %v1885 = vld [vmem:[#allocation2 + $0x64] sm:$0x1]
  %v1886 = vld [vmem:[#allocation2 + $0x68] sm:$0xf]
  %v1887 = vld [vmem:[#allocation2 + $0x6c] sm:$0x1]
  %v1888 = vld [vmem:[#allocation2 + $0x70] sm:$0xf]
  %v1889 = vld [vmem:[#allocation2 + $0x74] sm:$0x1]
  %v1890 = vld [vmem:[#allocation2 + $0x78] sm:$0xf]
  %v1891 = vld [vmem:[#allocation2 + $0x7c] sm:$0x1]
  %v1892 = vld [vmem:[#allocation2 + $0x80] sm:$0xf]
  %v1893 = vld [vmem:[#allocation2 + $0x84] sm:$0x1]
  %vm1894 = vsmask.f32 3328
  %vm1895 = vsmask.f32 7440
  %vm1896 = vmor %vm1894, %vm1895
  %v1898 = vshrl.u32 %v1862, 16
  %v1900 = vrot.slane %v1898, 4
  %v1901 = vshll.u32 %v1862, 16
  %v1903 = vrot.slane %v1901, 5
  %v1904 = vor.u32 %v1900, %v1903
  %v1905 = vrot.slane %v1904, 4
  %v1907 = vshll.u32 %v1863, 16
  %v1909 = vrot.slane %v1907, 5
  %v1910 = vsel %vm1896, %v1905, %v1909
  %v1912 = vshrl.u32 %v1864, 16
  %v1914 = vrot.slane %v1912, 4
  %v1915 = vshll.u32 %v1864, 16
  %v1917 = vrot.slane %v1915, 5
  %v1918 = vor.u32 %v1914, %v1917
  %v1919 = vrot.slane %v1918, 4
  %v1921 = vshll.u32 %v1865, 16
  %v1923 = vrot.slane %v1921, 5
  %v1924 = vsel %vm1896, %v1919, %v1923
  %v1926 = vshrl.u32 %v1866, 16
  %v1928 = vrot.slane %v1926, 4
  %v1929 = vshll.u32 %v1866, 16
  %v1931 = vrot.slane %v1929, 5
  %v1932 = vor.u32 %v1928, %v1931
  %v1933 = vrot.slane %v1932, 4
  %v1935 = vshll.u32 %v1867, 16
  %v1937 = vrot.slane %v1935, 5
  %v1938 = vsel %vm1896, %v1933, %v1937
  %v1940 = vshrl.u32 %v1868, 16
  %v1942 = vrot.slane %v1940, 4
  %v1943 = vshll.u32 %v1868, 16
  %v1945 = vrot.slane %v1943, 5
  %v1946 = vor.u32 %v1942, %v1945
  %v1947 = vrot.slane %v1946, 4
  %v1949 = vshll.u32 %v1869, 16
  %v1951 = vrot.slane %v1949, 5
  %v1952 = vsel %vm1896, %v1947, %v1951
  %v1954 = vshrl.u32 %v1870, 16
  %v1956 = vrot.slane %v1954, 4
  %v1957 = vshll.u32 %v1870, 16
  %v1959 = vrot.slane %v1957, 5
  %v1960 = vor.u32 %v1956, %v1959
  %v1961 = vrot.slane %v1960, 4
  %v1963 = vshll.u32 %v1871, 16
  %v1965 = vrot.slane %v1963, 5
  %v1966 = vsel %vm1896, %v1961, %v1965
  %v1968 = vshrl.u32 %v1872, 16
  %v1970 = vrot.slane %v1968, 4
  %v1971 = vshll.u32 %v1872, 16
  %v1973 = vrot.slane %v1971, 5
  %v1974 = vor.u32 %v1970, %v1973
  %v1975 = vrot.slane %v1974, 4
  %v1977 = vshll.u32 %v1873, 16
  %v1979 = vrot.slane %v1977, 5
  %v1980 = vsel %vm1896, %v1975, %v1979
  %v1982 = vshrl.u32 %v1874, 16
  %v1984 = vrot.slane %v1982, 4
  %v1985 = vshll.u32 %v1874, 16
  %v1987 = vrot.slane %v1985, 5
  %v1988 = vor.u32 %v1984, %v1987
  %v1989 = vrot.slane %v1988, 4
  %v1991 = vshll.u32 %v1875, 16
  %v1993 = vrot.slane %v1991, 5
  %v1994 = vsel %vm1896, %v1989, %v1993
  %v1996 = vshrl.u32 %v1876, 16
  %v1998 = vrot.slane %v1996, 4
  %v1999 = vshll.u32 %v1876, 16
  %v2001 = vrot.slane %v1999, 5
  %v2002 = vor.u32 %v1998, %v2001
  %v2003 = vrot.slane %v2002, 4
  %v2005 = vshll.u32 %v1877, 16
  %v2007 = vrot.slane %v2005, 5
  %v2008 = vsel %vm1896, %v2003, %v2007
  %v2010 = vshrl.u32 %v1878, 16
  %v2012 = vrot.slane %v2010, 4
  %v2013 = vshll.u32 %v1878, 16
  %v2015 = vrot.slane %v2013, 5
  %v2016 = vor.u32 %v2012, %v2015
  %v2017 = vrot.slane %v2016, 4
  %v2019 = vshll.u32 %v1879, 16
  %v2021 = vrot.slane %v2019, 5
  %v2022 = vsel %vm1896, %v2017, %v2021
  %v2024 = vshrl.u32 %v1880, 16
  %v2026 = vrot.slane %v2024, 4
  %v2027 = vshll.u32 %v1880, 16
  %v2029 = vrot.slane %v2027, 5
  %v2030 = vor.u32 %v2026, %v2029
  %v2031 = vrot.slane %v2030, 4
  %v2033 = vshll.u32 %v1881, 16
  %v2035 = vrot.slane %v2033, 5
  %v2036 = vsel %vm1896, %v2031, %v2035
  %v2038 = vshrl.u32 %v1882, 16
  %v2040 = vrot.slane %v2038, 4
  %v2041 = vshll.u32 %v1882, 16
  %v2043 = vrot.slane %v2041, 5
  %v2044 = vor.u32 %v2040, %v2043
  %v2045 = vrot.slane %v2044, 4
  %v2047 = vshll.u32 %v1883, 16
  %v2049 = vrot.slane %v2047, 5
  %v2050 = vsel %vm1896, %v2045, %v2049
  %v2052 = vshrl.u32 %v1884, 16
  %v2054 = vrot.slane %v2052, 4
  %v2055 = vshll.u32 %v1884, 16
  %v2057 = vrot.slane %v2055, 5
  %v2058 = vor.u32 %v2054, %v2057
  %v2059 = vrot.slane %v2058, 4
  %v2061 = vshll.u32 %v1885, 16
  %v2063 = vrot.slane %v2061, 5
  %v2064 = vsel %vm1896, %v2059, %v2063
  %v2066 = vshrl.u32 %v1886, 16
  %v2068 = vrot.slane %v2066, 4
  %v2069 = vshll.u32 %v1886, 16
  %v2071 = vrot.slane %v2069, 5
  %v2072 = vor.u32 %v2068, %v2071
  %v2073 = vrot.slane %v2072, 4
  %v2075 = vshll.u32 %v1887, 16
  %v2077 = vrot.slane %v2075, 5
  %v2078 = vsel %vm1896, %v2073, %v2077
  %v2080 = vshrl.u32 %v1888, 16
  %v2082 = vrot.slane %v2080, 4
  %v2083 = vshll.u32 %v1888, 16
  %v2085 = vrot.slane %v2083, 5
  %v2086 = vor.u32 %v2082, %v2085
  %v2087 = vrot.slane %v2086, 4
  %v2089 = vshll.u32 %v1889, 16
  %v2091 = vrot.slane %v2089, 5
  %v2092 = vsel %vm1896, %v2087, %v2091
  %v2094 = vshrl.u32 %v1890, 16
  %v2096 = vrot.slane %v2094, 4
  %v2097 = vshll.u32 %v1890, 16
  %v2099 = vrot.slane %v2097, 5
  %v2100 = vor.u32 %v2096, %v2099
  %v2101 = vrot.slane %v2100, 4
  %v2103 = vshll.u32 %v1891, 16
  %v2105 = vrot.slane %v2103, 5
  %v2106 = vsel %vm1896, %v2101, %v2105
  %v2108 = vshrl.u32 %v1892, 16
  %v2110 = vrot.slane %v2108, 4
  %v2111 = vshll.u32 %v1892, 16
  %v2113 = vrot.slane %v2111, 5
  %v2114 = vor.u32 %v2110, %v2113
  %v2115 = vrot.slane %v2114, 4
  %v2117 = vshll.u32 %v1893, 16
  %v2119 = vrot.slane %v2117, 5
  %v2120 = vsel %vm1896, %v2115, %v2119
  %2137 = vst [vmem:[#allocation3 + $0x8] sm:$0xf] %v1910
  %2138 = vst [vmem:[#allocation3 + $0x48] sm:$0xf] %v1924
  %2139 = vst [vmem:[#allocation3 + $0x88] sm:$0xf] %v1938
  %2140 = vst [vmem:[#allocation3 + $0xc8] sm:$0xf] %v1952
  %2141 = vst [vmem:[#allocation3 + $0x108] sm:$0xf] %v1966
  %2142 = vst [vmem:[#allocation3 + $0x148] sm:$0xf] %v1980
  %2143 = vst [vmem:[#allocation3 + $0x188] sm:$0xf] %v1994
  %2144 = vst [vmem:[#allocation3 + $0x1c8] sm:$0xf] %v2008
  %2145 = vst [vmem:[#allocation3 + $0x208] sm:$0xf] %v2022
  %2146 = vst [vmem:[#allocation3 + $0x248] sm:$0xf] %v2036
  %2147 = vst [vmem:[#allocation3 + $0x288] sm:$0xf] %v2050
  %2148 = vst [vmem:[#allocation3 + $0x2c8] sm:$0xf] %v2064
  %2149 = vst [vmem:[#allocation3 + $0x308] sm:$0xf] %v2078
  %2150 = vst [vmem:[#allocation3 + $0x348] sm:$0xf] %v2092
  %2151 = vst [vmem:[#allocation3 + $0x388] sm:$0xf] %v2106
  %2152 = vst [vmem:[#allocation3 + $0x3c8] sm:$0xf] %v2120
  %v2153 = vld [vmem:[%s979] sm:$0xf]
  %v2154 = vld [vmem:[%s979 + $0x4] sm:$0x1]
  %v2155 = vld [vmem:[%s979 + $0x8] sm:$0xf]
  %v2156 = vld [vmem:[%s979 + $0xc] sm:$0x1]
  %v2157 = vld [vmem:[%s979 + $0x10] sm:$0xf]
  %v2158 = vld [vmem:[%s979 + $0x14] sm:$0x1]
  %v2159 = vld [vmem:[%s979 + $0x18] sm:$0xf]
  %v2160 = vld [vmem:[%s979 + $0x1c] sm:$0x1]
  %v2161 = vld [vmem:[%s979 + $0x20] sm:$0xf]
  %v2162 = vld [vmem:[%s979 + $0x24] sm:$0x1]
  %v2163 = vld [vmem:[%s979 + $0x28] sm:$0xf]
  %v2164 = vld [vmem:[%s979 + $0x2c] sm:$0x1]
  %v2165 = vld [vmem:[%s979 + $0x30] sm:$0xf]
  %v2166 = vld [vmem:[%s979 + $0x34] sm:$0x1]
  %v2167 = vld [vmem:[%s979 + $0x38] sm:$0xf]
  %v2168 = vld [vmem:[%s979 + $0x3c] sm:$0x1]
  %v2169 = vld [vmem:[%s979 + $0x48] sm:$0xf]
  %v2170 = vld [vmem:[%s979 + $0x4c] sm:$0x1]
  %v2171 = vld [vmem:[%s979 + $0x50] sm:$0xf]
  %v2172 = vld [vmem:[%s979 + $0x54] sm:$0x1]
  %v2173 = vld [vmem:[%s979 + $0x58] sm:$0xf]
  %v2174 = vld [vmem:[%s979 + $0x5c] sm:$0x1]
  %v2175 = vld [vmem:[%s979 + $0x60] sm:$0xf]
  %v2176 = vld [vmem:[%s979 + $0x64] sm:$0x1]
  %v2177 = vld [vmem:[%s979 + $0x68] sm:$0xf]
  %v2178 = vld [vmem:[%s979 + $0x6c] sm:$0x1]
  %v2179 = vld [vmem:[%s979 + $0x70] sm:$0xf]
  %v2180 = vld [vmem:[%s979 + $0x74] sm:$0x1]
  %v2181 = vld [vmem:[%s979 + $0x78] sm:$0xf]
  %v2182 = vld [vmem:[%s979 + $0x7c] sm:$0x1]
  %v2183 = vld [vmem:[%s979 + $0x80] sm:$0xf]
  %v2184 = vld [vmem:[%s979 + $0x84] sm:$0x1]
  %v2186 = vshrl.u32 %v2153, 16
  %v2188 = vrot.slane %v2186, 4
  %v2189 = vshll.u32 %v2153, 16
  %v2191 = vrot.slane %v2189, 5
  %v2192 = vor.u32 %v2188, %v2191
  %v2193 = vrot.slane %v2192, 4
  %v2195 = vshll.u32 %v2154, 16
  %v2197 = vrot.slane %v2195, 5
  %v2198 = vsel %vm1896, %v2193, %v2197
  %v2200 = vshrl.u32 %v2155, 16
  %v2202 = vrot.slane %v2200, 4
  %v2203 = vshll.u32 %v2155, 16
  %v2205 = vrot.slane %v2203, 5
  %v2206 = vor.u32 %v2202, %v2205
  %v2207 = vrot.slane %v2206, 4
  %v2209 = vshll.u32 %v2156, 16
  %v2211 = vrot.slane %v2209, 5
  %v2212 = vsel %vm1896, %v2207, %v2211
  %v2214 = vshrl.u32 %v2157, 16
  %v2216 = vrot.slane %v2214, 4
  %v2217 = vshll.u32 %v2157, 16
  %v2219 = vrot.slane %v2217, 5
  %v2220 = vor.u32 %v2216, %v2219
  %v2221 = vrot.slane %v2220, 4
  %v2223 = vshll.u32 %v2158, 16
  %v2225 = vrot.slane %v2223, 5
  %v2226 = vsel %vm1896, %v2221, %v2225
  %v2228 = vshrl.u32 %v2159, 16
  %v2230 = vrot.slane %v2228, 4
  %v2231 = vshll.u32 %v2159, 16
  %v2233 = vrot.slane %v2231, 5
  %v2234 = vor.u32 %v2230, %v2233
  %v2235 = vrot.slane %v2234, 4
  %v2237 = vshll.u32 %v2160, 16
  %v2239 = vrot.slane %v2237, 5
  %v2240 = vsel %vm1896, %v2235, %v2239
  %v2242 = vshrl.u32 %v2161, 16
  %v2244 = vrot.slane %v2242, 4
  %v2245 = vshll.u32 %v2161, 16
  %v2247 = vrot.slane %v2245, 5
  %v2248 = vor.u32 %v2244, %v2247
  %v2249 = vrot.slane %v2248, 4
  %v2251 = vshll.u32 %v2162, 16
  %v2253 = vrot.slane %v2251, 5
  %v2254 = vsel %vm1896, %v2249, %v2253
  %v2256 = vshrl.u32 %v2163, 16
  %v2258 = vrot.slane %v2256, 4
  %v2259 = vshll.u32 %v2163, 16
  %v2261 = vrot.slane %v2259, 5
  %v2262 = vor.u32 %v2258, %v2261
  %v2263 = vrot.slane %v2262, 4
  %v2265 = vshll.u32 %v2164, 16
  %v2267 = vrot.slane %v2265, 5
  %v2268 = vsel %vm1896, %v2263, %v2267
  %v2270 = vshrl.u32 %v2165, 16
  %v2272 = vrot.slane %v2270, 4
  %v2273 = vshll.u32 %v2165, 16
  %v2275 = vrot.slane %v2273, 5
  %v2276 = vor.u32 %v2272, %v2275
  %v2277 = vrot.slane %v2276, 4
  %v2279 = vshll.u32 %v2166, 16
  %v2281 = vrot.slane %v2279, 5
  %v2282 = vsel %vm1896, %v2277, %v2281
  %v2284 = vshrl.u32 %v2167, 16
  %v2286 = vrot.slane %v2284, 4
  %v2287 = vshll.u32 %v2167, 16
  %v2289 = vrot.slane %v2287, 5
  %v2290 = vor.u32 %v2286, %v2289
  %v2291 = vrot.slane %v2290, 4
  %v2293 = vshll.u32 %v2168, 16
  %v2295 = vrot.slane %v2293, 5
  %v2296 = vsel %vm1896, %v2291, %v2295
  %v2298 = vshrl.u32 %v2169, 16
  %v2300 = vrot.slane %v2298, 4
  %v2301 = vshll.u32 %v2169, 16
  %v2303 = vrot.slane %v2301, 5
  %v2304 = vor.u32 %v2300, %v2303
  %v2305 = vrot.slane %v2304, 4
  %v2307 = vshll.u32 %v2170, 16
  %v2309 = vrot.slane %v2307, 5
  %v2310 = vsel %vm1896, %v2305, %v2309
  %v2312 = vshrl.u32 %v2171, 16
  %v2314 = vrot.slane %v2312, 4
  %v2315 = vshll.u32 %v2171, 16
  %v2317 = vrot.slane %v2315, 5
  %v2318 = vor.u32 %v2314, %v2317
  %v2319 = vrot.slane %v2318, 4
  %v2321 = vshll.u32 %v2172, 16
  %v2323 = vrot.slane %v2321, 5
  %v2324 = vsel %vm1896, %v2319, %v2323
  %v2326 = vshrl.u32 %v2173, 16
  %v2328 = vrot.slane %v2326, 4
  %v2329 = vshll.u32 %v2173, 16
  %v2331 = vrot.slane %v2329, 5
  %v2332 = vor.u32 %v2328, %v2331
  %v2333 = vrot.slane %v2332, 4
  %v2335 = vshll.u32 %v2174, 16
  %v2337 = vrot.slane %v2335, 5
  %v2338 = vsel %vm1896, %v2333, %v2337
  %v2340 = vshrl.u32 %v2175, 16
  %v2342 = vrot.slane %v2340, 4
  %v2343 = vshll.u32 %v2175, 16
  %v2345 = vrot.slane %v2343, 5
  %v2346 = vor.u32 %v2342, %v2345
  %v2347 = vrot.slane %v2346, 4
  %v2349 = vshll.u32 %v2176, 16
  %v2351 = vrot.slane %v2349, 5
  %v2352 = vsel %vm1896, %v2347, %v2351
  %v2354 = vshrl.u32 %v2177, 16
  %v2356 = vrot.slane %v2354, 4
  %v2357 = vshll.u32 %v2177, 16
  %v2359 = vrot.slane %v2357, 5
  %v2360 = vor.u32 %v2356, %v2359
  %v2361 = vrot.slane %v2360, 4
  %v2363 = vshll.u32 %v2178, 16
  %v2365 = vrot.slane %v2363, 5
  %v2366 = vsel %vm1896, %v2361, %v2365
  %v2368 = vshrl.u32 %v2179, 16
  %v2370 = vrot.slane %v2368, 4
  %v2371 = vshll.u32 %v2179, 16
  %v2373 = vrot.slane %v2371, 5
  %v2374 = vor.u32 %v2370, %v2373
  %v2375 = vrot.slane %v2374, 4
  %v2377 = vshll.u32 %v2180, 16
  %v2379 = vrot.slane %v2377, 5
  %v2380 = vsel %vm1896, %v2375, %v2379
  %v2382 = vshrl.u32 %v2181, 16
  %v2384 = vrot.slane %v2382, 4
  %v2385 = vshll.u32 %v2181, 16
  %v2387 = vrot.slane %v2385, 5
  %v2388 = vor.u32 %v2384, %v2387
  %v2389 = vrot.slane %v2388, 4
  %v2391 = vshll.u32 %v2182, 16
  %v2393 = vrot.slane %v2391, 5
  %v2394 = vsel %vm1896, %v2389, %v2393
  %v2396 = vshrl.u32 %v2183, 16
  %v2398 = vrot.slane %v2396, 4
  %v2399 = vshll.u32 %v2183, 16
  %v2401 = vrot.slane %v2399, 5
  %v2402 = vor.u32 %v2398, %v2401
  %v2403 = vrot.slane %v2402, 4
  %v2405 = vshll.u32 %v2184, 16
  %v2407 = vrot.slane %v2405, 5
  %v2408 = vsel %vm1896, %v2403, %v2407
  %2425 = vst [vmem:[#allocation3 + $0xc] sm:$0xf] %v2198
  %2426 = vst [vmem:[#allocation3 + $0x4c] sm:$0xf] %v2212
  %2427 = vst [vmem:[#allocation3 + $0x8c] sm:$0xf] %v2226
  %2428 = vst [vmem:[#allocation3 + $0xcc] sm:$0xf] %v2240
  %2429 = vst [vmem:[#allocation3 + $0x10c] sm:$0xf] %v2254
  %2430 = vst [vmem:[#allocation3 + $0x14c] sm:$0xf] %v2268
  %2431 = vst [vmem:[#allocation3 + $0x18c] sm:$0xf] %v2282
  %2432 = vst [vmem:[#allocation3 + $0x1cc] sm:$0xf] %v2296
  %2433 = vst [vmem:[#allocation3 + $0x20c] sm:$0xf] %v2310
  %2434 = vst [vmem:[#allocation3 + $0x24c] sm:$0xf] %v2324
  %2435 = vst [vmem:[#allocation3 + $0x28c] sm:$0xf] %v2338
  %2436 = vst [vmem:[#allocation3 + $0x2cc] sm:$0xf] %v2352
  %2437 = vst [vmem:[#allocation3 + $0x30c] sm:$0xf] %v2366
  %2438 = vst [vmem:[#allocation3 + $0x34c] sm:$0xf] %v2380
  %2439 = vst [vmem:[#allocation3 + $0x38c] sm:$0xf] %v2394
  %2440 = vst [vmem:[#allocation3 + $0x3cc] sm:$0xf] %v2408
  %v2441 = vld [vmem:[%s924] sm:$0xf]
  %v2442 = vld [vmem:[%s924 + $0x8] sm:$0xf]
  %v2443 = vld [vmem:[%s924 + $0x10] sm:$0xf]
  %v2444 = vld [vmem:[%s924 + $0x18] sm:$0xf]
  %v2445 = vld [vmem:[%s924 + $0x20] sm:$0xf]
  %v2446 = vld [vmem:[%s924 + $0x28] sm:$0xf]
  %v2447 = vld [vmem:[%s924 + $0x30] sm:$0xf]
  %v2448 = vld [vmem:[%s924 + $0x38] sm:$0xf]
  %v2449 = vld [vmem:[%s924 + $0x48] sm:$0xf]
  %v2450 = vld [vmem:[%s924 + $0x50] sm:$0xf]
  %v2451 = vld [vmem:[%s924 + $0x58] sm:$0xf]
  %v2452 = vld [vmem:[%s924 + $0x60] sm:$0xf]
  %v2453 = vld [vmem:[%s924 + $0x68] sm:$0xf]
  %v2454 = vld [vmem:[%s924 + $0x70] sm:$0xf]
  %v2455 = vld [vmem:[%s924 + $0x78] sm:$0xf]
  %v2456 = vld [vmem:[%s924 + $0x80] sm:$0xf]
  %2457 = vst [vmem:[#allocation3 + $0x10] sm:$0xf] %v2441
  %2458 = vst [vmem:[#allocation3 + $0x50] sm:$0xf] %v2442
  %2459 = vst [vmem:[#allocation3 + $0x90] sm:$0xf] %v2443
  %2460 = vst [vmem:[#allocation3 + $0xd0] sm:$0xf] %v2444
  %2461 = vst [vmem:[#allocation3 + $0x110] sm:$0xf] %v2445
  %2462 = vst [vmem:[#allocation3 + $0x150] sm:$0xf] %v2446
  %2463 = vst [vmem:[#allocation3 + $0x190] sm:$0xf] %v2447
  %2464 = vst [vmem:[#allocation3 + $0x1d0] sm:$0xf] %v2448
  %2465 = vst [vmem:[#allocation3 + $0x210] sm:$0xf] %v2449
  %2466 = vst [vmem:[#allocation3 + $0x250] sm:$0xf] %v2450
  %2467 = vst [vmem:[#allocation3 + $0x290] sm:$0xf] %v2451
  %2468 = vst [vmem:[#allocation3 + $0x2d0] sm:$0xf] %v2452
  %2469 = vst [vmem:[#allocation3 + $0x310] sm:$0xf] %v2453
  %2470 = vst [vmem:[#allocation3 + $0x350] sm:$0xf] %v2454
  %2471 = vst [vmem:[#allocation3 + $0x390] sm:$0xf] %v2455
  %2472 = vst [vmem:[#allocation3 + $0x3d0] sm:$0xf] %v2456
  %v2473 = vld [vmem:[%s1034] sm:$0xf]
  %v2474 = vld [vmem:[%s1034 + $0x8] sm:$0xf]
  %v2475 = vld [vmem:[%s1034 + $0x10] sm:$0xf]
  %v2476 = vld [vmem:[%s1034 + $0x18] sm:$0xf]
  %v2477 = vld [vmem:[%s1034 + $0x20] sm:$0xf]
  %v2478 = vld [vmem:[%s1034 + $0x28] sm:$0xf]
  %v2479 = vld [vmem:[%s1034 + $0x30] sm:$0xf]
  %v2480 = vld [vmem:[%s1034 + $0x38] sm:$0xf]
  %v2481 = vld [vmem:[%s1034 + $0x48] sm:$0xf]
  %v2482 = vld [vmem:[%s1034 + $0x50] sm:$0xf]
  %v2483 = vld [vmem:[%s1034 + $0x58] sm:$0xf]
  %v2484 = vld [vmem:[%s1034 + $0x60] sm:$0xf]
  %v2485 = vld [vmem:[%s1034 + $0x68] sm:$0xf]
  %v2486 = vld [vmem:[%s1034 + $0x70] sm:$0xf]
  %v2487 = vld [vmem:[%s1034 + $0x78] sm:$0xf]
  %v2488 = vld [vmem:[%s1034 + $0x80] sm:$0xf]
  %2489 = vst [vmem:[#allocation3 + $0x14] sm:$0xf] %v2473
  %2490 = vst [vmem:[#allocation3 + $0x54] sm:$0xf] %v2474
  %2491 = vst [vmem:[#allocation3 + $0x94] sm:$0xf] %v2475
  %2492 = vst [vmem:[#allocation3 + $0xd4] sm:$0xf] %v2476
  %2493 = vst [vmem:[#allocation3 + $0x114] sm:$0xf] %v2477
  %2494 = vst [vmem:[#allocation3 + $0x154] sm:$0xf] %v2478
  %2495 = vst [vmem:[#allocation3 + $0x194] sm:$0xf] %v2479
  %2496 = vst [vmem:[#allocation3 + $0x1d4] sm:$0xf] %v2480
  %2497 = vst [vmem:[#allocation3 + $0x214] sm:$0xf] %v2481
  %2498 = vst [vmem:[#allocation3 + $0x254] sm:$0xf] %v2482
  %2499 = vst [vmem:[#allocation3 + $0x294] sm:$0xf] %v2483
  %2500 = vst [vmem:[#allocation3 + $0x2d4] sm:$0xf] %v2484
  %2501 = vst [vmem:[#allocation3 + $0x314] sm:$0xf] %v2485
  %2502 = vst [vmem:[#allocation3 + $0x354] sm:$0xf] %v2486
  %2503 = vst [vmem:[#allocation3 + $0x394] sm:$0xf] %v2487
  %2504 = vst [vmem:[#allocation3 + $0x3d4] sm:$0xf] %v2488
  %v2505 = vld [vmem:[%s924] sm:$0xf]
  %v2506 = vld [vmem:[%s924 + $0x4] sm:$0x1]
  %v2507 = vld [vmem:[%s924 + $0x8] sm:$0xf]
  %v2508 = vld [vmem:[%s924 + $0xc] sm:$0x1]
  %v2509 = vld [vmem:[%s924 + $0x10] sm:$0xf]
  %v2510 = vld [vmem:[%s924 + $0x14] sm:$0x1]
  %v2511 = vld [vmem:[%s924 + $0x18] sm:$0xf]
  %v2512 = vld [vmem:[%s924 + $0x1c] sm:$0x1]
  %v2513 = vld [vmem:[%s924 + $0x20] sm:$0xf]
  %v2514 = vld [vmem:[%s924 + $0x24] sm:$0x1]
  %v2515 = vld [vmem:[%s924 + $0x28] sm:$0xf]
  %v2516 = vld [vmem:[%s924 + $0x2c] sm:$0x1]
  %v2517 = vld [vmem:[%s924 + $0x30] sm:$0xf]
  %v2518 = vld [vmem:[%s924 + $0x34] sm:$0x1]
  %v2519 = vld [vmem:[%s924 + $0x38] sm:$0xf]
  %v2520 = vld [vmem:[%s924 + $0x3c] sm:$0x1]
  %v2521 = vld [vmem:[%s924 + $0x48] sm:$0xf]
  %v2522 = vld [vmem:[%s924 + $0x4c] sm:$0x1]
  %v2523 = vld [vmem:[%s924 + $0x50] sm:$0xf]
  %v2524 = vld [vmem:[%s924 + $0x54] sm:$0x1]
  %v2525 = vld [vmem:[%s924 + $0x58] sm:$0xf]
  %v2526 = vld [vmem:[%s924 + $0x5c] sm:$0x1]
  %v2527 = vld [vmem:[%s924 + $0x60] sm:$0xf]
  %v2528 = vld [vmem:[%s924 + $0x64] sm:$0x1]
  %v2529 = vld [vmem:[%s924 + $0x68] sm:$0xf]
  %v2530 = vld [vmem:[%s924 + $0x6c] sm:$0x1]
  %v2531 = vld [vmem:[%s924 + $0x70] sm:$0xf]
  %v2532 = vld [vmem:[%s924 + $0x74] sm:$0x1]
  %v2533 = vld [vmem:[%s924 + $0x78] sm:$0xf]
  %v2534 = vld [vmem:[%s924 + $0x7c] sm:$0x1]
  %v2535 = vld [vmem:[%s924 + $0x80] sm:$0xf]
  %v2536 = vld [vmem:[%s924 + $0x84] sm:$0x1]
  %v2538 = vshrl.u32 %v2505, 16
  %v2540 = vrot.slane %v2538, 4
  %v2541 = vshll.u32 %v2505, 16
  %v2543 = vrot.slane %v2541, 5
  %v2544 = vor.u32 %v2540, %v2543
  %v2545 = vrot.slane %v2544, 4
  %v2547 = vshll.u32 %v2506, 16
  %v2549 = vrot.slane %v2547, 5
  %v2550 = vsel %vm1896, %v2545, %v2549
  %v2552 = vshrl.u32 %v2507, 16
  %v2554 = vrot.slane %v2552, 4
  %v2555 = vshll.u32 %v2507, 16
  %v2557 = vrot.slane %v2555, 5
  %v2558 = vor.u32 %v2554, %v2557
  %v2559 = vrot.slane %v2558, 4
  %v2561 = vshll.u32 %v2508, 16
  %v2563 = vrot.slane %v2561, 5
  %v2564 = vsel %vm1896, %v2559, %v2563
  %v2566 = vshrl.u32 %v2509, 16
  %v2568 = vrot.slane %v2566, 4
  %v2569 = vshll.u32 %v2509, 16
  %v2571 = vrot.slane %v2569, 5
  %v2572 = vor.u32 %v2568, %v2571
  %v2573 = vrot.slane %v2572, 4
  %v2575 = vshll.u32 %v2510, 16
  %v2577 = vrot.slane %v2575, 5
  %v2578 = vsel %vm1896, %v2573, %v2577
  %v2580 = vshrl.u32 %v2511, 16
  %v2582 = vrot.slane %v2580, 4
  %v2583 = vshll.u32 %v2511, 16
  %v2585 = vrot.slane %v2583, 5
  %v2586 = vor.u32 %v2582, %v2585
  %v2587 = vrot.slane %v2586, 4
  %v2589 = vshll.u32 %v2512, 16
  %v2591 = vrot.slane %v2589, 5
  %v2592 = vsel %vm1896, %v2587, %v2591
  %v2594 = vshrl.u32 %v2513, 16
  %v2596 = vrot.slane %v2594, 4
  %v2597 = vshll.u32 %v2513, 16
  %v2599 = vrot.slane %v2597, 5
  %v2600 = vor.u32 %v2596, %v2599
  %v2601 = vrot.slane %v2600, 4
  %v2603 = vshll.u32 %v2514, 16
  %v2605 = vrot.slane %v2603, 5
  %v2606 = vsel %vm1896, %v2601, %v2605
  %v2608 = vshrl.u32 %v2515, 16
  %v2610 = vrot.slane %v2608, 4
  %v2611 = vshll.u32 %v2515, 16
  %v2613 = vrot.slane %v2611, 5
  %v2614 = vor.u32 %v2610, %v2613
  %v2615 = vrot.slane %v2614, 4
  %v2617 = vshll.u32 %v2516, 16
  %v2619 = vrot.slane %v2617, 5
  %v2620 = vsel %vm1896, %v2615, %v2619
  %v2622 = vshrl.u32 %v2517, 16
  %v2624 = vrot.slane %v2622, 4
  %v2625 = vshll.u32 %v2517, 16
  %v2627 = vrot.slane %v2625, 5
  %v2628 = vor.u32 %v2624, %v2627
  %v2629 = vrot.slane %v2628, 4
  %v2631 = vshll.u32 %v2518, 16
  %v2633 = vrot.slane %v2631, 5
  %v2634 = vsel %vm1896, %v2629, %v2633
  %v2636 = vshrl.u32 %v2519, 16
  %v2638 = vrot.slane %v2636, 4
  %v2639 = vshll.u32 %v2519, 16
  %v2641 = vrot.slane %v2639, 5
  %v2642 = vor.u32 %v2638, %v2641
  %v2643 = vrot.slane %v2642, 4
  %v2645 = vshll.u32 %v2520, 16
  %v2647 = vrot.slane %v2645, 5
  %v2648 = vsel %vm1896, %v2643, %v2647
  %v2650 = vshrl.u32 %v2521, 16
  %v2652 = vrot.slane %v2650, 4
  %v2653 = vshll.u32 %v2521, 16
  %v2655 = vrot.slane %v2653, 5
  %v2656 = vor.u32 %v2652, %v2655
  %v2657 = vrot.slane %v2656, 4
  %v2659 = vshll.u32 %v2522, 16
  %v2661 = vrot.slane %v2659, 5
  %v2662 = vsel %vm1896, %v2657, %v2661
  %v2664 = vshrl.u32 %v2523, 16
  %v2666 = vrot.slane %v2664, 4
  %v2667 = vshll.u32 %v2523, 16
  %v2669 = vrot.slane %v2667, 5
  %v2670 = vor.u32 %v2666, %v2669
  %v2671 = vrot.slane %v2670, 4
  %v2673 = vshll.u32 %v2524, 16
  %v2675 = vrot.slane %v2673, 5
  %v2676 = vsel %vm1896, %v2671, %v2675
  %v2678 = vshrl.u32 %v2525, 16
  %v2680 = vrot.slane %v2678, 4
  %v2681 = vshll.u32 %v2525, 16
  %v2683 = vrot.slane %v2681, 5
  %v2684 = vor.u32 %v2680, %v2683
  %v2685 = vrot.slane %v2684, 4
  %v2687 = vshll.u32 %v2526, 16
  %v2689 = vrot.slane %v2687, 5
  %v2690 = vsel %vm1896, %v2685, %v2689
  %v2692 = vshrl.u32 %v2527, 16
  %v2694 = vrot.slane %v2692, 4
  %v2695 = vshll.u32 %v2527, 16
  %v2697 = vrot.slane %v2695, 5
  %v2698 = vor.u32 %v2694, %v2697
  %v2699 = vrot.slane %v2698, 4
  %v2701 = vshll.u32 %v2528, 16
  %v2703 = vrot.slane %v2701, 5
  %v2704 = vsel %vm1896, %v2699, %v2703
  %v2706 = vshrl.u32 %v2529, 16
  %v2708 = vrot.slane %v2706, 4
  %v2709 = vshll.u32 %v2529, 16
  %v2711 = vrot.slane %v2709, 5
  %v2712 = vor.u32 %v2708, %v2711
  %v2713 = vrot.slane %v2712, 4
  %v2715 = vshll.u32 %v2530, 16
  %v2717 = vrot.slane %v2715, 5
  %v2718 = vsel %vm1896, %v2713, %v2717
  %v2720 = vshrl.u32 %v2531, 16
  %v2722 = vrot.slane %v2720, 4
  %v2723 = vshll.u32 %v2531, 16
  %v2725 = vrot.slane %v2723, 5
  %v2726 = vor.u32 %v2722, %v2725
  %v2727 = vrot.slane %v2726, 4
  %v2729 = vshll.u32 %v2532, 16
  %v2731 = vrot.slane %v2729, 5
  %v2732 = vsel %vm1896, %v2727, %v2731
  %v2734 = vshrl.u32 %v2533, 16
  %v2736 = vrot.slane %v2734, 4
  %v2737 = vshll.u32 %v2533, 16
  %v2739 = vrot.slane %v2737, 5
  %v2740 = vor.u32 %v2736, %v2739
  %v2741 = vrot.slane %v2740, 4
  %v2743 = vshll.u32 %v2534, 16
  %v2745 = vrot.slane %v2743, 5
  %v2746 = vsel %vm1896, %v2741, %v2745
  %v2748 = vshrl.u32 %v2535, 16
  %v2750 = vrot.slane %v2748, 4
  %v2751 = vshll.u32 %v2535, 16
  %v2753 = vrot.slane %v2751, 5
  %v2754 = vor.u32 %v2750, %v2753
  %v2755 = vrot.slane %v2754, 4
  %v2757 = vshll.u32 %v2536, 16
  %v2759 = vrot.slane %v2757, 5
  %v2760 = vsel %vm1896, %v2755, %v2759
  %2777 = vst [vmem:[#allocation3 + $0x18] sm:$0xf] %v2550
  %2778 = vst [vmem:[#allocation3 + $0x58] sm:$0xf] %v2564
  %2779 = vst [vmem:[#allocation3 + $0x98] sm:$0xf] %v2578
  %2780 = vst [vmem:[#allocation3 + $0xd8] sm:$0xf] %v2592
  %2781 = vst [vmem:[#allocation3 + $0x118] sm:$0xf] %v2606
  %2782 = vst [vmem:[#allocation3 + $0x158] sm:$0xf] %v2620
  %2783 = vst [vmem:[#allocation3 + $0x198] sm:$0xf] %v2634
  %2784 = vst [vmem:[#allocation3 + $0x1d8] sm:$0xf] %v2648
  %2785 = vst [vmem:[#allocation3 + $0x218] sm:$0xf] %v2662
  %2786 = vst [vmem:[#allocation3 + $0x258] sm:$0xf] %v2676
  %2787 = vst [vmem:[#allocation3 + $0x298] sm:$0xf] %v2690
  %2788 = vst [vmem:[#allocation3 + $0x2d8] sm:$0xf] %v2704
  %2789 = vst [vmem:[#allocation3 + $0x318] sm:$0xf] %v2718
  %2790 = vst [vmem:[#allocation3 + $0x358] sm:$0xf] %v2732
  %2791 = vst [vmem:[#allocation3 + $0x398] sm:$0xf] %v2746
  %2792 = vst [vmem:[#allocation3 + $0x3d8] sm:$0xf] %v2760
  %v2793 = vld [vmem:[%s1034] sm:$0xf]
  %v2794 = vld [vmem:[%s1034 + $0x4] sm:$0x1]
  %v2795 = vld [vmem:[%s1034 + $0x8] sm:$0xf]
  %v2796 = vld [vmem:[%s1034 + $0xc] sm:$0x1]
  %v2797 = vld [vmem:[%s1034 + $0x10] sm:$0xf]
  %v2798 = vld [vmem:[%s1034 + $0x14] sm:$0x1]
  %v2799 = vld [vmem:[%s1034 + $0x18] sm:$0xf]
  %v2800 = vld [vmem:[%s1034 + $0x1c] sm:$0x1]
  %v2801 = vld [vmem:[%s1034 + $0x20] sm:$0xf]
  %v2802 = vld [vmem:[%s1034 + $0x24] sm:$0x1]
  %v2803 = vld [vmem:[%s1034 + $0x28] sm:$0xf]
  %v2804 = vld [vmem:[%s1034 + $0x2c] sm:$0x1]
  %v2805 = vld [vmem:[%s1034 + $0x30] sm:$0xf]
  %v2806 = vld [vmem:[%s1034 + $0x34] sm:$0x1]
  %v2807 = vld [vmem:[%s1034 + $0x38] sm:$0xf]
  %v2808 = vld [vmem:[%s1034 + $0x3c] sm:$0x1]
  %v2809 = vld [vmem:[%s1034 + $0x48] sm:$0xf]
  %v2810 = vld [vmem:[%s1034 + $0x4c] sm:$0x1]
  %v2811 = vld [vmem:[%s1034 + $0x50] sm:$0xf]
  %v2812 = vld [vmem:[%s1034 + $0x54] sm:$0x1]
  %v2813 = vld [vmem:[%s1034 + $0x58] sm:$0xf]
  %v2814 = vld [vmem:[%s1034 + $0x5c] sm:$0x1]
  %v2815 = vld [vmem:[%s1034 + $0x60] sm:$0xf]
  %v2816 = vld [vmem:[%s1034 + $0x64] sm:$0x1]
  %v2817 = vld [vmem:[%s1034 + $0x68] sm:$0xf]
  %v2818 = vld [vmem:[%s1034 + $0x6c] sm:$0x1]
  %v2819 = vld [vmem:[%s1034 + $0x70] sm:$0xf]
  %v2820 = vld [vmem:[%s1034 + $0x74] sm:$0x1]
  %v2821 = vld [vmem:[%s1034 + $0x78] sm:$0xf]
  %v2822 = vld [vmem:[%s1034 + $0x7c] sm:$0x1]
  %v2823 = vld [vmem:[%s1034 + $0x80] sm:$0xf]
  %v2824 = vld [vmem:[%s1034 + $0x84] sm:$0x1]
  %v2826 = vshrl.u32 %v2793, 16
  %v2828 = vrot.slane %v2826, 4
  %v2829 = vshll.u32 %v2793, 16
  %v2831 = vrot.slane %v2829, 5
  %v2832 = vor.u32 %v2828, %v2831
  %v2833 = vrot.slane %v2832, 4
  %v2835 = vshll.u32 %v2794, 16
  %v2837 = vrot.slane %v2835, 5
  %v2838 = vsel %vm1896, %v2833, %v2837
  %v2840 = vshrl.u32 %v2795, 16
  %v2842 = vrot.slane %v2840, 4
  %v2843 = vshll.u32 %v2795, 16
  %v2845 = vrot.slane %v2843, 5
  %v2846 = vor.u32 %v2842, %v2845
  %v2847 = vrot.slane %v2846, 4
  %v2849 = vshll.u32 %v2796, 16
  %v2851 = vrot.slane %v2849, 5
  %v2852 = vsel %vm1896, %v2847, %v2851
  %v2854 = vshrl.u32 %v2797, 16
  %v2856 = vrot.slane %v2854, 4
  %v2857 = vshll.u32 %v2797, 16
  %v2859 = vrot.slane %v2857, 5
  %v2860 = vor.u32 %v2856, %v2859
  %v2861 = vrot.slane %v2860, 4
  %v2863 = vshll.u32 %v2798, 16
  %v2865 = vrot.slane %v2863, 5
  %v2866 = vsel %vm1896, %v2861, %v2865
  %v2868 = vshrl.u32 %v2799, 16
  %v2870 = vrot.slane %v2868, 4
  %v2871 = vshll.u32 %v2799, 16
  %v2873 = vrot.slane %v2871, 5
  %v2874 = vor.u32 %v2870, %v2873
  %v2875 = vrot.slane %v2874, 4
  %v2877 = vshll.u32 %v2800, 16
  %v2879 = vrot.slane %v2877, 5
  %v2880 = vsel %vm1896, %v2875, %v2879
  %v2882 = vshrl.u32 %v2801, 16
  %v2884 = vrot.slane %v2882, 4
  %v2885 = vshll.u32 %v2801, 16
  %v2887 = vrot.slane %v2885, 5
  %v2888 = vor.u32 %v2884, %v2887
  %v2889 = vrot.slane %v2888, 4
  %v2891 = vshll.u32 %v2802, 16
  %v2893 = vrot.slane %v2891, 5
  %v2894 = vsel %vm1896, %v2889, %v2893
  %v2896 = vshrl.u32 %v2803, 16
  %v2898 = vrot.slane %v2896, 4
  %v2899 = vshll.u32 %v2803, 16
  %v2901 = vrot.slane %v2899, 5
  %v2902 = vor.u32 %v2898, %v2901
  %v2903 = vrot.slane %v2902, 4
  %v2905 = vshll.u32 %v2804, 16
  %v2907 = vrot.slane %v2905, 5
  %v2908 = vsel %vm1896, %v2903, %v2907
  %v2910 = vshrl.u32 %v2805, 16
  %v2912 = vrot.slane %v2910, 4
  %v2913 = vshll.u32 %v2805, 16
  %v2915 = vrot.slane %v2913, 5
  %v2916 = vor.u32 %v2912, %v2915
  %v2917 = vrot.slane %v2916, 4
  %v2919 = vshll.u32 %v2806, 16
  %v2921 = vrot.slane %v2919, 5
  %v2922 = vsel %vm1896, %v2917, %v2921
  %v2924 = vshrl.u32 %v2807, 16
  %v2926 = vrot.slane %v2924, 4
  %v2927 = vshll.u32 %v2807, 16
  %v2929 = vrot.slane %v2927, 5
  %v2930 = vor.u32 %v2926, %v2929
  %v2931 = vrot.slane %v2930, 4
  %v2933 = vshll.u32 %v2808, 16
  %v2935 = vrot.slane %v2933, 5
  %v2936 = vsel %vm1896, %v2931, %v2935
  %v2938 = vshrl.u32 %v2809, 16
  %v2940 = vrot.slane %v2938, 4
  %v2941 = vshll.u32 %v2809, 16
  %v2943 = vrot.slane %v2941, 5
  %v2944 = vor.u32 %v2940, %v2943
  %v2945 = vrot.slane %v2944, 4
  %v2947 = vshll.u32 %v2810, 16
  %v2949 = vrot.slane %v2947, 5
  %v2950 = vsel %vm1896, %v2945, %v2949
  %v2952 = vshrl.u32 %v2811, 16
  %v2954 = vrot.slane %v2952, 4
  %v2955 = vshll.u32 %v2811, 16
  %v2957 = vrot.slane %v2955, 5
  %v2958 = vor.u32 %v2954, %v2957
  %v2959 = vrot.slane %v2958, 4
  %v2961 = vshll.u32 %v2812, 16
  %v2963 = vrot.slane %v2961, 5
  %v2964 = vsel %vm1896, %v2959, %v2963
  %v2966 = vshrl.u32 %v2813, 16
  %v2968 = vrot.slane %v2966, 4
  %v2969 = vshll.u32 %v2813, 16
  %v2971 = vrot.slane %v2969, 5
  %v2972 = vor.u32 %v2968, %v2971
  %v2973 = vrot.slane %v2972, 4
  %v2975 = vshll.u32 %v2814, 16
  %v2977 = vrot.slane %v2975, 5
  %v2978 = vsel %vm1896, %v2973, %v2977
  %v2980 = vshrl.u32 %v2815, 16
  %v2982 = vrot.slane %v2980, 4
  %v2983 = vshll.u32 %v2815, 16
  %v2985 = vrot.slane %v2983, 5
  %v2986 = vor.u32 %v2982, %v2985
  %v2987 = vrot.slane %v2986, 4
  %v2989 = vshll.u32 %v2816, 16
  %v2991 = vrot.slane %v2989, 5
  %v2992 = vsel %vm1896, %v2987, %v2991
  %v2994 = vshrl.u32 %v2817, 16
  %v2996 = vrot.slane %v2994, 4
  %v2997 = vshll.u32 %v2817, 16
  %v2999 = vrot.slane %v2997, 5
  %v3000 = vor.u32 %v2996, %v2999
  %v3001 = vrot.slane %v3000, 4
  %v3003 = vshll.u32 %v2818, 16
  %v3005 = vrot.slane %v3003, 5
  %v3006 = vsel %vm1896, %v3001, %v3005
  %v3008 = vshrl.u32 %v2819, 16
  %v3010 = vrot.slane %v3008, 4
  %v3011 = vshll.u32 %v2819, 16
  %v3013 = vrot.slane %v3011, 5
  %v3014 = vor.u32 %v3010, %v3013
  %v3015 = vrot.slane %v3014, 4
  %v3017 = vshll.u32 %v2820, 16
  %v3019 = vrot.slane %v3017, 5
  %v3020 = vsel %vm1896, %v3015, %v3019
  %v3022 = vshrl.u32 %v2821, 16
  %v3024 = vrot.slane %v3022, 4
  %v3025 = vshll.u32 %v2821, 16
  %v3027 = vrot.slane %v3025, 5
  %v3028 = vor.u32 %v3024, %v3027
  %v3029 = vrot.slane %v3028, 4
  %v3031 = vshll.u32 %v2822, 16
  %v3033 = vrot.slane %v3031, 5
  %v3034 = vsel %vm1896, %v3029, %v3033
  %v3036 = vshrl.u32 %v2823, 16
  %v3038 = vrot.slane %v3036, 4
  %v3039 = vshll.u32 %v2823, 16
  %v3041 = vrot.slane %v3039, 5
  %v3042 = vor.u32 %v3038, %v3041
  %v3043 = vrot.slane %v3042, 4
  %v3045 = vshll.u32 %v2824, 16
  %v3047 = vrot.slane %v3045, 5
  %v3048 = vsel %vm1896, %v3043, %v3047
  %3065 = vst [vmem:[#allocation3 + $0x1c] sm:$0xf] %v2838
  %3066 = vst [vmem:[#allocation3 + $0x5c] sm:$0xf] %v2852
  %3067 = vst [vmem:[#allocation3 + $0x9c] sm:$0xf] %v2866
  %3068 = vst [vmem:[#allocation3 + $0xdc] sm:$0xf] %v2880
  %3069 = vst [vmem:[#allocation3 + $0x11c] sm:$0xf] %v2894
  %3070 = vst [vmem:[#allocation3 + $0x15c] sm:$0xf] %v2908
  %3071 = vst [vmem:[#allocation3 + $0x19c] sm:$0xf] %v2922
  %3072 = vst [vmem:[#allocation3 + $0x1dc] sm:$0xf] %v2936
  %3073 = vst [vmem:[#allocation3 + $0x21c] sm:$0xf] %v2950
  %3074 = vst [vmem:[#allocation3 + $0x25c] sm:$0xf] %v2964
  %3075 = vst [vmem:[#allocation3 + $0x29c] sm:$0xf] %v2978
  %3076 = vst [vmem:[#allocation3 + $0x2dc] sm:$0xf] %v2992
  %3077 = vst [vmem:[#allocation3 + $0x31c] sm:$0xf] %v3006
  %3078 = vst [vmem:[#allocation3 + $0x35c] sm:$0xf] %v3020
  %3079 = vst [vmem:[#allocation3 + $0x39c] sm:$0xf] %v3034
  %3080 = vst [vmem:[#allocation3 + $0x3dc] sm:$0xf] %v3048
  %v3081 = vld [vmem:[%s1313] sm:$0xf]
  %v3082 = vld [vmem:[%s1313 + $0x8] sm:$0xf]
  %v3083 = vld [vmem:[%s1313 + $0x10] sm:$0xf]
  %v3084 = vld [vmem:[%s1313 + $0x18] sm:$0xf]
  %v3085 = vld [vmem:[%s1313 + $0x20] sm:$0xf]
  %v3086 = vld [vmem:[%s1313 + $0x28] sm:$0xf]
  %v3087 = vld [vmem:[%s1313 + $0x30] sm:$0xf]
  %v3088 = vld [vmem:[%s1313 + $0x38] sm:$0xf]
  %v3089 = vld [vmem:[%s1313 + $0x48] sm:$0xf]
  %v3090 = vld [vmem:[%s1313 + $0x50] sm:$0xf]
  %v3091 = vld [vmem:[%s1313 + $0x58] sm:$0xf]
  %v3092 = vld [vmem:[%s1313 + $0x60] sm:$0xf]
  %v3093 = vld [vmem:[%s1313 + $0x68] sm:$0xf]
  %v3094 = vld [vmem:[%s1313 + $0x70] sm:$0xf]
  %v3095 = vld [vmem:[%s1313 + $0x78] sm:$0xf]
  %v3096 = vld [vmem:[%s1313 + $0x80] sm:$0xf]
  %3097 = vst [vmem:[#allocation3 + $0x20] sm:$0xf] %v3081
  %3098 = vst [vmem:[#allocation3 + $0x60] sm:$0xf] %v3082
  %3099 = vst [vmem:[#allocation3 + $0xa0] sm:$0xf] %v3083
  %3100 = vst [vmem:[#allocation3 + $0xe0] sm:$0xf] %v3084
  %3101 = vst [vmem:[#allocation3 + $0x120] sm:$0xf] %v3085
  %3102 = vst [vmem:[#allocation3 + $0x160] sm:$0xf] %v3086
  %3103 = vst [vmem:[#allocation3 + $0x1a0] sm:$0xf] %v3087
  %3104 = vst [vmem:[#allocation3 + $0x1e0] sm:$0xf] %v3088
  %3105 = vst [vmem:[#allocation3 + $0x220] sm:$0xf] %v3089
  %3106 = vst [vmem:[#allocation3 + $0x260] sm:$0xf] %v3090
  %3107 = vst [vmem:[#allocation3 + $0x2a0] sm:$0xf] %v3091
  %3108 = vst [vmem:[#allocation3 + $0x2e0] sm:$0xf] %v3092
  %3109 = vst [vmem:[#allocation3 + $0x320] sm:$0xf] %v3093
  %3110 = vst [vmem:[#allocation3 + $0x360] sm:$0xf] %v3094
  %3111 = vst [vmem:[#allocation3 + $0x3a0] sm:$0xf] %v3095
  %3112 = vst [vmem:[#allocation3 + $0x3e0] sm:$0xf] %v3096
  %v3113 = vld [vmem:[%s1429] sm:$0xf]
  %v3114 = vld [vmem:[%s1429 + $0x8] sm:$0xf]
  %v3115 = vld [vmem:[%s1429 + $0x10] sm:$0xf]
  %v3116 = vld [vmem:[%s1429 + $0x18] sm:$0xf]
  %v3117 = vld [vmem:[%s1429 + $0x20] sm:$0xf]
  %v3118 = vld [vmem:[%s1429 + $0x28] sm:$0xf]
  %v3119 = vld [vmem:[%s1429 + $0x30] sm:$0xf]
  %v3120 = vld [vmem:[%s1429 + $0x38] sm:$0xf]
  %v3121 = vld [vmem:[%s1429 + $0x48] sm:$0xf]
  %v3122 = vld [vmem:[%s1429 + $0x50] sm:$0xf]
  %v3123 = vld [vmem:[%s1429 + $0x58] sm:$0xf]
  %v3124 = vld [vmem:[%s1429 + $0x60] sm:$0xf]
  %v3125 = vld [vmem:[%s1429 + $0x68] sm:$0xf]
  %v3126 = vld [vmem:[%s1429 + $0x70] sm:$0xf]
  %v3127 = vld [vmem:[%s1429 + $0x78] sm:$0xf]
  %v3128 = vld [vmem:[%s1429 + $0x80] sm:$0xf]
  %3129 = vst [vmem:[#allocation3 + $0x24] sm:$0xf] %v3113
  %3130 = vst [vmem:[#allocation3 + $0x64] sm:$0xf] %v3114
  %3131 = vst [vmem:[#allocation3 + $0xa4] sm:$0xf] %v3115
  %3132 = vst [vmem:[#allocation3 + $0xe4] sm:$0xf] %v3116
  %3133 = vst [vmem:[#allocation3 + $0x124] sm:$0xf] %v3117
  %3134 = vst [vmem:[#allocation3 + $0x164] sm:$0xf] %v3118
  %3135 = vst [vmem:[#allocation3 + $0x1a4] sm:$0xf] %v3119
  %3136 = vst [vmem:[#allocation3 + $0x1e4] sm:$0xf] %v3120
  %3137 = vst [vmem:[#allocation3 + $0x224] sm:$0xf] %v3121
  %3138 = vst [vmem:[#allocation3 + $0x264] sm:$0xf] %v3122
  %3139 = vst [vmem:[#allocation3 + $0x2a4] sm:$0xf] %v3123
  %3140 = vst [vmem:[#allocation3 + $0x2e4] sm:$0xf] %v3124
  %3141 = vst [vmem:[#allocation3 + $0x324] sm:$0xf] %v3125
  %3142 = vst [vmem:[#allocation3 + $0x364] sm:$0xf] %v3126
  %3143 = vst [vmem:[#allocation3 + $0x3a4] sm:$0xf] %v3127
  %3144 = vst [vmem:[#allocation3 + $0x3e4] sm:$0xf] %v3128
  %v3145 = vld [vmem:[%s1313] sm:$0xf]
  %v3146 = vld [vmem:[%s1313 + $0x4] sm:$0x1]
  %v3147 = vld [vmem:[%s1313 + $0x8] sm:$0xf]
  %v3148 = vld [vmem:[%s1313 + $0xc] sm:$0x1]
  %v3149 = vld [vmem:[%s1313 + $0x10] sm:$0xf]
  %v3150 = vld [vmem:[%s1313 + $0x14] sm:$0x1]
  %v3151 = vld [vmem:[%s1313 + $0x18] sm:$0xf]
  %v3152 = vld [vmem:[%s1313 + $0x1c] sm:$0x1]
  %v3153 = vld [vmem:[%s1313 + $0x20] sm:$0xf]
  %v3154 = vld [vmem:[%s1313 + $0x24] sm:$0x1]
  %v3155 = vld [vmem:[%s1313 + $0x28] sm:$0xf]
  %v3156 = vld [vmem:[%s1313 + $0x2c] sm:$0x1]
  %v3157 = vld [vmem:[%s1313 + $0x30] sm:$0xf]
  %v3158 = vld [vmem:[%s1313 + $0x34] sm:$0x1]
  %v3159 = vld [vmem:[%s1313 + $0x38] sm:$0xf]
  %v3160 = vld [vmem:[%s1313 + $0x3c] sm:$0x1]
  %v3161 = vld [vmem:[%s1313 + $0x48] sm:$0xf]
  %v3162 = vld [vmem:[%s1313 + $0x4c] sm:$0x1]
  %v3163 = vld [vmem:[%s1313 + $0x50] sm:$0xf]
  %v3164 = vld [vmem:[%s1313 + $0x54] sm:$0x1]
  %v3165 = vld [vmem:[%s1313 + $0x58] sm:$0xf]
  %v3166 = vld [vmem:[%s1313 + $0x5c] sm:$0x1]
  %v3167 = vld [vmem:[%s1313 + $0x60] sm:$0xf]
  %v3168 = vld [vmem:[%s1313 + $0x64] sm:$0x1]
  %v3169 = vld [vmem:[%s1313 + $0x68] sm:$0xf]
  %v3170 = vld [vmem:[%s1313 + $0x6c] sm:$0x1]
  %v3171 = vld [vmem:[%s1313 + $0x70] sm:$0xf]
  %v3172 = vld [vmem:[%s1313 + $0x74] sm:$0x1]
  %v3173 = vld [vmem:[%s1313 + $0x78] sm:$0xf]
  %v3174 = vld [vmem:[%s1313 + $0x7c] sm:$0x1]
  %v3175 = vld [vmem:[%s1313 + $0x80] sm:$0xf]
  %v3176 = vld [vmem:[%s1313 + $0x84] sm:$0x1]
  %v3178 = vshrl.u32 %v3145, 16
  %v3180 = vrot.slane %v3178, 4
  %v3181 = vshll.u32 %v3145, 16
  %v3183 = vrot.slane %v3181, 5
  %v3184 = vor.u32 %v3180, %v3183
  %v3185 = vrot.slane %v3184, 4
  %v3187 = vshll.u32 %v3146, 16
  %v3189 = vrot.slane %v3187, 5
  %v3190 = vsel %vm1896, %v3185, %v3189
  %v3192 = vshrl.u32 %v3147, 16
  %v3194 = vrot.slane %v3192, 4
  %v3195 = vshll.u32 %v3147, 16
  %v3197 = vrot.slane %v3195, 5
  %v3198 = vor.u32 %v3194, %v3197
  %v3199 = vrot.slane %v3198, 4
  %v3201 = vshll.u32 %v3148, 16
  %v3203 = vrot.slane %v3201, 5
  %v3204 = vsel %vm1896, %v3199, %v3203
  %v3206 = vshrl.u32 %v3149, 16
  %v3208 = vrot.slane %v3206, 4
  %v3209 = vshll.u32 %v3149, 16
  %v3211 = vrot.slane %v3209, 5
  %v3212 = vor.u32 %v3208, %v3211
  %v3213 = vrot.slane %v3212, 4
  %v3215 = vshll.u32 %v3150, 16
  %v3217 = vrot.slane %v3215, 5
  %v3218 = vsel %vm1896, %v3213, %v3217
  %v3220 = vshrl.u32 %v3151, 16
  %v3222 = vrot.slane %v3220, 4
  %v3223 = vshll.u32 %v3151, 16
  %v3225 = vrot.slane %v3223, 5
  %v3226 = vor.u32 %v3222, %v3225
  %v3227 = vrot.slane %v3226, 4
  %v3229 = vshll.u32 %v3152, 16
  %v3231 = vrot.slane %v3229, 5
  %v3232 = vsel %vm1896, %v3227, %v3231
  %v3234 = vshrl.u32 %v3153, 16
  %v3236 = vrot.slane %v3234, 4
  %v3237 = vshll.u32 %v3153, 16
  %v3239 = vrot.slane %v3237, 5
  %v3240 = vor.u32 %v3236, %v3239
  %v3241 = vrot.slane %v3240, 4
  %v3243 = vshll.u32 %v3154, 16
  %v3245 = vrot.slane %v3243, 5
  %v3246 = vsel %vm1896, %v3241, %v3245
  %v3248 = vshrl.u32 %v3155, 16
  %v3250 = vrot.slane %v3248, 4
  %v3251 = vshll.u32 %v3155, 16
  %v3253 = vrot.slane %v3251, 5
  %v3254 = vor.u32 %v3250, %v3253
  %v3255 = vrot.slane %v3254, 4
  %v3257 = vshll.u32 %v3156, 16
  %v3259 = vrot.slane %v3257, 5
  %v3260 = vsel %vm1896, %v3255, %v3259
  %v3262 = vshrl.u32 %v3157, 16
  %v3264 = vrot.slane %v3262, 4
  %v3265 = vshll.u32 %v3157, 16
  %v3267 = vrot.slane %v3265, 5
  %v3268 = vor.u32 %v3264, %v3267
  %v3269 = vrot.slane %v3268, 4
  %v3271 = vshll.u32 %v3158, 16
  %v3273 = vrot.slane %v3271, 5
  %v3274 = vsel %vm1896, %v3269, %v3273
  %v3276 = vshrl.u32 %v3159, 16
  %v3278 = vrot.slane %v3276, 4
  %v3279 = vshll.u32 %v3159, 16
  %v3281 = vrot.slane %v3279, 5
  %v3282 = vor.u32 %v3278, %v3281
  %v3283 = vrot.slane %v3282, 4
  %v3285 = vshll.u32 %v3160, 16
  %v3287 = vrot.slane %v3285, 5
  %v3288 = vsel %vm1896, %v3283, %v3287
  %v3290 = vshrl.u32 %v3161, 16
  %v3292 = vrot.slane %v3290, 4
  %v3293 = vshll.u32 %v3161, 16
  %v3295 = vrot.slane %v3293, 5
  %v3296 = vor.u32 %v3292, %v3295
  %v3297 = vrot.slane %v3296, 4
  %v3299 = vshll.u32 %v3162, 16
  %v3301 = vrot.slane %v3299, 5
  %v3302 = vsel %vm1896, %v3297, %v3301
  %v3304 = vshrl.u32 %v3163, 16
  %v3306 = vrot.slane %v3304, 4
  %v3307 = vshll.u32 %v3163, 16
  %v3309 = vrot.slane %v3307, 5
  %v3310 = vor.u32 %v3306, %v3309
  %v3311 = vrot.slane %v3310, 4
  %v3313 = vshll.u32 %v3164, 16
  %v3315 = vrot.slane %v3313, 5
  %v3316 = vsel %vm1896, %v3311, %v3315
  %v3318 = vshrl.u32 %v3165, 16
  %v3320 = vrot.slane %v3318, 4
  %v3321 = vshll.u32 %v3165, 16
  %v3323 = vrot.slane %v3321, 5
  %v3324 = vor.u32 %v3320, %v3323
  %v3325 = vrot.slane %v3324, 4
  %v3327 = vshll.u32 %v3166, 16
  %v3329 = vrot.slane %v3327, 5
  %v3330 = vsel %vm1896, %v3325, %v3329
  %v3332 = vshrl.u32 %v3167, 16
  %v3334 = vrot.slane %v3332, 4
  %v3335 = vshll.u32 %v3167, 16
  %v3337 = vrot.slane %v3335, 5
  %v3338 = vor.u32 %v3334, %v3337
  %v3339 = vrot.slane %v3338, 4
  %v3341 = vshll.u32 %v3168, 16
  %v3343 = vrot.slane %v3341, 5
  %v3344 = vsel %vm1896, %v3339, %v3343
  %v3346 = vshrl.u32 %v3169, 16
  %v3348 = vrot.slane %v3346, 4
  %v3349 = vshll.u32 %v3169, 16
  %v3351 = vrot.slane %v3349, 5
  %v3352 = vor.u32 %v3348, %v3351
  %v3353 = vrot.slane %v3352, 4
  %v3355 = vshll.u32 %v3170, 16
  %v3357 = vrot.slane %v3355, 5
  %v3358 = vsel %vm1896, %v3353, %v3357
  %v3360 = vshrl.u32 %v3171, 16
  %v3362 = vrot.slane %v3360, 4
  %v3363 = vshll.u32 %v3171, 16
  %v3365 = vrot.slane %v3363, 5
  %v3366 = vor.u32 %v3362, %v3365
  %v3367 = vrot.slane %v3366, 4
  %v3369 = vshll.u32 %v3172, 16
  %v3371 = vrot.slane %v3369, 5
  %v3372 = vsel %vm1896, %v3367, %v3371
  %v3374 = vshrl.u32 %v3173, 16
  %v3376 = vrot.slane %v3374, 4
  %v3377 = vshll.u32 %v3173, 16
  %v3379 = vrot.slane %v3377, 5
  %v3380 = vor.u32 %v3376, %v3379
  %v3381 = vrot.slane %v3380, 4
  %v3383 = vshll.u32 %v3174, 16
  %v3385 = vrot.slane %v3383, 5
  %v3386 = vsel %vm1896, %v3381, %v3385
  %v3388 = vshrl.u32 %v3175, 16
  %v3390 = vrot.slane %v3388, 4
  %v3391 = vshll.u32 %v3175, 16
  %v3393 = vrot.slane %v3391, 5
  %v3394 = vor.u32 %v3390, %v3393
  %v3395 = vrot.slane %v3394, 4
  %v3397 = vshll.u32 %v3176, 16
  %v3399 = vrot.slane %v3397, 5
  %v3400 = vsel %vm1896, %v3395, %v3399
  %3417 = vst [vmem:[#allocation3 + $0x28] sm:$0xf] %v3190
  %3418 = vst [vmem:[#allocation3 + $0x68] sm:$0xf] %v3204
  %3419 = vst [vmem:[#allocation3 + $0xa8] sm:$0xf] %v3218
  %3420 = vst [vmem:[#allocation3 + $0xe8] sm:$0xf] %v3232
  %3421 = vst [vmem:[#allocation3 + $0x128] sm:$0xf] %v3246
  %3422 = vst [vmem:[#allocation3 + $0x168] sm:$0xf] %v3260
  %3423 = vst [vmem:[#allocation3 + $0x1a8] sm:$0xf] %v3274
  %3424 = vst [vmem:[#allocation3 + $0x1e8] sm:$0xf] %v3288
  %3425 = vst [vmem:[#allocation3 + $0x228] sm:$0xf] %v3302
  %3426 = vst [vmem:[#allocation3 + $0x268] sm:$0xf] %v3316
  %3427 = vst [vmem:[#allocation3 + $0x2a8] sm:$0xf] %v3330
  %3428 = vst [vmem:[#allocation3 + $0x2e8] sm:$0xf] %v3344
  %3429 = vst [vmem:[#allocation3 + $0x328] sm:$0xf] %v3358
  %3430 = vst [vmem:[#allocation3 + $0x368] sm:$0xf] %v3372
  %3431 = vst [vmem:[#allocation3 + $0x3a8] sm:$0xf] %v3386
  %3432 = vst [vmem:[#allocation3 + $0x3e8] sm:$0xf] %v3400
  %v3433 = vld [vmem:[%s1429] sm:$0xf]
  %v3434 = vld [vmem:[%s1429 + $0x4] sm:$0x1]
  %v3435 = vld [vmem:[%s1429 + $0x8] sm:$0xf]
  %v3436 = vld [vmem:[%s1429 + $0xc] sm:$0x1]
  %v3437 = vld [vmem:[%s1429 + $0x10] sm:$0xf]
  %v3438 = vld [vmem:[%s1429 + $0x14] sm:$0x1]
  %v3439 = vld [vmem:[%s1429 + $0x18] sm:$0xf]
  %v3440 = vld [vmem:[%s1429 + $0x1c] sm:$0x1]
  %v3441 = vld [vmem:[%s1429 + $0x20] sm:$0xf]
  %v3442 = vld [vmem:[%s1429 + $0x24] sm:$0x1]
  %v3443 = vld [vmem:[%s1429 + $0x28] sm:$0xf]
  %v3444 = vld [vmem:[%s1429 + $0x2c] sm:$0x1]
  %v3445 = vld [vmem:[%s1429 + $0x30] sm:$0xf]
  %v3446 = vld [vmem:[%s1429 + $0x34] sm:$0x1]
  %v3447 = vld [vmem:[%s1429 + $0x38] sm:$0xf]
  %v3448 = vld [vmem:[%s1429 + $0x3c] sm:$0x1]
  %v3449 = vld [vmem:[%s1429 + $0x48] sm:$0xf]
  %v3450 = vld [vmem:[%s1429 + $0x4c] sm:$0x1]
  %v3451 = vld [vmem:[%s1429 + $0x50] sm:$0xf]
  %v3452 = vld [vmem:[%s1429 + $0x54] sm:$0x1]
  %v3453 = vld [vmem:[%s1429 + $0x58] sm:$0xf]
  %v3454 = vld [vmem:[%s1429 + $0x5c] sm:$0x1]
  %v3455 = vld [vmem:[%s1429 + $0x60] sm:$0xf]
  %v3456 = vld [vmem:[%s1429 + $0x64] sm:$0x1]
  %v3457 = vld [vmem:[%s1429 + $0x68] sm:$0xf]
  %v3458 = vld [vmem:[%s1429 + $0x6c] sm:$0x1]
  %v3459 = vld [vmem:[%s1429 + $0x70] sm:$0xf]
  %v3460 = vld [vmem:[%s1429 + $0x74] sm:$0x1]
  %v3461 = vld [vmem:[%s1429 + $0x78] sm:$0xf]
  %v3462 = vld [vmem:[%s1429 + $0x7c] sm:$0x1]
  %v3463 = vld [vmem:[%s1429 + $0x80] sm:$0xf]
  %v3464 = vld [vmem:[%s1429 + $0x84] sm:$0x1]
  %v3466 = vshrl.u32 %v3433, 16
  %v3468 = vrot.slane %v3466, 4
  %v3469 = vshll.u32 %v3433, 16
  %v3471 = vrot.slane %v3469, 5
  %v3472 = vor.u32 %v3468, %v3471
  %v3473 = vrot.slane %v3472, 4
  %v3475 = vshll.u32 %v3434, 16
  %v3477 = vrot.slane %v3475, 5
  %v3478 = vsel %vm1896, %v3473, %v3477
  %v3480 = vshrl.u32 %v3435, 16
  %v3482 = vrot.slane %v3480, 4
  %v3483 = vshll.u32 %v3435, 16
  %v3485 = vrot.slane %v3483, 5
  %v3486 = vor.u32 %v3482, %v3485
  %v3487 = vrot.slane %v3486, 4
  %v3489 = vshll.u32 %v3436, 16
  %v3491 = vrot.slane %v3489, 5
  %v3492 = vsel %vm1896, %v3487, %v3491
  %v3494 = vshrl.u32 %v3437, 16
  %v3496 = vrot.slane %v3494, 4
  %v3497 = vshll.u32 %v3437, 16
  %v3499 = vrot.slane %v3497, 5
  %v3500 = vor.u32 %v3496, %v3499
  %v3501 = vrot.slane %v3500, 4
  %v3503 = vshll.u32 %v3438, 16
  %v3505 = vrot.slane %v3503, 5
  %v3506 = vsel %vm1896, %v3501, %v3505
  %v3508 = vshrl.u32 %v3439, 16
  %v3510 = vrot.slane %v3508, 4
  %v3511 = vshll.u32 %v3439, 16
  %v3513 = vrot.slane %v3511, 5
  %v3514 = vor.u32 %v3510, %v3513
  %v3515 = vrot.slane %v3514, 4
  %v3517 = vshll.u32 %v3440, 16
  %v3519 = vrot.slane %v3517, 5
  %v3520 = vsel %vm1896, %v3515, %v3519
  %v3522 = vshrl.u32 %v3441, 16
  %v3524 = vrot.slane %v3522, 4
  %v3525 = vshll.u32 %v3441, 16
  %v3527 = vrot.slane %v3525, 5
  %v3528 = vor.u32 %v3524, %v3527
  %v3529 = vrot.slane %v3528, 4
  %v3531 = vshll.u32 %v3442, 16
  %v3533 = vrot.slane %v3531, 5
  %v3534 = vsel %vm1896, %v3529, %v3533
  %v3536 = vshrl.u32 %v3443, 16
  %v3538 = vrot.slane %v3536, 4
  %v3539 = vshll.u32 %v3443, 16
  %v3541 = vrot.slane %v3539, 5
  %v3542 = vor.u32 %v3538, %v3541
  %v3543 = vrot.slane %v3542, 4
  %v3545 = vshll.u32 %v3444, 16
  %v3547 = vrot.slane %v3545, 5
  %v3548 = vsel %vm1896, %v3543, %v3547
  %v3550 = vshrl.u32 %v3445, 16
  %v3552 = vrot.slane %v3550, 4
  %v3553 = vshll.u32 %v3445, 16
  %v3555 = vrot.slane %v3553, 5
  %v3556 = vor.u32 %v3552, %v3555
  %v3557 = vrot.slane %v3556, 4
  %v3559 = vshll.u32 %v3446, 16
  %v3561 = vrot.slane %v3559, 5
  %v3562 = vsel %vm1896, %v3557, %v3561
  %v3564 = vshrl.u32 %v3447, 16
  %v3566 = vrot.slane %v3564, 4
  %v3567 = vshll.u32 %v3447, 16
  %v3569 = vrot.slane %v3567, 5
  %v3570 = vor.u32 %v3566, %v3569
  %v3571 = vrot.slane %v3570, 4
  %v3573 = vshll.u32 %v3448, 16
  %v3575 = vrot.slane %v3573, 5
  %v3576 = vsel %vm1896, %v3571, %v3575
  %v3578 = vshrl.u32 %v3449, 16
  %v3580 = vrot.slane %v3578, 4
  %v3581 = vshll.u32 %v3449, 16
  %v3583 = vrot.slane %v3581, 5
  %v3584 = vor.u32 %v3580, %v3583
  %v3585 = vrot.slane %v3584, 4
  %v3587 = vshll.u32 %v3450, 16
  %v3589 = vrot.slane %v3587, 5
  %v3590 = vsel %vm1896, %v3585, %v3589
  %v3592 = vshrl.u32 %v3451, 16
  %v3594 = vrot.slane %v3592, 4
  %v3595 = vshll.u32 %v3451, 16
  %v3597 = vrot.slane %v3595, 5
  %v3598 = vor.u32 %v3594, %v3597
  %v3599 = vrot.slane %v3598, 4
  %v3601 = vshll.u32 %v3452, 16
  %v3603 = vrot.slane %v3601, 5
  %v3604 = vsel %vm1896, %v3599, %v3603
  %v3606 = vshrl.u32 %v3453, 16
  %v3608 = vrot.slane %v3606, 4
  %v3609 = vshll.u32 %v3453, 16
  %v3611 = vrot.slane %v3609, 5
  %v3612 = vor.u32 %v3608, %v3611
  %v3613 = vrot.slane %v3612, 4
  %v3615 = vshll.u32 %v3454, 16
  %v3617 = vrot.slane %v3615, 5
  %v3618 = vsel %vm1896, %v3613, %v3617
  %v3620 = vshrl.u32 %v3455, 16
  %v3622 = vrot.slane %v3620, 4
  %v3623 = vshll.u32 %v3455, 16
  %v3625 = vrot.slane %v3623, 5
  %v3626 = vor.u32 %v3622, %v3625
  %v3627 = vrot.slane %v3626, 4
  %v3629 = vshll.u32 %v3456, 16
  %v3631 = vrot.slane %v3629, 5
  %v3632 = vsel %vm1896, %v3627, %v3631
  %v3634 = vshrl.u32 %v3457, 16
  %v3636 = vrot.slane %v3634, 4
  %v3637 = vshll.u32 %v3457, 16
  %v3639 = vrot.slane %v3637, 5
  %v3640 = vor.u32 %v3636, %v3639
  %v3641 = vrot.slane %v3640, 4
  %v3643 = vshll.u32 %v3458, 16
  %v3645 = vrot.slane %v3643, 5
  %v3646 = vsel %vm1896, %v3641, %v3645
  %v3648 = vshrl.u32 %v3459, 16
  %v3650 = vrot.slane %v3648, 4
  %v3651 = vshll.u32 %v3459, 16
  %v3653 = vrot.slane %v3651, 5
  %v3654 = vor.u32 %v3650, %v3653
  %v3655 = vrot.slane %v3654, 4
  %v3657 = vshll.u32 %v3460, 16
  %v3659 = vrot.slane %v3657, 5
  %v3660 = vsel %vm1896, %v3655, %v3659
  %v3662 = vshrl.u32 %v3461, 16
  %v3664 = vrot.slane %v3662, 4
  %v3665 = vshll.u32 %v3461, 16
  %v3667 = vrot.slane %v3665, 5
  %v3668 = vor.u32 %v3664, %v3667
  %v3669 = vrot.slane %v3668, 4
  %v3671 = vshll.u32 %v3462, 16
  %v3673 = vrot.slane %v3671, 5
  %v3674 = vsel %vm1896, %v3669, %v3673
  %v3676 = vshrl.u32 %v3463, 16
  %v3678 = vrot.slane %v3676, 4
  %v3679 = vshll.u32 %v3463, 16
  %v3681 = vrot.slane %v3679, 5
  %v3682 = vor.u32 %v3678, %v3681
  %v3683 = vrot.slane %v3682, 4
  %v3685 = vshll.u32 %v3464, 16
  %v3687 = vrot.slane %v3685, 5
  %v3688 = vsel %vm1896, %v3683, %v3687
  %3705 = vst [vmem:[#allocation3 + $0x2c] sm:$0xf] %v3478
  %3706 = vst [vmem:[#allocation3 + $0x6c] sm:$0xf] %v3492
  %3707 = vst [vmem:[#allocation3 + $0xac] sm:$0xf] %v3506
  %3708 = vst [vmem:[#allocation3 + $0xec] sm:$0xf] %v3520
  %3709 = vst [vmem:[#allocation3 + $0x12c] sm:$0xf] %v3534
  %3710 = vst [vmem:[#allocation3 + $0x16c] sm:$0xf] %v3548
  %3711 = vst [vmem:[#allocation3 + $0x1ac] sm:$0xf] %v3562
  %3712 = vst [vmem:[#allocation3 + $0x1ec] sm:$0xf] %v3576
  %3713 = vst [vmem:[#allocation3 + $0x22c] sm:$0xf] %v3590
  %3714 = vst [vmem:[#allocation3 + $0x26c] sm:$0xf] %v3604
  %3715 = vst [vmem:[#allocation3 + $0x2ac] sm:$0xf] %v3618
  %3716 = vst [vmem:[#allocation3 + $0x2ec] sm:$0xf] %v3632
  %3717 = vst [vmem:[#allocation3 + $0x32c] sm:$0xf] %v3646
  %3718 = vst [vmem:[#allocation3 + $0x36c] sm:$0xf] %v3660
  %3719 = vst [vmem:[#allocation3 + $0x3ac] sm:$0xf] %v3674
  %3720 = vst [vmem:[#allocation3 + $0x3ec] sm:$0xf] %v3688
  %s3721 = scalar_lea.vmem [#allocation2], 296
  %v3722 = vld [vmem:[%s3721] sm:$0xf]
  %v3723 = vld [vmem:[%s3721 + $0x8] sm:$0xf]
  %v3724 = vld [vmem:[%s3721 + $0x10] sm:$0xf]
  %v3725 = vld [vmem:[%s3721 + $0x18] sm:$0xf]
  %v3726 = vld [vmem:[%s3721 + $0x20] sm:$0xf]
  %v3727 = vld [vmem:[%s3721 + $0x28] sm:$0xf]
  %v3728 = vld [vmem:[%s3721 + $0x30] sm:$0xf]
  %v3729 = vld [vmem:[%s3721 + $0x38] sm:$0xf]
  %v3730 = vld [vmem:[%s3721 + $0x48] sm:$0xf]
  %v3731 = vld [vmem:[%s3721 + $0x50] sm:$0xf]
  %v3732 = vld [vmem:[%s3721 + $0x58] sm:$0xf]
  %v3733 = vld [vmem:[%s3721 + $0x60] sm:$0xf]
  %v3734 = vld [vmem:[%s3721 + $0x68] sm:$0xf]
  %v3735 = vld [vmem:[%s3721 + $0x70] sm:$0xf]
  %v3736 = vld [vmem:[%s3721 + $0x78] sm:$0xf]
  %v3737 = vld [vmem:[%s3721 + $0x80] sm:$0xf]
  %3738 = vst [vmem:[#allocation3 + $0x30] sm:$0xf] %v3722
  %3739 = vst [vmem:[#allocation3 + $0x70] sm:$0xf] %v3723
  %3740 = vst [vmem:[#allocation3 + $0xb0] sm:$0xf] %v3724
  %3741 = vst [vmem:[#allocation3 + $0xf0] sm:$0xf] %v3725
  %3742 = vst [vmem:[#allocation3 + $0x130] sm:$0xf] %v3726
  %3743 = vst [vmem:[#allocation3 + $0x170] sm:$0xf] %v3727
  %3744 = vst [vmem:[#allocation3 + $0x1b0] sm:$0xf] %v3728
  %3745 = vst [vmem:[#allocation3 + $0x1f0] sm:$0xf] %v3729
  %3746 = vst [vmem:[#allocation3 + $0x230] sm:$0xf] %v3730
  %3747 = vst [vmem:[#allocation3 + $0x270] sm:$0xf] %v3731
  %3748 = vst [vmem:[#allocation3 + $0x2b0] sm:$0xf] %v3732
  %3749 = vst [vmem:[#allocation3 + $0x2f0] sm:$0xf] %v3733
  %3750 = vst [vmem:[#allocation3 + $0x330] sm:$0xf] %v3734
  %3751 = vst [vmem:[#allocation3 + $0x370] sm:$0xf] %v3735
  %3752 = vst [vmem:[#allocation3 + $0x3b0] sm:$0xf] %v3736
  %3753 = vst [vmem:[#allocation3 + $0x3f0] sm:$0xf] %v3737
  %s3754 = scalar_lea.vmem [#allocation2], 440
  %v3755 = vld [vmem:[%s3754] sm:$0xf]
  %v3756 = vld [vmem:[%s3754 + $0x8] sm:$0xf]
  %v3757 = vld [vmem:[%s3754 + $0x10] sm:$0xf]
  %v3758 = vld [vmem:[%s3754 + $0x18] sm:$0xf]
  %v3759 = vld [vmem:[%s3754 + $0x20] sm:$0xf]
  %v3760 = vld [vmem:[%s3754 + $0x28] sm:$0xf]
  %v3761 = vld [vmem:[%s3754 + $0x30] sm:$0xf]
  %v3762 = vld [vmem:[%s3754 + $0x38] sm:$0xf]
  %v3763 = vld [vmem:[%s3754 + $0x48] sm:$0xf]
  %v3764 = vld [vmem:[%s3754 + $0x50] sm:$0xf]
  %v3765 = vld [vmem:[%s3754 + $0x58] sm:$0xf]
  %v3766 = vld [vmem:[%s3754 + $0x60] sm:$0xf]
  %v3767 = vld [vmem:[%s3754 + $0x68] sm:$0xf]
  %v3768 = vld [vmem:[%s3754 + $0x70] sm:$0xf]
  %v3769 = vld [vmem:[%s3754 + $0x78] sm:$0xf]
  %v3770 = vld [vmem:[%s3754 + $0x80] sm:$0xf]
  %3771 = vst [vmem:[#allocation3 + $0x34] sm:$0xf] %v3755
  %3772 = vst [vmem:[#allocation3 + $0x74] sm:$0xf] %v3756
  %3773 = vst [vmem:[#allocation3 + $0xb4] sm:$0xf] %v3757
  %3774 = vst [vmem:[#allocation3 + $0xf4] sm:$0xf] %v3758
  %3775 = vst [vmem:[#allocation3 + $0x134] sm:$0xf] %v3759
  %3776 = vst [vmem:[#allocation3 + $0x174] sm:$0xf] %v3760
  %3777 = vst [vmem:[#allocation3 + $0x1b4] sm:$0xf] %v3761
  %3778 = vst [vmem:[#allocation3 + $0x1f4] sm:$0xf] %v3762
  %3779 = vst [vmem:[#allocation3 + $0x234] sm:$0xf] %v3763
  %3780 = vst [vmem:[#allocation3 + $0x274] sm:$0xf] %v3764
  %3781 = vst [vmem:[#allocation3 + $0x2b4] sm:$0xf] %v3765
  %3782 = vst [vmem:[#allocation3 + $0x2f4] sm:$0xf] %v3766
  %3783 = vst [vmem:[#allocation3 + $0x334] sm:$0xf] %v3767
  %3784 = vst [vmem:[#allocation3 + $0x374] sm:$0xf] %v3768
  %3785 = vst [vmem:[#allocation3 + $0x3b4] sm:$0xf] %v3769
  %3786 = vst [vmem:[#allocation3 + $0x3f4] sm:$0xf] %v3770
  %v3787 = vld [vmem:[%s3721] sm:$0xf]
  %v3788 = vld [vmem:[%s3721 + $0x4] sm:$0x1]
  %v3789 = vld [vmem:[%s3721 + $0x8] sm:$0xf]
  %v3790 = vld [vmem:[%s3721 + $0xc] sm:$0x1]
  %v3791 = vld [vmem:[%s3721 + $0x10] sm:$0xf]
  %v3792 = vld [vmem:[%s3721 + $0x14] sm:$0x1]
  %v3793 = vld [vmem:[%s3721 + $0x18] sm:$0xf]
  %v3794 = vld [vmem:[%s3721 + $0x1c] sm:$0x1]
  %v3795 = vld [vmem:[%s3721 + $0x20] sm:$0xf]
  %v3796 = vld [vmem:[%s3721 + $0x24] sm:$0x1]
  %v3797 = vld [vmem:[%s3721 + $0x28] sm:$0xf]
  %v3798 = vld [vmem:[%s3721 + $0x2c] sm:$0x1]
  %v3799 = vld [vmem:[%s3721 + $0x30] sm:$0xf]
  %v3800 = vld [vmem:[%s3721 + $0x34] sm:$0x1]
  %v3801 = vld [vmem:[%s3721 + $0x38] sm:$0xf]
  %v3802 = vld [vmem:[%s3721 + $0x3c] sm:$0x1]
  %v3803 = vld [vmem:[%s3721 + $0x48] sm:$0xf]
  %v3804 = vld [vmem:[%s3721 + $0x4c] sm:$0x1]
  %v3805 = vld [vmem:[%s3721 + $0x50] sm:$0xf]
  %v3806 = vld [vmem:[%s3721 + $0x54] sm:$0x1]
  %v3807 = vld [vmem:[%s3721 + $0x58] sm:$0xf]
  %v3808 = vld [vmem:[%s3721 + $0x5c] sm:$0x1]
  %v3809 = vld [vmem:[%s3721 + $0x60] sm:$0xf]
  %v3810 = vld [vmem:[%s3721 + $0x64] sm:$0x1]
  %v3811 = vld [vmem:[%s3721 + $0x68] sm:$0xf]
  %v3812 = vld [vmem:[%s3721 + $0x6c] sm:$0x1]
  %v3813 = vld [vmem:[%s3721 + $0x70] sm:$0xf]
  %v3814 = vld [vmem:[%s3721 + $0x74] sm:$0x1]
  %v3815 = vld [vmem:[%s3721 + $0x78] sm:$0xf]
  %v3816 = vld [vmem:[%s3721 + $0x7c] sm:$0x1]
  %v3817 = vld [vmem:[%s3721 + $0x80] sm:$0xf]
  %v3818 = vld [vmem:[%s3721 + $0x84] sm:$0x1]
  %v3820 = vshrl.u32 %v3787, 16
  %v3822 = vrot.slane %v3820, 4
  %v3823 = vshll.u32 %v3787, 16
  %v3825 = vrot.slane %v3823, 5
  %v3826 = vor.u32 %v3822, %v3825
  %v3827 = vrot.slane %v3826, 4
  %v3829 = vshll.u32 %v3788, 16
  %v3831 = vrot.slane %v3829, 5
  %v3832 = vsel %vm1896, %v3827, %v3831
  %v3834 = vshrl.u32 %v3789, 16
  %v3836 = vrot.slane %v3834, 4
  %v3837 = vshll.u32 %v3789, 16
  %v3839 = vrot.slane %v3837, 5
  %v3840 = vor.u32 %v3836, %v3839
  %v3841 = vrot.slane %v3840, 4
  %v3843 = vshll.u32 %v3790, 16
  %v3845 = vrot.slane %v3843, 5
  %v3846 = vsel %vm1896, %v3841, %v3845
  %v3848 = vshrl.u32 %v3791, 16
  %v3850 = vrot.slane %v3848, 4
  %v3851 = vshll.u32 %v3791, 16
  %v3853 = vrot.slane %v3851, 5
  %v3854 = vor.u32 %v3850, %v3853
  %v3855 = vrot.slane %v3854, 4
  %v3857 = vshll.u32 %v3792, 16
  %v3859 = vrot.slane %v3857, 5
  %v3860 = vsel %vm1896, %v3855, %v3859
  %v3862 = vshrl.u32 %v3793, 16
  %v3864 = vrot.slane %v3862, 4
  %v3865 = vshll.u32 %v3793, 16
  %v3867 = vrot.slane %v3865, 5
  %v3868 = vor.u32 %v3864, %v3867
  %v3869 = vrot.slane %v3868, 4
  %v3871 = vshll.u32 %v3794, 16
  %v3873 = vrot.slane %v3871, 5
  %v3874 = vsel %vm1896, %v3869, %v3873
  %v3876 = vshrl.u32 %v3795, 16
  %v3878 = vrot.slane %v3876, 4
  %v3879 = vshll.u32 %v3795, 16
  %v3881 = vrot.slane %v3879, 5
  %v3882 = vor.u32 %v3878, %v3881
  %v3883 = vrot.slane %v3882, 4
  %v3885 = vshll.u32 %v3796, 16
  %v3887 = vrot.slane %v3885, 5
  %v3888 = vsel %vm1896, %v3883, %v3887
  %v3890 = vshrl.u32 %v3797, 16
  %v3892 = vrot.slane %v3890, 4
  %v3893 = vshll.u32 %v3797, 16
  %v3895 = vrot.slane %v3893, 5
  %v3896 = vor.u32 %v3892, %v3895
  %v3897 = vrot.slane %v3896, 4
  %v3899 = vshll.u32 %v3798, 16
  %v3901 = vrot.slane %v3899, 5
  %v3902 = vsel %vm1896, %v3897, %v3901
  %v3904 = vshrl.u32 %v3799, 16
  %v3906 = vrot.slane %v3904, 4
  %v3907 = vshll.u32 %v3799, 16
  %v3909 = vrot.slane %v3907, 5
  %v3910 = vor.u32 %v3906, %v3909
  %v3911 = vrot.slane %v3910, 4
  %v3913 = vshll.u32 %v3800, 16
  %v3915 = vrot.slane %v3913, 5
  %v3916 = vsel %vm1896, %v3911, %v3915
  %v3918 = vshrl.u32 %v3801, 16
  %v3920 = vrot.slane %v3918, 4
  %v3921 = vshll.u32 %v3801, 16
  %v3923 = vrot.slane %v3921, 5
  %v3924 = vor.u32 %v3920, %v3923
  %v3925 = vrot.slane %v3924, 4
  %v3927 = vshll.u32 %v3802, 16
  %v3929 = vrot.slane %v3927, 5
  %v3930 = vsel %vm1896, %v3925, %v3929
  %v3932 = vshrl.u32 %v3803, 16
  %v3934 = vrot.slane %v3932, 4
  %v3935 = vshll.u32 %v3803, 16
  %v3937 = vrot.slane %v3935, 5
  %v3938 = vor.u32 %v3934, %v3937
  %v3939 = vrot.slane %v3938, 4
  %v3941 = vshll.u32 %v3804, 16
  %v3943 = vrot.slane %v3941, 5
  %v3944 = vsel %vm1896, %v3939, %v3943
  %v3946 = vshrl.u32 %v3805, 16
  %v3948 = vrot.slane %v3946, 4
  %v3949 = vshll.u32 %v3805, 16
  %v3951 = vrot.slane %v3949, 5
  %v3952 = vor.u32 %v3948, %v3951
  %v3953 = vrot.slane %v3952, 4
  %v3955 = vshll.u32 %v3806, 16
  %v3957 = vrot.slane %v3955, 5
  %v3958 = vsel %vm1896, %v3953, %v3957
  %v3960 = vshrl.u32 %v3807, 16
  %v3962 = vrot.slane %v3960, 4
  %v3963 = vshll.u32 %v3807, 16
  %v3965 = vrot.slane %v3963, 5
  %v3966 = vor.u32 %v3962, %v3965
  %v3967 = vrot.slane %v3966, 4
  %v3969 = vshll.u32 %v3808, 16
  %v3971 = vrot.slane %v3969, 5
  %v3972 = vsel %vm1896, %v3967, %v3971
  %v3974 = vshrl.u32 %v3809, 16
  %v3976 = vrot.slane %v3974, 4
  %v3977 = vshll.u32 %v3809, 16
  %v3979 = vrot.slane %v3977, 5
  %v3980 = vor.u32 %v3976, %v3979
  %v3981 = vrot.slane %v3980, 4
  %v3983 = vshll.u32 %v3810, 16
  %v3985 = vrot.slane %v3983, 5
  %v3986 = vsel %vm1896, %v3981, %v3985
  %v3988 = vshrl.u32 %v3811, 16
  %v3990 = vrot.slane %v3988, 4
  %v3991 = vshll.u32 %v3811, 16
  %v3993 = vrot.slane %v3991, 5
  %v3994 = vor.u32 %v3990, %v3993
  %v3995 = vrot.slane %v3994, 4
  %v3997 = vshll.u32 %v3812, 16
  %v3999 = vrot.slane %v3997, 5
  %v4000 = vsel %vm1896, %v3995, %v3999
  %v4002 = vshrl.u32 %v3813, 16
  %v4004 = vrot.slane %v4002, 4
  %v4005 = vshll.u32 %v3813, 16
  %v4007 = vrot.slane %v4005, 5
  %v4008 = vor.u32 %v4004, %v4007
  %v4009 = vrot.slane %v4008, 4
  %v4011 = vshll.u32 %v3814, 16
  %v4013 = vrot.slane %v4011, 5
  %v4014 = vsel %vm1896, %v4009, %v4013
  %v4016 = vshrl.u32 %v3815, 16
  %v4018 = vrot.slane %v4016, 4
  %v4019 = vshll.u32 %v3815, 16
  %v4021 = vrot.slane %v4019, 5
  %v4022 = vor.u32 %v4018, %v4021
  %v4023 = vrot.slane %v4022, 4
  %v4025 = vshll.u32 %v3816, 16
  %v4027 = vrot.slane %v4025, 5
  %v4028 = vsel %vm1896, %v4023, %v4027
  %v4030 = vshrl.u32 %v3817, 16
  %v4032 = vrot.slane %v4030, 4
  %v4033 = vshll.u32 %v3817, 16
  %v4035 = vrot.slane %v4033, 5
  %v4036 = vor.u32 %v4032, %v4035
  %v4037 = vrot.slane %v4036, 4
  %v4039 = vshll.u32 %v3818, 16
  %v4041 = vrot.slane %v4039, 5
  %v4042 = vsel %vm1896, %v4037, %v4041
  %4059 = vst [vmem:[#allocation3 + $0x38] sm:$0xf] %v3832
  %4060 = vst [vmem:[#allocation3 + $0x78] sm:$0xf] %v3846
  %4061 = vst [vmem:[#allocation3 + $0xb8] sm:$0xf] %v3860
  %4062 = vst [vmem:[#allocation3 + $0xf8] sm:$0xf] %v3874
  %4063 = vst [vmem:[#allocation3 + $0x138] sm:$0xf] %v3888
  %4064 = vst [vmem:[#allocation3 + $0x178] sm:$0xf] %v3902
  %4065 = vst [vmem:[#allocation3 + $0x1b8] sm:$0xf] %v3916
  %4066 = vst [vmem:[#allocation3 + $0x1f8] sm:$0xf] %v3930
  %4067 = vst [vmem:[#allocation3 + $0x238] sm:$0xf] %v3944
  %4068 = vst [vmem:[#allocation3 + $0x278] sm:$0xf] %v3958
  %4069 = vst [vmem:[#allocation3 + $0x2b8] sm:$0xf] %v3972
  %4070 = vst [vmem:[#allocation3 + $0x2f8] sm:$0xf] %v3986
  %4071 = vst [vmem:[#allocation3 + $0x338] sm:$0xf] %v4000
  %4072 = vst [vmem:[#allocation3 + $0x378] sm:$0xf] %v4014
  %4073 = vst [vmem:[#allocation3 + $0x3b8] sm:$0xf] %v4028
  %4074 = vst [vmem:[#allocation3 + $0x3f8] sm:$0xf] %v4042
  %v4075 = vld [vmem:[%s3754] sm:$0xf]
  %v4076 = vld [vmem:[%s3754 + $0x4] sm:$0x1]
  %v4077 = vld [vmem:[%s3754 + $0x8] sm:$0xf]
  %v4078 = vld [vmem:[%s3754 + $0xc] sm:$0x1]
  %v4079 = vld [vmem:[%s3754 + $0x10] sm:$0xf]
  %v4080 = vld [vmem:[%s3754 + $0x14] sm:$0x1]
  %v4081 = vld [vmem:[%s3754 + $0x18] sm:$0xf]
  %v4082 = vld [vmem:[%s3754 + $0x1c] sm:$0x1]
  %v4083 = vld [vmem:[%s3754 + $0x20] sm:$0xf]
  %v4084 = vld [vmem:[%s3754 + $0x24] sm:$0x1]
  %v4085 = vld [vmem:[%s3754 + $0x28] sm:$0xf]
  %v4086 = vld [vmem:[%s3754 + $0x2c] sm:$0x1]
  %v4087 = vld [vmem:[%s3754 + $0x30] sm:$0xf]
  %v4088 = vld [vmem:[%s3754 + $0x34] sm:$0x1]
  %v4089 = vld [vmem:[%s3754 + $0x38] sm:$0xf]
  %v4090 = vld [vmem:[%s3754 + $0x3c] sm:$0x1]
  %v4091 = vld [vmem:[%s3754 + $0x48] sm:$0xf]
  %v4092 = vld [vmem:[%s3754 + $0x4c] sm:$0x1]
  %v4093 = vld [vmem:[%s3754 + $0x50] sm:$0xf]
  %v4094 = vld [vmem:[%s3754 + $0x54] sm:$0x1]
  %v4095 = vld [vmem:[%s3754 + $0x58] sm:$0xf]
  %v4096 = vld [vmem:[%s3754 + $0x5c] sm:$0x1]
  %v4097 = vld [vmem:[%s3754 + $0x60] sm:$0xf]
  %v4098 = vld [vmem:[%s3754 + $0x64] sm:$0x1]
  %v4099 = vld [vmem:[%s3754 + $0x68] sm:$0xf]
  %v4100 = vld [vmem:[%s3754 + $0x6c] sm:$0x1]
  %v4101 = vld [vmem:[%s3754 + $0x70] sm:$0xf]
  %v4102 = vld [vmem:[%s3754 + $0x74] sm:$0x1]
  %v4103 = vld [vmem:[%s3754 + $0x78] sm:$0xf]
  %v4104 = vld [vmem:[%s3754 + $0x7c] sm:$0x1]
  %v4105 = vld [vmem:[%s3754 + $0x80] sm:$0xf]
  %v4106 = vld [vmem:[%s3754 + $0x84] sm:$0x1]
  %v4108 = vshrl.u32 %v4075, 16
  %v4110 = vrot.slane %v4108, 4
  %v4111 = vshll.u32 %v4075, 16
  %v4113 = vrot.slane %v4111, 5
  %v4114 = vor.u32 %v4110, %v4113
  %v4115 = vrot.slane %v4114, 4
  %v4117 = vshll.u32 %v4076, 16
  %v4119 = vrot.slane %v4117, 5
  %v4120 = vsel %vm1896, %v4115, %v4119
  %v4122 = vshrl.u32 %v4077, 16
  %v4124 = vrot.slane %v4122, 4
  %v4125 = vshll.u32 %v4077, 16
  %v4127 = vrot.slane %v4125, 5
  %v4128 = vor.u32 %v4124, %v4127
  %v4129 = vrot.slane %v4128, 4
  %v4131 = vshll.u32 %v4078, 16
  %v4133 = vrot.slane %v4131, 5
  %v4134 = vsel %vm1896, %v4129, %v4133
  %v4136 = vshrl.u32 %v4079, 16
  %v4138 = vrot.slane %v4136, 4
  %v4139 = vshll.u32 %v4079, 16
  %v4141 = vrot.slane %v4139, 5
  %v4142 = vor.u32 %v4138, %v4141
  %v4143 = vrot.slane %v4142, 4
  %v4145 = vshll.u32 %v4080, 16
  %v4147 = vrot.slane %v4145, 5
  %v4148 = vsel %vm1896, %v4143, %v4147
  %v4150 = vshrl.u32 %v4081, 16
  %v4152 = vrot.slane %v4150, 4
  %v4153 = vshll.u32 %v4081, 16
  %v4155 = vrot.slane %v4153, 5
  %v4156 = vor.u32 %v4152, %v4155
  %v4157 = vrot.slane %v4156, 4
  %v4159 = vshll.u32 %v4082, 16
  %v4161 = vrot.slane %v4159, 5
  %v4162 = vsel %vm1896, %v4157, %v4161
  %v4164 = vshrl.u32 %v4083, 16
  %v4166 = vrot.slane %v4164, 4
  %v4167 = vshll.u32 %v4083, 16
  %v4169 = vrot.slane %v4167, 5
  %v4170 = vor.u32 %v4166, %v4169
  %v4171 = vrot.slane %v4170, 4
  %v4173 = vshll.u32 %v4084, 16
  %v4175 = vrot.slane %v4173, 5
  %v4176 = vsel %vm1896, %v4171, %v4175
  %v4178 = vshrl.u32 %v4085, 16
  %v4180 = vrot.slane %v4178, 4
  %v4181 = vshll.u32 %v4085, 16
  %v4183 = vrot.slane %v4181, 5
  %v4184 = vor.u32 %v4180, %v4183
  %v4185 = vrot.slane %v4184, 4
  %v4187 = vshll.u32 %v4086, 16
  %v4189 = vrot.slane %v4187, 5
  %v4190 = vsel %vm1896, %v4185, %v4189
  %v4192 = vshrl.u32 %v4087, 16
  %v4194 = vrot.slane %v4192, 4
  %v4195 = vshll.u32 %v4087, 16
  %v4197 = vrot.slane %v4195, 5
  %v4198 = vor.u32 %v4194, %v4197
  %v4199 = vrot.slane %v4198, 4
  %v4201 = vshll.u32 %v4088, 16
  %v4203 = vrot.slane %v4201, 5
  %v4204 = vsel %vm1896, %v4199, %v4203
  %v4206 = vshrl.u32 %v4089, 16
  %v4208 = vrot.slane %v4206, 4
  %v4209 = vshll.u32 %v4089, 16
  %v4211 = vrot.slane %v4209, 5
  %v4212 = vor.u32 %v4208, %v4211
  %v4213 = vrot.slane %v4212, 4
  %v4215 = vshll.u32 %v4090, 16
  %v4217 = vrot.slane %v4215, 5
  %v4218 = vsel %vm1896, %v4213, %v4217
  %v4220 = vshrl.u32 %v4091, 16
  %v4222 = vrot.slane %v4220, 4
  %v4223 = vshll.u32 %v4091, 16
  %v4225 = vrot.slane %v4223, 5
  %v4226 = vor.u32 %v4222, %v4225
  %v4227 = vrot.slane %v4226, 4
  %v4229 = vshll.u32 %v4092, 16
  %v4231 = vrot.slane %v4229, 5
  %v4232 = vsel %vm1896, %v4227, %v4231
  %v4234 = vshrl.u32 %v4093, 16
  %v4236 = vrot.slane %v4234, 4
  %v4237 = vshll.u32 %v4093, 16
  %v4239 = vrot.slane %v4237, 5
  %v4240 = vor.u32 %v4236, %v4239
  %v4241 = vrot.slane %v4240, 4
  %v4243 = vshll.u32 %v4094, 16
  %v4245 = vrot.slane %v4243, 5
  %v4246 = vsel %vm1896, %v4241, %v4245
  %v4248 = vshrl.u32 %v4095, 16
  %v4250 = vrot.slane %v4248, 4
  %v4251 = vshll.u32 %v4095, 16
  %v4253 = vrot.slane %v4251, 5
  %v4254 = vor.u32 %v4250, %v4253
  %v4255 = vrot.slane %v4254, 4
  %v4257 = vshll.u32 %v4096, 16
  %v4259 = vrot.slane %v4257, 5
  %v4260 = vsel %vm1896, %v4255, %v4259
  %v4262 = vshrl.u32 %v4097, 16
  %v4264 = vrot.slane %v4262, 4
  %v4265 = vshll.u32 %v4097, 16
  %v4267 = vrot.slane %v4265, 5
  %v4268 = vor.u32 %v4264, %v4267
  %v4269 = vrot.slane %v4268, 4
  %v4271 = vshll.u32 %v4098, 16
  %v4273 = vrot.slane %v4271, 5
  %v4274 = vsel %vm1896, %v4269, %v4273
  %v4276 = vshrl.u32 %v4099, 16
  %v4278 = vrot.slane %v4276, 4
  %v4279 = vshll.u32 %v4099, 16
  %v4281 = vrot.slane %v4279, 5
  %v4282 = vor.u32 %v4278, %v4281
  %v4283 = vrot.slane %v4282, 4
  %v4285 = vshll.u32 %v4100, 16
  %v4287 = vrot.slane %v4285, 5
  %v4288 = vsel %vm1896, %v4283, %v4287
  %v4290 = vshrl.u32 %v4101, 16
  %v4292 = vrot.slane %v4290, 4
  %v4293 = vshll.u32 %v4101, 16
  %v4295 = vrot.slane %v4293, 5
  %v4296 = vor.u32 %v4292, %v4295
  %v4297 = vrot.slane %v4296, 4
  %v4299 = vshll.u32 %v4102, 16
  %v4301 = vrot.slane %v4299, 5
  %v4302 = vsel %vm1896, %v4297, %v4301
  %v4304 = vshrl.u32 %v4103, 16
  %v4306 = vrot.slane %v4304, 4
  %v4307 = vshll.u32 %v4103, 16
  %v4309 = vrot.slane %v4307, 5
  %v4310 = vor.u32 %v4306, %v4309
  %v4311 = vrot.slane %v4310, 4
  %v4313 = vshll.u32 %v4104, 16
  %v4315 = vrot.slane %v4313, 5
  %v4316 = vsel %vm1896, %v4311, %v4315
  %v4318 = vshrl.u32 %v4105, 16
  %v4320 = vrot.slane %v4318, 4
  %v4321 = vshll.u32 %v4105, 16
  %v4323 = vrot.slane %v4321, 5
  %v4324 = vor.u32 %v4320, %v4323
  %v4325 = vrot.slane %v4324, 4
  %v4327 = vshll.u32 %v4106, 16
  %v4329 = vrot.slane %v4327, 5
  %v4330 = vsel %vm1896, %v4325, %v4329
  %4347 = vst [vmem:[#allocation3 + $0x3c] sm:$0xf] %v4120
  %4348 = vst [vmem:[#allocation3 + $0x7c] sm:$0xf] %v4134
  %4349 = vst [vmem:[#allocation3 + $0xbc] sm:$0xf] %v4148
  %4350 = vst [vmem:[#allocation3 + $0xfc] sm:$0xf] %v4162
  %4351 = vst [vmem:[#allocation3 + $0x13c] sm:$0xf] %v4176
  %4352 = vst [vmem:[#allocation3 + $0x17c] sm:$0xf] %v4190
  %4353 = vst [vmem:[#allocation3 + $0x1bc] sm:$0xf] %v4204
  %4354 = vst [vmem:[#allocation3 + $0x1fc] sm:$0xf] %v4218
  %4355 = vst [vmem:[#allocation3 + $0x23c] sm:$0xf] %v4232
  %4356 = vst [vmem:[#allocation3 + $0x27c] sm:$0xf] %v4246
  %4357 = vst [vmem:[#allocation3 + $0x2bc] sm:$0xf] %v4260
  %4358 = vst [vmem:[#allocation3 + $0x2fc] sm:$0xf] %v4274
  %4359 = vst [vmem:[#allocation3 + $0x33c] sm:$0xf] %v4288
  %4360 = vst [vmem:[#allocation3 + $0x37c] sm:$0xf] %v4302
  %4361 = vst [vmem:[#allocation3 + $0x3bc] sm:$0xf] %v4316
  %4362 = vst [vmem:[#allocation3 + $0x3fc] sm:$0xf] %v4330
  %v4363 = vld [vmem:[#allocation3] sm:$0xff]
  %v4364 = vld [vmem:[#allocation3 + $0x8] sm:$0xff]
  %v4365 = vld [vmem:[#allocation3 + $0x10] sm:$0xff]
  %v4366 = vld [vmem:[#allocation3 + $0x18] sm:$0xff]
  %v4367 = vld [vmem:[#allocation3 + $0x20] sm:$0xff]
  %v4368 = vld [vmem:[#allocation3 + $0x28] sm:$0xff]
  %v4369 = vld [vmem:[#allocation3 + $0x30] sm:$0xff]
  %v4370 = vld [vmem:[#allocation3 + $0x38] sm:$0xff]
  %v4371 = vld [vmem:[#allocation3 + $0x40] sm:$0xff]
  %v4372 = vld [vmem:[#allocation3 + $0x48] sm:$0xff]
  %v4373 = vld [vmem:[#allocation3 + $0x50] sm:$0xff]
  %v4374 = vld [vmem:[#allocation3 + $0x58] sm:$0xff]
  %v4375 = vld [vmem:[#allocation3 + $0x60] sm:$0xff]
  %v4376 = vld [vmem:[#allocation3 + $0x68] sm:$0xff]
  %v4377 = vld [vmem:[#allocation3 + $0x70] sm:$0xff]
  %v4378 = vld [vmem:[#allocation3 + $0x78] sm:$0xff]
  %v4379 = vld [vmem:[#allocation3 + $0x80] sm:$0xff]
  %v4380 = vld [vmem:[#allocation3 + $0x88] sm:$0xff]
  %v4381 = vld [vmem:[#allocation3 + $0x90] sm:$0xff]
  %v4382 = vld [vmem:[#allocation3 + $0x98] sm:$0xff]
  %v4383 = vld [vmem:[#allocation3 + $0xa0] sm:$0xff]
  %v4384 = vld [vmem:[#allocation3 + $0xa8] sm:$0xff]
  %v4385 = vld [vmem:[#allocation3 + $0xb0] sm:$0xff]
  %v4386 = vld [vmem:[#allocation3 + $0xb8] sm:$0xff]
  %v4387 = vld [vmem:[#allocation3 + $0xc0] sm:$0xff]
  %v4388 = vld [vmem:[#allocation3 + $0xc8] sm:$0xff]
  %v4389 = vld [vmem:[#allocation3 + $0xd0] sm:$0xff]
  %v4390 = vld [vmem:[#allocation3 + $0xd8] sm:$0xff]
  %v4391 = vld [vmem:[#allocation3 + $0xe0] sm:$0xff]
  %v4392 = vld [vmem:[#allocation3 + $0xe8] sm:$0xff]
  %v4393 = vld [vmem:[#allocation3 + $0xf0] sm:$0xff]
  %v4394 = vld [vmem:[#allocation3 + $0xf8] sm:$0xff]
  %v4395 = vld [vmem:[#allocation3 + $0x100] sm:$0xff]
  %v4396 = vld [vmem:[#allocation3 + $0x108] sm:$0xff]
  %v4397 = vld [vmem:[#allocation3 + $0x110] sm:$0xff]
  %v4398 = vld [vmem:[#allocation3 + $0x118] sm:$0xff]
  %v4399 = vld [vmem:[#allocation3 + $0x120] sm:$0xff]
  %v4400 = vld [vmem:[#allocation3 + $0x128] sm:$0xff]
  %v4401 = vld [vmem:[#allocation3 + $0x130] sm:$0xff]
  %v4402 = vld [vmem:[#allocation3 + $0x138] sm:$0xff]
  %v4403 = vld [vmem:[#allocation3 + $0x140] sm:$0xff]
  %v4404 = vld [vmem:[#allocation3 + $0x148] sm:$0xff]
  %v4405 = vld [vmem:[#allocation3 + $0x150] sm:$0xff]
  %v4406 = vld [vmem:[#allocation3 + $0x158] sm:$0xff]
  %v4407 = vld [vmem:[#allocation3 + $0x160] sm:$0xff]
  %v4408 = vld [vmem:[#allocation3 + $0x168] sm:$0xff]
  %v4409 = vld [vmem:[#allocation3 + $0x170] sm:$0xff]
  %v4410 = vld [vmem:[#allocation3 + $0x178] sm:$0xff]
  %v4411 = vld [vmem:[#allocation3 + $0x180] sm:$0xff]
  %v4412 = vld [vmem:[#allocation3 + $0x188] sm:$0xff]
  %v4413 = vld [vmem:[#allocation3 + $0x190] sm:$0xff]
  %v4414 = vld [vmem:[#allocation3 + $0x198] sm:$0xff]
  %v4415 = vld [vmem:[#allocation3 + $0x1a0] sm:$0xff]
  %v4416 = vld [vmem:[#allocation3 + $0x1a8] sm:$0xff]
  %v4417 = vld [vmem:[#allocation3 + $0x1b0] sm:$0xff]
  %v4418 = vld [vmem:[#allocation3 + $0x1b8] sm:$0xff]
  %v4419 = vld [vmem:[#allocation3 + $0x1c0] sm:$0xff]
  %v4420 = vld [vmem:[#allocation3 + $0x1c8] sm:$0xff]
  %v4421 = vld [vmem:[#allocation3 + $0x1d0] sm:$0xff]
  %v4422 = vld [vmem:[#allocation3 + $0x1d8] sm:$0xff]
  %v4423 = vld [vmem:[#allocation3 + $0x1e0] sm:$0xff]
  %v4424 = vld [vmem:[#allocation3 + $0x1e8] sm:$0xff]
  %v4425 = vld [vmem:[#allocation3 + $0x1f0] sm:$0xff]
  %v4426 = vld [vmem:[#allocation3 + $0x1f8] sm:$0xff]
  %v4427 = vld [vmem:[#allocation3 + $0x200] sm:$0xff]
  %v4428 = vld [vmem:[#allocation3 + $0x208] sm:$0xff]
  %v4429 = vld [vmem:[#allocation3 + $0x210] sm:$0xff]
  %v4430 = vld [vmem:[#allocation3 + $0x218] sm:$0xff]
  %v4431 = vld [vmem:[#allocation3 + $0x220] sm:$0xff]
  %v4432 = vld [vmem:[#allocation3 + $0x228] sm:$0xff]
  %v4433 = vld [vmem:[#allocation3 + $0x230] sm:$0xff]
  %v4434 = vld [vmem:[#allocation3 + $0x238] sm:$0xff]
  %v4435 = vld [vmem:[#allocation3 + $0x240] sm:$0xff]
  %v4436 = vld [vmem:[#allocation3 + $0x248] sm:$0xff]
  %v4437 = vld [vmem:[#allocation3 + $0x250] sm:$0xff]
  %v4438 = vld [vmem:[#allocation3 + $0x258] sm:$0xff]
  %v4439 = vld [vmem:[#allocation3 + $0x260] sm:$0xff]
  %v4440 = vld [vmem:[#allocation3 + $0x268] sm:$0xff]
  %v4441 = vld [vmem:[#allocation3 + $0x270] sm:$0xff]
  %v4442 = vld [vmem:[#allocation3 + $0x278] sm:$0xff]
  %v4443 = vld [vmem:[#allocation3 + $0x280] sm:$0xff]
  %v4444 = vld [vmem:[#allocation3 + $0x288] sm:$0xff]
  %v4445 = vld [vmem:[#allocation3 + $0x290] sm:$0xff]
  %v4446 = vld [vmem:[#allocation3 + $0x298] sm:$0xff]
  %v4447 = vld [vmem:[#allocation3 + $0x2a0] sm:$0xff]
  %v4448 = vld [vmem:[#allocation3 + $0x2a8] sm:$0xff]
  %v4449 = vld [vmem:[#allocation3 + $0x2b0] sm:$0xff]
  %v4450 = vld [vmem:[#allocation3 + $0x2b8] sm:$0xff]
  %v4451 = vld [vmem:[#allocation3 + $0x2c0] sm:$0xff]
  %v4452 = vld [vmem:[#allocation3 + $0x2c8] sm:$0xff]
  %v4453 = vld [vmem:[#allocation3 + $0x2d0] sm:$0xff]
  %v4454 = vld [vmem:[#allocation3 + $0x2d8] sm:$0xff]
  %v4455 = vld [vmem:[#allocation3 + $0x2e0] sm:$0xff]
  %v4456 = vld [vmem:[#allocation3 + $0x2e8] sm:$0xff]
  %v4457 = vld [vmem:[#allocation3 + $0x2f0] sm:$0xff]
  %v4458 = vld [vmem:[#allocation3 + $0x2f8] sm:$0xff]
  %v4459 = vld [vmem:[#allocation3 + $0x300] sm:$0xff]
  %v4460 = vld [vmem:[#allocation3 + $0x308] sm:$0xff]
  %v4461 = vld [vmem:[#allocation3 + $0x310] sm:$0xff]
  %v4462 = vld [vmem:[#allocation3 + $0x318] sm:$0xff]
  %v4463 = vld [vmem:[#allocation3 + $0x320] sm:$0xff]
  %v4464 = vld [vmem:[#allocation3 + $0x328] sm:$0xff]
  %v4465 = vld [vmem:[#allocation3 + $0x330] sm:$0xff]
  %v4466 = vld [vmem:[#allocation3 + $0x338] sm:$0xff]
  %v4467 = vld [vmem:[#allocation3 + $0x340] sm:$0xff]
  %v4468 = vld [vmem:[#allocation3 + $0x348] sm:$0xff]
  %v4469 = vld [vmem:[#allocation3 + $0x350] sm:$0xff]
  %v4470 = vld [vmem:[#allocation3 + $0x358] sm:$0xff]
  %v4471 = vld [vmem:[#allocation3 + $0x360] sm:$0xff]
  %v4472 = vld [vmem:[#allocation3 + $0x368] sm:$0xff]
  %v4473 = vld [vmem:[#allocation3 + $0x370] sm:$0xff]
  %v4474 = vld [vmem:[#allocation3 + $0x378] sm:$0xff]
  %v4475 = vld [vmem:[#allocation3 + $0x380] sm:$0xff]
  %v4476 = vld [vmem:[#allocation3 + $0x388] sm:$0xff]
  %v4477 = vld [vmem:[#allocation3 + $0x390] sm:$0xff]
  %v4478 = vld [vmem:[#allocation3 + $0x398] sm:$0xff]
  %v4479 = vld [vmem:[#allocation3 + $0x3a0] sm:$0xff]
  %v4480 = vld [vmem:[#allocation3 + $0x3a8] sm:$0xff]
  %v4481 = vld [vmem:[#allocation3 + $0x3b0] sm:$0xff]
  %v4482 = vld [vmem:[#allocation3 + $0x3b8] sm:$0xff]
  %v4483 = vld [vmem:[#allocation3 + $0x3c0] sm:$0xff]
  %v4484 = vld [vmem:[#allocation3 + $0x3c8] sm:$0xff]
  %v4485 = vld [vmem:[#allocation3 + $0x3d0] sm:$0xff]
  %v4486 = vld [vmem:[#allocation3 + $0x3d8] sm:$0xff]
  %v4487 = vld [vmem:[#allocation3 + $0x3e0] sm:$0xff]
  %v4488 = vld [vmem:[#allocation3 + $0x3e8] sm:$0xff]
  %v4489 = vld [vmem:[#allocation3 + $0x3f0] sm:$0xff]
  %v4490 = vld [vmem:[#allocation3 + $0x3f8] sm:$0xff]
  %v4491 = vld [vmem:[%s2] sm:$0xf]
  %v4492 = vld [vmem:[%s2 + $0x4] sm:$0xf]
  %v4493 = vld [vmem:[%s2 + $0x8] sm:$0xf]
  %v4494 = vld [vmem:[%s2 + $0xc] sm:$0xf]
  %v4495 = vld [vmem:[%s2 + $0x10] sm:$0xf]
  %v4496 = vld [vmem:[%s2 + $0x14] sm:$0xf]
  %v4497 = vld [vmem:[%s2 + $0x18] sm:$0xf]
  %v4498 = vld [vmem:[%s2 + $0x1c] sm:$0xf]
  %v4499 = vld [vmem:[%s2 + $0x20] sm:$0xf]
  %v4500 = vld [vmem:[%s2 + $0x24] sm:$0xf]
  %v4501 = vld [vmem:[%s2 + $0x28] sm:$0xf]
  %v4502 = vld [vmem:[%s2 + $0x2c] sm:$0xf]
  %v4503 = vld [vmem:[%s2 + $0x30] sm:$0xf]
  %v4504 = vld [vmem:[%s2 + $0x34] sm:$0xf]
  %v4505 = vld [vmem:[%s2 + $0x38] sm:$0xf]
  %v4506 = vld [vmem:[%s2 + $0x3c] sm:$0xf]
  %v4507 = vld [vmem:[%s2 + $0x40] sm:$0xf]
  %v4508 = vld [vmem:[%s2 + $0x44] sm:$0xf]
  %v4509 = vld [vmem:[%s2 + $0x48] sm:$0xf]
  %v4510 = vld [vmem:[%s2 + $0x4c] sm:$0xf]
  %v4511 = vld [vmem:[%s2 + $0x50] sm:$0xf]
  %v4512 = vld [vmem:[%s2 + $0x54] sm:$0xf]
  %v4513 = vld [vmem:[%s2 + $0x58] sm:$0xf]
  %v4514 = vld [vmem:[%s2 + $0x5c] sm:$0xf]
  %v4515 = vld [vmem:[%s2 + $0x60] sm:$0xf]
  %v4516 = vld [vmem:[%s2 + $0x64] sm:$0xf]
  %v4517 = vld [vmem:[%s2 + $0x68] sm:$0xf]
  %v4518 = vld [vmem:[%s2 + $0x6c] sm:$0xf]
  %v4519 = vld [vmem:[%s2 + $0x70] sm:$0xf]
  %v4520 = vld [vmem:[%s2 + $0x74] sm:$0xf]
  %v4521 = vld [vmem:[%s2 + $0x78] sm:$0xf]
  %v4522 = vld [vmem:[%s2 + $0x7c] sm:$0xf]
  %v4523 = vld [vmem:[%s2 + $0x80] sm:$0xf]
  %v4524 = vld [vmem:[%s2 + $0x84] sm:$0xf]
  %v4525 = vld [vmem:[%s2 + $0x88] sm:$0xf]
  %v4526 = vld [vmem:[%s2 + $0x8c] sm:$0xf]
  %v4527 = vld [vmem:[%s2 + $0x90] sm:$0xf]
  %v4528 = vld [vmem:[%s2 + $0x94] sm:$0xf]
  %v4529 = vld [vmem:[%s2 + $0x98] sm:$0xf]
  %v4530 = vld [vmem:[%s2 + $0x9c] sm:$0xf]
  %v4531 = vld [vmem:[%s2 + $0xa0] sm:$0xf]
  %v4532 = vld [vmem:[%s2 + $0xa4] sm:$0xf]
  %v4533 = vld [vmem:[%s2 + $0xa8] sm:$0xf]
  %v4534 = vld [vmem:[%s2 + $0xac] sm:$0xf]
  %v4535 = vld [vmem:[%s2 + $0xb0] sm:$0xf]
  %v4536 = vld [vmem:[%s2 + $0xb4] sm:$0xf]
  %v4537 = vld [vmem:[%s2 + $0xb8] sm:$0xf]
  %v4538 = vld [vmem:[%s2 + $0xbc] sm:$0xf]
  %v4539 = vld [vmem:[%s2 + $0xc0] sm:$0xf]
  %v4540 = vld [vmem:[%s2 + $0xc4] sm:$0xf]
  %v4541 = vld [vmem:[%s2 + $0xc8] sm:$0xf]
  %v4542 = vld [vmem:[%s2 + $0xcc] sm:$0xf]
  %v4543 = vld [vmem:[%s2 + $0xd0] sm:$0xf]
  %v4544 = vld [vmem:[%s2 + $0xd4] sm:$0xf]
  %v4545 = vld [vmem:[%s2 + $0xd8] sm:$0xf]
  %v4546 = vld [vmem:[%s2 + $0xdc] sm:$0xf]
  %v4547 = vld [vmem:[%s2 + $0xe0] sm:$0xf]
  %v4548 = vld [vmem:[%s2 + $0xe4] sm:$0xf]
  %v4549 = vld [vmem:[%s2 + $0xe8] sm:$0xf]
  %v4550 = vld [vmem:[%s2 + $0xec] sm:$0xf]
  %v4551 = vld [vmem:[%s2 + $0xf0] sm:$0xf]
  %v4552 = vld [vmem:[%s2 + $0xf4] sm:$0xf]
  %v4553 = vld [vmem:[%s2 + $0xf8] sm:$0xf]
  %v4554 = vld [vmem:[%s2 + $0xfc] sm:$0xf]
  %v4555 = vld [vmem:[%s2 + $0x100] sm:$0xf]
  %v4556 = vld [vmem:[%s2 + $0x104] sm:$0xf]
  %v4557 = vld [vmem:[%s2 + $0x108] sm:$0xf]
  %v4558 = vld [vmem:[%s2 + $0x10c] sm:$0xf]
  %v4559 = vld [vmem:[%s2 + $0x110] sm:$0xf]
  %v4560 = vld [vmem:[%s2 + $0x114] sm:$0xf]
  %v4561 = vld [vmem:[%s2 + $0x118] sm:$0xf]
  %v4562 = vld [vmem:[%s2 + $0x11c] sm:$0xf]
  %v4563 = vld [vmem:[%s2 + $0x120] sm:$0xf]
  %v4564 = vld [vmem:[%s2 + $0x124] sm:$0xf]
  %v4565 = vld [vmem:[%s2 + $0x128] sm:$0xf]
  %v4566 = vld [vmem:[%s2 + $0x12c] sm:$0xf]
  %v4567 = vld [vmem:[%s2 + $0x130] sm:$0xf]
  %v4568 = vld [vmem:[%s2 + $0x134] sm:$0xf]
  %v4569 = vld [vmem:[%s2 + $0x138] sm:$0xf]
  %v4570 = vld [vmem:[%s2 + $0x13c] sm:$0xf]
  %v4571 = vld [vmem:[%s2 + $0x140] sm:$0xf]
  %v4572 = vld [vmem:[%s2 + $0x144] sm:$0xf]
  %v4573 = vld [vmem:[%s2 + $0x148] sm:$0xf]
  %v4574 = vld [vmem:[%s2 + $0x14c] sm:$0xf]
  %v4575 = vld [vmem:[%s2 + $0x150] sm:$0xf]
  %v4576 = vld [vmem:[%s2 + $0x154] sm:$0xf]
  %v4577 = vld [vmem:[%s2 + $0x158] sm:$0xf]
  %v4578 = vld [vmem:[%s2 + $0x15c] sm:$0xf]
  %v4579 = vld [vmem:[%s2 + $0x160] sm:$0xf]
  %v4580 = vld [vmem:[%s2 + $0x164] sm:$0xf]
  %v4581 = vld [vmem:[%s2 + $0x168] sm:$0xf]
  %v4582 = vld [vmem:[%s2 + $0x16c] sm:$0xf]
  %v4583 = vld [vmem:[%s2 + $0x170] sm:$0xf]
  %v4584 = vld [vmem:[%s2 + $0x174] sm:$0xf]
  %v4585 = vld [vmem:[%s2 + $0x178] sm:$0xf]
  %v4586 = vld [vmem:[%s2 + $0x17c] sm:$0xf]
  %v4587 = vld [vmem:[%s2 + $0x180] sm:$0xf]
  %v4588 = vld [vmem:[%s2 + $0x184] sm:$0xf]
  %v4589 = vld [vmem:[%s2 + $0x188] sm:$0xf]
  %v4590 = vld [vmem:[%s2 + $0x18c] sm:$0xf]
  %v4591 = vld [vmem:[%s2 + $0x190] sm:$0xf]
  %v4592 = vld [vmem:[%s2 + $0x194] sm:$0xf]
  %v4593 = vld [vmem:[%s2 + $0x198] sm:$0xf]
  %v4594 = vld [vmem:[%s2 + $0x19c] sm:$0xf]
  %v4595 = vld [vmem:[%s2 + $0x1a0] sm:$0xf]
  %v4596 = vld [vmem:[%s2 + $0x1a4] sm:$0xf]
  %v4597 = vld [vmem:[%s2 + $0x1a8] sm:$0xf]
  %v4598 = vld [vmem:[%s2 + $0x1ac] sm:$0xf]
  %v4599 = vld [vmem:[%s2 + $0x1b0] sm:$0xf]
  %v4600 = vld [vmem:[%s2 + $0x1b4] sm:$0xf]
  %v4601 = vld [vmem:[%s2 + $0x1b8] sm:$0xf]
  %v4602 = vld [vmem:[%s2 + $0x1bc] sm:$0xf]
  %v4603 = vld [vmem:[%s2 + $0x1c0] sm:$0xf]
  %v4604 = vld [vmem:[%s2 + $0x1c4] sm:$0xf]
  %v4605 = vld [vmem:[%s2 + $0x1c8] sm:$0xf]
  %v4606 = vld [vmem:[%s2 + $0x1cc] sm:$0xf]
  %v4607 = vld [vmem:[%s2 + $0x1d0] sm:$0xf]
  %v4608 = vld [vmem:[%s2 + $0x1d4] sm:$0xf]
  %v4609 = vld [vmem:[%s2 + $0x1d8] sm:$0xf]
  %v4610 = vld [vmem:[%s2 + $0x1dc] sm:$0xf]
  %v4611 = vld [vmem:[%s2 + $0x1e0] sm:$0xf]
  %v4612 = vld [vmem:[%s2 + $0x1e4] sm:$0xf]
  %v4613 = vld [vmem:[%s2 + $0x1e8] sm:$0xf]
  %v4614 = vld [vmem:[%s2 + $0x1ec] sm:$0xf]
  %v4615 = vld [vmem:[%s2 + $0x1f0] sm:$0xf]
  %v4616 = vld [vmem:[%s2 + $0x1f4] sm:$0xf]
  %v4617 = vld [vmem:[%s2 + $0x1f8] sm:$0xf]
  %v4618 = vld [vmem:[%s2 + $0x1fc] sm:$0xf]
  %v4619 = vld [vmem:[%s2 + $0x200] sm:$0xf]
  %v4620 = vld [vmem:[%s2 + $0x204] sm:$0xf]
  %v4621 = vld [vmem:[%s2 + $0x208] sm:$0xf]
  %v4622 = vld [vmem:[%s2 + $0x20c] sm:$0xf]
  %v4623 = vld [vmem:[%s2 + $0x210] sm:$0xf]
  %v4624 = vld [vmem:[%s2 + $0x214] sm:$0xf]
  %v4625 = vld [vmem:[%s2 + $0x218] sm:$0xf]
  %v4626 = vld [vmem:[%s2 + $0x21c] sm:$0xf]
  %v4627 = vld [vmem:[%s2 + $0x220] sm:$0xf]
  %v4628 = vld [vmem:[%s2 + $0x224] sm:$0xf]
  %v4629 = vld [vmem:[%s2 + $0x228] sm:$0xf]
  %v4630 = vld [vmem:[%s2 + $0x22c] sm:$0xf]
  %v4631 = vld [vmem:[%s2 + $0x230] sm:$0xf]
  %v4632 = vld [vmem:[%s2 + $0x234] sm:$0xf]
  %v4633 = vld [vmem:[%s2 + $0x238] sm:$0xf]
  %v4634 = vld [vmem:[%s2 + $0x23c] sm:$0xf]
  %v4635 = vld [vmem:[%s2 + $0x240] sm:$0xf]
  %v4636 = vld [vmem:[%s2 + $0x244] sm:$0xf]
  %v4637 = vld [vmem:[%s2 + $0x248] sm:$0xf]
  %v4638 = vld [vmem:[%s2 + $0x24c] sm:$0xf]
  %v4639 = vld [vmem:[%s2 + $0x250] sm:$0xf]
  %v4640 = vld [vmem:[%s2 + $0x254] sm:$0xf]
  %v4641 = vld [vmem:[%s2 + $0x258] sm:$0xf]
  %v4642 = vld [vmem:[%s2 + $0x25c] sm:$0xf]
  %v4643 = vld [vmem:[%s2 + $0x260] sm:$0xf]
  %v4644 = vld [vmem:[%s2 + $0x264] sm:$0xf]
  %v4645 = vld [vmem:[%s2 + $0x268] sm:$0xf]
  %v4646 = vld [vmem:[%s2 + $0x26c] sm:$0xf]
  %v4647 = vld [vmem:[%s2 + $0x270] sm:$0xf]
  %v4648 = vld [vmem:[%s2 + $0x274] sm:$0xf]
  %v4649 = vld [vmem:[%s2 + $0x278] sm:$0xf]
  %v4650 = vld [vmem:[%s2 + $0x27c] sm:$0xf]
  %v4651 = vld [vmem:[%s2 + $0x280] sm:$0xf]
  %v4652 = vld [vmem:[%s2 + $0x284] sm:$0xf]
  %v4653 = vld [vmem:[%s2 + $0x288] sm:$0xf]
  %v4654 = vld [vmem:[%s2 + $0x28c] sm:$0xf]
  %v4655 = vld [vmem:[%s2 + $0x290] sm:$0xf]
  %v4656 = vld [vmem:[%s2 + $0x294] sm:$0xf]
  %v4657 = vld [vmem:[%s2 + $0x298] sm:$0xf]
  %v4658 = vld [vmem:[%s2 + $0x29c] sm:$0xf]
  %v4659 = vld [vmem:[%s2 + $0x2a0] sm:$0xf]
  %v4660 = vld [vmem:[%s2 + $0x2a4] sm:$0xf]
  %v4661 = vld [vmem:[%s2 + $0x2a8] sm:$0xf]
  %v4662 = vld [vmem:[%s2 + $0x2ac] sm:$0xf]
  %v4663 = vld [vmem:[%s2 + $0x2b0] sm:$0xf]
  %v4664 = vld [vmem:[%s2 + $0x2b4] sm:$0xf]
  %v4665 = vld [vmem:[%s2 + $0x2b8] sm:$0xf]
  %v4666 = vld [vmem:[%s2 + $0x2bc] sm:$0xf]
  %v4667 = vld [vmem:[%s2 + $0x2c0] sm:$0xf]
  %v4668 = vld [vmem:[%s2 + $0x2c4] sm:$0xf]
  %v4669 = vld [vmem:[%s2 + $0x2c8] sm:$0xf]
  %v4670 = vld [vmem:[%s2 + $0x2cc] sm:$0xf]
  %v4671 = vld [vmem:[%s2 + $0x2d0] sm:$0xf]
  %v4672 = vld [vmem:[%s2 + $0x2d4] sm:$0xf]
  %v4673 = vld [vmem:[%s2 + $0x2d8] sm:$0xf]
  %v4674 = vld [vmem:[%s2 + $0x2dc] sm:$0xf]
  %v4675 = vld [vmem:[%s2 + $0x2e0] sm:$0xf]
  %v4676 = vld [vmem:[%s2 + $0x2e4] sm:$0xf]
  %v4677 = vld [vmem:[%s2 + $0x2e8] sm:$0xf]
  %v4678 = vld [vmem:[%s2 + $0x2ec] sm:$0xf]
  %v4679 = vld [vmem:[%s2 + $0x2f0] sm:$0xf]
  %v4680 = vld [vmem:[%s2 + $0x2f4] sm:$0xf]
  %v4681 = vld [vmem:[%s2 + $0x2f8] sm:$0xf]
  %v4682 = vld [vmem:[%s2 + $0x2fc] sm:$0xf]
  %v4683 = vld [vmem:[%s2 + $0x300] sm:$0xf]
  %v4684 = vld [vmem:[%s2 + $0x304] sm:$0xf]
  %v4685 = vld [vmem:[%s2 + $0x308] sm:$0xf]
  %v4686 = vld [vmem:[%s2 + $0x30c] sm:$0xf]
  %v4687 = vld [vmem:[%s2 + $0x310] sm:$0xf]
  %v4688 = vld [vmem:[%s2 + $0x314] sm:$0xf]
  %v4689 = vld [vmem:[%s2 + $0x318] sm:$0xf]
  %v4690 = vld [vmem:[%s2 + $0x31c] sm:$0xf]
  %v4691 = vld [vmem:[%s2 + $0x320] sm:$0xf]
  %v4692 = vld [vmem:[%s2 + $0x324] sm:$0xf]
  %v4693 = vld [vmem:[%s2 + $0x328] sm:$0xf]
  %v4694 = vld [vmem:[%s2 + $0x32c] sm:$0xf]
  %v4695 = vld [vmem:[%s2 + $0x330] sm:$0xf]
  %v4696 = vld [vmem:[%s2 + $0x334] sm:$0xf]
  %v4697 = vld [vmem:[%s2 + $0x338] sm:$0xf]
  %v4698 = vld [vmem:[%s2 + $0x33c] sm:$0xf]
  %v4699 = vld [vmem:[%s2 + $0x340] sm:$0xf]
  %v4700 = vld [vmem:[%s2 + $0x344] sm:$0xf]
  %v4701 = vld [vmem:[%s2 + $0x348] sm:$0xf]
  %v4702 = vld [vmem:[%s2 + $0x34c] sm:$0xf]
  %v4703 = vld [vmem:[%s2 + $0x350] sm:$0xf]
  %v4704 = vld [vmem:[%s2 + $0x354] sm:$0xf]
  %v4705 = vld [vmem:[%s2 + $0x358] sm:$0xf]
  %v4706 = vld [vmem:[%s2 + $0x35c] sm:$0xf]
  %v4707 = vld [vmem:[%s2 + $0x360] sm:$0xf]
  %v4708 = vld [vmem:[%s2 + $0x364] sm:$0xf]
  %v4709 = vld [vmem:[%s2 + $0x368] sm:$0xf]
  %v4710 = vld [vmem:[%s2 + $0x36c] sm:$0xf]
  %v4711 = vld [vmem:[%s2 + $0x370] sm:$0xf]
  %v4712 = vld [vmem:[%s2 + $0x374] sm:$0xf]
  %v4713 = vld [vmem:[%s2 + $0x378] sm:$0xf]
  %v4714 = vld [vmem:[%s2 + $0x37c] sm:$0xf]
  %v4715 = vld [vmem:[%s2 + $0x380] sm:$0xf]
  %v4716 = vld [vmem:[%s2 + $0x384] sm:$0xf]
  %v4717 = vld [vmem:[%s2 + $0x388] sm:$0xf]
  %v4718 = vld [vmem:[%s2 + $0x38c] sm:$0xf]
  %v4719 = vld [vmem:[%s2 + $0x390] sm:$0xf]
  %v4720 = vld [vmem:[%s2 + $0x394] sm:$0xf]
  %v4721 = vld [vmem:[%s2 + $0x398] sm:$0xf]
  %v4722 = vld [vmem:[%s2 + $0x39c] sm:$0xf]
  %v4723 = vld [vmem:[%s2 + $0x3a0] sm:$0xf]
  %v4724 = vld [vmem:[%s2 + $0x3a4] sm:$0xf]
  %v4725 = vld [vmem:[%s2 + $0x3a8] sm:$0xf]
  %v4726 = vld [vmem:[%s2 + $0x3ac] sm:$0xf]
  %v4727 = vld [vmem:[%s2 + $0x3b0] sm:$0xf]
  %v4728 = vld [vmem:[%s2 + $0x3b4] sm:$0xf]
  %v4729 = vld [vmem:[%s2 + $0x3b8] sm:$0xf]
  %v4730 = vld [vmem:[%s2 + $0x3bc] sm:$0xf]
  %v4731 = vld [vmem:[%s2 + $0x3c0] sm:$0xf]
  %v4732 = vld [vmem:[%s2 + $0x3c4] sm:$0xf]
  %v4733 = vld [vmem:[%s2 + $0x3c8] sm:$0xf]
  %v4734 = vld [vmem:[%s2 + $0x3cc] sm:$0xf]
  %v4735 = vld [vmem:[%s2 + $0x3d0] sm:$0xf]
  %v4736 = vld [vmem:[%s2 + $0x3d4] sm:$0xf]
  %v4737 = vld [vmem:[%s2 + $0x3d8] sm:$0xf]
  %v4738 = vld [vmem:[%s2 + $0x3dc] sm:$0xf]
  %v4739 = vld [vmem:[%s2 + $0x3e0] sm:$0xf]
  %v4740 = vld [vmem:[%s2 + $0x3e4] sm:$0xf]
  %v4741 = vld [vmem:[%s2 + $0x3e8] sm:$0xf]
  %v4742 = vld [vmem:[%s2 + $0x3ec] sm:$0xf]
  %v4743 = vld [vmem:[%s2 + $0x3f0] sm:$0xf]
  %v4744 = vld [vmem:[%s2 + $0x3f4] sm:$0xf]
  %v4745 = vld [vmem:[%s2 + $0x3f8] sm:$0xf]
  %v4746 = vld [vmem:[%s2 + $0x3fc] sm:$0xf]
  %v4875 = vunpack.c.l.b16 %v4363
  %v4876 = vunpack.c.h.b16 %v4363
  %v4877 = vunpack.c.l.b16 %v4364
  %v4878 = vunpack.c.h.b16 %v4364
  %v4879 = vunpack.c.l.b16 %v4365
  %v4880 = vunpack.c.h.b16 %v4365
  %v4881 = vunpack.c.l.b16 %v4366
  %v4882 = vunpack.c.h.b16 %v4366
  %v4883 = vunpack.c.l.b16 %v4367
  %v4884 = vunpack.c.h.b16 %v4367
  %v4885 = vunpack.c.l.b16 %v4368
  %v4886 = vunpack.c.h.b16 %v4368
  %v4887 = vunpack.c.l.b16 %v4369
  %v4888 = vunpack.c.h.b16 %v4369
  %v4889 = vunpack.c.l.b16 %v4370
  %v4890 = vunpack.c.h.b16 %v4370
  %v4891 = vunpack.c.l.b16 %v4371
  %v4892 = vunpack.c.h.b16 %v4371
  %v4893 = vunpack.c.l.b16 %v4372
  %v4894 = vunpack.c.h.b16 %v4372
  %v4895 = vunpack.c.l.b16 %v4373
  %v4896 = vunpack.c.h.b16 %v4373
  %v4897 = vunpack.c.l.b16 %v4374
  %v4898 = vunpack.c.h.b16 %v4374
  %v4899 = vunpack.c.l.b16 %v4375
  %v4900 = vunpack.c.h.b16 %v4375
  %v4901 = vunpack.c.l.b16 %v4376
  %v4902 = vunpack.c.h.b16 %v4376
  %v4903 = vunpack.c.l.b16 %v4377
  %v4904 = vunpack.c.h.b16 %v4377
  %v4905 = vunpack.c.l.b16 %v4378
  %v4906 = vunpack.c.h.b16 %v4378
  %v4907 = vunpack.c.l.b16 %v4379
  %v4908 = vunpack.c.h.b16 %v4379
  %v4909 = vunpack.c.l.b16 %v4380
  %v4910 = vunpack.c.h.b16 %v4380
  %v4911 = vunpack.c.l.b16 %v4381
  %v4912 = vunpack.c.h.b16 %v4381
  %v4913 = vunpack.c.l.b16 %v4382
  %v4914 = vunpack.c.h.b16 %v4382
  %v4915 = vunpack.c.l.b16 %v4383
  %v4916 = vunpack.c.h.b16 %v4383
  %v4917 = vunpack.c.l.b16 %v4384
  %v4918 = vunpack.c.h.b16 %v4384
  %v4919 = vunpack.c.l.b16 %v4385
  %v4920 = vunpack.c.h.b16 %v4385
  %v4921 = vunpack.c.l.b16 %v4386
  %v4922 = vunpack.c.h.b16 %v4386
  %v4923 = vunpack.c.l.b16 %v4387
  %v4924 = vunpack.c.h.b16 %v4387
  %v4925 = vunpack.c.l.b16 %v4388
  %v4926 = vunpack.c.h.b16 %v4388
  %v4927 = vunpack.c.l.b16 %v4389
  %v4928 = vunpack.c.h.b16 %v4389
  %v4929 = vunpack.c.l.b16 %v4390
  %v4930 = vunpack.c.h.b16 %v4390
  %v4931 = vunpack.c.l.b16 %v4391
  %v4932 = vunpack.c.h.b16 %v4391
  %v4933 = vunpack.c.l.b16 %v4392
  %v4934 = vunpack.c.h.b16 %v4392
  %v4935 = vunpack.c.l.b16 %v4393
  %v4936 = vunpack.c.h.b16 %v4393
  %v4937 = vunpack.c.l.b16 %v4394
  %v4938 = vunpack.c.h.b16 %v4394
  %v4939 = vunpack.c.l.b16 %v4395
  %v4940 = vunpack.c.h.b16 %v4395
  %v4941 = vunpack.c.l.b16 %v4396
  %v4942 = vunpack.c.h.b16 %v4396
  %v4943 = vunpack.c.l.b16 %v4397
  %v4944 = vunpack.c.h.b16 %v4397
  %v4945 = vunpack.c.l.b16 %v4398
  %v4946 = vunpack.c.h.b16 %v4398
  %v4947 = vunpack.c.l.b16 %v4399
  %v4948 = vunpack.c.h.b16 %v4399
  %v4949 = vunpack.c.l.b16 %v4400
  %v4950 = vunpack.c.h.b16 %v4400
  %v4951 = vunpack.c.l.b16 %v4401
  %v4952 = vunpack.c.h.b16 %v4401
  %v4953 = vunpack.c.l.b16 %v4402
  %v4954 = vunpack.c.h.b16 %v4402
  %v4955 = vunpack.c.l.b16 %v4403
  %v4956 = vunpack.c.h.b16 %v4403
  %v4957 = vunpack.c.l.b16 %v4404
  %v4958 = vunpack.c.h.b16 %v4404
  %v4959 = vunpack.c.l.b16 %v4405
  %v4960 = vunpack.c.h.b16 %v4405
  %v4961 = vunpack.c.l.b16 %v4406
  %v4962 = vunpack.c.h.b16 %v4406
  %v4963 = vunpack.c.l.b16 %v4407
  %v4964 = vunpack.c.h.b16 %v4407
  %v4965 = vunpack.c.l.b16 %v4408
  %v4966 = vunpack.c.h.b16 %v4408
  %v4967 = vunpack.c.l.b16 %v4409
  %v4968 = vunpack.c.h.b16 %v4409
  %v4969 = vunpack.c.l.b16 %v4410
  %v4970 = vunpack.c.h.b16 %v4410
  %v4971 = vunpack.c.l.b16 %v4411
  %v4972 = vunpack.c.h.b16 %v4411
  %v4973 = vunpack.c.l.b16 %v4412
  %v4974 = vunpack.c.h.b16 %v4412
  %v4975 = vunpack.c.l.b16 %v4413
  %v4976 = vunpack.c.h.b16 %v4413
  %v4977 = vunpack.c.l.b16 %v4414
  %v4978 = vunpack.c.h.b16 %v4414
  %v4979 = vunpack.c.l.b16 %v4415
  %v4980 = vunpack.c.h.b16 %v4415
  %v4981 = vunpack.c.l.b16 %v4416
  %v4982 = vunpack.c.h.b16 %v4416
  %v4983 = vunpack.c.l.b16 %v4417
  %v4984 = vunpack.c.h.b16 %v4417
  %v4985 = vunpack.c.l.b16 %v4418
  %v4986 = vunpack.c.h.b16 %v4418
  %v4987 = vunpack.c.l.b16 %v4419
  %v4988 = vunpack.c.h.b16 %v4419
  %v4989 = vunpack.c.l.b16 %v4420
  %v4990 = vunpack.c.h.b16 %v4420
  %v4991 = vunpack.c.l.b16 %v4421
  %v4992 = vunpack.c.h.b16 %v4421
  %v4993 = vunpack.c.l.b16 %v4422
  %v4994 = vunpack.c.h.b16 %v4422
  %v4995 = vunpack.c.l.b16 %v4423
  %v4996 = vunpack.c.h.b16 %v4423
  %v4997 = vunpack.c.l.b16 %v4424
  %v4998 = vunpack.c.h.b16 %v4424
  %v4999 = vunpack.c.l.b16 %v4425
  %v5000 = vunpack.c.h.b16 %v4425
  %v5001 = vunpack.c.l.b16 %v4426
  %v5002 = vunpack.c.h.b16 %v4426
  %v5003 = vunpack.c.l.b16 %v4427
  %v5004 = vunpack.c.h.b16 %v4427
  %v5005 = vunpack.c.l.b16 %v4428
  %v5006 = vunpack.c.h.b16 %v4428
  %v5007 = vunpack.c.l.b16 %v4429
  %v5008 = vunpack.c.h.b16 %v4429
  %v5009 = vunpack.c.l.b16 %v4430
  %v5010 = vunpack.c.h.b16 %v4430
  %v5011 = vunpack.c.l.b16 %v4431
  %v5012 = vunpack.c.h.b16 %v4431
  %v5013 = vunpack.c.l.b16 %v4432
  %v5014 = vunpack.c.h.b16 %v4432
  %v5015 = vunpack.c.l.b16 %v4433
  %v5016 = vunpack.c.h.b16 %v4433
  %v5017 = vunpack.c.l.b16 %v4434
  %v5018 = vunpack.c.h.b16 %v4434
  %v5019 = vunpack.c.l.b16 %v4435
  %v5020 = vunpack.c.h.b16 %v4435
  %v5021 = vunpack.c.l.b16 %v4436
  %v5022 = vunpack.c.h.b16 %v4436
  %v5023 = vunpack.c.l.b16 %v4437
  %v5024 = vunpack.c.h.b16 %v4437
  %v5025 = vunpack.c.l.b16 %v4438
  %v5026 = vunpack.c.h.b16 %v4438
  %v5027 = vunpack.c.l.b16 %v4439
  %v5028 = vunpack.c.h.b16 %v4439
  %v5029 = vunpack.c.l.b16 %v4440
  %v5030 = vunpack.c.h.b16 %v4440
  %v5031 = vunpack.c.l.b16 %v4441
  %v5032 = vunpack.c.h.b16 %v4441
  %v5033 = vunpack.c.l.b16 %v4442
  %v5034 = vunpack.c.h.b16 %v4442
  %v5035 = vunpack.c.l.b16 %v4443
  %v5036 = vunpack.c.h.b16 %v4443
  %v5037 = vunpack.c.l.b16 %v4444
  %v5038 = vunpack.c.h.b16 %v4444
  %v5039 = vunpack.c.l.b16 %v4445
  %v5040 = vunpack.c.h.b16 %v4445
  %v5041 = vunpack.c.l.b16 %v4446
  %v5042 = vunpack.c.h.b16 %v4446
  %v5043 = vunpack.c.l.b16 %v4447
  %v5044 = vunpack.c.h.b16 %v4447
  %v5045 = vunpack.c.l.b16 %v4448
  %v5046 = vunpack.c.h.b16 %v4448
  %v5047 = vunpack.c.l.b16 %v4449
  %v5048 = vunpack.c.h.b16 %v4449
  %v5049 = vunpack.c.l.b16 %v4450
  %v5050 = vunpack.c.h.b16 %v4450
  %v5051 = vunpack.c.l.b16 %v4451
  %v5052 = vunpack.c.h.b16 %v4451
  %v5053 = vunpack.c.l.b16 %v4452
  %v5054 = vunpack.c.h.b16 %v4452
  %v5055 = vunpack.c.l.b16 %v4453
  %v5056 = vunpack.c.h.b16 %v4453
  %v5057 = vunpack.c.l.b16 %v4454
  %v5058 = vunpack.c.h.b16 %v4454
  %v5059 = vunpack.c.l.b16 %v4455
  %v5060 = vunpack.c.h.b16 %v4455
  %v5061 = vunpack.c.l.b16 %v4456
  %v5062 = vunpack.c.h.b16 %v4456
  %v5063 = vunpack.c.l.b16 %v4457
  %v5064 = vunpack.c.h.b16 %v4457
  %v5065 = vunpack.c.l.b16 %v4458
  %v5066 = vunpack.c.h.b16 %v4458
  %v5067 = vunpack.c.l.b16 %v4459
  %v5068 = vunpack.c.h.b16 %v4459
  %v5069 = vunpack.c.l.b16 %v4460
  %v5070 = vunpack.c.h.b16 %v4460
  %v5071 = vunpack.c.l.b16 %v4461
  %v5072 = vunpack.c.h.b16 %v4461
  %v5073 = vunpack.c.l.b16 %v4462
  %v5074 = vunpack.c.h.b16 %v4462
  %v5075 = vunpack.c.l.b16 %v4463
  %v5076 = vunpack.c.h.b16 %v4463
  %v5077 = vunpack.c.l.b16 %v4464
  %v5078 = vunpack.c.h.b16 %v4464
  %v5079 = vunpack.c.l.b16 %v4465
  %v5080 = vunpack.c.h.b16 %v4465
  %v5081 = vunpack.c.l.b16 %v4466
  %v5082 = vunpack.c.h.b16 %v4466
  %v5083 = vunpack.c.l.b16 %v4467
  %v5084 = vunpack.c.h.b16 %v4467
  %v5085 = vunpack.c.l.b16 %v4468
  %v5086 = vunpack.c.h.b16 %v4468
  %v5087 = vunpack.c.l.b16 %v4469
  %v5088 = vunpack.c.h.b16 %v4469
  %v5089 = vunpack.c.l.b16 %v4470
  %v5090 = vunpack.c.h.b16 %v4470
  %v5091 = vunpack.c.l.b16 %v4471
  %v5092 = vunpack.c.h.b16 %v4471
  %v5093 = vunpack.c.l.b16 %v4472
  %v5094 = vunpack.c.h.b16 %v4472
  %v5095 = vunpack.c.l.b16 %v4473
  %v5096 = vunpack.c.h.b16 %v4473
  %v5097 = vunpack.c.l.b16 %v4474
  %v5098 = vunpack.c.h.b16 %v4474
  %v5099 = vunpack.c.l.b16 %v4475
  %v5100 = vunpack.c.h.b16 %v4475
  %v5101 = vunpack.c.l.b16 %v4476
  %v5102 = vunpack.c.h.b16 %v4476
  %v5103 = vunpack.c.l.b16 %v4477
  %v5104 = vunpack.c.h.b16 %v4477
  %v5105 = vunpack.c.l.b16 %v4478
  %v5106 = vunpack.c.h.b16 %v4478
  %v5107 = vunpack.c.l.b16 %v4479
  %v5108 = vunpack.c.h.b16 %v4479
  %v5109 = vunpack.c.l.b16 %v4480
  %v5110 = vunpack.c.h.b16 %v4480
  %v5111 = vunpack.c.l.b16 %v4481
  %v5112 = vunpack.c.h.b16 %v4481
  %v5113 = vunpack.c.l.b16 %v4482
  %v5114 = vunpack.c.h.b16 %v4482
  %v5115 = vunpack.c.l.b16 %v4483
  %v5116 = vunpack.c.h.b16 %v4483
  %v5117 = vunpack.c.l.b16 %v4484
  %v5118 = vunpack.c.h.b16 %v4484
  %v5119 = vunpack.c.l.b16 %v4485
  %v5120 = vunpack.c.h.b16 %v4485
  %v5121 = vunpack.c.l.b16 %v4486
  %v5122 = vunpack.c.h.b16 %v4486
  %v5123 = vunpack.c.l.b16 %v4487
  %v5124 = vunpack.c.h.b16 %v4487
  %v5125 = vunpack.c.l.b16 %v4488
  %v5126 = vunpack.c.h.b16 %v4488
  %v5127 = vunpack.c.l.b16 %v4489
  %v5128 = vunpack.c.h.b16 %v4489
  %v5129 = vunpack.c.l.b16 %v4490
  %v5130 = vunpack.c.h.b16 %v4490
  %v5131 = vpack.c.b16 %v4891, %v4875
  %v5132 = vpack.c.b16 %v4892, %v4876
  %v5133 = vpack.c.b16 %v4893, %v4877
  %v5134 = vpack.c.b16 %v4894, %v4878
  %v5135 = vpack.c.b16 %v4895, %v4879
  %v5136 = vpack.c.b16 %v4896, %v4880
  %v5137 = vpack.c.b16 %v4897, %v4881
  %v5138 = vpack.c.b16 %v4898, %v4882
  %v5139 = vpack.c.b16 %v4899, %v4883
  %v5140 = vpack.c.b16 %v4900, %v4884
  %v5141 = vpack.c.b16 %v4901, %v4885
  %v5142 = vpack.c.b16 %v4902, %v4886
  %v5143 = vpack.c.b16 %v4903, %v4887
  %v5144 = vpack.c.b16 %v4904, %v4888
  %v5145 = vpack.c.b16 %v4905, %v4889
  %v5146 = vpack.c.b16 %v4906, %v4890
  %v5147 = vpack.c.b16 %v4923, %v4907
  %v5148 = vpack.c.b16 %v4924, %v4908
  %v5149 = vpack.c.b16 %v4925, %v4909
  %v5150 = vpack.c.b16 %v4926, %v4910
  %v5151 = vpack.c.b16 %v4927, %v4911
  %v5152 = vpack.c.b16 %v4928, %v4912
  %v5153 = vpack.c.b16 %v4929, %v4913
  %v5154 = vpack.c.b16 %v4930, %v4914
  %v5155 = vpack.c.b16 %v4931, %v4915
  %v5156 = vpack.c.b16 %v4932, %v4916
  %v5157 = vpack.c.b16 %v4933, %v4917
  %v5158 = vpack.c.b16 %v4934, %v4918
  %v5159 = vpack.c.b16 %v4935, %v4919
  %v5160 = vpack.c.b16 %v4936, %v4920
  %v5161 = vpack.c.b16 %v4937, %v4921
  %v5162 = vpack.c.b16 %v4938, %v4922
  %v5163 = vpack.c.b16 %v4955, %v4939
  %v5164 = vpack.c.b16 %v4956, %v4940
  %v5165 = vpack.c.b16 %v4957, %v4941
  %v5166 = vpack.c.b16 %v4958, %v4942
  %v5167 = vpack.c.b16 %v4959, %v4943
  %v5168 = vpack.c.b16 %v4960, %v4944
  %v5169 = vpack.c.b16 %v4961, %v4945
  %v5170 = vpack.c.b16 %v4962, %v4946
  %v5171 = vpack.c.b16 %v4963, %v4947
  %v5172 = vpack.c.b16 %v4964, %v4948
  %v5173 = vpack.c.b16 %v4965, %v4949
  %v5174 = vpack.c.b16 %v4966, %v4950
  %v5175 = vpack.c.b16 %v4967, %v4951
  %v5176 = vpack.c.b16 %v4968, %v4952
  %v5177 = vpack.c.b16 %v4969, %v4953
  %v5178 = vpack.c.b16 %v4970, %v4954
  %v5179 = vpack.c.b16 %v4987, %v4971
  %v5180 = vpack.c.b16 %v4988, %v4972
  %v5181 = vpack.c.b16 %v4989, %v4973
  %v5182 = vpack.c.b16 %v4990, %v4974
  %v5183 = vpack.c.b16 %v4991, %v4975
  %v5184 = vpack.c.b16 %v4992, %v4976
  %v5185 = vpack.c.b16 %v4993, %v4977
  %v5186 = vpack.c.b16 %v4994, %v4978
  %v5187 = vpack.c.b16 %v4995, %v4979
  %v5188 = vpack.c.b16 %v4996, %v4980
  %v5189 = vpack.c.b16 %v4997, %v4981
  %v5190 = vpack.c.b16 %v4998, %v4982
  %v5191 = vpack.c.b16 %v4999, %v4983
  %v5192 = vpack.c.b16 %v5000, %v4984
  %v5193 = vpack.c.b16 %v5001, %v4985
  %v5194 = vpack.c.b16 %v5002, %v4986
  %v5195 = vpack.c.b16 %v5019, %v5003
  %v5196 = vpack.c.b16 %v5020, %v5004
  %v5197 = vpack.c.b16 %v5021, %v5005
  %v5198 = vpack.c.b16 %v5022, %v5006
  %v5199 = vpack.c.b16 %v5023, %v5007
  %v5200 = vpack.c.b16 %v5024, %v5008
  %v5201 = vpack.c.b16 %v5025, %v5009
  %v5202 = vpack.c.b16 %v5026, %v5010
  %v5203 = vpack.c.b16 %v5027, %v5011
  %v5204 = vpack.c.b16 %v5028, %v5012
  %v5205 = vpack.c.b16 %v5029, %v5013
  %v5206 = vpack.c.b16 %v5030, %v5014
  %v5207 = vpack.c.b16 %v5031, %v5015
  %v5208 = vpack.c.b16 %v5032, %v5016
  %v5209 = vpack.c.b16 %v5033, %v5017
  %v5210 = vpack.c.b16 %v5034, %v5018
  %v5211 = vpack.c.b16 %v5051, %v5035
  %v5212 = vpack.c.b16 %v5052, %v5036
  %v5213 = vpack.c.b16 %v5053, %v5037
  %v5214 = vpack.c.b16 %v5054, %v5038
  %v5215 = vpack.c.b16 %v5055, %v5039
  %v5216 = vpack.c.b16 %v5056, %v5040
  %v5217 = vpack.c.b16 %v5057, %v5041
  %v5218 = vpack.c.b16 %v5058, %v5042
  %v5219 = vpack.c.b16 %v5059, %v5043
  %v5220 = vpack.c.b16 %v5060, %v5044
  %v5221 = vpack.c.b16 %v5061, %v5045
  %v5222 = vpack.c.b16 %v5062, %v5046
  %v5223 = vpack.c.b16 %v5063, %v5047
  %v5224 = vpack.c.b16 %v5064, %v5048
  %v5225 = vpack.c.b16 %v5065, %v5049
  %v5226 = vpack.c.b16 %v5066, %v5050
  %v5227 = vpack.c.b16 %v5083, %v5067
  %v5228 = vpack.c.b16 %v5084, %v5068
  %v5229 = vpack.c.b16 %v5085, %v5069
  %v5230 = vpack.c.b16 %v5086, %v5070
  %v5231 = vpack.c.b16 %v5087, %v5071
  %v5232 = vpack.c.b16 %v5088, %v5072
  %v5233 = vpack.c.b16 %v5089, %v5073
  %v5234 = vpack.c.b16 %v5090, %v5074
  %v5235 = vpack.c.b16 %v5091, %v5075
  %v5236 = vpack.c.b16 %v5092, %v5076
  %v5237 = vpack.c.b16 %v5093, %v5077
  %v5238 = vpack.c.b16 %v5094, %v5078
  %v5239 = vpack.c.b16 %v5095, %v5079
  %v5240 = vpack.c.b16 %v5096, %v5080
  %v5241 = vpack.c.b16 %v5097, %v5081
  %v5242 = vpack.c.b16 %v5098, %v5082
  %v5243 = vpack.c.b16 %v5115, %v5099
  %v5244 = vpack.c.b16 %v5116, %v5100
  %v5245 = vpack.c.b16 %v5117, %v5101
  %v5246 = vpack.c.b16 %v5118, %v5102
  %v5247 = vpack.c.b16 %v5119, %v5103
  %v5248 = vpack.c.b16 %v5120, %v5104
  %v5249 = vpack.c.b16 %v5121, %v5105
  %v5250 = vpack.c.b16 %v5122, %v5106
  %v5251 = vpack.c.b16 %v5123, %v5107
  %v5252 = vpack.c.b16 %v5124, %v5108
  %v5253 = vpack.c.b16 %v5125, %v5109
  %v5254 = vpack.c.b16 %v5126, %v5110
  %v5255 = vpack.c.b16 %v5127, %v5111
  %v5256 = vpack.c.b16 %v5128, %v5112
  %v5257 = vpack.c.b16 %v5129, %v5113
  %v5258 = vpack.c.b16 %v5130, %v5114
  %v5643 = vunpack.c.l.b16 %v4491
  %v5644 = vunpack.c.l.b16 %v4492
  %v5645 = vunpack.c.l.b16 %v4493
  %v5646 = vunpack.c.l.b16 %v4494
  %v5647 = vunpack.c.l.b16 %v4495
  %v5648 = vunpack.c.l.b16 %v4496
  %v5649 = vunpack.c.l.b16 %v4497
  %v5650 = vunpack.c.l.b16 %v4498
  %v5651 = vunpack.c.l.b16 %v4499
  %v5652 = vunpack.c.l.b16 %v4500
  %v5653 = vunpack.c.l.b16 %v4501
  %v5654 = vunpack.c.l.b16 %v4502
  %v5655 = vunpack.c.l.b16 %v4503
  %v5656 = vunpack.c.l.b16 %v4504
  %v5657 = vunpack.c.l.b16 %v4505
  %v5658 = vunpack.c.l.b16 %v4506
  %v5659 = vunpack.c.l.b16 %v4507
  %v5660 = vunpack.c.l.b16 %v4508
  %v5661 = vunpack.c.l.b16 %v4509
  %v5662 = vunpack.c.l.b16 %v4510
  %v5663 = vunpack.c.l.b16 %v4511
  %v5664 = vunpack.c.l.b16 %v4512
  %v5665 = vunpack.c.l.b16 %v4513
  %v5666 = vunpack.c.l.b16 %v4514
  %v5667 = vunpack.c.l.b16 %v4515
  %v5668 = vunpack.c.l.b16 %v4516
  %v5669 = vunpack.c.l.b16 %v4517
  %v5670 = vunpack.c.l.b16 %v4518
  %v5671 = vunpack.c.l.b16 %v4519
  %v5672 = vunpack.c.l.b16 %v4520
  %v5673 = vunpack.c.l.b16 %v4521
  %v5674 = vunpack.c.l.b16 %v4522
  %v5675 = vunpack.c.l.b16 %v4523
  %v5676 = vunpack.c.l.b16 %v4524
  %v5677 = vunpack.c.l.b16 %v4525
  %v5678 = vunpack.c.l.b16 %v4526
  %v5679 = vunpack.c.l.b16 %v4527
  %v5680 = vunpack.c.l.b16 %v4528
  %v5681 = vunpack.c.l.b16 %v4529
  %v5682 = vunpack.c.l.b16 %v4530
  %v5683 = vunpack.c.l.b16 %v4531
  %v5684 = vunpack.c.l.b16 %v4532
  %v5685 = vunpack.c.l.b16 %v4533
  %v5686 = vunpack.c.l.b16 %v4534
  %v5687 = vunpack.c.l.b16 %v4535
  %v5688 = vunpack.c.l.b16 %v4536
  %v5689 = vunpack.c.l.b16 %v4537
  %v5690 = vunpack.c.l.b16 %v4538
  %v5691 = vunpack.c.l.b16 %v4539
  %v5692 = vunpack.c.l.b16 %v4540
  %v5693 = vunpack.c.l.b16 %v4541
  %v5694 = vunpack.c.l.b16 %v4542
  %v5695 = vunpack.c.l.b16 %v4543
  %v5696 = vunpack.c.l.b16 %v4544
  %v5697 = vunpack.c.l.b16 %v4545
  %v5698 = vunpack.c.l.b16 %v4546
  %v5699 = vunpack.c.l.b16 %v4547
  %v5700 = vunpack.c.l.b16 %v4548
  %v5701 = vunpack.c.l.b16 %v4549
  %v5702 = vunpack.c.l.b16 %v4550
  %v5703 = vunpack.c.l.b16 %v4551
  %v5704 = vunpack.c.l.b16 %v4552
  %v5705 = vunpack.c.l.b16 %v4553
  %v5706 = vunpack.c.l.b16 %v4554
  %v5707 = vunpack.c.l.b16 %v4555
  %v5708 = vunpack.c.l.b16 %v4556
  %v5709 = vunpack.c.l.b16 %v4557
  %v5710 = vunpack.c.l.b16 %v4558
  %v5711 = vunpack.c.l.b16 %v4559
  %v5712 = vunpack.c.l.b16 %v4560
  %v5713 = vunpack.c.l.b16 %v4561
  %v5714 = vunpack.c.l.b16 %v4562
  %v5715 = vunpack.c.l.b16 %v4563
  %v5716 = vunpack.c.l.b16 %v4564
  %v5717 = vunpack.c.l.b16 %v4565
  %v5718 = vunpack.c.l.b16 %v4566
  %v5719 = vunpack.c.l.b16 %v4567
  %v5720 = vunpack.c.l.b16 %v4568
  %v5721 = vunpack.c.l.b16 %v4569
  %v5722 = vunpack.c.l.b16 %v4570
  %v5723 = vunpack.c.l.b16 %v4571
  %v5724 = vunpack.c.l.b16 %v4572
  %v5725 = vunpack.c.l.b16 %v4573
  %v5726 = vunpack.c.l.b16 %v4574
  %v5727 = vunpack.c.l.b16 %v4575
  %v5728 = vunpack.c.l.b16 %v4576
  %v5729 = vunpack.c.l.b16 %v4577
  %v5730 = vunpack.c.l.b16 %v4578
  %v5731 = vunpack.c.l.b16 %v4579
  %v5732 = vunpack.c.l.b16 %v4580
  %v5733 = vunpack.c.l.b16 %v4581
  %v5734 = vunpack.c.l.b16 %v4582
  %v5735 = vunpack.c.l.b16 %v4583
  %v5736 = vunpack.c.l.b16 %v4584
  %v5737 = vunpack.c.l.b16 %v4585
  %v5738 = vunpack.c.l.b16 %v4586
  %v5739 = vunpack.c.l.b16 %v4587
  %v5740 = vunpack.c.l.b16 %v4588
  %v5741 = vunpack.c.l.b16 %v4589
  %v5742 = vunpack.c.l.b16 %v4590
  %v5743 = vunpack.c.l.b16 %v4591
  %v5744 = vunpack.c.l.b16 %v4592
  %v5745 = vunpack.c.l.b16 %v4593
  %v5746 = vunpack.c.l.b16 %v4594
  %v5747 = vunpack.c.l.b16 %v4595
  %v5748 = vunpack.c.l.b16 %v4596
  %v5749 = vunpack.c.l.b16 %v4597
  %v5750 = vunpack.c.l.b16 %v4598
  %v5751 = vunpack.c.l.b16 %v4599
  %v5752 = vunpack.c.l.b16 %v4600
  %v5753 = vunpack.c.l.b16 %v4601
  %v5754 = vunpack.c.l.b16 %v4602
  %v5755 = vunpack.c.l.b16 %v4603
  %v5756 = vunpack.c.l.b16 %v4604
  %v5757 = vunpack.c.l.b16 %v4605
  %v5758 = vunpack.c.l.b16 %v4606
  %v5759 = vunpack.c.l.b16 %v4607
  %v5760 = vunpack.c.l.b16 %v4608
  %v5761 = vunpack.c.l.b16 %v4609
  %v5762 = vunpack.c.l.b16 %v4610
  %v5763 = vunpack.c.l.b16 %v4611
  %v5764 = vunpack.c.l.b16 %v4612
  %v5765 = vunpack.c.l.b16 %v4613
  %v5766 = vunpack.c.l.b16 %v4614
  %v5767 = vunpack.c.l.b16 %v4615
  %v5768 = vunpack.c.l.b16 %v4616
  %v5769 = vunpack.c.l.b16 %v4617
  %v5770 = vunpack.c.l.b16 %v4618
  %v5771 = vunpack.c.l.b16 %v4619
  %v5772 = vunpack.c.l.b16 %v4620
  %v5773 = vunpack.c.l.b16 %v4621
  %v5774 = vunpack.c.l.b16 %v4622
  %v5775 = vunpack.c.l.b16 %v4623
  %v5776 = vunpack.c.l.b16 %v4624
  %v5777 = vunpack.c.l.b16 %v4625
  %v5778 = vunpack.c.l.b16 %v4626
  %v5779 = vunpack.c.l.b16 %v4627
  %v5780 = vunpack.c.l.b16 %v4628
  %v5781 = vunpack.c.l.b16 %v4629
  %v5782 = vunpack.c.l.b16 %v4630
  %v5783 = vunpack.c.l.b16 %v4631
  %v5784 = vunpack.c.l.b16 %v4632
  %v5785 = vunpack.c.l.b16 %v4633
  %v5786 = vunpack.c.l.b16 %v4634
  %v5787 = vunpack.c.l.b16 %v4635
  %v5788 = vunpack.c.l.b16 %v4636
  %v5789 = vunpack.c.l.b16 %v4637
  %v5790 = vunpack.c.l.b16 %v4638
  %v5791 = vunpack.c.l.b16 %v4639
  %v5792 = vunpack.c.l.b16 %v4640
  %v5793 = vunpack.c.l.b16 %v4641
  %v5794 = vunpack.c.l.b16 %v4642
  %v5795 = vunpack.c.l.b16 %v4643
  %v5796 = vunpack.c.l.b16 %v4644
  %v5797 = vunpack.c.l.b16 %v4645
  %v5798 = vunpack.c.l.b16 %v4646
  %v5799 = vunpack.c.l.b16 %v4647
  %v5800 = vunpack.c.l.b16 %v4648
  %v5801 = vunpack.c.l.b16 %v4649
  %v5802 = vunpack.c.l.b16 %v4650
  %v5803 = vunpack.c.l.b16 %v4651
  %v5804 = vunpack.c.l.b16 %v4652
  %v5805 = vunpack.c.l.b16 %v4653
  %v5806 = vunpack.c.l.b16 %v4654
  %v5807 = vunpack.c.l.b16 %v4655
  %v5808 = vunpack.c.l.b16 %v4656
  %v5809 = vunpack.c.l.b16 %v4657
  %v5810 = vunpack.c.l.b16 %v4658
  %v5811 = vunpack.c.l.b16 %v4659
  %v5812 = vunpack.c.l.b16 %v4660
  %v5813 = vunpack.c.l.b16 %v4661
  %v5814 = vunpack.c.l.b16 %v4662
  %v5815 = vunpack.c.l.b16 %v4663
  %v5816 = vunpack.c.l.b16 %v4664
  %v5817 = vunpack.c.l.b16 %v4665
  %v5818 = vunpack.c.l.b16 %v4666
  %v5819 = vunpack.c.l.b16 %v4667
  %v5820 = vunpack.c.l.b16 %v4668
  %v5821 = vunpack.c.l.b16 %v4669
  %v5822 = vunpack.c.l.b16 %v4670
  %v5823 = vunpack.c.l.b16 %v4671
  %v5824 = vunpack.c.l.b16 %v4672
  %v5825 = vunpack.c.l.b16 %v4673
  %v5826 = vunpack.c.l.b16 %v4674
  %v5827 = vunpack.c.l.b16 %v4675
  %v5828 = vunpack.c.l.b16 %v4676
  %v5829 = vunpack.c.l.b16 %v4677
  %v5830 = vunpack.c.l.b16 %v4678
  %v5831 = vunpack.c.l.b16 %v4679
  %v5832 = vunpack.c.l.b16 %v4680
  %v5833 = vunpack.c.l.b16 %v4681
  %v5834 = vunpack.c.l.b16 %v4682
  %v5835 = vunpack.c.l.b16 %v4683
  %v5836 = vunpack.c.l.b16 %v4684
  %v5837 = vunpack.c.l.b16 %v4685
  %v5838 = vunpack.c.l.b16 %v4686
  %v5839 = vunpack.c.l.b16 %v4687
  %v5840 = vunpack.c.l.b16 %v4688
  %v5841 = vunpack.c.l.b16 %v4689
  %v5842 = vunpack.c.l.b16 %v4690
  %v5843 = vunpack.c.l.b16 %v4691
  %v5844 = vunpack.c.l.b16 %v4692
  %v5845 = vunpack.c.l.b16 %v4693
  %v5846 = vunpack.c.l.b16 %v4694
  %v5847 = vunpack.c.l.b16 %v4695
  %v5848 = vunpack.c.l.b16 %v4696
  %v5849 = vunpack.c.l.b16 %v4697
  %v5850 = vunpack.c.l.b16 %v4698
  %v5851 = vunpack.c.l.b16 %v4699
  %v5852 = vunpack.c.l.b16 %v4700
  %v5853 = vunpack.c.l.b16 %v4701
  %v5854 = vunpack.c.l.b16 %v4702
  %v5855 = vunpack.c.l.b16 %v4703
  %v5856 = vunpack.c.l.b16 %v4704
  %v5857 = vunpack.c.l.b16 %v4705
  %v5858 = vunpack.c.l.b16 %v4706
  %v5859 = vunpack.c.l.b16 %v4707
  %v5860 = vunpack.c.l.b16 %v4708
  %v5861 = vunpack.c.l.b16 %v4709
  %v5862 = vunpack.c.l.b16 %v4710
  %v5863 = vunpack.c.l.b16 %v4711
  %v5864 = vunpack.c.l.b16 %v4712
  %v5865 = vunpack.c.l.b16 %v4713
  %v5866 = vunpack.c.l.b16 %v4714
  %v5867 = vunpack.c.l.b16 %v4715
  %v5868 = vunpack.c.l.b16 %v4716
  %v5869 = vunpack.c.l.b16 %v4717
  %v5870 = vunpack.c.l.b16 %v4718
  %v5871 = vunpack.c.l.b16 %v4719
  %v5872 = vunpack.c.l.b16 %v4720
  %v5873 = vunpack.c.l.b16 %v4721
  %v5874 = vunpack.c.l.b16 %v4722
  %v5875 = vunpack.c.l.b16 %v4723
  %v5876 = vunpack.c.l.b16 %v4724
  %v5877 = vunpack.c.l.b16 %v4725
  %v5878 = vunpack.c.l.b16 %v4726
  %v5879 = vunpack.c.l.b16 %v4727
  %v5880 = vunpack.c.l.b16 %v4728
  %v5881 = vunpack.c.l.b16 %v4729
  %v5882 = vunpack.c.l.b16 %v4730
  %v5883 = vunpack.c.l.b16 %v4731
  %v5884 = vunpack.c.l.b16 %v4732
  %v5885 = vunpack.c.l.b16 %v4733
  %v5886 = vunpack.c.l.b16 %v4734
  %v5887 = vunpack.c.l.b16 %v4735
  %v5888 = vunpack.c.l.b16 %v4736
  %v5889 = vunpack.c.l.b16 %v4737
  %v5890 = vunpack.c.l.b16 %v4738
  %v5891 = vunpack.c.l.b16 %v4739
  %v5892 = vunpack.c.l.b16 %v4740
  %v5893 = vunpack.c.l.b16 %v4741
  %v5894 = vunpack.c.l.b16 %v4742
  %v5895 = vunpack.c.l.b16 %v4743
  %v5896 = vunpack.c.l.b16 %v4744
  %v5897 = vunpack.c.l.b16 %v4745
  %v5898 = vunpack.c.l.b16 %v4746
  %v5899 = vpack.c.b16 %v5644, %v5643
  %v5900 = vpack.c.b16 %v5646, %v5645
  %v5901 = vpack.c.b16 %v5648, %v5647
  %v5902 = vpack.c.b16 %v5650, %v5649
  %v5903 = vpack.c.b16 %v5652, %v5651
  %v5904 = vpack.c.b16 %v5654, %v5653
  %v5905 = vpack.c.b16 %v5656, %v5655
  %v5906 = vpack.c.b16 %v5658, %v5657
  %v5907 = vpack.c.b16 %v5660, %v5659
  %v5908 = vpack.c.b16 %v5662, %v5661
  %v5909 = vpack.c.b16 %v5664, %v5663
  %v5910 = vpack.c.b16 %v5666, %v5665
  %v5911 = vpack.c.b16 %v5668, %v5667
  %v5912 = vpack.c.b16 %v5670, %v5669
  %v5913 = vpack.c.b16 %v5672, %v5671
  %v5914 = vpack.c.b16 %v5674, %v5673
  %v5915 = vpack.c.b16 %v5676, %v5675
  %v5916 = vpack.c.b16 %v5678, %v5677
  %v5917 = vpack.c.b16 %v5680, %v5679
  %v5918 = vpack.c.b16 %v5682, %v5681
  %v5919 = vpack.c.b16 %v5684, %v5683
  %v5920 = vpack.c.b16 %v5686, %v5685
  %v5921 = vpack.c.b16 %v5688, %v5687
  %v5922 = vpack.c.b16 %v5690, %v5689
  %v5923 = vpack.c.b16 %v5692, %v5691
  %v5924 = vpack.c.b16 %v5694, %v5693
  %v5925 = vpack.c.b16 %v5696, %v5695
  %v5926 = vpack.c.b16 %v5698, %v5697
  %v5927 = vpack.c.b16 %v5700, %v5699
  %v5928 = vpack.c.b16 %v5702, %v5701
  %v5929 = vpack.c.b16 %v5704, %v5703
  %v5930 = vpack.c.b16 %v5706, %v5705
  %v5931 = vpack.c.b16 %v5708, %v5707
  %v5932 = vpack.c.b16 %v5710, %v5709
  %v5933 = vpack.c.b16 %v5712, %v5711
  %v5934 = vpack.c.b16 %v5714, %v5713
  %v5935 = vpack.c.b16 %v5716, %v5715
  %v5936 = vpack.c.b16 %v5718, %v5717
  %v5937 = vpack.c.b16 %v5720, %v5719
  %v5938 = vpack.c.b16 %v5722, %v5721
  %v5939 = vpack.c.b16 %v5724, %v5723
  %v5940 = vpack.c.b16 %v5726, %v5725
  %v5941 = vpack.c.b16 %v5728, %v5727
  %v5942 = vpack.c.b16 %v5730, %v5729
  %v5943 = vpack.c.b16 %v5732, %v5731
  %v5944 = vpack.c.b16 %v5734, %v5733
  %v5945 = vpack.c.b16 %v5736, %v5735
  %v5946 = vpack.c.b16 %v5738, %v5737
  %v5947 = vpack.c.b16 %v5740, %v5739
  %v5948 = vpack.c.b16 %v5742, %v5741
  %v5949 = vpack.c.b16 %v5744, %v5743
  %v5950 = vpack.c.b16 %v5746, %v5745
  %v5951 = vpack.c.b16 %v5748, %v5747
  %v5952 = vpack.c.b16 %v5750, %v5749
  %v5953 = vpack.c.b16 %v5752, %v5751
  %v5954 = vpack.c.b16 %v5754, %v5753
  %v5955 = vpack.c.b16 %v5756, %v5755
  %v5956 = vpack.c.b16 %v5758, %v5757
  %v5957 = vpack.c.b16 %v5760, %v5759
  %v5958 = vpack.c.b16 %v5762, %v5761
  %v5959 = vpack.c.b16 %v5764, %v5763
  %v5960 = vpack.c.b16 %v5766, %v5765
  %v5961 = vpack.c.b16 %v5768, %v5767
  %v5962 = vpack.c.b16 %v5770, %v5769
  %v5963 = vpack.c.b16 %v5772, %v5771
  %v5964 = vpack.c.b16 %v5774, %v5773
  %v5965 = vpack.c.b16 %v5776, %v5775
  %v5966 = vpack.c.b16 %v5778, %v5777
  %v5967 = vpack.c.b16 %v5780, %v5779
  %v5968 = vpack.c.b16 %v5782, %v5781
  %v5969 = vpack.c.b16 %v5784, %v5783
  %v5970 = vpack.c.b16 %v5786, %v5785
  %v5971 = vpack.c.b16 %v5788, %v5787
  %v5972 = vpack.c.b16 %v5790, %v5789
  %v5973 = vpack.c.b16 %v5792, %v5791
  %v5974 = vpack.c.b16 %v5794, %v5793
  %v5975 = vpack.c.b16 %v5796, %v5795
  %v5976 = vpack.c.b16 %v5798, %v5797
  %v5977 = vpack.c.b16 %v5800, %v5799
  %v5978 = vpack.c.b16 %v5802, %v5801
  %v5979 = vpack.c.b16 %v5804, %v5803
  %v5980 = vpack.c.b16 %v5806, %v5805
  %v5981 = vpack.c.b16 %v5808, %v5807
  %v5982 = vpack.c.b16 %v5810, %v5809
  %v5983 = vpack.c.b16 %v5812, %v5811
  %v5984 = vpack.c.b16 %v5814, %v5813
  %v5985 = vpack.c.b16 %v5816, %v5815
  %v5986 = vpack.c.b16 %v5818, %v5817
  %v5987 = vpack.c.b16 %v5820, %v5819
  %v5988 = vpack.c.b16 %v5822, %v5821
  %v5989 = vpack.c.b16 %v5824, %v5823
  %v5990 = vpack.c.b16 %v5826, %v5825
  %v5991 = vpack.c.b16 %v5828, %v5827
  %v5992 = vpack.c.b16 %v5830, %v5829
  %v5993 = vpack.c.b16 %v5832, %v5831
  %v5994 = vpack.c.b16 %v5834, %v5833
  %v5995 = vpack.c.b16 %v5836, %v5835
  %v5996 = vpack.c.b16 %v5838, %v5837
  %v5997 = vpack.c.b16 %v5840, %v5839
  %v5998 = vpack.c.b16 %v5842, %v5841
  %v5999 = vpack.c.b16 %v5844, %v5843
  %v6000 = vpack.c.b16 %v5846, %v5845
  %v6001 = vpack.c.b16 %v5848, %v5847
  %v6002 = vpack.c.b16 %v5850, %v5849
  %v6003 = vpack.c.b16 %v5852, %v5851
  %v6004 = vpack.c.b16 %v5854, %v5853
  %v6005 = vpack.c.b16 %v5856, %v5855
  %v6006 = vpack.c.b16 %v5858, %v5857
  %v6007 = vpack.c.b16 %v5860, %v5859
  %v6008 = vpack.c.b16 %v5862, %v5861
  %v6009 = vpack.c.b16 %v5864, %v5863
  %v6010 = vpack.c.b16 %v5866, %v5865
  %v6011 = vpack.c.b16 %v5868, %v5867
  %v6012 = vpack.c.b16 %v5870, %v5869
  %v6013 = vpack.c.b16 %v5872, %v5871
  %v6014 = vpack.c.b16 %v5874, %v5873
  %v6015 = vpack.c.b16 %v5876, %v5875
  %v6016 = vpack.c.b16 %v5878, %v5877
  %v6017 = vpack.c.b16 %v5880, %v5879
  %v6018 = vpack.c.b16 %v5882, %v5881
  %v6019 = vpack.c.b16 %v5884, %v5883
  %v6020 = vpack.c.b16 %v5886, %v5885
  %v6021 = vpack.c.b16 %v5888, %v5887
  %v6022 = vpack.c.b16 %v5890, %v5889
  %v6023 = vpack.c.b16 %v5892, %v5891
  %v6024 = vpack.c.b16 %v5894, %v5893
  %v6025 = vpack.c.b16 %v5896, %v5895
  %v6026 = vpack.c.b16 %v5898, %v5897
  %6155 = vmatprep.subr.bf16.mxu0 0
  %6156 = vmatpush1.bf16.msra.mxu0 %v5906
  %6157 = vmatprep.subr.bf16.mxu0 0
  %6158 = vmatpush1.bf16.msra.mxu0 %v5905
  %6159 = vmatprep.subr.bf16.mxu0 0
  %6160 = vmatpush1.bf16.msra.mxu0 %v5904
  %6161 = vmatprep.subr.bf16.mxu0 0
  %6162 = vmatpush1.bf16.msra.mxu0 %v5903
  %6163 = vmatprep.subr.bf16.mxu0 0
  %6164 = vmatpush1.bf16.msra.mxu0 %v5902
  %6165 = vmatprep.subr.bf16.mxu0 0
  %6166 = vmatpush1.bf16.msra.mxu0 %v5901
  %6167 = vmatprep.subr.bf16.mxu0 0
  %6168 = vmatpush1.bf16.msra.mxu0 %v5900
  %6169 = vmatprep.subr.bf16.mxu0 0
  %6170 = vmatpush1.bf16.msra.mxu0 %v5899
  %6171 = vmatprep.subr.bf16.mxu0 0
  %6172 = vmatpush2.bf16.msra.mxu0 %v5914
  %6173 = vmatprep.subr.bf16.mxu0 0
  %6174 = vmatpush2.bf16.msra.mxu0 %v5913
  %6175 = vmatprep.subr.bf16.mxu0 0
  %6176 = vmatpush2.bf16.msra.mxu0 %v5912
  %6177 = vmatprep.subr.bf16.mxu0 0
  %6178 = vmatpush2.bf16.msra.mxu0 %v5911
  %6179 = vmatprep.subr.bf16.mxu0 0
  %6180 = vmatpush2.bf16.msra.mxu0 %v5910
  %6181 = vmatprep.subr.bf16.mxu0 0
  %6182 = vmatpush2.bf16.msra.mxu0 %v5909
  %6183 = vmatprep.subr.bf16.mxu0 0
  %6184 = vmatpush2.bf16.msra.mxu0 %v5908
  %6185 = vmatprep.subr.bf16.mxu0 0
  %6186 = vmatpush2.bf16.msra.mxu0 %v5907
  %6187 = vmatprep.mubr.bf16.mxu0 %v5132
  %6188 = vmatmul.mubr.bf16.gmra.mxu0 %v5131
  %v6189 = vpop.f32.mrf.mxu0
  %v6190 = vadd.f32 0.0, %v6189
  %v6191 = vpop.f32.mrf.mxu0
  %v6192 = vpop.f32.mrf.mxu0
  %v6193 = vadd.f32 0.0, %v6192
  %v6194 = vpop.f32.mrf.mxu0
  %6195 = vmatprep.mubr.bf16.mxu0 %v5148
  %6196 = vmatmul.mubr.bf16.gmra.mxu0 %v5147
  %v6197 = vpop.f32.mrf.mxu0
  %v6198 = vadd.f32 0.0, %v6197
  %v6199 = vpop.f32.mrf.mxu0
  %v6200 = vpop.f32.mrf.mxu0
  %v6201 = vadd.f32 0.0, %v6200
  %v6202 = vpop.f32.mrf.mxu0
  %6203 = vmatprep.mubr.bf16.mxu0 %v5164
  %6204 = vmatmul.mubr.bf16.gmra.mxu0 %v5163
  %v6205 = vpop.f32.mrf.mxu0
  %v6206 = vadd.f32 0.0, %v6205
  %v6207 = vpop.f32.mrf.mxu0
  %v6208 = vpop.f32.mrf.mxu0
  %v6209 = vadd.f32 0.0, %v6208
  %v6210 = vpop.f32.mrf.mxu0
  %6211 = vmatprep.mubr.bf16.mxu0 %v5180
  %6212 = vmatmul.mubr.bf16.gmra.mxu0 %v5179
  %v6213 = vpop.f32.mrf.mxu0
  %v6214 = vadd.f32 0.0, %v6213
  %v6215 = vpop.f32.mrf.mxu0
  %v6216 = vpop.f32.mrf.mxu0
  %v6217 = vadd.f32 0.0, %v6216
  %v6218 = vpop.f32.mrf.mxu0
  %6219 = vmatprep.mubr.bf16.mxu0 %v5196
  %6220 = vmatmul.mubr.bf16.gmra.mxu0 %v5195
  %v6221 = vpop.f32.mrf.mxu0
  %v6222 = vadd.f32 0.0, %v6221
  %v6223 = vpop.f32.mrf.mxu0
  %v6224 = vpop.f32.mrf.mxu0
  %v6225 = vadd.f32 0.0, %v6224
  %v6226 = vpop.f32.mrf.mxu0
  %6227 = vmatprep.mubr.bf16.mxu0 %v5212
  %6228 = vmatmul.mubr.bf16.gmra.mxu0 %v5211
  %v6229 = vpop.f32.mrf.mxu0
  %v6230 = vadd.f32 0.0, %v6229
  %v6231 = vpop.f32.mrf.mxu0
  %v6232 = vpop.f32.mrf.mxu0
  %v6233 = vadd.f32 0.0, %v6232
  %v6234 = vpop.f32.mrf.mxu0
  %6235 = vmatprep.mubr.bf16.mxu0 %v5228
  %6236 = vmatmul.mubr.bf16.gmra.mxu0 %v5227
  %v6237 = vpop.f32.mrf.mxu0
  %v6238 = vadd.f32 0.0, %v6237
  %v6239 = vpop.f32.mrf.mxu0
  %v6240 = vpop.f32.mrf.mxu0
  %v6241 = vadd.f32 0.0, %v6240
  %v6242 = vpop.f32.mrf.mxu0
  %6243 = vmatprep.mubr.bf16.mxu0 %v5244
  %6244 = vmatmul.mubr.bf16.gmra.mxu0 %v5243
  %v6245 = vpop.f32.mrf.mxu0
  %v6246 = vadd.f32 0.0, %v6245
  %v6247 = vpop.f32.mrf.mxu0
  %v6248 = vpop.f32.mrf.mxu0
  %v6249 = vadd.f32 0.0, %v6248
  %v6250 = vpop.f32.mrf.mxu0
  %6251 = vdwg.mxu0
  %6252 = vmatprep.subr.bf16.mxu0 0
  %6253 = vmatpush1.bf16.msra.mxu0 %v5922
  %6254 = vmatprep.subr.bf16.mxu0 0
  %6255 = vmatpush1.bf16.msra.mxu0 %v5921
  %6256 = vmatprep.subr.bf16.mxu0 0
  %6257 = vmatpush1.bf16.msra.mxu0 %v5920
  %6258 = vmatprep.subr.bf16.mxu0 0
  %6259 = vmatpush1.bf16.msra.mxu0 %v5919
  %6260 = vmatprep.subr.bf16.mxu0 0
  %6261 = vmatpush1.bf16.msra.mxu0 %v5918
  %6262 = vmatprep.subr.bf16.mxu0 0
  %6263 = vmatpush1.bf16.msra.mxu0 %v5917
  %6264 = vmatprep.subr.bf16.mxu0 0
  %6265 = vmatpush1.bf16.msra.mxu0 %v5916
  %6266 = vmatprep.subr.bf16.mxu0 0
  %6267 = vmatpush1.bf16.msra.mxu0 %v5915
  %6268 = vmatprep.subr.bf16.mxu0 0
  %6269 = vmatpush2.bf16.msra.mxu0 %v5930
  %6270 = vmatprep.subr.bf16.mxu0 0
  %6271 = vmatpush2.bf16.msra.mxu0 %v5929
  %6272 = vmatprep.subr.bf16.mxu0 0
  %6273 = vmatpush2.bf16.msra.mxu0 %v5928
  %6274 = vmatprep.subr.bf16.mxu0 0
  %6275 = vmatpush2.bf16.msra.mxu0 %v5927
  %6276 = vmatprep.subr.bf16.mxu0 0
  %6277 = vmatpush2.bf16.msra.mxu0 %v5926
  %6278 = vmatprep.subr.bf16.mxu0 0
  %6279 = vmatpush2.bf16.msra.mxu0 %v5925
  %6280 = vmatprep.subr.bf16.mxu0 0
  %6281 = vmatpush2.bf16.msra.mxu0 %v5924
  %6282 = vmatprep.subr.bf16.mxu0 0
  %6283 = vmatpush2.bf16.msra.mxu0 %v5923
  %6284 = vmatprep.mubr.bf16.mxu0 %v5134
  %6285 = vmatmul.mubr.bf16.gmra.mxu0 %v5133
  %v6286 = vpop.f32.mrf.mxu0
  %v6287 = vadd.f32 %v6190, %v6286
  %v6288 = vpop.f32.mrf.mxu0
  %v6289 = vpop.f32.mrf.mxu0
  %v6290 = vadd.f32 %v6193, %v6289
  %v6291 = vpop.f32.mrf.mxu0
  %6292 = vmatprep.mubr.bf16.mxu0 %v5150
  %6293 = vmatmul.mubr.bf16.gmra.mxu0 %v5149
  %v6294 = vpop.f32.mrf.mxu0
  %v6295 = vadd.f32 %v6198, %v6294
  %v6296 = vpop.f32.mrf.mxu0
  %v6297 = vpop.f32.mrf.mxu0
  %v6298 = vadd.f32 %v6201, %v6297
  %v6299 = vpop.f32.mrf.mxu0
  %6300 = vmatprep.mubr.bf16.mxu0 %v5166
  %6301 = vmatmul.mubr.bf16.gmra.mxu0 %v5165
  %v6302 = vpop.f32.mrf.mxu0
  %v6303 = vadd.f32 %v6206, %v6302
  %v6304 = vpop.f32.mrf.mxu0
  %v6305 = vpop.f32.mrf.mxu0
  %v6306 = vadd.f32 %v6209, %v6305
  %v6307 = vpop.f32.mrf.mxu0
  %6308 = vmatprep.mubr.bf16.mxu0 %v5182
  %6309 = vmatmul.mubr.bf16.gmra.mxu0 %v5181
  %v6310 = vpop.f32.mrf.mxu0
  %v6311 = vadd.f32 %v6214, %v6310
  %v6312 = vpop.f32.mrf.mxu0
  %v6313 = vpop.f32.mrf.mxu0
  %v6314 = vadd.f32 %v6217, %v6313
  %v6315 = vpop.f32.mrf.mxu0
  %6316 = vmatprep.mubr.bf16.mxu0 %v5198
  %6317 = vmatmul.mubr.bf16.gmra.mxu0 %v5197
  %v6318 = vpop.f32.mrf.mxu0
  %v6319 = vadd.f32 %v6222, %v6318
  %v6320 = vpop.f32.mrf.mxu0
  %v6321 = vpop.f32.mrf.mxu0
  %v6322 = vadd.f32 %v6225, %v6321
  %v6323 = vpop.f32.mrf.mxu0
  %6324 = vmatprep.mubr.bf16.mxu0 %v5214
  %6325 = vmatmul.mubr.bf16.gmra.mxu0 %v5213
  %v6326 = vpop.f32.mrf.mxu0
  %v6327 = vadd.f32 %v6230, %v6326
  %v6328 = vpop.f32.mrf.mxu0
  %v6329 = vpop.f32.mrf.mxu0
  %v6330 = vadd.f32 %v6233, %v6329
  %v6331 = vpop.f32.mrf.mxu0
  %6332 = vmatprep.mubr.bf16.mxu0 %v5230
  %6333 = vmatmul.mubr.bf16.gmra.mxu0 %v5229
  %v6334 = vpop.f32.mrf.mxu0
  %v6335 = vadd.f32 %v6238, %v6334
  %v6336 = vpop.f32.mrf.mxu0
  %v6337 = vpop.f32.mrf.mxu0
  %v6338 = vadd.f32 %v6241, %v6337
  %v6339 = vpop.f32.mrf.mxu0
  %6340 = vmatprep.mubr.bf16.mxu0 %v5246
  %6341 = vmatmul.mubr.bf16.gmra.mxu0 %v5245
  %v6342 = vpop.f32.mrf.mxu0
  %v6343 = vadd.f32 %v6246, %v6342
  %v6344 = vpop.f32.mrf.mxu0
  %v6345 = vpop.f32.mrf.mxu0
  %v6346 = vadd.f32 %v6249, %v6345
  %v6347 = vpop.f32.mrf.mxu0
  %6348 = vdwg.mxu0
  %6349 = vmatprep.subr.bf16.mxu0 0
  %6350 = vmatpush1.bf16.msra.mxu0 %v5938
  %6351 = vmatprep.subr.bf16.mxu0 0
  %6352 = vmatpush1.bf16.msra.mxu0 %v5937
  %6353 = vmatprep.subr.bf16.mxu0 0
  %6354 = vmatpush1.bf16.msra.mxu0 %v5936
  %6355 = vmatprep.subr.bf16.mxu0 0
  %6356 = vmatpush1.bf16.msra.mxu0 %v5935
  %6357 = vmatprep.subr.bf16.mxu0 0
  %6358 = vmatpush1.bf16.msra.mxu0 %v5934
  %6359 = vmatprep.subr.bf16.mxu0 0
  %6360 = vmatpush1.bf16.msra.mxu0 %v5933
  %6361 = vmatprep.subr.bf16.mxu0 0
  %6362 = vmatpush1.bf16.msra.mxu0 %v5932
  %6363 = vmatprep.subr.bf16.mxu0 0
  %6364 = vmatpush1.bf16.msra.mxu0 %v5931
  %6365 = vmatprep.subr.bf16.mxu0 0
  %6366 = vmatpush2.bf16.msra.mxu0 %v5946
  %6367 = vmatprep.subr.bf16.mxu0 0
  %6368 = vmatpush2.bf16.msra.mxu0 %v5945
  %6369 = vmatprep.subr.bf16.mxu0 0
  %6370 = vmatpush2.bf16.msra.mxu0 %v5944
  %6371 = vmatprep.subr.bf16.mxu0 0
  %6372 = vmatpush2.bf16.msra.mxu0 %v5943
  %6373 = vmatprep.subr.bf16.mxu0 0
  %6374 = vmatpush2.bf16.msra.mxu0 %v5942
  %6375 = vmatprep.subr.bf16.mxu0 0
  %6376 = vmatpush2.bf16.msra.mxu0 %v5941
  %6377 = vmatprep.subr.bf16.mxu0 0
  %6378 = vmatpush2.bf16.msra.mxu0 %v5940
  %6379 = vmatprep.subr.bf16.mxu0 0
  %6380 = vmatpush2.bf16.msra.mxu0 %v5939
  %6381 = vmatprep.mubr.bf16.mxu0 %v5136
  %6382 = vmatmul.mubr.bf16.gmra.mxu0 %v5135
  %v6383 = vpop.f32.mrf.mxu0
  %v6384 = vadd.f32 %v6287, %v6383
  %v6385 = vpop.f32.mrf.mxu0
  %v6386 = vpop.f32.mrf.mxu0
  %v6387 = vadd.f32 %v6290, %v6386
  %v6388 = vpop.f32.mrf.mxu0
  %6389 = vmatprep.mubr.bf16.mxu0 %v5152
  %6390 = vmatmul.mubr.bf16.gmra.mxu0 %v5151
  %v6391 = vpop.f32.mrf.mxu0
  %v6392 = vadd.f32 %v6295, %v6391
  %v6393 = vpop.f32.mrf.mxu0
  %v6394 = vpop.f32.mrf.mxu0
  %v6395 = vadd.f32 %v6298, %v6394
  %v6396 = vpop.f32.mrf.mxu0
  %6397 = vmatprep.mubr.bf16.mxu0 %v5168
  %6398 = vmatmul.mubr.bf16.gmra.mxu0 %v5167
  %v6399 = vpop.f32.mrf.mxu0
  %v6400 = vadd.f32 %v6303, %v6399
  %v6401 = vpop.f32.mrf.mxu0
  %v6402 = vpop.f32.mrf.mxu0
  %v6403 = vadd.f32 %v6306, %v6402
  %v6404 = vpop.f32.mrf.mxu0
  %6405 = vmatprep.mubr.bf16.mxu0 %v5184
  %6406 = vmatmul.mubr.bf16.gmra.mxu0 %v5183
  %v6407 = vpop.f32.mrf.mxu0
  %v6408 = vadd.f32 %v6311, %v6407
  %v6409 = vpop.f32.mrf.mxu0
  %v6410 = vpop.f32.mrf.mxu0
  %v6411 = vadd.f32 %v6314, %v6410
  %v6412 = vpop.f32.mrf.mxu0
  %6413 = vmatprep.mubr.bf16.mxu0 %v5200
  %6414 = vmatmul.mubr.bf16.gmra.mxu0 %v5199
  %v6415 = vpop.f32.mrf.mxu0
  %v6416 = vadd.f32 %v6319, %v6415
  %v6417 = vpop.f32.mrf.mxu0
  %v6418 = vpop.f32.mrf.mxu0
  %v6419 = vadd.f32 %v6322, %v6418
  %v6420 = vpop.f32.mrf.mxu0
  %6421 = vmatprep.mubr.bf16.mxu0 %v5216
  %6422 = vmatmul.mubr.bf16.gmra.mxu0 %v5215
  %v6423 = vpop.f32.mrf.mxu0
  %v6424 = vadd.f32 %v6327, %v6423
  %v6425 = vpop.f32.mrf.mxu0
  %v6426 = vpop.f32.mrf.mxu0
  %v6427 = vadd.f32 %v6330, %v6426
  %v6428 = vpop.f32.mrf.mxu0
  %6429 = vmatprep.mubr.bf16.mxu0 %v5232
  %6430 = vmatmul.mubr.bf16.gmra.mxu0 %v5231
  %v6431 = vpop.f32.mrf.mxu0
  %v6432 = vadd.f32 %v6335, %v6431
  %v6433 = vpop.f32.mrf.mxu0
  %v6434 = vpop.f32.mrf.mxu0
  %v6435 = vadd.f32 %v6338, %v6434
  %v6436 = vpop.f32.mrf.mxu0
  %6437 = vmatprep.mubr.bf16.mxu0 %v5248
  %6438 = vmatmul.mubr.bf16.gmra.mxu0 %v5247
  %v6439 = vpop.f32.mrf.mxu0
  %v6440 = vadd.f32 %v6343, %v6439
  %v6441 = vpop.f32.mrf.mxu0
  %v6442 = vpop.f32.mrf.mxu0
  %v6443 = vadd.f32 %v6346, %v6442
  %v6444 = vpop.f32.mrf.mxu0
  %6445 = vdwg.mxu0
  %6446 = vmatprep.subr.bf16.mxu0 0
  %6447 = vmatpush1.bf16.msra.mxu0 %v5954
  %6448 = vmatprep.subr.bf16.mxu0 0
  %6449 = vmatpush1.bf16.msra.mxu0 %v5953
  %6450 = vmatprep.subr.bf16.mxu0 0
  %6451 = vmatpush1.bf16.msra.mxu0 %v5952
  %6452 = vmatprep.subr.bf16.mxu0 0
  %6453 = vmatpush1.bf16.msra.mxu0 %v5951
  %6454 = vmatprep.subr.bf16.mxu0 0
  %6455 = vmatpush1.bf16.msra.mxu0 %v5950
  %6456 = vmatprep.subr.bf16.mxu0 0
  %6457 = vmatpush1.bf16.msra.mxu0 %v5949
  %6458 = vmatprep.subr.bf16.mxu0 0
  %6459 = vmatpush1.bf16.msra.mxu0 %v5948
  %6460 = vmatprep.subr.bf16.mxu0 0
  %6461 = vmatpush1.bf16.msra.mxu0 %v5947
  %6462 = vmatprep.subr.bf16.mxu0 0
  %6463 = vmatpush2.bf16.msra.mxu0 %v5962
  %6464 = vmatprep.subr.bf16.mxu0 0
  %6465 = vmatpush2.bf16.msra.mxu0 %v5961
  %6466 = vmatprep.subr.bf16.mxu0 0
  %6467 = vmatpush2.bf16.msra.mxu0 %v5960
  %6468 = vmatprep.subr.bf16.mxu0 0
  %6469 = vmatpush2.bf16.msra.mxu0 %v5959
  %6470 = vmatprep.subr.bf16.mxu0 0
  %6471 = vmatpush2.bf16.msra.mxu0 %v5958
  %6472 = vmatprep.subr.bf16.mxu0 0
  %6473 = vmatpush2.bf16.msra.mxu0 %v5957
  %6474 = vmatprep.subr.bf16.mxu0 0
  %6475 = vmatpush2.bf16.msra.mxu0 %v5956
  %6476 = vmatprep.subr.bf16.mxu0 0
  %6477 = vmatpush2.bf16.msra.mxu0 %v5955
  %6478 = vmatprep.mubr.bf16.mxu0 %v5138
  %6479 = vmatmul.mubr.bf16.gmra.mxu0 %v5137
  %v6480 = vpop.f32.mrf.mxu0
  %v6481 = vadd.f32 %v6384, %v6480
  %v6482 = vpop.f32.mrf.mxu0
  %v6483 = vpop.f32.mrf.mxu0
  %v6484 = vadd.f32 %v6387, %v6483
  %v6485 = vpop.f32.mrf.mxu0
  %6486 = vmatprep.mubr.bf16.mxu0 %v5154
  %6487 = vmatmul.mubr.bf16.gmra.mxu0 %v5153
  %v6488 = vpop.f32.mrf.mxu0
  %v6489 = vadd.f32 %v6392, %v6488
  %v6490 = vpop.f32.mrf.mxu0
  %v6491 = vpop.f32.mrf.mxu0
  %v6492 = vadd.f32 %v6395, %v6491
  %v6493 = vpop.f32.mrf.mxu0
  %6494 = vmatprep.mubr.bf16.mxu0 %v5170
  %6495 = vmatmul.mubr.bf16.gmra.mxu0 %v5169
  %v6496 = vpop.f32.mrf.mxu0
  %v6497 = vadd.f32 %v6400, %v6496
  %v6498 = vpop.f32.mrf.mxu0
  %v6499 = vpop.f32.mrf.mxu0
  %v6500 = vadd.f32 %v6403, %v6499
  %v6501 = vpop.f32.mrf.mxu0
  %6502 = vmatprep.mubr.bf16.mxu0 %v5186
  %6503 = vmatmul.mubr.bf16.gmra.mxu0 %v5185
  %v6504 = vpop.f32.mrf.mxu0
  %v6505 = vadd.f32 %v6408, %v6504
  %v6506 = vpop.f32.mrf.mxu0
  %v6507 = vpop.f32.mrf.mxu0
  %v6508 = vadd.f32 %v6411, %v6507
  %v6509 = vpop.f32.mrf.mxu0
  %6510 = vmatprep.mubr.bf16.mxu0 %v5202
  %6511 = vmatmul.mubr.bf16.gmra.mxu0 %v5201
  %v6512 = vpop.f32.mrf.mxu0
  %v6513 = vadd.f32 %v6416, %v6512
  %v6514 = vpop.f32.mrf.mxu0
  %v6515 = vpop.f32.mrf.mxu0
  %v6516 = vadd.f32 %v6419, %v6515
  %v6517 = vpop.f32.mrf.mxu0
  %6518 = vmatprep.mubr.bf16.mxu0 %v5218
  %6519 = vmatmul.mubr.bf16.gmra.mxu0 %v5217
  %v6520 = vpop.f32.mrf.mxu0
  %v6521 = vadd.f32 %v6424, %v6520
  %v6522 = vpop.f32.mrf.mxu0
  %v6523 = vpop.f32.mrf.mxu0
  %v6524 = vadd.f32 %v6427, %v6523
  %v6525 = vpop.f32.mrf.mxu0
  %6526 = vmatprep.mubr.bf16.mxu0 %v5234
  %6527 = vmatmul.mubr.bf16.gmra.mxu0 %v5233
  %v6528 = vpop.f32.mrf.mxu0
  %v6529 = vadd.f32 %v6432, %v6528
  %v6530 = vpop.f32.mrf.mxu0
  %v6531 = vpop.f32.mrf.mxu0
  %v6532 = vadd.f32 %v6435, %v6531
  %v6533 = vpop.f32.mrf.mxu0
  %6534 = vmatprep.mubr.bf16.mxu0 %v5250
  %6535 = vmatmul.mubr.bf16.gmra.mxu0 %v5249
  %v6536 = vpop.f32.mrf.mxu0
  %v6537 = vadd.f32 %v6440, %v6536
  %v6538 = vpop.f32.mrf.mxu0
  %v6539 = vpop.f32.mrf.mxu0
  %v6540 = vadd.f32 %v6443, %v6539
  %v6541 = vpop.f32.mrf.mxu0
  %6542 = vdwg.mxu0
  %6543 = vmatprep.subr.bf16.mxu0 0
  %6544 = vmatpush1.bf16.msra.mxu0 %v5970
  %6545 = vmatprep.subr.bf16.mxu0 0
  %6546 = vmatpush1.bf16.msra.mxu0 %v5969
  %6547 = vmatprep.subr.bf16.mxu0 0
  %6548 = vmatpush1.bf16.msra.mxu0 %v5968
  %6549 = vmatprep.subr.bf16.mxu0 0
  %6550 = vmatpush1.bf16.msra.mxu0 %v5967
  %6551 = vmatprep.subr.bf16.mxu0 0
  %6552 = vmatpush1.bf16.msra.mxu0 %v5966
  %6553 = vmatprep.subr.bf16.mxu0 0
  %6554 = vmatpush1.bf16.msra.mxu0 %v5965
  %6555 = vmatprep.subr.bf16.mxu0 0
  %6556 = vmatpush1.bf16.msra.mxu0 %v5964
  %6557 = vmatprep.subr.bf16.mxu0 0
  %6558 = vmatpush1.bf16.msra.mxu0 %v5963
  %6559 = vmatprep.subr.bf16.mxu0 0
  %6560 = vmatpush2.bf16.msra.mxu0 %v5978
  %6561 = vmatprep.subr.bf16.mxu0 0
  %6562 = vmatpush2.bf16.msra.mxu0 %v5977
  %6563 = vmatprep.subr.bf16.mxu0 0
  %6564 = vmatpush2.bf16.msra.mxu0 %v5976
  %6565 = vmatprep.subr.bf16.mxu0 0
  %6566 = vmatpush2.bf16.msra.mxu0 %v5975
  %6567 = vmatprep.subr.bf16.mxu0 0
  %6568 = vmatpush2.bf16.msra.mxu0 %v5974
  %6569 = vmatprep.subr.bf16.mxu0 0
  %6570 = vmatpush2.bf16.msra.mxu0 %v5973
  %6571 = vmatprep.subr.bf16.mxu0 0
  %6572 = vmatpush2.bf16.msra.mxu0 %v5972
  %6573 = vmatprep.subr.bf16.mxu0 0
  %6574 = vmatpush2.bf16.msra.mxu0 %v5971
  %6575 = vmatprep.mubr.bf16.mxu0 %v5140
  %6576 = vmatmul.mubr.bf16.gmra.mxu0 %v5139
  %v6577 = vpop.f32.mrf.mxu0
  %v6578 = vadd.f32 %v6481, %v6577
  %v6579 = vpop.f32.mrf.mxu0
  %v6580 = vpop.f32.mrf.mxu0
  %v6581 = vadd.f32 %v6484, %v6580
  %v6582 = vpop.f32.mrf.mxu0
  %6583 = vmatprep.mubr.bf16.mxu0 %v5156
  %6584 = vmatmul.mubr.bf16.gmra.mxu0 %v5155
  %v6585 = vpop.f32.mrf.mxu0
  %v6586 = vadd.f32 %v6489, %v6585
  %v6587 = vpop.f32.mrf.mxu0
  %v6588 = vpop.f32.mrf.mxu0
  %v6589 = vadd.f32 %v6492, %v6588
  %v6590 = vpop.f32.mrf.mxu0
  %6591 = vmatprep.mubr.bf16.mxu0 %v5172
  %6592 = vmatmul.mubr.bf16.gmra.mxu0 %v5171
  %v6593 = vpop.f32.mrf.mxu0
  %v6594 = vadd.f32 %v6497, %v6593
  %v6595 = vpop.f32.mrf.mxu0
  %v6596 = vpop.f32.mrf.mxu0
  %v6597 = vadd.f32 %v6500, %v6596
  %v6598 = vpop.f32.mrf.mxu0
  %6599 = vmatprep.mubr.bf16.mxu0 %v5188
  %6600 = vmatmul.mubr.bf16.gmra.mxu0 %v5187
  %v6601 = vpop.f32.mrf.mxu0
  %v6602 = vadd.f32 %v6505, %v6601
  %v6603 = vpop.f32.mrf.mxu0
  %v6604 = vpop.f32.mrf.mxu0
  %v6605 = vadd.f32 %v6508, %v6604
  %v6606 = vpop.f32.mrf.mxu0
  %6607 = vmatprep.mubr.bf16.mxu0 %v5204
  %6608 = vmatmul.mubr.bf16.gmra.mxu0 %v5203
  %v6609 = vpop.f32.mrf.mxu0
  %v6610 = vadd.f32 %v6513, %v6609
  %v6611 = vpop.f32.mrf.mxu0
  %v6612 = vpop.f32.mrf.mxu0
  %v6613 = vadd.f32 %v6516, %v6612
  %v6614 = vpop.f32.mrf.mxu0
  %6615 = vmatprep.mubr.bf16.mxu0 %v5220
  %6616 = vmatmul.mubr.bf16.gmra.mxu0 %v5219
  %v6617 = vpop.f32.mrf.mxu0
  %v6618 = vadd.f32 %v6521, %v6617
  %v6619 = vpop.f32.mrf.mxu0
  %v6620 = vpop.f32.mrf.mxu0
  %v6621 = vadd.f32 %v6524, %v6620
  %v6622 = vpop.f32.mrf.mxu0
  %6623 = vmatprep.mubr.bf16.mxu0 %v5236
  %6624 = vmatmul.mubr.bf16.gmra.mxu0 %v5235
  %v6625 = vpop.f32.mrf.mxu0
  %v6626 = vadd.f32 %v6529, %v6625
  %v6627 = vpop.f32.mrf.mxu0
  %v6628 = vpop.f32.mrf.mxu0
  %v6629 = vadd.f32 %v6532, %v6628
  %v6630 = vpop.f32.mrf.mxu0
  %6631 = vmatprep.mubr.bf16.mxu0 %v5252
  %6632 = vmatmul.mubr.bf16.gmra.mxu0 %v5251
  %v6633 = vpop.f32.mrf.mxu0
  %v6634 = vadd.f32 %v6537, %v6633
  %v6635 = vpop.f32.mrf.mxu0
  %v6636 = vpop.f32.mrf.mxu0
  %v6637 = vadd.f32 %v6540, %v6636
  %v6638 = vpop.f32.mrf.mxu0
  %6639 = vdwg.mxu0
  %6640 = vmatprep.subr.bf16.mxu0 0
  %6641 = vmatpush1.bf16.msra.mxu0 %v5986
  %6642 = vmatprep.subr.bf16.mxu0 0
  %6643 = vmatpush1.bf16.msra.mxu0 %v5985
  %6644 = vmatprep.subr.bf16.mxu0 0
  %6645 = vmatpush1.bf16.msra.mxu0 %v5984
  %6646 = vmatprep.subr.bf16.mxu0 0
  %6647 = vmatpush1.bf16.msra.mxu0 %v5983
  %6648 = vmatprep.subr.bf16.mxu0 0
  %6649 = vmatpush1.bf16.msra.mxu0 %v5982
  %6650 = vmatprep.subr.bf16.mxu0 0
  %6651 = vmatpush1.bf16.msra.mxu0 %v5981
  %6652 = vmatprep.subr.bf16.mxu0 0
  %6653 = vmatpush1.bf16.msra.mxu0 %v5980
  %6654 = vmatprep.subr.bf16.mxu0 0
  %6655 = vmatpush1.bf16.msra.mxu0 %v5979
  %6656 = vmatprep.subr.bf16.mxu0 0
  %6657 = vmatpush2.bf16.msra.mxu0 %v5994
  %6658 = vmatprep.subr.bf16.mxu0 0
  %6659 = vmatpush2.bf16.msra.mxu0 %v5993
  %6660 = vmatprep.subr.bf16.mxu0 0
  %6661 = vmatpush2.bf16.msra.mxu0 %v5992
  %6662 = vmatprep.subr.bf16.mxu0 0
  %6663 = vmatpush2.bf16.msra.mxu0 %v5991
  %6664 = vmatprep.subr.bf16.mxu0 0
  %6665 = vmatpush2.bf16.msra.mxu0 %v5990
  %6666 = vmatprep.subr.bf16.mxu0 0
  %6667 = vmatpush2.bf16.msra.mxu0 %v5989
  %6668 = vmatprep.subr.bf16.mxu0 0
  %6669 = vmatpush2.bf16.msra.mxu0 %v5988
  %6670 = vmatprep.subr.bf16.mxu0 0
  %6671 = vmatpush2.bf16.msra.mxu0 %v5987
  %6672 = vmatprep.mubr.bf16.mxu0 %v5142
  %6673 = vmatmul.mubr.bf16.gmra.mxu0 %v5141
  %v6674 = vpop.f32.mrf.mxu0
  %v6675 = vadd.f32 %v6578, %v6674
  %v6676 = vpop.f32.mrf.mxu0
  %v6677 = vpop.f32.mrf.mxu0
  %v6678 = vadd.f32 %v6581, %v6677
  %v6679 = vpop.f32.mrf.mxu0
  %6680 = vmatprep.mubr.bf16.mxu0 %v5158
  %6681 = vmatmul.mubr.bf16.gmra.mxu0 %v5157
  %v6682 = vpop.f32.mrf.mxu0
  %v6683 = vadd.f32 %v6586, %v6682
  %v6684 = vpop.f32.mrf.mxu0
  %v6685 = vpop.f32.mrf.mxu0
  %v6686 = vadd.f32 %v6589, %v6685
  %v6687 = vpop.f32.mrf.mxu0
  %6688 = vmatprep.mubr.bf16.mxu0 %v5174
  %6689 = vmatmul.mubr.bf16.gmra.mxu0 %v5173
  %v6690 = vpop.f32.mrf.mxu0
  %v6691 = vadd.f32 %v6594, %v6690
  %v6692 = vpop.f32.mrf.mxu0
  %v6693 = vpop.f32.mrf.mxu0
  %v6694 = vadd.f32 %v6597, %v6693
  %v6695 = vpop.f32.mrf.mxu0
  %6696 = vmatprep.mubr.bf16.mxu0 %v5190
  %6697 = vmatmul.mubr.bf16.gmra.mxu0 %v5189
  %v6698 = vpop.f32.mrf.mxu0
  %v6699 = vadd.f32 %v6602, %v6698
  %v6700 = vpop.f32.mrf.mxu0
  %v6701 = vpop.f32.mrf.mxu0
  %v6702 = vadd.f32 %v6605, %v6701
  %v6703 = vpop.f32.mrf.mxu0
  %6704 = vmatprep.mubr.bf16.mxu0 %v5206
  %6705 = vmatmul.mubr.bf16.gmra.mxu0 %v5205
  %v6706 = vpop.f32.mrf.mxu0
  %v6707 = vadd.f32 %v6610, %v6706
  %v6708 = vpop.f32.mrf.mxu0
  %v6709 = vpop.f32.mrf.mxu0
  %v6710 = vadd.f32 %v6613, %v6709
  %v6711 = vpop.f32.mrf.mxu0
  %6712 = vmatprep.mubr.bf16.mxu0 %v5222
  %6713 = vmatmul.mubr.bf16.gmra.mxu0 %v5221
  %v6714 = vpop.f32.mrf.mxu0
  %v6715 = vadd.f32 %v6618, %v6714
  %v6716 = vpop.f32.mrf.mxu0
  %v6717 = vpop.f32.mrf.mxu0
  %v6718 = vadd.f32 %v6621, %v6717
  %v6719 = vpop.f32.mrf.mxu0
  %6720 = vmatprep.mubr.bf16.mxu0 %v5238
  %6721 = vmatmul.mubr.bf16.gmra.mxu0 %v5237
  %v6722 = vpop.f32.mrf.mxu0
  %v6723 = vadd.f32 %v6626, %v6722
  %v6724 = vpop.f32.mrf.mxu0
  %v6725 = vpop.f32.mrf.mxu0
  %v6726 = vadd.f32 %v6629, %v6725
  %v6727 = vpop.f32.mrf.mxu0
  %6728 = vmatprep.mubr.bf16.mxu0 %v5254
  %6729 = vmatmul.mubr.bf16.gmra.mxu0 %v5253
  %v6730 = vpop.f32.mrf.mxu0
  %v6731 = vadd.f32 %v6634, %v6730
  %v6732 = vpop.f32.mrf.mxu0
  %v6733 = vpop.f32.mrf.mxu0
  %v6734 = vadd.f32 %v6637, %v6733
  %v6735 = vpop.f32.mrf.mxu0
  %6736 = vdwg.mxu0
  %6737 = vmatprep.subr.bf16.mxu0 0
  %6738 = vmatpush1.bf16.msra.mxu0 %v6002
  %6739 = vmatprep.subr.bf16.mxu0 0
  %6740 = vmatpush1.bf16.msra.mxu0 %v6001
  %6741 = vmatprep.subr.bf16.mxu0 0
  %6742 = vmatpush1.bf16.msra.mxu0 %v6000
  %6743 = vmatprep.subr.bf16.mxu0 0
  %6744 = vmatpush1.bf16.msra.mxu0 %v5999
  %6745 = vmatprep.subr.bf16.mxu0 0
  %6746 = vmatpush1.bf16.msra.mxu0 %v5998
  %6747 = vmatprep.subr.bf16.mxu0 0
  %6748 = vmatpush1.bf16.msra.mxu0 %v5997
  %6749 = vmatprep.subr.bf16.mxu0 0
  %6750 = vmatpush1.bf16.msra.mxu0 %v5996
  %6751 = vmatprep.subr.bf16.mxu0 0
  %6752 = vmatpush1.bf16.msra.mxu0 %v5995
  %6753 = vmatprep.subr.bf16.mxu0 0
  %6754 = vmatpush2.bf16.msra.mxu0 %v6010
  %6755 = vmatprep.subr.bf16.mxu0 0
  %6756 = vmatpush2.bf16.msra.mxu0 %v6009
  %6757 = vmatprep.subr.bf16.mxu0 0
  %6758 = vmatpush2.bf16.msra.mxu0 %v6008
  %6759 = vmatprep.subr.bf16.mxu0 0
  %6760 = vmatpush2.bf16.msra.mxu0 %v6007
  %6761 = vmatprep.subr.bf16.mxu0 0
  %6762 = vmatpush2.bf16.msra.mxu0 %v6006
  %6763 = vmatprep.subr.bf16.mxu0 0
  %6764 = vmatpush2.bf16.msra.mxu0 %v6005
  %6765 = vmatprep.subr.bf16.mxu0 0
  %6766 = vmatpush2.bf16.msra.mxu0 %v6004
  %6767 = vmatprep.subr.bf16.mxu0 0
  %6768 = vmatpush2.bf16.msra.mxu0 %v6003
  %6769 = vmatprep.mubr.bf16.mxu0 %v5144
  %6770 = vmatmul.mubr.bf16.gmra.mxu0 %v5143
  %v6771 = vpop.f32.mrf.mxu0
  %v6772 = vadd.f32 %v6675, %v6771
  %v6773 = vpop.f32.mrf.mxu0
  %v6774 = vpop.f32.mrf.mxu0
  %v6775 = vadd.f32 %v6678, %v6774
  %v6776 = vpop.f32.mrf.mxu0
  %6777 = vmatprep.mubr.bf16.mxu0 %v5160
  %6778 = vmatmul.mubr.bf16.gmra.mxu0 %v5159
  %v6779 = vpop.f32.mrf.mxu0
  %v6780 = vadd.f32 %v6683, %v6779
  %v6781 = vpop.f32.mrf.mxu0
  %v6782 = vpop.f32.mrf.mxu0
  %v6783 = vadd.f32 %v6686, %v6782
  %v6784 = vpop.f32.mrf.mxu0
  %6785 = vmatprep.mubr.bf16.mxu0 %v5176
  %6786 = vmatmul.mubr.bf16.gmra.mxu0 %v5175
  %v6787 = vpop.f32.mrf.mxu0
  %v6788 = vadd.f32 %v6691, %v6787
  %v6789 = vpop.f32.mrf.mxu0
  %v6790 = vpop.f32.mrf.mxu0
  %v6791 = vadd.f32 %v6694, %v6790
  %v6792 = vpop.f32.mrf.mxu0
  %6793 = vmatprep.mubr.bf16.mxu0 %v5192
  %6794 = vmatmul.mubr.bf16.gmra.mxu0 %v5191
  %v6795 = vpop.f32.mrf.mxu0
  %v6796 = vadd.f32 %v6699, %v6795
  %v6797 = vpop.f32.mrf.mxu0
  %v6798 = vpop.f32.mrf.mxu0
  %v6799 = vadd.f32 %v6702, %v6798
  %v6800 = vpop.f32.mrf.mxu0
  %6801 = vmatprep.mubr.bf16.mxu0 %v5208
  %6802 = vmatmul.mubr.bf16.gmra.mxu0 %v5207
  %v6803 = vpop.f32.mrf.mxu0
  %v6804 = vadd.f32 %v6707, %v6803
  %v6805 = vpop.f32.mrf.mxu0
  %v6806 = vpop.f32.mrf.mxu0
  %v6807 = vadd.f32 %v6710, %v6806
  %v6808 = vpop.f32.mrf.mxu0
  %6809 = vmatprep.mubr.bf16.mxu0 %v5224
  %6810 = vmatmul.mubr.bf16.gmra.mxu0 %v5223
  %v6811 = vpop.f32.mrf.mxu0
  %v6812 = vadd.f32 %v6715, %v6811
  %v6813 = vpop.f32.mrf.mxu0
  %v6814 = vpop.f32.mrf.mxu0
  %v6815 = vadd.f32 %v6718, %v6814
  %v6816 = vpop.f32.mrf.mxu0
  %6817 = vmatprep.mubr.bf16.mxu0 %v5240
  %6818 = vmatmul.mubr.bf16.gmra.mxu0 %v5239
  %v6819 = vpop.f32.mrf.mxu0
  %v6820 = vadd.f32 %v6723, %v6819
  %v6821 = vpop.f32.mrf.mxu0
  %v6822 = vpop.f32.mrf.mxu0
  %v6823 = vadd.f32 %v6726, %v6822
  %v6824 = vpop.f32.mrf.mxu0
  %6825 = vmatprep.mubr.bf16.mxu0 %v5256
  %6826 = vmatmul.mubr.bf16.gmra.mxu0 %v5255
  %v6827 = vpop.f32.mrf.mxu0
  %v6828 = vadd.f32 %v6731, %v6827
  %v6829 = vpop.f32.mrf.mxu0
  %v6830 = vpop.f32.mrf.mxu0
  %v6831 = vadd.f32 %v6734, %v6830
  %v6832 = vpop.f32.mrf.mxu0
  %6833 = vdwg.mxu0
  %6834 = vmatprep.subr.bf16.mxu0 0
  %6835 = vmatpush1.bf16.msra.mxu0 %v6018
  %6836 = vmatprep.subr.bf16.mxu0 0
  %6837 = vmatpush1.bf16.msra.mxu0 %v6017
  %6838 = vmatprep.subr.bf16.mxu0 0
  %6839 = vmatpush1.bf16.msra.mxu0 %v6016
  %6840 = vmatprep.subr.bf16.mxu0 0
  %6841 = vmatpush1.bf16.msra.mxu0 %v6015
  %6842 = vmatprep.subr.bf16.mxu0 0
  %6843 = vmatpush1.bf16.msra.mxu0 %v6014
  %6844 = vmatprep.subr.bf16.mxu0 0
  %6845 = vmatpush1.bf16.msra.mxu0 %v6013
  %6846 = vmatprep.subr.bf16.mxu0 0
  %6847 = vmatpush1.bf16.msra.mxu0 %v6012
  %6848 = vmatprep.subr.bf16.mxu0 0
  %6849 = vmatpush1.bf16.msra.mxu0 %v6011
  %6850 = vmatprep.subr.bf16.mxu0 0
  %6851 = vmatpush2.bf16.msra.mxu0 %v6026
  %6852 = vmatprep.subr.bf16.mxu0 0
  %6853 = vmatpush2.bf16.msra.mxu0 %v6025
  %6854 = vmatprep.subr.bf16.mxu0 0
  %6855 = vmatpush2.bf16.msra.mxu0 %v6024
  %6856 = vmatprep.subr.bf16.mxu0 0
  %6857 = vmatpush2.bf16.msra.mxu0 %v6023
  %6858 = vmatprep.subr.bf16.mxu0 0
  %6859 = vmatpush2.bf16.msra.mxu0 %v6022
  %6860 = vmatprep.subr.bf16.mxu0 0
  %6861 = vmatpush2.bf16.msra.mxu0 %v6021
  %6862 = vmatprep.subr.bf16.mxu0 0
  %6863 = vmatpush2.bf16.msra.mxu0 %v6020
  %6864 = vmatprep.subr.bf16.mxu0 0
  %6865 = vmatpush2.bf16.msra.mxu0 %v6019
  %6866 = vmatprep.mubr.bf16.mxu0 %v5146
  %6867 = vmatmul.mubr.bf16.gmra.mxu0 %v5145
  %v6868 = vpop.f32.mrf.mxu0
  %v6869 = vadd.f32 %v6772, %v6868
  %v6870 = vpop.f32.mrf.mxu0
  %v6871 = vpop.f32.mrf.mxu0
  %v6872 = vadd.f32 %v6775, %v6871
  %v6873 = vpop.f32.mrf.mxu0
  %6874 = vmatprep.mubr.bf16.mxu0 %v5162
  %6875 = vmatmul.mubr.bf16.gmra.mxu0 %v5161
  %v6876 = vpop.f32.mrf.mxu0
  %v6877 = vadd.f32 %v6780, %v6876
  %v6878 = vpop.f32.mrf.mxu0
  %v6879 = vpop.f32.mrf.mxu0
  %v6880 = vadd.f32 %v6783, %v6879
  %v6881 = vpop.f32.mrf.mxu0
  %6882 = vmatprep.mubr.bf16.mxu0 %v5178
  %6883 = vmatmul.mubr.bf16.gmra.mxu0 %v5177
  %v6884 = vpop.f32.mrf.mxu0
  %v6885 = vadd.f32 %v6788, %v6884
  %v6886 = vpop.f32.mrf.mxu0
  %v6887 = vpop.f32.mrf.mxu0
  %v6888 = vadd.f32 %v6791, %v6887
  %v6889 = vpop.f32.mrf.mxu0
  %6890 = vmatprep.mubr.bf16.mxu0 %v5194
  %6891 = vmatmul.mubr.bf16.gmra.mxu0 %v5193
  %v6892 = vpop.f32.mrf.mxu0
  %v6893 = vadd.f32 %v6796, %v6892
  %v6894 = vpop.f32.mrf.mxu0
  %v6895 = vpop.f32.mrf.mxu0
  %v6896 = vadd.f32 %v6799, %v6895
  %v6897 = vpop.f32.mrf.mxu0
  %6898 = vmatprep.mubr.bf16.mxu0 %v5210
  %6899 = vmatmul.mubr.bf16.gmra.mxu0 %v5209
  %v6900 = vpop.f32.mrf.mxu0
  %v6901 = vadd.f32 %v6804, %v6900
  %v6902 = vpop.f32.mrf.mxu0
  %v6903 = vpop.f32.mrf.mxu0
  %v6904 = vadd.f32 %v6807, %v6903
  %v6905 = vpop.f32.mrf.mxu0
  %6906 = vmatprep.mubr.bf16.mxu0 %v5226
  %6907 = vmatmul.mubr.bf16.gmra.mxu0 %v5225
  %v6908 = vpop.f32.mrf.mxu0
  %v6909 = vadd.f32 %v6812, %v6908
  %v6910 = vpop.f32.mrf.mxu0
  %v6911 = vpop.f32.mrf.mxu0
  %v6912 = vadd.f32 %v6815, %v6911
  %v6913 = vpop.f32.mrf.mxu0
  %6914 = vmatprep.mubr.bf16.mxu0 %v5242
  %6915 = vmatmul.mubr.bf16.gmra.mxu0 %v5241
  %v6916 = vpop.f32.mrf.mxu0
  %v6917 = vadd.f32 %v6820, %v6916
  %v6918 = vpop.f32.mrf.mxu0
  %v6919 = vpop.f32.mrf.mxu0
  %v6920 = vadd.f32 %v6823, %v6919
  %v6921 = vpop.f32.mrf.mxu0
  %6922 = vmatprep.mubr.bf16.mxu0 %v5258
  %6923 = vmatmul.mubr.bf16.gmra.mxu0 %v5257
  %v6924 = vpop.f32.mrf.mxu0
  %v6925 = vadd.f32 %v6828, %v6924
  %v6926 = vpop.f32.mrf.mxu0
  %v6927 = vpop.f32.mrf.mxu0
  %v6928 = vadd.f32 %v6831, %v6927
  %v6929 = vpop.f32.mrf.mxu0
  %6930 = vdwg.mxu0
  %v6931 = vadd.f32 %v6869, %v6872
  %v6932 = vadd.f32 %v6931, %v6877
  %v6933 = vadd.f32 %v6932, %v6880
  %v6934 = vadd.f32 %v6933, %v6885
  %v6935 = vadd.f32 %v6934, %v6888
  %v6936 = vadd.f32 %v6935, %v6893
  %v6937 = vadd.f32 %v6936, %v6896
  %v6938 = vadd.f32 %v6937, %v6901
  %v6939 = vadd.f32 %v6938, %v6904
  %v6940 = vadd.f32 %v6939, %v6909
  %v6941 = vadd.f32 %v6940, %v6912
  %v6942 = vadd.f32 %v6941, %v6917
  %v6943 = vadd.f32 %v6942, %v6920
  %v6944 = vadd.f32 %v6943, %v6925
  %v6945 = vadd.f32 %v6944, %v6928
  %v6946 = vrot.slane %v6945, 4
  %v6947 = vadd.f32 %v6945, %v6946
  %v6948 = vrot.slane %v6947, 2
  %v6949 = vadd.f32 %v6947, %v6948
  %v6950 = vrot.slane %v6949, 1
  %v6951 = vadd.f32 %v6949, %v6950
  %v6952 = vrcp.pop 128.0
  %v6953 = vmul.f32 %v6951, %v6952
  %v6954 = vsub.f32 %v6869, %v6953
  %v6955 = vsub.f32 %v6872, %v6953
  %v6956 = vsub.f32 %v6877, %v6953
  %v6957 = vsub.f32 %v6880, %v6953
  %v6958 = vsub.f32 %v6885, %v6953
  %v6959 = vsub.f32 %v6888, %v6953
  %v6960 = vsub.f32 %v6893, %v6953
  %v6961 = vsub.f32 %v6896, %v6953
  %v6962 = vsub.f32 %v6901, %v6953
  %v6963 = vsub.f32 %v6904, %v6953
  %v6964 = vsub.f32 %v6909, %v6953
  %v6965 = vsub.f32 %v6912, %v6953
  %v6966 = vsub.f32 %v6917, %v6953
  %v6967 = vsub.f32 %v6920, %v6953
  %v6968 = vsub.f32 %v6925, %v6953
  %v6969 = vsub.f32 %v6928, %v6953
  %v6970 = vmul.f32 %v6954, %v6954
  %v6971 = vmul.f32 %v6955, %v6955
  %v6972 = vmul.f32 %v6956, %v6956
  %v6973 = vmul.f32 %v6957, %v6957
  %v6974 = vmul.f32 %v6958, %v6958
  %v6975 = vmul.f32 %v6959, %v6959
  %v6976 = vmul.f32 %v6960, %v6960
  %v6977 = vmul.f32 %v6961, %v6961
  %v6978 = vmul.f32 %v6962, %v6962
  %v6979 = vmul.f32 %v6963, %v6963
  %v6980 = vmul.f32 %v6964, %v6964
  %v6981 = vmul.f32 %v6965, %v6965
  %v6982 = vmul.f32 %v6966, %v6966
  %v6983 = vmul.f32 %v6967, %v6967
  %v6984 = vmul.f32 %v6968, %v6968
  %v6985 = vmul.f32 %v6969, %v6969
  %v6986 = vadd.f32 %v6970, %v6971
  %v6987 = vadd.f32 %v6986, %v6972
  %v6988 = vadd.f32 %v6987, %v6973
  %v6989 = vadd.f32 %v6988, %v6974
  %v6990 = vadd.f32 %v6989, %v6975
  %v6991 = vadd.f32 %v6990, %v6976
  %v6992 = vadd.f32 %v6991, %v6977
  %v6993 = vadd.f32 %v6992, %v6978
  %v6994 = vadd.f32 %v6993, %v6979
  %v6995 = vadd.f32 %v6994, %v6980
  %v6996 = vadd.f32 %v6995, %v6981
  %v6997 = vadd.f32 %v6996, %v6982
  %v6998 = vadd.f32 %v6997, %v6983
  %v6999 = vadd.f32 %v6998, %v6984
  %v7000 = vadd.f32 %v6999, %v6985
  %v7001 = vrot.slane %v7000, 4
  %v7002 = vadd.f32 %v7000, %v7001
  %v7003 = vrot.slane %v7002, 2
  %v7004 = vadd.f32 %v7002, %v7003
  %v7005 = vrot.slane %v7004, 1
  %v7006 = vadd.f32 %v7004, %v7005
  %v7007 = vmul.f32 %v7006, %v6952
  %v7008 = vadd.f32 %v7007, 1e-05
  %v7009 = vrsqrt.pop %v7008
  %v7010 = vmul.f32 %v6954, %v7009
  %v7011 = vmul.f32 %v6955, %v7009
  %v7012 = vmul.f32 %v6956, %v7009
  %v7013 = vmul.f32 %v6957, %v7009
  %v7014 = vmul.f32 %v6958, %v7009
  %v7015 = vmul.f32 %v6959, %v7009
  %v7016 = vmul.f32 %v6960, %v7009
  %v7017 = vmul.f32 %v6961, %v7009
  %v7018 = vmul.f32 %v6962, %v7009
  %v7019 = vmul.f32 %v6963, %v7009
  %v7020 = vmul.f32 %v6964, %v7009
  %v7021 = vmul.f32 %v6965, %v7009
  %v7022 = vmul.f32 %v6966, %v7009
  %v7023 = vmul.f32 %v6967, %v7009
  %v7024 = vmul.f32 %v6968, %v7009
  %v7025 = vmul.f32 %v6969, %v7009
  %v7026 = vld [vmem:[%s4] sm:$0x1]
  %v7028 = vlaneseq
  %v7029 = vshrl.u32 %v7028, 7
  %v7030 = vsub.s32 0, %v7029
  %v7031 = vrot.slane %v7026, %v7030
  %v7033 = vmul.f32 %v7010, %v7031
  %v7034 = vmul.f32 %v7011, %v7031
  %v7035 = vmul.f32 %v7012, %v7031
  %v7036 = vmul.f32 %v7013, %v7031
  %v7037 = vmul.f32 %v7014, %v7031
  %v7038 = vmul.f32 %v7015, %v7031
  %v7039 = vmul.f32 %v7016, %v7031
  %v7040 = vmul.f32 %v7017, %v7031
  %v7041 = vmul.f32 %v7018, %v7031
  %v7042 = vmul.f32 %v7019, %v7031
  %v7043 = vmul.f32 %v7020, %v7031
  %v7044 = vmul.f32 %v7021, %v7031
  %v7045 = vmul.f32 %v7022, %v7031
  %v7046 = vmul.f32 %v7023, %v7031
  %v7047 = vmul.f32 %v7024, %v7031
  %v7048 = vmul.f32 %v7025, %v7031
  %v7049 = vld [vmem:[%s5] sm:$0x1]
  %v7051 = vlaneseq
  %v7052 = vshrl.u32 %v7051, 7
  %v7053 = vsub.s32 0, %v7052
  %v7054 = vrot.slane %v7049, %v7053
  %v7056 = vadd.f32 %v7033, %v7054
  %v7057 = vadd.f32 %v7034, %v7054
  %v7058 = vadd.f32 %v7035, %v7054
  %v7059 = vadd.f32 %v7036, %v7054
  %v7060 = vadd.f32 %v7037, %v7054
  %v7061 = vadd.f32 %v7038, %v7054
  %v7062 = vadd.f32 %v7039, %v7054
  %v7063 = vadd.f32 %v7040, %v7054
  %v7064 = vadd.f32 %v7041, %v7054
  %v7065 = vadd.f32 %v7042, %v7054
  %v7066 = vadd.f32 %v7043, %v7054
  %v7067 = vadd.f32 %v7044, %v7054
  %v7068 = vadd.f32 %v7045, %v7054
  %v7069 = vadd.f32 %v7046, %v7054
  %v7070 = vadd.f32 %v7047, %v7054
  %v7071 = vadd.f32 %v7048, %v7054
  %vm7072 = vcmp.gt.f32.partialorder %v7056, 0.0
  %vm7073 = vcmp.gt.f32.partialorder %v7057, 0.0
  %vm7074 = vcmp.gt.f32.partialorder %v7058, 0.0
  %vm7075 = vcmp.gt.f32.partialorder %v7059, 0.0
  %vm7076 = vcmp.gt.f32.partialorder %v7060, 0.0
  %vm7077 = vcmp.gt.f32.partialorder %v7061, 0.0
  %vm7078 = vcmp.gt.f32.partialorder %v7062, 0.0
  %vm7079 = vcmp.gt.f32.partialorder %v7063, 0.0
  %vm7080 = vcmp.gt.f32.partialorder %v7064, 0.0
  %vm7081 = vcmp.gt.f32.partialorder %v7065, 0.0
  %vm7082 = vcmp.gt.f32.partialorder %v7066, 0.0
  %vm7083 = vcmp.gt.f32.partialorder %v7067, 0.0
  %vm7084 = vcmp.gt.f32.partialorder %v7068, 0.0
  %vm7085 = vcmp.gt.f32.partialorder %v7069, 0.0
  %vm7086 = vcmp.gt.f32.partialorder %v7070, 0.0
  %vm7087 = vcmp.gt.f32.partialorder %v7071, 0.0
  %v7088 = vmul.f32 %v7056, 0.2
  %v7089 = vmul.f32 %v7057, 0.2
  %v7090 = vmul.f32 %v7058, 0.2
  %v7091 = vmul.f32 %v7059, 0.2
  %v7092 = vmul.f32 %v7060, 0.2
  %v7093 = vmul.f32 %v7061, 0.2
  %v7094 = vmul.f32 %v7062, 0.2
  %v7095 = vmul.f32 %v7063, 0.2
  %v7096 = vmul.f32 %v7064, 0.2
  %v7097 = vmul.f32 %v7065, 0.2
  %v7098 = vmul.f32 %v7066, 0.2
  %v7099 = vmul.f32 %v7067, 0.2
  %v7100 = vmul.f32 %v7068, 0.2
  %v7101 = vmul.f32 %v7069, 0.2
  %v7102 = vmul.f32 %v7070, 0.2
  %v7103 = vmul.f32 %v7071, 0.2
  %v7104 = vsel %vm7072, %v7056, %v7088
  %v7105 = vsel %vm7073, %v7057, %v7089
  %v7106 = vsel %vm7074, %v7058, %v7090
  %v7107 = vsel %vm7075, %v7059, %v7091
  %v7108 = vsel %vm7076, %v7060, %v7092
  %v7109 = vsel %vm7077, %v7061, %v7093
  %v7110 = vsel %vm7078, %v7062, %v7094
  %v7111 = vsel %vm7079, %v7063, %v7095
  %v7112 = vsel %vm7080, %v7064, %v7096
  %v7113 = vsel %vm7081, %v7065, %v7097
  %v7114 = vsel %vm7082, %v7066, %v7098
  %v7115 = vsel %vm7083, %v7067, %v7099
  %v7116 = vsel %vm7084, %v7068, %v7100
  %v7117 = vsel %vm7085, %v7069, %v7101
  %v7118 = vsel %vm7086, %v7070, %v7102
  %v7119 = vsel %vm7087, %v7071, %v7103
  %vm7120 = vcmask 1042432
  %vm7121 = vsmask.f32 2304
  %vm7122 = vmand %vm7120, %vm7121
  %v7123 = vld [vmem:[#allocation4] sm:$0x7]
  %v7124 = vsel %vm7122, 0, %v7123
  %7125 = vst [vmem:[#allocation4] sm:$0x7] %v7124
  %v7126 = vld [vmem:[#allocation4 + $0x14] sm:$0x7]
  %v7127 = vsel %vm7122, 0, %v7126
  %7128 = vst [vmem:[#allocation4 + $0x14] sm:$0x7] %v7127
  %v7129 = vld [vmem:[#allocation4 + $0x28] sm:$0x7]
  %v7130 = vsel %vm7122, 0, %v7129
  %7131 = vst [vmem:[#allocation4 + $0x28] sm:$0x7] %v7130
  %v7132 = vld [vmem:[#allocation4 + $0x3c] sm:$0x7]
  %v7133 = vsel %vm7122, 0, %v7132
  %7134 = vst [vmem:[#allocation4 + $0x3c] sm:$0x7] %v7133
  %s7135 = scalar_lea.vmem [#allocation4], 96
  %v7136 = vld [vmem:[%s7135] sm:$0x7]
  %v7137 = vsel %vm7122, 0, %v7136
  %7138 = vst [vmem:[%s7135] sm:$0x7] %v7137
  %v7139 = vld [vmem:[%s7135 + $0x14] sm:$0x7]
  %v7140 = vsel %vm7122, 0, %v7139
  %7141 = vst [vmem:[%s7135 + $0x14] sm:$0x7] %v7140
  %v7142 = vld [vmem:[%s7135 + $0x28] sm:$0x7]
  %v7143 = vsel %vm7122, 0, %v7142
  %7144 = vst [vmem:[%s7135 + $0x28] sm:$0x7] %v7143
  %v7145 = vld [vmem:[%s7135 + $0x3c] sm:$0x7]
  %v7146 = vsel %vm7122, 0, %v7145
  %7147 = vst [vmem:[%s7135 + $0x3c] sm:$0x7] %v7146
  %v7148 = vld [vmem:[#allocation4] sm:$0x1]
  %v7149 = vsel %vm837, 0, %v7148
  %7150 = vst [vmem:[#allocation4] sm:$0x1] %v7149
  %v7151 = vld [vmem:[#allocation4 + $0x4] sm:$0x1]
  %v7152 = vsel %vm837, 0, %v7151
  %7153 = vst [vmem:[#allocation4 + $0x4] sm:$0x1] %v7152
  %v7154 = vld [vmem:[#allocation4 + $0x8] sm:$0x1]
  %v7155 = vsel %vm837, 0, %v7154
  %7156 = vst [vmem:[#allocation4 + $0x8] sm:$0x1] %v7155
  %v7157 = vld [vmem:[#allocation4 + $0xc] sm:$0x1]
  %v7158 = vsel %vm837, 0, %v7157
  %7159 = vst [vmem:[#allocation4 + $0xc] sm:$0x1] %v7158
  %v7160 = vld [vmem:[#allocation4 + $0x10] sm:$0x1]
  %v7161 = vsel %vm837, 0, %v7160
  %7162 = vst [vmem:[#allocation4 + $0x10] sm:$0x1] %v7161
  %v7163 = vld [vmem:[#allocation4 + $0x14] sm:$0x1]
  %v7164 = vsel %vm837, 0, %v7163
  %7165 = vst [vmem:[#allocation4 + $0x14] sm:$0x1] %v7164
  %v7166 = vld [vmem:[#allocation4 + $0x18] sm:$0x1]
  %v7167 = vsel %vm837, 0, %v7166
  %7168 = vst [vmem:[#allocation4 + $0x18] sm:$0x1] %v7167
  %v7169 = vld [vmem:[#allocation4 + $0x1c] sm:$0x1]
  %v7170 = vsel %vm837, 0, %v7169
  %7171 = vst [vmem:[#allocation4 + $0x1c] sm:$0x1] %v7170
  %v7172 = vld [vmem:[#allocation4 + $0x20] sm:$0x1]
  %v7173 = vsel %vm837, 0, %v7172
  %7174 = vst [vmem:[#allocation4 + $0x20] sm:$0x1] %v7173
  %v7175 = vld [vmem:[#allocation4 + $0x24] sm:$0x1]
  %v7176 = vsel %vm837, 0, %v7175
  %7177 = vst [vmem:[#allocation4 + $0x24] sm:$0x1] %v7176
  %s7178 = scalar_lea.vmem [#allocation4], 80
  %v7179 = vld [vmem:[%s7178] sm:$0x1]
  %v7180 = vsel %vm837, 0, %v7179
  %7181 = vst [vmem:[%s7178] sm:$0x1] %v7180
  %v7182 = vld [vmem:[%s7178 + $0x4] sm:$0x1]
  %v7183 = vsel %vm837, 0, %v7182
  %7184 = vst [vmem:[%s7178 + $0x4] sm:$0x1] %v7183
  %v7185 = vld [vmem:[%s7178 + $0x8] sm:$0x1]
  %v7186 = vsel %vm837, 0, %v7185
  %7187 = vst [vmem:[%s7178 + $0x8] sm:$0x1] %v7186
  %v7188 = vld [vmem:[%s7178 + $0xc] sm:$0x1]
  %v7189 = vsel %vm837, 0, %v7188
  %7190 = vst [vmem:[%s7178 + $0xc] sm:$0x1] %v7189
  %v7191 = vld [vmem:[%s7178 + $0x10] sm:$0x1]
  %v7192 = vsel %vm837, 0, %v7191
  %7193 = vst [vmem:[%s7178 + $0x10] sm:$0x1] %v7192
  %v7194 = vld [vmem:[%s7178 + $0x14] sm:$0x1]
  %v7195 = vsel %vm837, 0, %v7194
  %7196 = vst [vmem:[%s7178 + $0x14] sm:$0x1] %v7195
  %v7197 = vld [vmem:[%s7178 + $0x18] sm:$0x1]
  %v7198 = vsel %vm837, 0, %v7197
  %7199 = vst [vmem:[%s7178 + $0x18] sm:$0x1] %v7198
  %v7200 = vld [vmem:[%s7178 + $0x1c] sm:$0x1]
  %v7201 = vsel %vm837, 0, %v7200
  %7202 = vst [vmem:[%s7178 + $0x1c] sm:$0x1] %v7201
  %v7203 = vld [vmem:[%s7178 + $0x20] sm:$0x1]
  %v7204 = vsel %vm837, 0, %v7203
  %7205 = vst [vmem:[%s7178 + $0x20] sm:$0x1] %v7204
  %v7206 = vld [vmem:[%s7178 + $0x24] sm:$0x1]
  %v7207 = vsel %vm837, 0, %v7206
  %7208 = vst [vmem:[%s7178 + $0x24] sm:$0x1] %v7207
  %s7209 = scalar_lea.vmem [#allocation4], 40
  %vm7210 = vcmask 1042434
  %vm7211 = vmand %vm7210, %vm7121
  %v7212 = vld [vmem:[%s7209] sm:$0x4]
  %v7213 = vsel %vm7211, 0, %v7212
  %7214 = vst [vmem:[%s7209] sm:$0x4] %v7213
  %v7215 = vld [vmem:[%s7209 + $0x4] sm:$0x4]
  %v7216 = vsel %vm7211, 0, %v7215
  %7217 = vst [vmem:[%s7209 + $0x4] sm:$0x4] %v7216
  %v7218 = vld [vmem:[%s7209 + $0x8] sm:$0x4]
  %v7219 = vsel %vm7211, 0, %v7218
  %7220 = vst [vmem:[%s7209 + $0x8] sm:$0x4] %v7219
  %v7221 = vld [vmem:[%s7209 + $0xc] sm:$0x4]
  %v7222 = vsel %vm7211, 0, %v7221
  %7223 = vst [vmem:[%s7209 + $0xc] sm:$0x4] %v7222
  %v7224 = vld [vmem:[%s7209 + $0x10] sm:$0x4]
  %v7225 = vsel %vm7211, 0, %v7224
  %7226 = vst [vmem:[%s7209 + $0x10] sm:$0x4] %v7225
  %v7227 = vld [vmem:[%s7209 + $0x14] sm:$0x4]
  %v7228 = vsel %vm7211, 0, %v7227
  %7229 = vst [vmem:[%s7209 + $0x14] sm:$0x4] %v7228
  %v7230 = vld [vmem:[%s7209 + $0x18] sm:$0x4]
  %v7231 = vsel %vm7211, 0, %v7230
  %7232 = vst [vmem:[%s7209 + $0x18] sm:$0x4] %v7231
  %v7233 = vld [vmem:[%s7209 + $0x1c] sm:$0x4]
  %v7234 = vsel %vm7211, 0, %v7233
  %7235 = vst [vmem:[%s7209 + $0x1c] sm:$0x4] %v7234
  %v7236 = vld [vmem:[%s7209 + $0x20] sm:$0x4]
  %v7237 = vsel %vm7211, 0, %v7236
  %7238 = vst [vmem:[%s7209 + $0x20] sm:$0x4] %v7237
  %v7239 = vld [vmem:[%s7209 + $0x24] sm:$0x4]
  %v7240 = vsel %vm7211, 0, %v7239
  %7241 = vst [vmem:[%s7209 + $0x24] sm:$0x4] %v7240
  %s7242 = scalar_lea.vmem [#allocation4], 120
  %v7243 = vld [vmem:[%s7242] sm:$0x4]
  %v7244 = vsel %vm7211, 0, %v7243
  %7245 = vst [vmem:[%s7242] sm:$0x4] %v7244
  %v7246 = vld [vmem:[%s7242 + $0x4] sm:$0x4]
  %v7247 = vsel %vm7211, 0, %v7246
  %7248 = vst [vmem:[%s7242 + $0x4] sm:$0x4] %v7247
  %v7249 = vld [vmem:[%s7242 + $0x8] sm:$0x4]
  %v7250 = vsel %vm7211, 0, %v7249
  %7251 = vst [vmem:[%s7242 + $0x8] sm:$0x4] %v7250
  %v7252 = vld [vmem:[%s7242 + $0xc] sm:$0x4]
  %v7253 = vsel %vm7211, 0, %v7252
  %7254 = vst [vmem:[%s7242 + $0xc] sm:$0x4] %v7253
  %v7255 = vld [vmem:[%s7242 + $0x10] sm:$0x4]
  %v7256 = vsel %vm7211, 0, %v7255
  %7257 = vst [vmem:[%s7242 + $0x10] sm:$0x4] %v7256
  %v7258 = vld [vmem:[%s7242 + $0x14] sm:$0x4]
  %v7259 = vsel %vm7211, 0, %v7258
  %7260 = vst [vmem:[%s7242 + $0x14] sm:$0x4] %v7259
  %v7261 = vld [vmem:[%s7242 + $0x18] sm:$0x4]
  %v7262 = vsel %vm7211, 0, %v7261
  %7263 = vst [vmem:[%s7242 + $0x18] sm:$0x4] %v7262
  %v7264 = vld [vmem:[%s7242 + $0x1c] sm:$0x4]
  %v7265 = vsel %vm7211, 0, %v7264
  %7266 = vst [vmem:[%s7242 + $0x1c] sm:$0x4] %v7265
  %v7267 = vld [vmem:[%s7242 + $0x20] sm:$0x4]
  %v7268 = vsel %vm7211, 0, %v7267
  %7269 = vst [vmem:[%s7242 + $0x20] sm:$0x4] %v7268
  %v7270 = vld [vmem:[%s7242 + $0x24] sm:$0x4]
  %v7271 = vsel %vm7211, 0, %v7270
  %7272 = vst [vmem:[%s7242 + $0x24] sm:$0x4] %v7271
  %v7273 = vcombine.low %v7104, %v7106
  %v7274 = vcombine.high %v7104, %v7106
  %v7276 = vunpack.c.l.s4 1983009808
  %v7277 = vunpack.c.0.s8 %v7276
  %v7278 = vlaneseq
  %v7279 = vshrl.u32 %v7278, 7
  %v7280 = vsub.s32 %v7277, %v7279
  %v7281 = vrot.slane %v7273, %v7280
  %v7283 = vunpack.c.l.s4 1983009808
  %v7284 = vunpack.c.0.s8 %v7283
  %v7285 = vlaneseq
  %v7286 = vshrl.u32 %v7285, 7
  %v7287 = vsub.s32 %v7284, %v7286
  %v7288 = vrot.slane %v7274, %v7287
  %v7289 = vcombine.low %v7105, %v7107
  %v7290 = vcombine.high %v7105, %v7107
  %v7292 = vunpack.c.l.s4 1983009808
  %v7293 = vunpack.c.0.s8 %v7292
  %v7294 = vlaneseq
  %v7295 = vshrl.u32 %v7294, 7
  %v7296 = vsub.s32 %v7293, %v7295
  %v7297 = vrot.slane %v7289, %v7296
  %v7299 = vunpack.c.l.s4 1983009808
  %v7300 = vunpack.c.0.s8 %v7299
  %v7301 = vlaneseq
  %v7302 = vshrl.u32 %v7301, 7
  %v7303 = vsub.s32 %v7300, %v7302
  %v7304 = vrot.slane %v7290, %v7303
  %v7305 = vcombine.low %v7108, %v7110
  %v7306 = vcombine.high %v7108, %v7110
  %v7308 = vunpack.c.l.s4 1983009808
  %v7309 = vunpack.c.0.s8 %v7308
  %v7310 = vlaneseq
  %v7311 = vshrl.u32 %v7310, 7
  %v7312 = vsub.s32 %v7309, %v7311
  %v7313 = vrot.slane %v7305, %v7312
  %v7315 = vunpack.c.l.s4 1983009808
  %v7316 = vunpack.c.0.s8 %v7315
  %v7317 = vlaneseq
  %v7318 = vshrl.u32 %v7317, 7
  %v7319 = vsub.s32 %v7316, %v7318
  %v7320 = vrot.slane %v7306, %v7319
  %v7321 = vcombine.low %v7109, %v7111
  %v7322 = vcombine.high %v7109, %v7111
  %v7324 = vunpack.c.l.s4 1983009808
  %v7325 = vunpack.c.0.s8 %v7324
  %v7326 = vlaneseq
  %v7327 = vshrl.u32 %v7326, 7
  %v7328 = vsub.s32 %v7325, %v7327
  %v7329 = vrot.slane %v7321, %v7328
  %v7331 = vunpack.c.l.s4 1983009808
  %v7332 = vunpack.c.0.s8 %v7331
  %v7333 = vlaneseq
  %v7334 = vshrl.u32 %v7333, 7
  %v7335 = vsub.s32 %v7332, %v7334
  %v7336 = vrot.slane %v7322, %v7335
  %v7337 = vcombine.low %v7281, %v7297
  %v7338 = vcombine.high %v7281, %v7297
  %v7340 = vunpack.c.l.s4 1934713408
  %v7341 = vunpack.c.0.s8 %v7340
  %v7342 = vlaneseq
  %v7343 = vshrl.u32 %v7342, 7
  %v7344 = vsub.s32 %v7341, %v7343
  %v7345 = vrot.slane %v7337, %v7344
  %v7347 = vunpack.c.l.s4 1934713408
  %v7348 = vunpack.c.0.s8 %v7347
  %v7349 = vlaneseq
  %v7350 = vshrl.u32 %v7349, 7
  %v7351 = vsub.s32 %v7348, %v7350
  %v7352 = vrot.slane %v7338, %v7351
  %v7353 = vcombine.low %v7288, %v7304
  %v7354 = vcombine.high %v7288, %v7304
  %v7356 = vunpack.c.l.s4 1934713408
  %v7357 = vunpack.c.0.s8 %v7356
  %v7358 = vlaneseq
  %v7359 = vshrl.u32 %v7358, 7
  %v7360 = vsub.s32 %v7357, %v7359
  %v7361 = vrot.slane %v7353, %v7360
  %v7363 = vunpack.c.l.s4 1934713408
  %v7364 = vunpack.c.0.s8 %v7363
  %v7365 = vlaneseq
  %v7366 = vshrl.u32 %v7365, 7
  %v7367 = vsub.s32 %v7364, %v7366
  %v7368 = vrot.slane %v7354, %v7367
  %v7369 = vcombine.low %v7313, %v7329
  %v7370 = vcombine.high %v7313, %v7329
  %v7372 = vunpack.c.l.s4 1934713408
  %v7373 = vunpack.c.0.s8 %v7372
  %v7374 = vlaneseq
  %v7375 = vshrl.u32 %v7374, 7
  %v7376 = vsub.s32 %v7373, %v7375
  %v7377 = vrot.slane %v7369, %v7376
  %v7379 = vunpack.c.l.s4 1934713408
  %v7380 = vunpack.c.0.s8 %v7379
  %v7381 = vlaneseq
  %v7382 = vshrl.u32 %v7381, 7
  %v7383 = vsub.s32 %v7380, %v7382
  %v7384 = vrot.slane %v7370, %v7383
  %v7385 = vcombine.low %v7320, %v7336
  %v7386 = vcombine.high %v7320, %v7336
  %v7388 = vunpack.c.l.s4 1934713408
  %v7389 = vunpack.c.0.s8 %v7388
  %v7390 = vlaneseq
  %v7391 = vshrl.u32 %v7390, 7
  %v7392 = vsub.s32 %v7389, %v7391
  %v7393 = vrot.slane %v7385, %v7392
  %v7395 = vunpack.c.l.s4 1934713408
  %v7396 = vunpack.c.0.s8 %v7395
  %v7397 = vlaneseq
  %v7398 = vshrl.u32 %v7397, 7
  %v7399 = vsub.s32 %v7396, %v7398
  %v7400 = vrot.slane %v7386, %v7399
  %v7401 = vcombine.low %v7345, %v7377
  %v7402 = vcombine.high %v7345, %v7377
  %v7403 = vcombine.low %v7352, %v7384
  %v7404 = vcombine.high %v7352, %v7384
  %v7405 = vcombine.low %v7361, %v7393
  %v7406 = vcombine.high %v7361, %v7393
  %v7407 = vcombine.low %v7368, %v7400
  %v7408 = vcombine.high %v7368, %v7400
  %v7409 = vcombine.low %v7112, %v7114
  %v7410 = vcombine.high %v7112, %v7114
  %v7412 = vunpack.c.l.s4 1983009808
  %v7413 = vunpack.c.0.s8 %v7412
  %v7414 = vlaneseq
  %v7415 = vshrl.u32 %v7414, 7
  %v7416 = vsub.s32 %v7413, %v7415
  %v7417 = vrot.slane %v7409, %v7416
  %v7419 = vunpack.c.l.s4 1983009808
  %v7420 = vunpack.c.0.s8 %v7419
  %v7421 = vlaneseq
  %v7422 = vshrl.u32 %v7421, 7
  %v7423 = vsub.s32 %v7420, %v7422
  %v7424 = vrot.slane %v7410, %v7423
  %v7425 = vcombine.low %v7113, %v7115
  %v7426 = vcombine.high %v7113, %v7115
  %v7428 = vunpack.c.l.s4 1983009808
  %v7429 = vunpack.c.0.s8 %v7428
  %v7430 = vlaneseq
  %v7431 = vshrl.u32 %v7430, 7
  %v7432 = vsub.s32 %v7429, %v7431
  %v7433 = vrot.slane %v7425, %v7432
  %v7435 = vunpack.c.l.s4 1983009808
  %v7436 = vunpack.c.0.s8 %v7435
  %v7437 = vlaneseq
  %v7438 = vshrl.u32 %v7437, 7
  %v7439 = vsub.s32 %v7436, %v7438
  %v7440 = vrot.slane %v7426, %v7439
  %v7441 = vcombine.low %v7116, %v7118
  %v7442 = vcombine.high %v7116, %v7118
  %v7444 = vunpack.c.l.s4 1983009808
  %v7445 = vunpack.c.0.s8 %v7444
  %v7446 = vlaneseq
  %v7447 = vshrl.u32 %v7446, 7
  %v7448 = vsub.s32 %v7445, %v7447
  %v7449 = vrot.slane %v7441, %v7448
  %v7451 = vunpack.c.l.s4 1983009808
  %v7452 = vunpack.c.0.s8 %v7451
  %v7453 = vlaneseq
  %v7454 = vshrl.u32 %v7453, 7
  %v7455 = vsub.s32 %v7452, %v7454
  %v7456 = vrot.slane %v7442, %v7455
  %v7457 = vcombine.low %v7117, %v7119
  %v7458 = vcombine.high %v7117, %v7119
  %v7460 = vunpack.c.l.s4 1983009808
  %v7461 = vunpack.c.0.s8 %v7460
  %v7462 = vlaneseq
  %v7463 = vshrl.u32 %v7462, 7
  %v7464 = vsub.s32 %v7461, %v7463
  %v7465 = vrot.slane %v7457, %v7464
  %v7467 = vunpack.c.l.s4 1983009808
  %v7468 = vunpack.c.0.s8 %v7467
  %v7469 = vlaneseq
  %v7470 = vshrl.u32 %v7469, 7
  %v7471 = vsub.s32 %v7468, %v7470
  %v7472 = vrot.slane %v7458, %v7471
  %v7473 = vcombine.low %v7417, %v7433
  %v7474 = vcombine.high %v7417, %v7433
  %v7476 = vunpack.c.l.s4 1934713408
  %v7477 = vunpack.c.0.s8 %v7476
  %v7478 = vlaneseq
  %v7479 = vshrl.u32 %v7478, 7
  %v7480 = vsub.s32 %v7477, %v7479
  %v7481 = vrot.slane %v7473, %v7480
  %v7483 = vunpack.c.l.s4 1934713408
  %v7484 = vunpack.c.0.s8 %v7483
  %v7485 = vlaneseq
  %v7486 = vshrl.u32 %v7485, 7
  %v7487 = vsub.s32 %v7484, %v7486
  %v7488 = vrot.slane %v7474, %v7487
  %v7489 = vcombine.low %v7424, %v7440
  %v7490 = vcombine.high %v7424, %v7440
  %v7492 = vunpack.c.l.s4 1934713408
  %v7493 = vunpack.c.0.s8 %v7492
  %v7494 = vlaneseq
  %v7495 = vshrl.u32 %v7494, 7
  %v7496 = vsub.s32 %v7493, %v7495
  %v7497 = vrot.slane %v7489, %v7496
  %v7499 = vunpack.c.l.s4 1934713408
  %v7500 = vunpack.c.0.s8 %v7499
  %v7501 = vlaneseq
  %v7502 = vshrl.u32 %v7501, 7
  %v7503 = vsub.s32 %v7500, %v7502
  %v7504 = vrot.slane %v7490, %v7503
  %v7505 = vcombine.low %v7449, %v7465
  %v7506 = vcombine.high %v7449, %v7465
  %v7508 = vunpack.c.l.s4 1934713408
  %v7509 = vunpack.c.0.s8 %v7508
  %v7510 = vlaneseq
  %v7511 = vshrl.u32 %v7510, 7
  %v7512 = vsub.s32 %v7509, %v7511
  %v7513 = vrot.slane %v7505, %v7512
  %v7515 = vunpack.c.l.s4 1934713408
  %v7516 = vunpack.c.0.s8 %v7515
  %v7517 = vlaneseq
  %v7518 = vshrl.u32 %v7517, 7
  %v7519 = vsub.s32 %v7516, %v7518
  %v7520 = vrot.slane %v7506, %v7519
  %v7521 = vcombine.low %v7456, %v7472
  %v7522 = vcombine.high %v7456, %v7472
  %v7524 = vunpack.c.l.s4 1934713408
  %v7525 = vunpack.c.0.s8 %v7524
  %v7526 = vlaneseq
  %v7527 = vshrl.u32 %v7526, 7
  %v7528 = vsub.s32 %v7525, %v7527
  %v7529 = vrot.slane %v7521, %v7528
  %v7531 = vunpack.c.l.s4 1934713408
  %v7532 = vunpack.c.0.s8 %v7531
  %v7533 = vlaneseq
  %v7534 = vshrl.u32 %v7533, 7
  %v7535 = vsub.s32 %v7532, %v7534
  %v7536 = vrot.slane %v7522, %v7535
  %v7537 = vcombine.low %v7481, %v7513
  %v7538 = vcombine.high %v7481, %v7513
  %v7539 = vcombine.low %v7488, %v7520
  %v7540 = vcombine.high %v7488, %v7520
  %v7541 = vcombine.low %v7497, %v7529
  %v7542 = vcombine.high %v7497, %v7529
  %v7543 = vcombine.low %v7504, %v7536
  %v7544 = vcombine.high %v7504, %v7536
  %v7545 = vcombine.low %v7401, %v7405
  %v7546 = vcombine.high %v7401, %v7405
  %v7548 = vunpack.c.l.s4 1983009808
  %v7549 = vunpack.c.0.s8 %v7548
  %v7550 = vlaneseq
  %v7551 = vshrl.u32 %v7550, 7
  %v7552 = vsub.s32 %v7549, %v7551
  %v7553 = vrot.slane %v7545, %v7552
  %v7555 = vunpack.c.l.s4 1983009808
  %v7556 = vunpack.c.0.s8 %v7555
  %v7557 = vlaneseq
  %v7558 = vshrl.u32 %v7557, 7
  %v7559 = vsub.s32 %v7556, %v7558
  %v7560 = vrot.slane %v7546, %v7559
  %v7561 = vcombine.low %v7403, %v7407
  %v7562 = vcombine.high %v7403, %v7407
  %v7564 = vunpack.c.l.s4 1983009808
  %v7565 = vunpack.c.0.s8 %v7564
  %v7566 = vlaneseq
  %v7567 = vshrl.u32 %v7566, 7
  %v7568 = vsub.s32 %v7565, %v7567
  %v7569 = vrot.slane %v7561, %v7568
  %v7571 = vunpack.c.l.s4 1983009808
  %v7572 = vunpack.c.0.s8 %v7571
  %v7573 = vlaneseq
  %v7574 = vshrl.u32 %v7573, 7
  %v7575 = vsub.s32 %v7572, %v7574
  %v7576 = vrot.slane %v7562, %v7575
  %v7577 = vcombine.low %v7553, %v7569
  %v7578 = vcombine.high %v7553, %v7569
  %v7580 = vunpack.c.l.s4 1934713408
  %v7581 = vunpack.c.0.s8 %v7580
  %v7582 = vlaneseq
  %v7583 = vshrl.u32 %v7582, 7
  %v7584 = vsub.s32 %v7581, %v7583
  %v7585 = vrot.slane %v7577, %v7584
  %v7587 = vunpack.c.l.s4 1934713408
  %v7588 = vunpack.c.0.s8 %v7587
  %v7589 = vlaneseq
  %v7590 = vshrl.u32 %v7589, 7
  %v7591 = vsub.s32 %v7588, %v7590
  %v7592 = vrot.slane %v7578, %v7591
  %v7593 = vcombine.low %v7560, %v7576
  %v7594 = vcombine.high %v7560, %v7576
  %v7596 = vunpack.c.l.s4 1934713408
  %v7597 = vunpack.c.0.s8 %v7596
  %v7598 = vlaneseq
  %v7599 = vshrl.u32 %v7598, 7
  %v7600 = vsub.s32 %v7597, %v7599
  %v7601 = vrot.slane %v7593, %v7600
  %v7603 = vunpack.c.l.s4 1934713408
  %v7604 = vunpack.c.0.s8 %v7603
  %v7605 = vlaneseq
  %v7606 = vshrl.u32 %v7605, 7
  %v7607 = vsub.s32 %v7604, %v7606
  %v7608 = vrot.slane %v7594, %v7607
  %v7609 = vcombine.high %v7585, 0.0
  %v7610 = vcombine.high %v7592, 0.0
  %v7611 = vcombine.high %v7601, 0.0
  %v7612 = vcombine.high %v7608, 0.0
  %v7613 = vcombine.low %v7537, %v7541
  %v7614 = vcombine.high %v7537, %v7541
  %v7616 = vunpack.c.l.s4 1983009808
  %v7617 = vunpack.c.0.s8 %v7616
  %v7618 = vlaneseq
  %v7619 = vshrl.u32 %v7618, 7
  %v7620 = vsub.s32 %v7617, %v7619
  %v7621 = vrot.slane %v7613, %v7620
  %v7623 = vunpack.c.l.s4 1983009808
  %v7624 = vunpack.c.0.s8 %v7623
  %v7625 = vlaneseq
  %v7626 = vshrl.u32 %v7625, 7
  %v7627 = vsub.s32 %v7624, %v7626
  %v7628 = vrot.slane %v7614, %v7627
  %v7629 = vcombine.low %v7539, %v7543
  %v7630 = vcombine.high %v7539, %v7543
  %v7632 = vunpack.c.l.s4 1983009808
  %v7633 = vunpack.c.0.s8 %v7632
  %v7634 = vlaneseq
  %v7635 = vshrl.u32 %v7634, 7
  %v7636 = vsub.s32 %v7633, %v7635
  %v7637 = vrot.slane %v7629, %v7636
  %v7639 = vunpack.c.l.s4 1983009808
  %v7640 = vunpack.c.0.s8 %v7639
  %v7641 = vlaneseq
  %v7642 = vshrl.u32 %v7641, 7
  %v7643 = vsub.s32 %v7640, %v7642
  %v7644 = vrot.slane %v7630, %v7643
  %v7645 = vcombine.low %v7621, %v7637
  %v7646 = vcombine.high %v7621, %v7637
  %v7648 = vunpack.c.l.s4 1934713408
  %v7649 = vunpack.c.0.s8 %v7648
  %v7650 = vlaneseq
  %v7651 = vshrl.u32 %v7650, 7
  %v7652 = vsub.s32 %v7649, %v7651
  %v7653 = vrot.slane %v7645, %v7652
  %v7655 = vunpack.c.l.s4 1934713408
  %v7656 = vunpack.c.0.s8 %v7655
  %v7657 = vlaneseq
  %v7658 = vshrl.u32 %v7657, 7
  %v7659 = vsub.s32 %v7656, %v7658
  %v7660 = vrot.slane %v7646, %v7659
  %v7661 = vcombine.low %v7628, %v7644
  %v7662 = vcombine.high %v7628, %v7644
  %v7664 = vunpack.c.l.s4 1934713408
  %v7665 = vunpack.c.0.s8 %v7664
  %v7666 = vlaneseq
  %v7667 = vshrl.u32 %v7666, 7
  %v7668 = vsub.s32 %v7665, %v7667
  %v7669 = vrot.slane %v7661, %v7668
  %v7671 = vunpack.c.l.s4 1934713408
  %v7672 = vunpack.c.0.s8 %v7671
  %v7673 = vlaneseq
  %v7674 = vshrl.u32 %v7673, 7
  %v7675 = vsub.s32 %v7672, %v7674
  %v7676 = vrot.slane %v7662, %v7675
  %v7677 = vcombine.high %v7653, 0.0
  %v7678 = vcombine.high %v7660, 0.0
  %v7679 = vcombine.high %v7669, 0.0
  %v7680 = vcombine.high %v7676, 0.0
  %v7681 = vpack.c.bf16 %v7585, %v7585
  %v7682 = vpack.c.bf16 %v7592, %v7592
  %v7683 = vpack.c.bf16 %v7601, %v7601
  %v7684 = vpack.c.bf16 %v7608, %v7608
  %v7685 = vpack.c.bf16 %v7653, %v7653
  %v7686 = vpack.c.bf16 %v7660, %v7660
  %v7687 = vpack.c.bf16 %v7669, %v7669
  %v7688 = vpack.c.bf16 %v7676, %v7676
  %7689 = vst [vmem:[%s7242] sm:$0x3] %v7681
  %7690 = vst [vmem:[%s7242 + $0x4] sm:$0x3] %v7682
  %7691 = vst [vmem:[%s7242 + $0x8] sm:$0x3] %v7683
  %7692 = vst [vmem:[%s7242 + $0xc] sm:$0x3] %v7684
  %7693 = vst [vmem:[%s7242 + $0x14] sm:$0x3] %v7685
  %7694 = vst [vmem:[%s7242 + $0x18] sm:$0x3] %v7686
  %7695 = vst [vmem:[%s7242 + $0x1c] sm:$0x3] %v7687
  %7696 = vst [vmem:[%s7242 + $0x20] sm:$0x3] %v7688
  %v7697 = vpack.c.bf16 %v7609, %v7609
  %v7698 = vpack.c.bf16 %v7610, %v7610
  %v7699 = vpack.c.bf16 %v7611, %v7611
  %v7700 = vpack.c.bf16 %v7612, %v7612
  %v7701 = vpack.c.bf16 %v7677, %v7677
  %v7702 = vpack.c.bf16 %v7678, %v7678
  %v7703 = vpack.c.bf16 %v7679, %v7679
  %v7704 = vpack.c.bf16 %v7680, %v7680
  %s7705 = scalar_lea.vmem [#allocation4], 44
  %7706 = vst [vmem:[%s7705] sm:$0x3] %v7697
  %7707 = vst [vmem:[%s7705 + $0x4] sm:$0x3] %v7698
  %7708 = vst [vmem:[%s7705 + $0x8] sm:$0x3] %v7699
  %7709 = vst [vmem:[%s7705 + $0xc] sm:$0x3] %v7700
  %7710 = vst [vmem:[%s7705 + $0x14] sm:$0x3] %v7701
  %7711 = vst [vmem:[%s7705 + $0x18] sm:$0x3] %v7702
  %7712 = vst [vmem:[%s7705 + $0x1c] sm:$0x3] %v7703
  %7713 = vst [vmem:[%s7705 + $0x20] sm:$0x3] %v7704
  %v7714 = vcombine.low %v7402, %v7406
  %v7715 = vcombine.high %v7402, %v7406
  %v7717 = vunpack.c.l.s4 1983009808
  %v7718 = vunpack.c.0.s8 %v7717
  %v7719 = vlaneseq
  %v7720 = vshrl.u32 %v7719, 7
  %v7721 = vsub.s32 %v7718, %v7720
  %v7722 = vrot.slane %v7714, %v7721
  %v7724 = vunpack.c.l.s4 1983009808
  %v7725 = vunpack.c.0.s8 %v7724
  %v7726 = vlaneseq
  %v7727 = vshrl.u32 %v7726, 7
  %v7728 = vsub.s32 %v7725, %v7727
  %v7729 = vrot.slane %v7715, %v7728
  %v7730 = vcombine.low %v7404, %v7408
  %v7731 = vcombine.high %v7404, %v7408
  %v7733 = vunpack.c.l.s4 1983009808
  %v7734 = vunpack.c.0.s8 %v7733
  %v7735 = vlaneseq
  %v7736 = vshrl.u32 %v7735, 7
  %v7737 = vsub.s32 %v7734, %v7736
  %v7738 = vrot.slane %v7730, %v7737
  %v7740 = vunpack.c.l.s4 1983009808
  %v7741 = vunpack.c.0.s8 %v7740
  %v7742 = vlaneseq
  %v7743 = vshrl.u32 %v7742, 7
  %v7744 = vsub.s32 %v7741, %v7743
  %v7745 = vrot.slane %v7731, %v7744
  %v7746 = vcombine.low %v7722, %v7738
  %v7747 = vcombine.high %v7722, %v7738
  %v7749 = vunpack.c.l.s4 1934713408
  %v7750 = vunpack.c.0.s8 %v7749
  %v7751 = vlaneseq
  %v7752 = vshrl.u32 %v7751, 7
  %v7753 = vsub.s32 %v7750, %v7752
  %v7754 = vrot.slane %v7746, %v7753
  %v7756 = vunpack.c.l.s4 1934713408
  %v7757 = vunpack.c.0.s8 %v7756
  %v7758 = vlaneseq
  %v7759 = vshrl.u32 %v7758, 7
  %v7760 = vsub.s32 %v7757, %v7759
  %v7761 = vrot.slane %v7747, %v7760
  %v7762 = vcombine.low %v7729, %v7745
  %v7763 = vcombine.high %v7729, %v7745
  %v7765 = vunpack.c.l.s4 1934713408
  %v7766 = vunpack.c.0.s8 %v7765
  %v7767 = vlaneseq
  %v7768 = vshrl.u32 %v7767, 7
  %v7769 = vsub.s32 %v7766, %v7768
  %v7770 = vrot.slane %v7762, %v7769
  %v7772 = vunpack.c.l.s4 1934713408
  %v7773 = vunpack.c.0.s8 %v7772
  %v7774 = vlaneseq
  %v7775 = vshrl.u32 %v7774, 7
  %v7776 = vsub.s32 %v7773, %v7775
  %v7777 = vrot.slane %v7763, %v7776
  %v7778 = vcombine.high %v7754, 0.0
  %v7779 = vcombine.high %v7761, 0.0
  %v7780 = vcombine.high %v7770, 0.0
  %v7781 = vcombine.high %v7777, 0.0
  %v7782 = vcombine.low %v7538, %v7542
  %v7783 = vcombine.high %v7538, %v7542
  %v7785 = vunpack.c.l.s4 1983009808
  %v7786 = vunpack.c.0.s8 %v7785
  %v7787 = vlaneseq
  %v7788 = vshrl.u32 %v7787, 7
  %v7789 = vsub.s32 %v7786, %v7788
  %v7790 = vrot.slane %v7782, %v7789
  %v7792 = vunpack.c.l.s4 1983009808
  %v7793 = vunpack.c.0.s8 %v7792
  %v7794 = vlaneseq
  %v7795 = vshrl.u32 %v7794, 7
  %v7796 = vsub.s32 %v7793, %v7795
  %v7797 = vrot.slane %v7783, %v7796
  %v7798 = vcombine.low %v7540, %v7544
  %v7799 = vcombine.high %v7540, %v7544
  %v7801 = vunpack.c.l.s4 1983009808
  %v7802 = vunpack.c.0.s8 %v7801
  %v7803 = vlaneseq
  %v7804 = vshrl.u32 %v7803, 7
  %v7805 = vsub.s32 %v7802, %v7804
  %v7806 = vrot.slane %v7798, %v7805
  %v7808 = vunpack.c.l.s4 1983009808
  %v7809 = vunpack.c.0.s8 %v7808
  %v7810 = vlaneseq
  %v7811 = vshrl.u32 %v7810, 7
  %v7812 = vsub.s32 %v7809, %v7811
  %v7813 = vrot.slane %v7799, %v7812
  %v7814 = vcombine.low %v7790, %v7806
  %v7815 = vcombine.high %v7790, %v7806
  %v7817 = vunpack.c.l.s4 1934713408
  %v7818 = vunpack.c.0.s8 %v7817
  %v7819 = vlaneseq
  %v7820 = vshrl.u32 %v7819, 7
  %v7821 = vsub.s32 %v7818, %v7820
  %v7822 = vrot.slane %v7814, %v7821
  %v7824 = vunpack.c.l.s4 1934713408
  %v7825 = vunpack.c.0.s8 %v7824
  %v7826 = vlaneseq
  %v7827 = vshrl.u32 %v7826, 7
  %v7828 = vsub.s32 %v7825, %v7827
  %v7829 = vrot.slane %v7815, %v7828
  %v7830 = vcombine.low %v7797, %v7813
  %v7831 = vcombine.high %v7797, %v7813
  %v7833 = vunpack.c.l.s4 1934713408
  %v7834 = vunpack.c.0.s8 %v7833
  %v7835 = vlaneseq
  %v7836 = vshrl.u32 %v7835, 7
  %v7837 = vsub.s32 %v7834, %v7836
  %v7838 = vrot.slane %v7830, %v7837
  %v7840 = vunpack.c.l.s4 1934713408
  %v7841 = vunpack.c.0.s8 %v7840
  %v7842 = vlaneseq
  %v7843 = vshrl.u32 %v7842, 7
  %v7844 = vsub.s32 %v7841, %v7843
  %v7845 = vrot.slane %v7831, %v7844
  %v7846 = vcombine.high %v7822, 0.0
  %v7847 = vcombine.high %v7829, 0.0
  %v7848 = vcombine.high %v7838, 0.0
  %v7849 = vcombine.high %v7845, 0.0
  %v7850 = vpack.c.bf16 %v7754, %v7754
  %v7851 = vpack.c.bf16 %v7761, %v7761
  %v7852 = vpack.c.bf16 %v7770, %v7770
  %v7853 = vpack.c.bf16 %v7777, %v7777
  %v7854 = vpack.c.bf16 %v7822, %v7822
  %v7855 = vpack.c.bf16 %v7829, %v7829
  %v7856 = vpack.c.bf16 %v7838, %v7838
  %v7857 = vpack.c.bf16 %v7845, %v7845
  %v7866 = vunpack.c.l.b16 %v7850
  %v7867 = vunpack.c.l.b16 %v7851
  %v7868 = vunpack.c.l.b16 %v7852
  %v7869 = vunpack.c.l.b16 %v7853
  %v7870 = vunpack.c.l.b16 %v7854
  %v7871 = vunpack.c.l.b16 %v7855
  %v7872 = vunpack.c.l.b16 %v7856
  %v7873 = vunpack.c.l.b16 %v7857
  %v7874 = vpack.c.b16 %v7866, %v7866
  %v7875 = vpack.c.b16 %v7867, %v7867
  %v7876 = vpack.c.b16 %v7868, %v7868
  %v7877 = vpack.c.b16 %v7869, %v7869
  %v7878 = vpack.c.b16 %v7870, %v7870
  %v7879 = vpack.c.b16 %v7871, %v7871
  %v7880 = vpack.c.b16 %v7872, %v7872
  %v7881 = vpack.c.b16 %v7873, %v7873
  %v7883 = vshrl.u32 %v7874, 16
  %v7885 = vrot.slane %v7883, 7
  %v7886 = vshll.u32 %v7874, 16
  %v7888 = vor.u32 %v7885, %v7886
  %v7890 = vshrl.u32 %v7875, 16
  %v7892 = vrot.slane %v7890, 7
  %v7893 = vshll.u32 %v7875, 16
  %v7895 = vor.u32 %v7892, %v7893
  %v7897 = vshrl.u32 %v7876, 16
  %v7899 = vrot.slane %v7897, 7
  %v7900 = vshll.u32 %v7876, 16
  %v7902 = vor.u32 %v7899, %v7900
  %v7904 = vshrl.u32 %v7877, 16
  %v7906 = vrot.slane %v7904, 7
  %v7907 = vshll.u32 %v7877, 16
  %v7909 = vor.u32 %v7906, %v7907
  %v7911 = vshrl.u32 %v7878, 16
  %v7913 = vrot.slane %v7911, 7
  %v7914 = vshll.u32 %v7878, 16
  %v7916 = vor.u32 %v7913, %v7914
  %v7918 = vshrl.u32 %v7879, 16
  %v7920 = vrot.slane %v7918, 7
  %v7921 = vshll.u32 %v7879, 16
  %v7923 = vor.u32 %v7920, %v7921
  %v7925 = vshrl.u32 %v7880, 16
  %v7927 = vrot.slane %v7925, 7
  %v7928 = vshll.u32 %v7880, 16
  %v7930 = vor.u32 %v7927, %v7928
  %v7932 = vshrl.u32 %v7881, 16
  %v7934 = vrot.slane %v7932, 7
  %v7935 = vshll.u32 %v7881, 16
  %v7937 = vor.u32 %v7934, %v7935
  %vm7946 = vsmask.f32 2306
  %vm7947 = vmand %vm7120, %vm7946
  %v7948 = vld [vmem:[%s7178] sm:$0x7]
  %v7949 = vsel %vm7947, %v7888, %v7948
  %7950 = vst [vmem:[%s7178] sm:$0x7] %v7949
  %v7951 = vld [vmem:[%s7178 + $0x4] sm:$0x7]
  %v7952 = vsel %vm7947, %v7895, %v7951
  %7953 = vst [vmem:[%s7178 + $0x4] sm:$0x7] %v7952
  %v7954 = vld [vmem:[%s7178 + $0x8] sm:$0x7]
  %v7955 = vsel %vm7947, %v7902, %v7954
  %7956 = vst [vmem:[%s7178 + $0x8] sm:$0x7] %v7955
  %v7957 = vld [vmem:[%s7178 + $0xc] sm:$0x7]
  %v7958 = vsel %vm7947, %v7909, %v7957
  %7959 = vst [vmem:[%s7178 + $0xc] sm:$0x7] %v7958
  %v7960 = vld [vmem:[%s7178 + $0x14] sm:$0x7]
  %v7961 = vsel %vm7947, %v7916, %v7960
  %7962 = vst [vmem:[%s7178 + $0x14] sm:$0x7] %v7961
  %v7963 = vld [vmem:[%s7178 + $0x18] sm:$0x7]
  %v7964 = vsel %vm7947, %v7923, %v7963
  %7965 = vst [vmem:[%s7178 + $0x18] sm:$0x7] %v7964
  %v7966 = vld [vmem:[%s7178 + $0x1c] sm:$0x7]
  %v7967 = vsel %vm7947, %v7930, %v7966
  %7968 = vst [vmem:[%s7178 + $0x1c] sm:$0x7] %v7967
  %v7969 = vld [vmem:[%s7178 + $0x20] sm:$0x7]
  %v7970 = vsel %vm7947, %v7937, %v7969
  %7971 = vst [vmem:[%s7178 + $0x20] sm:$0x7] %v7970
  %v7972 = vpack.c.bf16 %v7778, %v7778
  %v7973 = vpack.c.bf16 %v7779, %v7779
  %v7974 = vpack.c.bf16 %v7780, %v7780
  %v7975 = vpack.c.bf16 %v7781, %v7781
  %v7976 = vpack.c.bf16 %v7846, %v7846
  %v7977 = vpack.c.bf16 %v7847, %v7847
  %v7978 = vpack.c.bf16 %v7848, %v7848
  %v7979 = vpack.c.bf16 %v7849, %v7849
  %v7988 = vunpack.c.l.b16 %v7972
  %v7989 = vunpack.c.l.b16 %v7973
  %v7990 = vunpack.c.l.b16 %v7974
  %v7991 = vunpack.c.l.b16 %v7975
  %v7992 = vunpack.c.l.b16 %v7976
  %v7993 = vunpack.c.l.b16 %v7977
  %v7994 = vunpack.c.l.b16 %v7978
  %v7995 = vunpack.c.l.b16 %v7979
  %v7996 = vpack.c.b16 %v7988, %v7988
  %v7997 = vpack.c.b16 %v7989, %v7989
  %v7998 = vpack.c.b16 %v7990, %v7990
  %v7999 = vpack.c.b16 %v7991, %v7991
  %v8000 = vpack.c.b16 %v7992, %v7992
  %v8001 = vpack.c.b16 %v7993, %v7993
  %v8002 = vpack.c.b16 %v7994, %v7994
  %v8003 = vpack.c.b16 %v7995, %v7995
  %v8005 = vshrl.u32 %v7996, 16
  %v8007 = vrot.slane %v8005, 7
  %v8008 = vshll.u32 %v7996, 16
  %v8010 = vor.u32 %v8007, %v8008
  %v8012 = vshrl.u32 %v7997, 16
  %v8014 = vrot.slane %v8012, 7
  %v8015 = vshll.u32 %v7997, 16
  %v8017 = vor.u32 %v8014, %v8015
  %v8019 = vshrl.u32 %v7998, 16
  %v8021 = vrot.slane %v8019, 7
  %v8022 = vshll.u32 %v7998, 16
  %v8024 = vor.u32 %v8021, %v8022
  %v8026 = vshrl.u32 %v7999, 16
  %v8028 = vrot.slane %v8026, 7
  %v8029 = vshll.u32 %v7999, 16
  %v8031 = vor.u32 %v8028, %v8029
  %v8033 = vshrl.u32 %v8000, 16
  %v8035 = vrot.slane %v8033, 7
  %v8036 = vshll.u32 %v8000, 16
  %v8038 = vor.u32 %v8035, %v8036
  %v8040 = vshrl.u32 %v8001, 16
  %v8042 = vrot.slane %v8040, 7
  %v8043 = vshll.u32 %v8001, 16
  %v8045 = vor.u32 %v8042, %v8043
  %v8047 = vshrl.u32 %v8002, 16
  %v8049 = vrot.slane %v8047, 7
  %v8050 = vshll.u32 %v8002, 16
  %v8052 = vor.u32 %v8049, %v8050
  %v8054 = vshrl.u32 %v8003, 16
  %v8056 = vrot.slane %v8054, 7
  %v8057 = vshll.u32 %v8003, 16
  %v8059 = vor.u32 %v8056, %v8057
  %s8068 = scalar_lea.vmem [#allocation4], 4
  %v8069 = vld [vmem:[%s8068] sm:$0x7]
  %v8070 = vsel %vm7947, %v8010, %v8069
  %8071 = vst [vmem:[%s8068] sm:$0x7] %v8070
  %v8072 = vld [vmem:[%s8068 + $0x4] sm:$0x7]
  %v8073 = vsel %vm7947, %v8017, %v8072
  %8074 = vst [vmem:[%s8068 + $0x4] sm:$0x7] %v8073
  %v8075 = vld [vmem:[%s8068 + $0x8] sm:$0x7]
  %v8076 = vsel %vm7947, %v8024, %v8075
  %8077 = vst [vmem:[%s8068 + $0x8] sm:$0x7] %v8076
  %v8078 = vld [vmem:[%s8068 + $0xc] sm:$0x7]
  %v8079 = vsel %vm7947, %v8031, %v8078
  %8080 = vst [vmem:[%s8068 + $0xc] sm:$0x7] %v8079
  %v8081 = vld [vmem:[%s8068 + $0x14] sm:$0x7]
  %v8082 = vsel %vm7947, %v8038, %v8081
  %8083 = vst [vmem:[%s8068 + $0x14] sm:$0x7] %v8082
  %v8084 = vld [vmem:[%s8068 + $0x18] sm:$0x7]
  %v8085 = vsel %vm7947, %v8045, %v8084
  %8086 = vst [vmem:[%s8068 + $0x18] sm:$0x7] %v8085
  %v8087 = vld [vmem:[%s8068 + $0x1c] sm:$0x7]
  %v8088 = vsel %vm7947, %v8052, %v8087
  %8089 = vst [vmem:[%s8068 + $0x1c] sm:$0x7] %v8088
  %v8090 = vld [vmem:[%s8068 + $0x20] sm:$0x7]
  %v8091 = vsel %vm7947, %v8059, %v8090
  %8092 = vst [vmem:[%s8068 + $0x20] sm:$0x7] %v8091
  %v8093 = vld [vmem:[#allocation4] sm:$0x3]
  %v8094 = vld [vmem:[#allocation4 + $0x4] sm:$0x3]
  %v8095 = vld [vmem:[#allocation4 + $0x8] sm:$0x3]
  %v8096 = vld [vmem:[#allocation4 + $0xc] sm:$0x3]
  %v8097 = vld [vmem:[#allocation4 + $0x14] sm:$0x3]
  %v8098 = vld [vmem:[#allocation4 + $0x18] sm:$0x3]
  %v8099 = vld [vmem:[#allocation4 + $0x1c] sm:$0x3]
  %v8100 = vld [vmem:[#allocation4 + $0x20] sm:$0x3]
  %8101 = vst [vmem:[#allocation5] sm:$0x3] %v8093
  %8102 = vst [vmem:[#allocation5 + $0x20] sm:$0x3] %v8094
  %8103 = vst [vmem:[#allocation5 + $0x40] sm:$0x3] %v8095
  %8104 = vst [vmem:[#allocation5 + $0x60] sm:$0x3] %v8096
  %8105 = vst [vmem:[#allocation5 + $0x80] sm:$0x3] %v8097
  %8106 = vst [vmem:[#allocation5 + $0xa0] sm:$0x3] %v8098
  %8107 = vst [vmem:[#allocation5 + $0xc0] sm:$0x3] %v8099
  %8108 = vst [vmem:[#allocation5 + $0xe0] sm:$0x3] %v8100
  %v8109 = vld [vmem:[%s7209] sm:$0x3]
  %v8110 = vld [vmem:[%s7209 + $0x4] sm:$0x3]
  %v8111 = vld [vmem:[%s7209 + $0x8] sm:$0x3]
  %v8112 = vld [vmem:[%s7209 + $0xc] sm:$0x3]
  %v8113 = vld [vmem:[%s7209 + $0x14] sm:$0x3]
  %v8114 = vld [vmem:[%s7209 + $0x18] sm:$0x3]
  %v8115 = vld [vmem:[%s7209 + $0x1c] sm:$0x3]
  %v8116 = vld [vmem:[%s7209 + $0x20] sm:$0x3]
  %8117 = vst [vmem:[#allocation5 + $0x2] sm:$0x3] %v8109
  %8118 = vst [vmem:[#allocation5 + $0x22] sm:$0x3] %v8110
  %8119 = vst [vmem:[#allocation5 + $0x42] sm:$0x3] %v8111
  %8120 = vst [vmem:[#allocation5 + $0x62] sm:$0x3] %v8112
  %8121 = vst [vmem:[#allocation5 + $0x82] sm:$0x3] %v8113
  %8122 = vst [vmem:[#allocation5 + $0xa2] sm:$0x3] %v8114
  %8123 = vst [vmem:[#allocation5 + $0xc2] sm:$0x3] %v8115
  %8124 = vst [vmem:[#allocation5 + $0xe2] sm:$0x3] %v8116
  %v8125 = vld [vmem:[#allocation4] sm:$0x7]
  %v8126 = vld [vmem:[#allocation4 + $0x4] sm:$0x7]
  %v8127 = vld [vmem:[#allocation4 + $0x8] sm:$0x7]
  %v8128 = vld [vmem:[#allocation4 + $0xc] sm:$0x7]
  %v8129 = vld [vmem:[#allocation4 + $0x14] sm:$0x7]
  %v8130 = vld [vmem:[#allocation4 + $0x18] sm:$0x7]
  %v8131 = vld [vmem:[#allocation4 + $0x1c] sm:$0x7]
  %v8132 = vld [vmem:[#allocation4 + $0x20] sm:$0x7]
  %v8142 = vunpack.c.l.s4 1983009808
  %v8143 = vunpack.c.0.s8 %v8142
  %v8144 = vlaneseq
  %v8145 = vshrl.u32 %v8144, 7
  %v8146 = vsub.s32 %v8143, %v8145
  %v8147 = vrot.slane %v8125, %v8146
  %v8148 = vcombine.high %v8147, %v8147
  %v8150 = vunpack.c.l.s4 1983009808
  %v8151 = vunpack.c.0.s8 %v8150
  %v8152 = vlaneseq
  %v8153 = vshrl.u32 %v8152, 7
  %v8154 = vsub.s32 %v8151, %v8153
  %v8155 = vrot.slane %v8126, %v8154
  %v8156 = vcombine.high %v8155, %v8155
  %v8158 = vunpack.c.l.s4 1983009808
  %v8159 = vunpack.c.0.s8 %v8158
  %v8160 = vlaneseq
  %v8161 = vshrl.u32 %v8160, 7
  %v8162 = vsub.s32 %v8159, %v8161
  %v8163 = vrot.slane %v8127, %v8162
  %v8164 = vcombine.high %v8163, %v8163
  %v8166 = vunpack.c.l.s4 1983009808
  %v8167 = vunpack.c.0.s8 %v8166
  %v8168 = vlaneseq
  %v8169 = vshrl.u32 %v8168, 7
  %v8170 = vsub.s32 %v8167, %v8169
  %v8171 = vrot.slane %v8128, %v8170
  %v8172 = vcombine.high %v8171, %v8171
  %v8174 = vunpack.c.l.s4 1983009808
  %v8175 = vunpack.c.0.s8 %v8174
  %v8176 = vlaneseq
  %v8177 = vshrl.u32 %v8176, 7
  %v8178 = vsub.s32 %v8175, %v8177
  %v8179 = vrot.slane %v8129, %v8178
  %v8180 = vcombine.high %v8179, %v8179
  %v8182 = vunpack.c.l.s4 1983009808
  %v8183 = vunpack.c.0.s8 %v8182
  %v8184 = vlaneseq
  %v8185 = vshrl.u32 %v8184, 7
  %v8186 = vsub.s32 %v8183, %v8185
  %v8187 = vrot.slane %v8130, %v8186
  %v8188 = vcombine.high %v8187, %v8187
  %v8190 = vunpack.c.l.s4 1983009808
  %v8191 = vunpack.c.0.s8 %v8190
  %v8192 = vlaneseq
  %v8193 = vshrl.u32 %v8192, 7
  %v8194 = vsub.s32 %v8191, %v8193
  %v8195 = vrot.slane %v8131, %v8194
  %v8196 = vcombine.high %v8195, %v8195
  %v8198 = vunpack.c.l.s4 1983009808
  %v8199 = vunpack.c.0.s8 %v8198
  %v8200 = vlaneseq
  %v8201 = vshrl.u32 %v8200, 7
  %v8202 = vsub.s32 %v8199, %v8201
  %v8203 = vrot.slane %v8132, %v8202
  %v8204 = vcombine.high %v8203, %v8203
  %vm8205 = vsmask.f32 1280
  %vm8206 = vsmask.f32 3336
  %vm8207 = vmor %vm8205, %vm8206
  %vm8208 = vsmask.f32 5392
  %vm8209 = vmor %vm8207, %vm8208
  %vm8210 = vsmask.f32 7448
  %vm8211 = vmor %vm8209, %vm8210
  %v8213 = vshrl.u32 %v8147, 16
  %v8215 = vrot.slane %v8213, 6
  %v8216 = vshll.u32 %v8147, 16
  %v8218 = vrot.slane %v8216, 7
  %v8219 = vor.u32 %v8215, %v8218
  %v8220 = vrot.slane %v8219, 2
  %v8222 = vshll.u32 %v8148, 16
  %v8224 = vrot.slane %v8222, 7
  %v8225 = vsel %vm8211, %v8220, %v8224
  %v8227 = vshrl.u32 %v8155, 16
  %v8229 = vrot.slane %v8227, 6
  %v8230 = vshll.u32 %v8155, 16
  %v8232 = vrot.slane %v8230, 7
  %v8233 = vor.u32 %v8229, %v8232
  %v8234 = vrot.slane %v8233, 2
  %v8236 = vshll.u32 %v8156, 16
  %v8238 = vrot.slane %v8236, 7
  %v8239 = vsel %vm8211, %v8234, %v8238
  %v8241 = vshrl.u32 %v8163, 16
  %v8243 = vrot.slane %v8241, 6
  %v8244 = vshll.u32 %v8163, 16
  %v8246 = vrot.slane %v8244, 7
  %v8247 = vor.u32 %v8243, %v8246
  %v8248 = vrot.slane %v8247, 2
  %v8250 = vshll.u32 %v8164, 16
  %v8252 = vrot.slane %v8250, 7
  %v8253 = vsel %vm8211, %v8248, %v8252
  %v8255 = vshrl.u32 %v8171, 16
  %v8257 = vrot.slane %v8255, 6
  %v8258 = vshll.u32 %v8171, 16
  %v8260 = vrot.slane %v8258, 7
  %v8261 = vor.u32 %v8257, %v8260
  %v8262 = vrot.slane %v8261, 2
  %v8264 = vshll.u32 %v8172, 16
  %v8266 = vrot.slane %v8264, 7
  %v8267 = vsel %vm8211, %v8262, %v8266
  %v8269 = vshrl.u32 %v8179, 16
  %v8271 = vrot.slane %v8269, 6
  %v8272 = vshll.u32 %v8179, 16
  %v8274 = vrot.slane %v8272, 7
  %v8275 = vor.u32 %v8271, %v8274
  %v8276 = vrot.slane %v8275, 2
  %v8278 = vshll.u32 %v8180, 16
  %v8280 = vrot.slane %v8278, 7
  %v8281 = vsel %vm8211, %v8276, %v8280
  %v8283 = vshrl.u32 %v8187, 16
  %v8285 = vrot.slane %v8283, 6
  %v8286 = vshll.u32 %v8187, 16
  %v8288 = vrot.slane %v8286, 7
  %v8289 = vor.u32 %v8285, %v8288
  %v8290 = vrot.slane %v8289, 2
  %v8292 = vshll.u32 %v8188, 16
  %v8294 = vrot.slane %v8292, 7
  %v8295 = vsel %vm8211, %v8290, %v8294
  %v8297 = vshrl.u32 %v8195, 16
  %v8299 = vrot.slane %v8297, 6
  %v8300 = vshll.u32 %v8195, 16
  %v8302 = vrot.slane %v8300, 7
  %v8303 = vor.u32 %v8299, %v8302
  %v8304 = vrot.slane %v8303, 2
  %v8306 = vshll.u32 %v8196, 16
  %v8308 = vrot.slane %v8306, 7
  %v8309 = vsel %vm8211, %v8304, %v8308
  %v8311 = vshrl.u32 %v8203, 16
  %v8313 = vrot.slane %v8311, 6
  %v8314 = vshll.u32 %v8203, 16
  %v8316 = vrot.slane %v8314, 7
  %v8317 = vor.u32 %v8313, %v8316
  %v8318 = vrot.slane %v8317, 2
  %v8320 = vshll.u32 %v8204, 16
  %v8322 = vrot.slane %v8320, 7
  %v8323 = vsel %vm8211, %v8318, %v8322
  %8332 = vst [vmem:[#allocation5 + $0x4] sm:$0x3] %v8225
  %8333 = vst [vmem:[#allocation5 + $0x24] sm:$0x3] %v8239
  %8334 = vst [vmem:[#allocation5 + $0x44] sm:$0x3] %v8253
  %8335 = vst [vmem:[#allocation5 + $0x64] sm:$0x3] %v8267
  %8336 = vst [vmem:[#allocation5 + $0x84] sm:$0x3] %v8281
  %8337 = vst [vmem:[#allocation5 + $0xa4] sm:$0x3] %v8295
  %8338 = vst [vmem:[#allocation5 + $0xc4] sm:$0x3] %v8309
  %8339 = vst [vmem:[#allocation5 + $0xe4] sm:$0x3] %v8323
  %v8340 = vld [vmem:[%s7209] sm:$0x7]
  %v8341 = vld [vmem:[%s7209 + $0x4] sm:$0x7]
  %v8342 = vld [vmem:[%s7209 + $0x8] sm:$0x7]
  %v8343 = vld [vmem:[%s7209 + $0xc] sm:$0x7]
  %v8344 = vld [vmem:[%s7209 + $0x14] sm:$0x7]
  %v8345 = vld [vmem:[%s7209 + $0x18] sm:$0x7]
  %v8346 = vld [vmem:[%s7209 + $0x1c] sm:$0x7]
  %v8347 = vld [vmem:[%s7209 + $0x20] sm:$0x7]
  %v8357 = vunpack.c.l.s4 1983009808
  %v8358 = vunpack.c.0.s8 %v8357
  %v8359 = vlaneseq
  %v8360 = vshrl.u32 %v8359, 7
  %v8361 = vsub.s32 %v8358, %v8360
  %v8362 = vrot.slane %v8340, %v8361
  %v8363 = vcombine.high %v8362, %v8362
  %v8365 = vunpack.c.l.s4 1983009808
  %v8366 = vunpack.c.0.s8 %v8365
  %v8367 = vlaneseq
  %v8368 = vshrl.u32 %v8367, 7
  %v8369 = vsub.s32 %v8366, %v8368
  %v8370 = vrot.slane %v8341, %v8369
  %v8371 = vcombine.high %v8370, %v8370
  %v8373 = vunpack.c.l.s4 1983009808
  %v8374 = vunpack.c.0.s8 %v8373
  %v8375 = vlaneseq
  %v8376 = vshrl.u32 %v8375, 7
  %v8377 = vsub.s32 %v8374, %v8376
  %v8378 = vrot.slane %v8342, %v8377
  %v8379 = vcombine.high %v8378, %v8378
  %v8381 = vunpack.c.l.s4 1983009808
  %v8382 = vunpack.c.0.s8 %v8381
  %v8383 = vlaneseq
  %v8384 = vshrl.u32 %v8383, 7
  %v8385 = vsub.s32 %v8382, %v8384
  %v8386 = vrot.slane %v8343, %v8385
  %v8387 = vcombine.high %v8386, %v8386
  %v8389 = vunpack.c.l.s4 1983009808
  %v8390 = vunpack.c.0.s8 %v8389
  %v8391 = vlaneseq
  %v8392 = vshrl.u32 %v8391, 7
  %v8393 = vsub.s32 %v8390, %v8392
  %v8394 = vrot.slane %v8344, %v8393
  %v8395 = vcombine.high %v8394, %v8394
  %v8397 = vunpack.c.l.s4 1983009808
  %v8398 = vunpack.c.0.s8 %v8397
  %v8399 = vlaneseq
  %v8400 = vshrl.u32 %v8399, 7
  %v8401 = vsub.s32 %v8398, %v8400
  %v8402 = vrot.slane %v8345, %v8401
  %v8403 = vcombine.high %v8402, %v8402
  %v8405 = vunpack.c.l.s4 1983009808
  %v8406 = vunpack.c.0.s8 %v8405
  %v8407 = vlaneseq
  %v8408 = vshrl.u32 %v8407, 7
  %v8409 = vsub.s32 %v8406, %v8408
  %v8410 = vrot.slane %v8346, %v8409
  %v8411 = vcombine.high %v8410, %v8410
  %v8413 = vunpack.c.l.s4 1983009808
  %v8414 = vunpack.c.0.s8 %v8413
  %v8415 = vlaneseq
  %v8416 = vshrl.u32 %v8415, 7
  %v8417 = vsub.s32 %v8414, %v8416
  %v8418 = vrot.slane %v8347, %v8417
  %v8419 = vcombine.high %v8418, %v8418
  %v8421 = vshrl.u32 %v8362, 16
  %v8423 = vrot.slane %v8421, 6
  %v8424 = vshll.u32 %v8362, 16
  %v8426 = vrot.slane %v8424, 7
  %v8427 = vor.u32 %v8423, %v8426
  %v8428 = vrot.slane %v8427, 2
  %v8430 = vshll.u32 %v8363, 16
  %v8432 = vrot.slane %v8430, 7
  %v8433 = vsel %vm8211, %v8428, %v8432
  %v8435 = vshrl.u32 %v8370, 16
  %v8437 = vrot.slane %v8435, 6
  %v8438 = vshll.u32 %v8370, 16
  %v8440 = vrot.slane %v8438, 7
  %v8441 = vor.u32 %v8437, %v8440
  %v8442 = vrot.slane %v8441, 2
  %v8444 = vshll.u32 %v8371, 16
  %v8446 = vrot.slane %v8444, 7
  %v8447 = vsel %vm8211, %v8442, %v8446
  %v8449 = vshrl.u32 %v8378, 16
  %v8451 = vrot.slane %v8449, 6
  %v8452 = vshll.u32 %v8378, 16
  %v8454 = vrot.slane %v8452, 7
  %v8455 = vor.u32 %v8451, %v8454
  %v8456 = vrot.slane %v8455, 2
  %v8458 = vshll.u32 %v8379, 16
  %v8460 = vrot.slane %v8458, 7
  %v8461 = vsel %vm8211, %v8456, %v8460
  %v8463 = vshrl.u32 %v8386, 16
  %v8465 = vrot.slane %v8463, 6
  %v8466 = vshll.u32 %v8386, 16
  %v8468 = vrot.slane %v8466, 7
  %v8469 = vor.u32 %v8465, %v8468
  %v8470 = vrot.slane %v8469, 2
  %v8472 = vshll.u32 %v8387, 16
  %v8474 = vrot.slane %v8472, 7
  %v8475 = vsel %vm8211, %v8470, %v8474
  %v8477 = vshrl.u32 %v8394, 16
  %v8479 = vrot.slane %v8477, 6
  %v8480 = vshll.u32 %v8394, 16
  %v8482 = vrot.slane %v8480, 7
  %v8483 = vor.u32 %v8479, %v8482
  %v8484 = vrot.slane %v8483, 2
  %v8486 = vshll.u32 %v8395, 16
  %v8488 = vrot.slane %v8486, 7
  %v8489 = vsel %vm8211, %v8484, %v8488
  %v8491 = vshrl.u32 %v8402, 16
  %v8493 = vrot.slane %v8491, 6
  %v8494 = vshll.u32 %v8402, 16
  %v8496 = vrot.slane %v8494, 7
  %v8497 = vor.u32 %v8493, %v8496
  %v8498 = vrot.slane %v8497, 2
  %v8500 = vshll.u32 %v8403, 16
  %v8502 = vrot.slane %v8500, 7
  %v8503 = vsel %vm8211, %v8498, %v8502
  %v8505 = vshrl.u32 %v8410, 16
  %v8507 = vrot.slane %v8505, 6
  %v8508 = vshll.u32 %v8410, 16
  %v8510 = vrot.slane %v8508, 7
  %v8511 = vor.u32 %v8507, %v8510
  %v8512 = vrot.slane %v8511, 2
  %v8514 = vshll.u32 %v8411, 16
  %v8516 = vrot.slane %v8514, 7
  %v8517 = vsel %vm8211, %v8512, %v8516
  %v8519 = vshrl.u32 %v8418, 16
  %v8521 = vrot.slane %v8519, 6
  %v8522 = vshll.u32 %v8418, 16
  %v8524 = vrot.slane %v8522, 7
  %v8525 = vor.u32 %v8521, %v8524
  %v8526 = vrot.slane %v8525, 2
  %v8528 = vshll.u32 %v8419, 16
  %v8530 = vrot.slane %v8528, 7
  %v8531 = vsel %vm8211, %v8526, %v8530
  %8540 = vst [vmem:[#allocation5 + $0x6] sm:$0x3] %v8433
  %8541 = vst [vmem:[#allocation5 + $0x26] sm:$0x3] %v8447
  %8542 = vst [vmem:[#allocation5 + $0x46] sm:$0x3] %v8461
  %8543 = vst [vmem:[#allocation5 + $0x66] sm:$0x3] %v8475
  %8544 = vst [vmem:[#allocation5 + $0x86] sm:$0x3] %v8489
  %8545 = vst [vmem:[#allocation5 + $0xa6] sm:$0x3] %v8503
  %8546 = vst [vmem:[#allocation5 + $0xc6] sm:$0x3] %v8517
  %8547 = vst [vmem:[#allocation5 + $0xe6] sm:$0x3] %v8531
  %v8548 = vld [vmem:[%s7178] sm:$0x3]
  %v8549 = vld [vmem:[%s7178 + $0x4] sm:$0x3]
  %v8550 = vld [vmem:[%s7178 + $0x8] sm:$0x3]
  %v8551 = vld [vmem:[%s7178 + $0xc] sm:$0x3]
  %v8552 = vld [vmem:[%s7178 + $0x14] sm:$0x3]
  %v8553 = vld [vmem:[%s7178 + $0x18] sm:$0x3]
  %v8554 = vld [vmem:[%s7178 + $0x1c] sm:$0x3]
  %v8555 = vld [vmem:[%s7178 + $0x20] sm:$0x3]
  %8556 = vst [vmem:[#allocation5 + $0x8] sm:$0x3] %v8548
  %8557 = vst [vmem:[#allocation5 + $0x28] sm:$0x3] %v8549
  %8558 = vst [vmem:[#allocation5 + $0x48] sm:$0x3] %v8550
  %8559 = vst [vmem:[#allocation5 + $0x68] sm:$0x3] %v8551
  %8560 = vst [vmem:[#allocation5 + $0x88] sm:$0x3] %v8552
  %8561 = vst [vmem:[#allocation5 + $0xa8] sm:$0x3] %v8553
  %8562 = vst [vmem:[#allocation5 + $0xc8] sm:$0x3] %v8554
  %8563 = vst [vmem:[#allocation5 + $0xe8] sm:$0x3] %v8555
  %v8564 = vld [vmem:[%s7242] sm:$0x3]
  %v8565 = vld [vmem:[%s7242 + $0x4] sm:$0x3]
  %v8566 = vld [vmem:[%s7242 + $0x8] sm:$0x3]
  %v8567 = vld [vmem:[%s7242 + $0xc] sm:$0x3]
  %v8568 = vld [vmem:[%s7242 + $0x14] sm:$0x3]
  %v8569 = vld [vmem:[%s7242 + $0x18] sm:$0x3]
  %v8570 = vld [vmem:[%s7242 + $0x1c] sm:$0x3]
  %v8571 = vld [vmem:[%s7242 + $0x20] sm:$0x3]
  %8572 = vst [vmem:[#allocation5 + $0xa] sm:$0x3] %v8564
  %8573 = vst [vmem:[#allocation5 + $0x2a] sm:$0x3] %v8565
  %8574 = vst [vmem:[#allocation5 + $0x4a] sm:$0x3] %v8566
  %8575 = vst [vmem:[#allocation5 + $0x6a] sm:$0x3] %v8567
  %8576 = vst [vmem:[#allocation5 + $0x8a] sm:$0x3] %v8568
  %8577 = vst [vmem:[#allocation5 + $0xaa] sm:$0x3] %v8569
  %8578 = vst [vmem:[#allocation5 + $0xca] sm:$0x3] %v8570
  %8579 = vst [vmem:[#allocation5 + $0xea] sm:$0x3] %v8571
  %v8580 = vld [vmem:[%s7178] sm:$0x7]
  %v8581 = vld [vmem:[%s7178 + $0x4] sm:$0x7]
  %v8582 = vld [vmem:[%s7178 + $0x8] sm:$0x7]
  %v8583 = vld [vmem:[%s7178 + $0xc] sm:$0x7]
  %v8584 = vld [vmem:[%s7178 + $0x14] sm:$0x7]
  %v8585 = vld [vmem:[%s7178 + $0x18] sm:$0x7]
  %v8586 = vld [vmem:[%s7178 + $0x1c] sm:$0x7]
  %v8587 = vld [vmem:[%s7178 + $0x20] sm:$0x7]
  %v8597 = vunpack.c.l.s4 1983009808
  %v8598 = vunpack.c.0.s8 %v8597
  %v8599 = vlaneseq
  %v8600 = vshrl.u32 %v8599, 7
  %v8601 = vsub.s32 %v8598, %v8600
  %v8602 = vrot.slane %v8580, %v8601
  %v8603 = vcombine.high %v8602, %v8602
  %v8605 = vunpack.c.l.s4 1983009808
  %v8606 = vunpack.c.0.s8 %v8605
  %v8607 = vlaneseq
  %v8608 = vshrl.u32 %v8607, 7
  %v8609 = vsub.s32 %v8606, %v8608
  %v8610 = vrot.slane %v8581, %v8609
  %v8611 = vcombine.high %v8610, %v8610
  %v8613 = vunpack.c.l.s4 1983009808
  %v8614 = vunpack.c.0.s8 %v8613
  %v8615 = vlaneseq
  %v8616 = vshrl.u32 %v8615, 7
  %v8617 = vsub.s32 %v8614, %v8616
  %v8618 = vrot.slane %v8582, %v8617
  %v8619 = vcombine.high %v8618, %v8618
  %v8621 = vunpack.c.l.s4 1983009808
  %v8622 = vunpack.c.0.s8 %v8621
  %v8623 = vlaneseq
  %v8624 = vshrl.u32 %v8623, 7
  %v8625 = vsub.s32 %v8622, %v8624
  %v8626 = vrot.slane %v8583, %v8625
  %v8627 = vcombine.high %v8626, %v8626
  %v8629 = vunpack.c.l.s4 1983009808
  %v8630 = vunpack.c.0.s8 %v8629
  %v8631 = vlaneseq
  %v8632 = vshrl.u32 %v8631, 7
  %v8633 = vsub.s32 %v8630, %v8632
  %v8634 = vrot.slane %v8584, %v8633
  %v8635 = vcombine.high %v8634, %v8634
  %v8637 = vunpack.c.l.s4 1983009808
  %v8638 = vunpack.c.0.s8 %v8637
  %v8639 = vlaneseq
  %v8640 = vshrl.u32 %v8639, 7
  %v8641 = vsub.s32 %v8638, %v8640
  %v8642 = vrot.slane %v8585, %v8641
  %v8643 = vcombine.high %v8642, %v8642
  %v8645 = vunpack.c.l.s4 1983009808
  %v8646 = vunpack.c.0.s8 %v8645
  %v8647 = vlaneseq
  %v8648 = vshrl.u32 %v8647, 7
  %v8649 = vsub.s32 %v8646, %v8648
  %v8650 = vrot.slane %v8586, %v8649
  %v8651 = vcombine.high %v8650, %v8650
  %v8653 = vunpack.c.l.s4 1983009808
  %v8654 = vunpack.c.0.s8 %v8653
  %v8655 = vlaneseq
  %v8656 = vshrl.u32 %v8655, 7
  %v8657 = vsub.s32 %v8654, %v8656
  %v8658 = vrot.slane %v8587, %v8657
  %v8659 = vcombine.high %v8658, %v8658
  %v8661 = vshrl.u32 %v8602, 16
  %v8663 = vrot.slane %v8661, 6
  %v8664 = vshll.u32 %v8602, 16
  %v8666 = vrot.slane %v8664, 7
  %v8667 = vor.u32 %v8663, %v8666
  %v8668 = vrot.slane %v8667, 2
  %v8670 = vshll.u32 %v8603, 16
  %v8672 = vrot.slane %v8670, 7
  %v8673 = vsel %vm8211, %v8668, %v8672
  %v8675 = vshrl.u32 %v8610, 16
  %v8677 = vrot.slane %v8675, 6
  %v8678 = vshll.u32 %v8610, 16
  %v8680 = vrot.slane %v8678, 7
  %v8681 = vor.u32 %v8677, %v8680
  %v8682 = vrot.slane %v8681, 2
  %v8684 = vshll.u32 %v8611, 16
  %v8686 = vrot.slane %v8684, 7
  %v8687 = vsel %vm8211, %v8682, %v8686
  %v8689 = vshrl.u32 %v8618, 16
  %v8691 = vrot.slane %v8689, 6
  %v8692 = vshll.u32 %v8618, 16
  %v8694 = vrot.slane %v8692, 7
  %v8695 = vor.u32 %v8691, %v8694
  %v8696 = vrot.slane %v8695, 2
  %v8698 = vshll.u32 %v8619, 16
  %v8700 = vrot.slane %v8698, 7
  %v8701 = vsel %vm8211, %v8696, %v8700
  %v8703 = vshrl.u32 %v8626, 16
  %v8705 = vrot.slane %v8703, 6
  %v8706 = vshll.u32 %v8626, 16
  %v8708 = vrot.slane %v8706, 7
  %v8709 = vor.u32 %v8705, %v8708
  %v8710 = vrot.slane %v8709, 2
  %v8712 = vshll.u32 %v8627, 16
  %v8714 = vrot.slane %v8712, 7
  %v8715 = vsel %vm8211, %v8710, %v8714
  %v8717 = vshrl.u32 %v8634, 16
  %v8719 = vrot.slane %v8717, 6
  %v8720 = vshll.u32 %v8634, 16
  %v8722 = vrot.slane %v8720, 7
  %v8723 = vor.u32 %v8719, %v8722
  %v8724 = vrot.slane %v8723, 2
  %v8726 = vshll.u32 %v8635, 16
  %v8728 = vrot.slane %v8726, 7
  %v8729 = vsel %vm8211, %v8724, %v8728
  %v8731 = vshrl.u32 %v8642, 16
  %v8733 = vrot.slane %v8731, 6
  %v8734 = vshll.u32 %v8642, 16
  %v8736 = vrot.slane %v8734, 7
  %v8737 = vor.u32 %v8733, %v8736
  %v8738 = vrot.slane %v8737, 2
  %v8740 = vshll.u32 %v8643, 16
  %v8742 = vrot.slane %v8740, 7
  %v8743 = vsel %vm8211, %v8738, %v8742
  %v8745 = vshrl.u32 %v8650, 16
  %v8747 = vrot.slane %v8745, 6
  %v8748 = vshll.u32 %v8650, 16
  %v8750 = vrot.slane %v8748, 7
  %v8751 = vor.u32 %v8747, %v8750
  %v8752 = vrot.slane %v8751, 2
  %v8754 = vshll.u32 %v8651, 16
  %v8756 = vrot.slane %v8754, 7
  %v8757 = vsel %vm8211, %v8752, %v8756
  %v8759 = vshrl.u32 %v8658, 16
  %v8761 = vrot.slane %v8759, 6
  %v8762 = vshll.u32 %v8658, 16
  %v8764 = vrot.slane %v8762, 7
  %v8765 = vor.u32 %v8761, %v8764
  %v8766 = vrot.slane %v8765, 2
  %v8768 = vshll.u32 %v8659, 16
  %v8770 = vrot.slane %v8768, 7
  %v8771 = vsel %vm8211, %v8766, %v8770
  %8780 = vst [vmem:[#allocation5 + $0xc] sm:$0x3] %v8673
  %8781 = vst [vmem:[#allocation5 + $0x2c] sm:$0x3] %v8687
  %8782 = vst [vmem:[#allocation5 + $0x4c] sm:$0x3] %v8701
  %8783 = vst [vmem:[#allocation5 + $0x6c] sm:$0x3] %v8715
  %8784 = vst [vmem:[#allocation5 + $0x8c] sm:$0x3] %v8729
  %8785 = vst [vmem:[#allocation5 + $0xac] sm:$0x3] %v8743
  %8786 = vst [vmem:[#allocation5 + $0xcc] sm:$0x3] %v8757
  %8787 = vst [vmem:[#allocation5 + $0xec] sm:$0x3] %v8771
  %v8788 = vld [vmem:[%s7242] sm:$0x7]
  %v8789 = vld [vmem:[%s7242 + $0x4] sm:$0x7]
  %v8790 = vld [vmem:[%s7242 + $0x8] sm:$0x7]
  %v8791 = vld [vmem:[%s7242 + $0xc] sm:$0x7]
  %v8792 = vld [vmem:[%s7242 + $0x14] sm:$0x7]
  %v8793 = vld [vmem:[%s7242 + $0x18] sm:$0x7]
  %v8794 = vld [vmem:[%s7242 + $0x1c] sm:$0x7]
  %v8795 = vld [vmem:[%s7242 + $0x20] sm:$0x7]
  %v8805 = vunpack.c.l.s4 1983009808
  %v8806 = vunpack.c.0.s8 %v8805
  %v8807 = vlaneseq
  %v8808 = vshrl.u32 %v8807, 7
  %v8809 = vsub.s32 %v8806, %v8808
  %v8810 = vrot.slane %v8788, %v8809
  %v8811 = vcombine.high %v8810, %v8810
  %v8813 = vunpack.c.l.s4 1983009808
  %v8814 = vunpack.c.0.s8 %v8813
  %v8815 = vlaneseq
  %v8816 = vshrl.u32 %v8815, 7
  %v8817 = vsub.s32 %v8814, %v8816
  %v8818 = vrot.slane %v8789, %v8817
  %v8819 = vcombine.high %v8818, %v8818
  %v8821 = vunpack.c.l.s4 1983009808
  %v8822 = vunpack.c.0.s8 %v8821
  %v8823 = vlaneseq
  %v8824 = vshrl.u32 %v8823, 7
  %v8825 = vsub.s32 %v8822, %v8824
  %v8826 = vrot.slane %v8790, %v8825
  %v8827 = vcombine.high %v8826, %v8826
  %v8829 = vunpack.c.l.s4 1983009808
  %v8830 = vunpack.c.0.s8 %v8829
  %v8831 = vlaneseq
  %v8832 = vshrl.u32 %v8831, 7
  %v8833 = vsub.s32 %v8830, %v8832
  %v8834 = vrot.slane %v8791, %v8833
  %v8835 = vcombine.high %v8834, %v8834
  %v8837 = vunpack.c.l.s4 1983009808
  %v8838 = vunpack.c.0.s8 %v8837
  %v8839 = vlaneseq
  %v8840 = vshrl.u32 %v8839, 7
  %v8841 = vsub.s32 %v8838, %v8840
  %v8842 = vrot.slane %v8792, %v8841
  %v8843 = vcombine.high %v8842, %v8842
  %v8845 = vunpack.c.l.s4 1983009808
  %v8846 = vunpack.c.0.s8 %v8845
  %v8847 = vlaneseq
  %v8848 = vshrl.u32 %v8847, 7
  %v8849 = vsub.s32 %v8846, %v8848
  %v8850 = vrot.slane %v8793, %v8849
  %v8851 = vcombine.high %v8850, %v8850
  %v8853 = vunpack.c.l.s4 1983009808
  %v8854 = vunpack.c.0.s8 %v8853
  %v8855 = vlaneseq
  %v8856 = vshrl.u32 %v8855, 7
  %v8857 = vsub.s32 %v8854, %v8856
  %v8858 = vrot.slane %v8794, %v8857
  %v8859 = vcombine.high %v8858, %v8858
  %v8861 = vunpack.c.l.s4 1983009808
  %v8862 = vunpack.c.0.s8 %v8861
  %v8863 = vlaneseq
  %v8864 = vshrl.u32 %v8863, 7
  %v8865 = vsub.s32 %v8862, %v8864
  %v8866 = vrot.slane %v8795, %v8865
  %v8867 = vcombine.high %v8866, %v8866
  %v8869 = vshrl.u32 %v8810, 16
  %v8871 = vrot.slane %v8869, 6
  %v8872 = vshll.u32 %v8810, 16
  %v8874 = vrot.slane %v8872, 7
  %v8875 = vor.u32 %v8871, %v8874
  %v8876 = vrot.slane %v8875, 2
  %v8878 = vshll.u32 %v8811, 16
  %v8880 = vrot.slane %v8878, 7
  %v8881 = vsel %vm8211, %v8876, %v8880
  %v8883 = vshrl.u32 %v8818, 16
  %v8885 = vrot.slane %v8883, 6
  %v8886 = vshll.u32 %v8818, 16
  %v8888 = vrot.slane %v8886, 7
  %v8889 = vor.u32 %v8885, %v8888
  %v8890 = vrot.slane %v8889, 2
  %v8892 = vshll.u32 %v8819, 16
  %v8894 = vrot.slane %v8892, 7
  %v8895 = vsel %vm8211, %v8890, %v8894
  %v8897 = vshrl.u32 %v8826, 16
  %v8899 = vrot.slane %v8897, 6
  %v8900 = vshll.u32 %v8826, 16
  %v8902 = vrot.slane %v8900, 7
  %v8903 = vor.u32 %v8899, %v8902
  %v8904 = vrot.slane %v8903, 2
  %v8906 = vshll.u32 %v8827, 16
  %v8908 = vrot.slane %v8906, 7
  %v8909 = vsel %vm8211, %v8904, %v8908
  %v8911 = vshrl.u32 %v8834, 16
  %v8913 = vrot.slane %v8911, 6
  %v8914 = vshll.u32 %v8834, 16
  %v8916 = vrot.slane %v8914, 7
  %v8917 = vor.u32 %v8913, %v8916
  %v8918 = vrot.slane %v8917, 2
  %v8920 = vshll.u32 %v8835, 16
  %v8922 = vrot.slane %v8920, 7
  %v8923 = vsel %vm8211, %v8918, %v8922
  %v8925 = vshrl.u32 %v8842, 16
  %v8927 = vrot.slane %v8925, 6
  %v8928 = vshll.u32 %v8842, 16
  %v8930 = vrot.slane %v8928, 7
  %v8931 = vor.u32 %v8927, %v8930
  %v8932 = vrot.slane %v8931, 2
  %v8934 = vshll.u32 %v8843, 16
  %v8936 = vrot.slane %v8934, 7
  %v8937 = vsel %vm8211, %v8932, %v8936
  %v8939 = vshrl.u32 %v8850, 16
  %v8941 = vrot.slane %v8939, 6
  %v8942 = vshll.u32 %v8850, 16
  %v8944 = vrot.slane %v8942, 7
  %v8945 = vor.u32 %v8941, %v8944
  %v8946 = vrot.slane %v8945, 2
  %v8948 = vshll.u32 %v8851, 16
  %v8950 = vrot.slane %v8948, 7
  %v8951 = vsel %vm8211, %v8946, %v8950
  %v8953 = vshrl.u32 %v8858, 16
  %v8955 = vrot.slane %v8953, 6
  %v8956 = vshll.u32 %v8858, 16
  %v8958 = vrot.slane %v8956, 7
  %v8959 = vor.u32 %v8955, %v8958
  %v8960 = vrot.slane %v8959, 2
  %v8962 = vshll.u32 %v8859, 16
  %v8964 = vrot.slane %v8962, 7
  %v8965 = vsel %vm8211, %v8960, %v8964
  %v8967 = vshrl.u32 %v8866, 16
  %v8969 = vrot.slane %v8967, 6
  %v8970 = vshll.u32 %v8866, 16
  %v8972 = vrot.slane %v8970, 7
  %v8973 = vor.u32 %v8969, %v8972
  %v8974 = vrot.slane %v8973, 2
  %v8976 = vshll.u32 %v8867, 16
  %v8978 = vrot.slane %v8976, 7
  %v8979 = vsel %vm8211, %v8974, %v8978
  %8988 = vst [vmem:[#allocation5 + $0xe] sm:$0x3] %v8881
  %8989 = vst [vmem:[#allocation5 + $0x2e] sm:$0x3] %v8895
  %8990 = vst [vmem:[#allocation5 + $0x4e] sm:$0x3] %v8909
  %8991 = vst [vmem:[#allocation5 + $0x6e] sm:$0x3] %v8923
  %8992 = vst [vmem:[#allocation5 + $0x8e] sm:$0x3] %v8937
  %8993 = vst [vmem:[#allocation5 + $0xae] sm:$0x3] %v8951
  %8994 = vst [vmem:[#allocation5 + $0xce] sm:$0x3] %v8965
  %8995 = vst [vmem:[#allocation5 + $0xee] sm:$0x3] %v8979
  %v8996 = vld [vmem:[%s8068] sm:$0x3]
  %v8997 = vld [vmem:[%s8068 + $0x4] sm:$0x3]
  %v8998 = vld [vmem:[%s8068 + $0x8] sm:$0x3]
  %v8999 = vld [vmem:[%s8068 + $0xc] sm:$0x3]
  %v9000 = vld [vmem:[%s8068 + $0x14] sm:$0x3]
  %v9001 = vld [vmem:[%s8068 + $0x18] sm:$0x3]
  %v9002 = vld [vmem:[%s8068 + $0x1c] sm:$0x3]
  %v9003 = vld [vmem:[%s8068 + $0x20] sm:$0x3]
  %9004 = vst [vmem:[#allocation5 + $0x10] sm:$0x3] %v8996
  %9005 = vst [vmem:[#allocation5 + $0x30] sm:$0x3] %v8997
  %9006 = vst [vmem:[#allocation5 + $0x50] sm:$0x3] %v8998
  %9007 = vst [vmem:[#allocation5 + $0x70] sm:$0x3] %v8999
  %9008 = vst [vmem:[#allocation5 + $0x90] sm:$0x3] %v9000
  %9009 = vst [vmem:[#allocation5 + $0xb0] sm:$0x3] %v9001
  %9010 = vst [vmem:[#allocation5 + $0xd0] sm:$0x3] %v9002
  %9011 = vst [vmem:[#allocation5 + $0xf0] sm:$0x3] %v9003
  %v9012 = vld [vmem:[%s7705] sm:$0x3]
  %v9013 = vld [vmem:[%s7705 + $0x4] sm:$0x3]
  %v9014 = vld [vmem:[%s7705 + $0x8] sm:$0x3]
  %v9015 = vld [vmem:[%s7705 + $0xc] sm:$0x3]
  %v9016 = vld [vmem:[%s7705 + $0x14] sm:$0x3]
  %v9017 = vld [vmem:[%s7705 + $0x18] sm:$0x3]
  %v9018 = vld [vmem:[%s7705 + $0x1c] sm:$0x3]
  %v9019 = vld [vmem:[%s7705 + $0x20] sm:$0x3]
  %9020 = vst [vmem:[#allocation5 + $0x12] sm:$0x3] %v9012
  %9021 = vst [vmem:[#allocation5 + $0x32] sm:$0x3] %v9013
  %9022 = vst [vmem:[#allocation5 + $0x52] sm:$0x3] %v9014
  %9023 = vst [vmem:[#allocation5 + $0x72] sm:$0x3] %v9015
  %9024 = vst [vmem:[#allocation5 + $0x92] sm:$0x3] %v9016
  %9025 = vst [vmem:[#allocation5 + $0xb2] sm:$0x3] %v9017
  %9026 = vst [vmem:[#allocation5 + $0xd2] sm:$0x3] %v9018
  %9027 = vst [vmem:[#allocation5 + $0xf2] sm:$0x3] %v9019
  %v9028 = vld [vmem:[%s8068] sm:$0x7]
  %v9029 = vld [vmem:[%s8068 + $0x4] sm:$0x7]
  %v9030 = vld [vmem:[%s8068 + $0x8] sm:$0x7]
  %v9031 = vld [vmem:[%s8068 + $0xc] sm:$0x7]
  %v9032 = vld [vmem:[%s8068 + $0x14] sm:$0x7]
  %v9033 = vld [vmem:[%s8068 + $0x18] sm:$0x7]
  %v9034 = vld [vmem:[%s8068 + $0x1c] sm:$0x7]
  %v9035 = vld [vmem:[%s8068 + $0x20] sm:$0x7]
  %v9045 = vunpack.c.l.s4 1983009808
  %v9046 = vunpack.c.0.s8 %v9045
  %v9047 = vlaneseq
  %v9048 = vshrl.u32 %v9047, 7
  %v9049 = vsub.s32 %v9046, %v9048
  %v9050 = vrot.slane %v9028, %v9049
  %v9051 = vcombine.high %v9050, %v9050
  %v9053 = vunpack.c.l.s4 1983009808
  %v9054 = vunpack.c.0.s8 %v9053
  %v9055 = vlaneseq
  %v9056 = vshrl.u32 %v9055, 7
  %v9057 = vsub.s32 %v9054, %v9056
  %v9058 = vrot.slane %v9029, %v9057
  %v9059 = vcombine.high %v9058, %v9058
  %v9061 = vunpack.c.l.s4 1983009808
  %v9062 = vunpack.c.0.s8 %v9061
  %v9063 = vlaneseq
  %v9064 = vshrl.u32 %v9063, 7
  %v9065 = vsub.s32 %v9062, %v9064
  %v9066 = vrot.slane %v9030, %v9065
  %v9067 = vcombine.high %v9066, %v9066
  %v9069 = vunpack.c.l.s4 1983009808
  %v9070 = vunpack.c.0.s8 %v9069
  %v9071 = vlaneseq
  %v9072 = vshrl.u32 %v9071, 7
  %v9073 = vsub.s32 %v9070, %v9072
  %v9074 = vrot.slane %v9031, %v9073
  %v9075 = vcombine.high %v9074, %v9074
  %v9077 = vunpack.c.l.s4 1983009808
  %v9078 = vunpack.c.0.s8 %v9077
  %v9079 = vlaneseq
  %v9080 = vshrl.u32 %v9079, 7
  %v9081 = vsub.s32 %v9078, %v9080
  %v9082 = vrot.slane %v9032, %v9081
  %v9083 = vcombine.high %v9082, %v9082
  %v9085 = vunpack.c.l.s4 1983009808
  %v9086 = vunpack.c.0.s8 %v9085
  %v9087 = vlaneseq
  %v9088 = vshrl.u32 %v9087, 7
  %v9089 = vsub.s32 %v9086, %v9088
  %v9090 = vrot.slane %v9033, %v9089
  %v9091 = vcombine.high %v9090, %v9090
  %v9093 = vunpack.c.l.s4 1983009808
  %v9094 = vunpack.c.0.s8 %v9093
  %v9095 = vlaneseq
  %v9096 = vshrl.u32 %v9095, 7
  %v9097 = vsub.s32 %v9094, %v9096
  %v9098 = vrot.slane %v9034, %v9097
  %v9099 = vcombine.high %v9098, %v9098
  %v9101 = vunpack.c.l.s4 1983009808
  %v9102 = vunpack.c.0.s8 %v9101
  %v9103 = vlaneseq
  %v9104 = vshrl.u32 %v9103, 7
  %v9105 = vsub.s32 %v9102, %v9104
  %v9106 = vrot.slane %v9035, %v9105
  %v9107 = vcombine.high %v9106, %v9106
  %v9109 = vshrl.u32 %v9050, 16
  %v9111 = vrot.slane %v9109, 6
  %v9112 = vshll.u32 %v9050, 16
  %v9114 = vrot.slane %v9112, 7
  %v9115 = vor.u32 %v9111, %v9114
  %v9116 = vrot.slane %v9115, 2
  %v9118 = vshll.u32 %v9051, 16
  %v9120 = vrot.slane %v9118, 7
  %v9121 = vsel %vm8211, %v9116, %v9120
  %v9123 = vshrl.u32 %v9058, 16
  %v9125 = vrot.slane %v9123, 6
  %v9126 = vshll.u32 %v9058, 16
  %v9128 = vrot.slane %v9126, 7
  %v9129 = vor.u32 %v9125, %v9128
  %v9130 = vrot.slane %v9129, 2
  %v9132 = vshll.u32 %v9059, 16
  %v9134 = vrot.slane %v9132, 7
  %v9135 = vsel %vm8211, %v9130, %v9134
  %v9137 = vshrl.u32 %v9066, 16
  %v9139 = vrot.slane %v9137, 6
  %v9140 = vshll.u32 %v9066, 16
  %v9142 = vrot.slane %v9140, 7
  %v9143 = vor.u32 %v9139, %v9142
  %v9144 = vrot.slane %v9143, 2
  %v9146 = vshll.u32 %v9067, 16
  %v9148 = vrot.slane %v9146, 7
  %v9149 = vsel %vm8211, %v9144, %v9148
  %v9151 = vshrl.u32 %v9074, 16
  %v9153 = vrot.slane %v9151, 6
  %v9154 = vshll.u32 %v9074, 16
  %v9156 = vrot.slane %v9154, 7
  %v9157 = vor.u32 %v9153, %v9156
  %v9158 = vrot.slane %v9157, 2
  %v9160 = vshll.u32 %v9075, 16
  %v9162 = vrot.slane %v9160, 7
  %v9163 = vsel %vm8211, %v9158, %v9162
  %v9165 = vshrl.u32 %v9082, 16
  %v9167 = vrot.slane %v9165, 6
  %v9168 = vshll.u32 %v9082, 16
  %v9170 = vrot.slane %v9168, 7
  %v9171 = vor.u32 %v9167, %v9170
  %v9172 = vrot.slane %v9171, 2
  %v9174 = vshll.u32 %v9083, 16
  %v9176 = vrot.slane %v9174, 7
  %v9177 = vsel %vm8211, %v9172, %v9176
  %v9179 = vshrl.u32 %v9090, 16
  %v9181 = vrot.slane %v9179, 6
  %v9182 = vshll.u32 %v9090, 16
  %v9184 = vrot.slane %v9182, 7
  %v9185 = vor.u32 %v9181, %v9184
  %v9186 = vrot.slane %v9185, 2
  %v9188 = vshll.u32 %v9091, 16
  %v9190 = vrot.slane %v9188, 7
  %v9191 = vsel %vm8211, %v9186, %v9190
  %v9193 = vshrl.u32 %v9098, 16
  %v9195 = vrot.slane %v9193, 6
  %v9196 = vshll.u32 %v9098, 16
  %v9198 = vrot.slane %v9196, 7
  %v9199 = vor.u32 %v9195, %v9198
  %v9200 = vrot.slane %v9199, 2
  %v9202 = vshll.u32 %v9099, 16
  %v9204 = vrot.slane %v9202, 7
  %v9205 = vsel %vm8211, %v9200, %v9204
  %v9207 = vshrl.u32 %v9106, 16
  %v9209 = vrot.slane %v9207, 6
  %v9210 = vshll.u32 %v9106, 16
  %v9212 = vrot.slane %v9210, 7
  %v9213 = vor.u32 %v9209, %v9212
  %v9214 = vrot.slane %v9213, 2
  %v9216 = vshll.u32 %v9107, 16
  %v9218 = vrot.slane %v9216, 7
  %v9219 = vsel %vm8211, %v9214, %v9218
  %9228 = vst [vmem:[#allocation5 + $0x14] sm:$0x3] %v9121
  %9229 = vst [vmem:[#allocation5 + $0x34] sm:$0x3] %v9135
  %9230 = vst [vmem:[#allocation5 + $0x54] sm:$0x3] %v9149
  %9231 = vst [vmem:[#allocation5 + $0x74] sm:$0x3] %v9163
  %9232 = vst [vmem:[#allocation5 + $0x94] sm:$0x3] %v9177
  %9233 = vst [vmem:[#allocation5 + $0xb4] sm:$0x3] %v9191
  %9234 = vst [vmem:[#allocation5 + $0xd4] sm:$0x3] %v9205
  %9235 = vst [vmem:[#allocation5 + $0xf4] sm:$0x3] %v9219
  %v9236 = vld [vmem:[%s7705] sm:$0x7]
  %v9237 = vld [vmem:[%s7705 + $0x4] sm:$0x7]
  %v9238 = vld [vmem:[%s7705 + $0x8] sm:$0x7]
  %v9239 = vld [vmem:[%s7705 + $0xc] sm:$0x7]
  %v9240 = vld [vmem:[%s7705 + $0x14] sm:$0x7]
  %v9241 = vld [vmem:[%s7705 + $0x18] sm:$0x7]
  %v9242 = vld [vmem:[%s7705 + $0x1c] sm:$0x7]
  %v9243 = vld [vmem:[%s7705 + $0x20] sm:$0x7]
  %v9253 = vunpack.c.l.s4 1983009808
  %v9254 = vunpack.c.0.s8 %v9253
  %v9255 = vlaneseq
  %v9256 = vshrl.u32 %v9255, 7
  %v9257 = vsub.s32 %v9254, %v9256
  %v9258 = vrot.slane %v9236, %v9257
  %v9259 = vcombine.high %v9258, %v9258
  %v9261 = vunpack.c.l.s4 1983009808
  %v9262 = vunpack.c.0.s8 %v9261
  %v9263 = vlaneseq
  %v9264 = vshrl.u32 %v9263, 7
  %v9265 = vsub.s32 %v9262, %v9264
  %v9266 = vrot.slane %v9237, %v9265
  %v9267 = vcombine.high %v9266, %v9266
  %v9269 = vunpack.c.l.s4 1983009808
  %v9270 = vunpack.c.0.s8 %v9269
  %v9271 = vlaneseq
  %v9272 = vshrl.u32 %v9271, 7
  %v9273 = vsub.s32 %v9270, %v9272
  %v9274 = vrot.slane %v9238, %v9273
  %v9275 = vcombine.high %v9274, %v9274
  %v9277 = vunpack.c.l.s4 1983009808
  %v9278 = vunpack.c.0.s8 %v9277
  %v9279 = vlaneseq
  %v9280 = vshrl.u32 %v9279, 7
  %v9281 = vsub.s32 %v9278, %v9280
  %v9282 = vrot.slane %v9239, %v9281
  %v9283 = vcombine.high %v9282, %v9282
  %v9285 = vunpack.c.l.s4 1983009808
  %v9286 = vunpack.c.0.s8 %v9285
  %v9287 = vlaneseq
  %v9288 = vshrl.u32 %v9287, 7
  %v9289 = vsub.s32 %v9286, %v9288
  %v9290 = vrot.slane %v9240, %v9289
  %v9291 = vcombine.high %v9290, %v9290
  %v9293 = vunpack.c.l.s4 1983009808
  %v9294 = vunpack.c.0.s8 %v9293
  %v9295 = vlaneseq
  %v9296 = vshrl.u32 %v9295, 7
  %v9297 = vsub.s32 %v9294, %v9296
  %v9298 = vrot.slane %v9241, %v9297
  %v9299 = vcombine.high %v9298, %v9298
  %v9301 = vunpack.c.l.s4 1983009808
  %v9302 = vunpack.c.0.s8 %v9301
  %v9303 = vlaneseq
  %v9304 = vshrl.u32 %v9303, 7
  %v9305 = vsub.s32 %v9302, %v9304
  %v9306 = vrot.slane %v9242, %v9305
  %v9307 = vcombine.high %v9306, %v9306
  %v9309 = vunpack.c.l.s4 1983009808
  %v9310 = vunpack.c.0.s8 %v9309
  %v9311 = vlaneseq
  %v9312 = vshrl.u32 %v9311, 7
  %v9313 = vsub.s32 %v9310, %v9312
  %v9314 = vrot.slane %v9243, %v9313
  %v9315 = vcombine.high %v9314, %v9314
  %v9317 = vshrl.u32 %v9258, 16
  %v9319 = vrot.slane %v9317, 6
  %v9320 = vshll.u32 %v9258, 16
  %v9322 = vrot.slane %v9320, 7
  %v9323 = vor.u32 %v9319, %v9322
  %v9324 = vrot.slane %v9323, 2
  %v9326 = vshll.u32 %v9259, 16
  %v9328 = vrot.slane %v9326, 7
  %v9329 = vsel %vm8211, %v9324, %v9328
  %v9331 = vshrl.u32 %v9266, 16
  %v9333 = vrot.slane %v9331, 6
  %v9334 = vshll.u32 %v9266, 16
  %v9336 = vrot.slane %v9334, 7
  %v9337 = vor.u32 %v9333, %v9336
  %v9338 = vrot.slane %v9337, 2
  %v9340 = vshll.u32 %v9267, 16
  %v9342 = vrot.slane %v9340, 7
  %v9343 = vsel %vm8211, %v9338, %v9342
  %v9345 = vshrl.u32 %v9274, 16
  %v9347 = vrot.slane %v9345, 6
  %v9348 = vshll.u32 %v9274, 16
  %v9350 = vrot.slane %v9348, 7
  %v9351 = vor.u32 %v9347, %v9350
  %v9352 = vrot.slane %v9351, 2
  %v9354 = vshll.u32 %v9275, 16
  %v9356 = vrot.slane %v9354, 7
  %v9357 = vsel %vm8211, %v9352, %v9356
  %v9359 = vshrl.u32 %v9282, 16
  %v9361 = vrot.slane %v9359, 6
  %v9362 = vshll.u32 %v9282, 16
  %v9364 = vrot.slane %v9362, 7
  %v9365 = vor.u32 %v9361, %v9364
  %v9366 = vrot.slane %v9365, 2
  %v9368 = vshll.u32 %v9283, 16
  %v9370 = vrot.slane %v9368, 7
  %v9371 = vsel %vm8211, %v9366, %v9370
  %v9373 = vshrl.u32 %v9290, 16
  %v9375 = vrot.slane %v9373, 6
  %v9376 = vshll.u32 %v9290, 16
  %v9378 = vrot.slane %v9376, 7
  %v9379 = vor.u32 %v9375, %v9378
  %v9380 = vrot.slane %v9379, 2
  %v9382 = vshll.u32 %v9291, 16
  %v9384 = vrot.slane %v9382, 7
  %v9385 = vsel %vm8211, %v9380, %v9384
  %v9387 = vshrl.u32 %v9298, 16
  %v9389 = vrot.slane %v9387, 6
  %v9390 = vshll.u32 %v9298, 16
  %v9392 = vrot.slane %v9390, 7
  %v9393 = vor.u32 %v9389, %v9392
  %v9394 = vrot.slane %v9393, 2
  %v9396 = vshll.u32 %v9299, 16
  %v9398 = vrot.slane %v9396, 7
  %v9399 = vsel %vm8211, %v9394, %v9398
  %v9401 = vshrl.u32 %v9306, 16
  %v9403 = vrot.slane %v9401, 6
  %v9404 = vshll.u32 %v9306, 16
  %v9406 = vrot.slane %v9404, 7
  %v9407 = vor.u32 %v9403, %v9406
  %v9408 = vrot.slane %v9407, 2
  %v9410 = vshll.u32 %v9307, 16
  %v9412 = vrot.slane %v9410, 7
  %v9413 = vsel %vm8211, %v9408, %v9412
  %v9415 = vshrl.u32 %v9314, 16
  %v9417 = vrot.slane %v9415, 6
  %v9418 = vshll.u32 %v9314, 16
  %v9420 = vrot.slane %v9418, 7
  %v9421 = vor.u32 %v9417, %v9420
  %v9422 = vrot.slane %v9421, 2
  %v9424 = vshll.u32 %v9315, 16
  %v9426 = vrot.slane %v9424, 7
  %v9427 = vsel %vm8211, %v9422, %v9426
  %9436 = vst [vmem:[#allocation5 + $0x16] sm:$0x3] %v9329
  %9437 = vst [vmem:[#allocation5 + $0x36] sm:$0x3] %v9343
  %9438 = vst [vmem:[#allocation5 + $0x56] sm:$0x3] %v9357
  %9439 = vst [vmem:[#allocation5 + $0x76] sm:$0x3] %v9371
  %9440 = vst [vmem:[#allocation5 + $0x96] sm:$0x3] %v9385
  %9441 = vst [vmem:[#allocation5 + $0xb6] sm:$0x3] %v9399
  %9442 = vst [vmem:[#allocation5 + $0xd6] sm:$0x3] %v9413
  %9443 = vst [vmem:[#allocation5 + $0xf6] sm:$0x3] %v9427
  %s9444 = scalar_lea.vmem [#allocation4], 84
  %v9445 = vld [vmem:[%s9444] sm:$0x3]
  %v9446 = vld [vmem:[%s9444 + $0x4] sm:$0x3]
  %v9447 = vld [vmem:[%s9444 + $0x8] sm:$0x3]
  %v9448 = vld [vmem:[%s9444 + $0xc] sm:$0x3]
  %v9449 = vld [vmem:[%s9444 + $0x14] sm:$0x3]
  %v9450 = vld [vmem:[%s9444 + $0x18] sm:$0x3]
  %v9451 = vld [vmem:[%s9444 + $0x1c] sm:$0x3]
  %v9452 = vld [vmem:[%s9444 + $0x20] sm:$0x3]
  %9453 = vst [vmem:[#allocation5 + $0x18] sm:$0x3] %v9445
  %9454 = vst [vmem:[#allocation5 + $0x38] sm:$0x3] %v9446
  %9455 = vst [vmem:[#allocation5 + $0x58] sm:$0x3] %v9447
  %9456 = vst [vmem:[#allocation5 + $0x78] sm:$0x3] %v9448
  %9457 = vst [vmem:[#allocation5 + $0x98] sm:$0x3] %v9449
  %9458 = vst [vmem:[#allocation5 + $0xb8] sm:$0x3] %v9450
  %9459 = vst [vmem:[#allocation5 + $0xd8] sm:$0x3] %v9451
  %9460 = vst [vmem:[#allocation5 + $0xf8] sm:$0x3] %v9452
  %s9461 = scalar_lea.vmem [#allocation4], 124
  %v9462 = vld [vmem:[%s9461] sm:$0x3]
  %v9463 = vld [vmem:[%s9461 + $0x4] sm:$0x3]
  %v9464 = vld [vmem:[%s9461 + $0x8] sm:$0x3]
  %v9465 = vld [vmem:[%s9461 + $0xc] sm:$0x3]
  %v9466 = vld [vmem:[%s9461 + $0x14] sm:$0x3]
  %v9467 = vld [vmem:[%s9461 + $0x18] sm:$0x3]
  %v9468 = vld [vmem:[%s9461 + $0x1c] sm:$0x3]
  %v9469 = vld [vmem:[%s9461 + $0x20] sm:$0x3]
  %9470 = vst [vmem:[#allocation5 + $0x1a] sm:$0x3] %v9462
  %9471 = vst [vmem:[#allocation5 + $0x3a] sm:$0x3] %v9463
  %9472 = vst [vmem:[#allocation5 + $0x5a] sm:$0x3] %v9464
  %9473 = vst [vmem:[#allocation5 + $0x7a] sm:$0x3] %v9465
  %9474 = vst [vmem:[#allocation5 + $0x9a] sm:$0x3] %v9466
  %9475 = vst [vmem:[#allocation5 + $0xba] sm:$0x3] %v9467
  %9476 = vst [vmem:[#allocation5 + $0xda] sm:$0x3] %v9468
  %9477 = vst [vmem:[#allocation5 + $0xfa] sm:$0x3] %v9469
  %v9478 = vld [vmem:[%s9444] sm:$0x7]
  %v9479 = vld [vmem:[%s9444 + $0x4] sm:$0x7]
  %v9480 = vld [vmem:[%s9444 + $0x8] sm:$0x7]
  %v9481 = vld [vmem:[%s9444 + $0xc] sm:$0x7]
  %v9482 = vld [vmem:[%s9444 + $0x14] sm:$0x7]
  %v9483 = vld [vmem:[%s9444 + $0x18] sm:$0x7]
  %v9484 = vld [vmem:[%s9444 + $0x1c] sm:$0x7]
  %v9485 = vld [vmem:[%s9444 + $0x20] sm:$0x7]
  %v9495 = vunpack.c.l.s4 1983009808
  %v9496 = vunpack.c.0.s8 %v9495
  %v9497 = vlaneseq
  %v9498 = vshrl.u32 %v9497, 7
  %v9499 = vsub.s32 %v9496, %v9498
  %v9500 = vrot.slane %v9478, %v9499
  %v9501 = vcombine.high %v9500, %v9500
  %v9503 = vunpack.c.l.s4 1983009808
  %v9504 = vunpack.c.0.s8 %v9503
  %v9505 = vlaneseq
  %v9506 = vshrl.u32 %v9505, 7
  %v9507 = vsub.s32 %v9504, %v9506
  %v9508 = vrot.slane %v9479, %v9507
  %v9509 = vcombine.high %v9508, %v9508
  %v9511 = vunpack.c.l.s4 1983009808
  %v9512 = vunpack.c.0.s8 %v9511
  %v9513 = vlaneseq
  %v9514 = vshrl.u32 %v9513, 7
  %v9515 = vsub.s32 %v9512, %v9514
  %v9516 = vrot.slane %v9480, %v9515
  %v9517 = vcombine.high %v9516, %v9516
  %v9519 = vunpack.c.l.s4 1983009808
  %v9520 = vunpack.c.0.s8 %v9519
  %v9521 = vlaneseq
  %v9522 = vshrl.u32 %v9521, 7
  %v9523 = vsub.s32 %v9520, %v9522
  %v9524 = vrot.slane %v9481, %v9523
  %v9525 = vcombine.high %v9524, %v9524
  %v9527 = vunpack.c.l.s4 1983009808
  %v9528 = vunpack.c.0.s8 %v9527
  %v9529 = vlaneseq
  %v9530 = vshrl.u32 %v9529, 7
  %v9531 = vsub.s32 %v9528, %v9530
  %v9532 = vrot.slane %v9482, %v9531
  %v9533 = vcombine.high %v9532, %v9532
  %v9535 = vunpack.c.l.s4 1983009808
  %v9536 = vunpack.c.0.s8 %v9535
  %v9537 = vlaneseq
  %v9538 = vshrl.u32 %v9537, 7
  %v9539 = vsub.s32 %v9536, %v9538
  %v9540 = vrot.slane %v9483, %v9539
  %v9541 = vcombine.high %v9540, %v9540
  %v9543 = vunpack.c.l.s4 1983009808
  %v9544 = vunpack.c.0.s8 %v9543
  %v9545 = vlaneseq
  %v9546 = vshrl.u32 %v9545, 7
  %v9547 = vsub.s32 %v9544, %v9546
  %v9548 = vrot.slane %v9484, %v9547
  %v9549 = vcombine.high %v9548, %v9548
  %v9551 = vunpack.c.l.s4 1983009808
  %v9552 = vunpack.c.0.s8 %v9551
  %v9553 = vlaneseq
  %v9554 = vshrl.u32 %v9553, 7
  %v9555 = vsub.s32 %v9552, %v9554
  %v9556 = vrot.slane %v9485, %v9555
  %v9557 = vcombine.high %v9556, %v9556
  %v9559 = vshrl.u32 %v9500, 16
  %v9561 = vrot.slane %v9559, 6
  %v9562 = vshll.u32 %v9500, 16
  %v9564 = vrot.slane %v9562, 7
  %v9565 = vor.u32 %v9561, %v9564
  %v9566 = vrot.slane %v9565, 2
  %v9568 = vshll.u32 %v9501, 16
  %v9570 = vrot.slane %v9568, 7
  %v9571 = vsel %vm8211, %v9566, %v9570
  %v9573 = vshrl.u32 %v9508, 16
  %v9575 = vrot.slane %v9573, 6
  %v9576 = vshll.u32 %v9508, 16
  %v9578 = vrot.slane %v9576, 7
  %v9579 = vor.u32 %v9575, %v9578
  %v9580 = vrot.slane %v9579, 2
  %v9582 = vshll.u32 %v9509, 16
  %v9584 = vrot.slane %v9582, 7
  %v9585 = vsel %vm8211, %v9580, %v9584
  %v9587 = vshrl.u32 %v9516, 16
  %v9589 = vrot.slane %v9587, 6
  %v9590 = vshll.u32 %v9516, 16
  %v9592 = vrot.slane %v9590, 7
  %v9593 = vor.u32 %v9589, %v9592
  %v9594 = vrot.slane %v9593, 2
  %v9596 = vshll.u32 %v9517, 16
  %v9598 = vrot.slane %v9596, 7
  %v9599 = vsel %vm8211, %v9594, %v9598
  %v9601 = vshrl.u32 %v9524, 16
  %v9603 = vrot.slane %v9601, 6
  %v9604 = vshll.u32 %v9524, 16
  %v9606 = vrot.slane %v9604, 7
  %v9607 = vor.u32 %v9603, %v9606
  %v9608 = vrot.slane %v9607, 2
  %v9610 = vshll.u32 %v9525, 16
  %v9612 = vrot.slane %v9610, 7
  %v9613 = vsel %vm8211, %v9608, %v9612
  %v9615 = vshrl.u32 %v9532, 16
  %v9617 = vrot.slane %v9615, 6
  %v9618 = vshll.u32 %v9532, 16
  %v9620 = vrot.slane %v9618, 7
  %v9621 = vor.u32 %v9617, %v9620
  %v9622 = vrot.slane %v9621, 2
  %v9624 = vshll.u32 %v9533, 16
  %v9626 = vrot.slane %v9624, 7
  %v9627 = vsel %vm8211, %v9622, %v9626
  %v9629 = vshrl.u32 %v9540, 16
  %v9631 = vrot.slane %v9629, 6
  %v9632 = vshll.u32 %v9540, 16
  %v9634 = vrot.slane %v9632, 7
  %v9635 = vor.u32 %v9631, %v9634
  %v9636 = vrot.slane %v9635, 2
  %v9638 = vshll.u32 %v9541, 16
  %v9640 = vrot.slane %v9638, 7
  %v9641 = vsel %vm8211, %v9636, %v9640
  %v9643 = vshrl.u32 %v9548, 16
  %v9645 = vrot.slane %v9643, 6
  %v9646 = vshll.u32 %v9548, 16
  %v9648 = vrot.slane %v9646, 7
  %v9649 = vor.u32 %v9645, %v9648
  %v9650 = vrot.slane %v9649, 2
  %v9652 = vshll.u32 %v9549, 16
  %v9654 = vrot.slane %v9652, 7
  %v9655 = vsel %vm8211, %v9650, %v9654
  %v9657 = vshrl.u32 %v9556, 16
  %v9659 = vrot.slane %v9657, 6
  %v9660 = vshll.u32 %v9556, 16
  %v9662 = vrot.slane %v9660, 7
  %v9663 = vor.u32 %v9659, %v9662
  %v9664 = vrot.slane %v9663, 2
  %v9666 = vshll.u32 %v9557, 16
  %v9668 = vrot.slane %v9666, 7
  %v9669 = vsel %vm8211, %v9664, %v9668
  %9678 = vst [vmem:[#allocation5 + $0x1c] sm:$0x3] %v9571
  %9679 = vst [vmem:[#allocation5 + $0x3c] sm:$0x3] %v9585
  %9680 = vst [vmem:[#allocation5 + $0x5c] sm:$0x3] %v9599
  %9681 = vst [vmem:[#allocation5 + $0x7c] sm:$0x3] %v9613
  %9682 = vst [vmem:[#allocation5 + $0x9c] sm:$0x3] %v9627
  %9683 = vst [vmem:[#allocation5 + $0xbc] sm:$0x3] %v9641
  %9684 = vst [vmem:[#allocation5 + $0xdc] sm:$0x3] %v9655
  %9685 = vst [vmem:[#allocation5 + $0xfc] sm:$0x3] %v9669
  %v9686 = vld [vmem:[%s9461] sm:$0x7]
  %v9687 = vld [vmem:[%s9461 + $0x4] sm:$0x7]
  %v9688 = vld [vmem:[%s9461 + $0x8] sm:$0x7]
  %v9689 = vld [vmem:[%s9461 + $0xc] sm:$0x7]
  %v9690 = vld [vmem:[%s9461 + $0x14] sm:$0x7]
  %v9691 = vld [vmem:[%s9461 + $0x18] sm:$0x7]
  %v9692 = vld [vmem:[%s9461 + $0x1c] sm:$0x7]
  %v9693 = vld [vmem:[%s9461 + $0x20] sm:$0x7]
  %v9703 = vunpack.c.l.s4 1983009808
  %v9704 = vunpack.c.0.s8 %v9703
  %v9705 = vlaneseq
  %v9706 = vshrl.u32 %v9705, 7
  %v9707 = vsub.s32 %v9704, %v9706
  %v9708 = vrot.slane %v9686, %v9707
  %v9709 = vcombine.high %v9708, %v9708
  %v9711 = vunpack.c.l.s4 1983009808
  %v9712 = vunpack.c.0.s8 %v9711
  %v9713 = vlaneseq
  %v9714 = vshrl.u32 %v9713, 7
  %v9715 = vsub.s32 %v9712, %v9714
  %v9716 = vrot.slane %v9687, %v9715
  %v9717 = vcombine.high %v9716, %v9716
  %v9719 = vunpack.c.l.s4 1983009808
  %v9720 = vunpack.c.0.s8 %v9719
  %v9721 = vlaneseq
  %v9722 = vshrl.u32 %v9721, 7
  %v9723 = vsub.s32 %v9720, %v9722
  %v9724 = vrot.slane %v9688, %v9723
  %v9725 = vcombine.high %v9724, %v9724
  %v9727 = vunpack.c.l.s4 1983009808
  %v9728 = vunpack.c.0.s8 %v9727
  %v9729 = vlaneseq
  %v9730 = vshrl.u32 %v9729, 7
  %v9731 = vsub.s32 %v9728, %v9730
  %v9732 = vrot.slane %v9689, %v9731
  %v9733 = vcombine.high %v9732, %v9732
  %v9735 = vunpack.c.l.s4 1983009808
  %v9736 = vunpack.c.0.s8 %v9735
  %v9737 = vlaneseq
  %v9738 = vshrl.u32 %v9737, 7
  %v9739 = vsub.s32 %v9736, %v9738
  %v9740 = vrot.slane %v9690, %v9739
  %v9741 = vcombine.high %v9740, %v9740
  %v9743 = vunpack.c.l.s4 1983009808
  %v9744 = vunpack.c.0.s8 %v9743
  %v9745 = vlaneseq
  %v9746 = vshrl.u32 %v9745, 7
  %v9747 = vsub.s32 %v9744, %v9746
  %v9748 = vrot.slane %v9691, %v9747
  %v9749 = vcombine.high %v9748, %v9748
  %v9751 = vunpack.c.l.s4 1983009808
  %v9752 = vunpack.c.0.s8 %v9751
  %v9753 = vlaneseq
  %v9754 = vshrl.u32 %v9753, 7
  %v9755 = vsub.s32 %v9752, %v9754
  %v9756 = vrot.slane %v9692, %v9755
  %v9757 = vcombine.high %v9756, %v9756
  %v9759 = vunpack.c.l.s4 1983009808
  %v9760 = vunpack.c.0.s8 %v9759
  %v9761 = vlaneseq
  %v9762 = vshrl.u32 %v9761, 7
  %v9763 = vsub.s32 %v9760, %v9762
  %v9764 = vrot.slane %v9693, %v9763
  %v9765 = vcombine.high %v9764, %v9764
  %v9767 = vshrl.u32 %v9708, 16
  %v9769 = vrot.slane %v9767, 6
  %v9770 = vshll.u32 %v9708, 16
  %v9772 = vrot.slane %v9770, 7
  %v9773 = vor.u32 %v9769, %v9772
  %v9774 = vrot.slane %v9773, 2
  %v9776 = vshll.u32 %v9709, 16
  %v9778 = vrot.slane %v9776, 7
  %v9779 = vsel %vm8211, %v9774, %v9778
  %v9781 = vshrl.u32 %v9716, 16
  %v9783 = vrot.slane %v9781, 6
  %v9784 = vshll.u32 %v9716, 16
  %v9786 = vrot.slane %v9784, 7
  %v9787 = vor.u32 %v9783, %v9786
  %v9788 = vrot.slane %v9787, 2
  %v9790 = vshll.u32 %v9717, 16
  %v9792 = vrot.slane %v9790, 7
  %v9793 = vsel %vm8211, %v9788, %v9792
  %v9795 = vshrl.u32 %v9724, 16
  %v9797 = vrot.slane %v9795, 6
  %v9798 = vshll.u32 %v9724, 16
  %v9800 = vrot.slane %v9798, 7
  %v9801 = vor.u32 %v9797, %v9800
  %v9802 = vrot.slane %v9801, 2
  %v9804 = vshll.u32 %v9725, 16
  %v9806 = vrot.slane %v9804, 7
  %v9807 = vsel %vm8211, %v9802, %v9806
  %v9809 = vshrl.u32 %v9732, 16
  %v9811 = vrot.slane %v9809, 6
  %v9812 = vshll.u32 %v9732, 16
  %v9814 = vrot.slane %v9812, 7
  %v9815 = vor.u32 %v9811, %v9814
  %v9816 = vrot.slane %v9815, 2
  %v9818 = vshll.u32 %v9733, 16
  %v9820 = vrot.slane %v9818, 7
  %v9821 = vsel %vm8211, %v9816, %v9820
  %v9823 = vshrl.u32 %v9740, 16
  %v9825 = vrot.slane %v9823, 6
  %v9826 = vshll.u32 %v9740, 16
  %v9828 = vrot.slane %v9826, 7
  %v9829 = vor.u32 %v9825, %v9828
  %v9830 = vrot.slane %v9829, 2
  %v9832 = vshll.u32 %v9741, 16
  %v9834 = vrot.slane %v9832, 7
  %v9835 = vsel %vm8211, %v9830, %v9834
  %v9837 = vshrl.u32 %v9748, 16
  %v9839 = vrot.slane %v9837, 6
  %v9840 = vshll.u32 %v9748, 16
  %v9842 = vrot.slane %v9840, 7
  %v9843 = vor.u32 %v9839, %v9842
  %v9844 = vrot.slane %v9843, 2
  %v9846 = vshll.u32 %v9749, 16
  %v9848 = vrot.slane %v9846, 7
  %v9849 = vsel %vm8211, %v9844, %v9848
  %v9851 = vshrl.u32 %v9756, 16
  %v9853 = vrot.slane %v9851, 6
  %v9854 = vshll.u32 %v9756, 16
  %v9856 = vrot.slane %v9854, 7
  %v9857 = vor.u32 %v9853, %v9856
  %v9858 = vrot.slane %v9857, 2
  %v9860 = vshll.u32 %v9757, 16
  %v9862 = vrot.slane %v9860, 7
  %v9863 = vsel %vm8211, %v9858, %v9862
  %v9865 = vshrl.u32 %v9764, 16
  %v9867 = vrot.slane %v9865, 6
  %v9868 = vshll.u32 %v9764, 16
  %v9870 = vrot.slane %v9868, 7
  %v9871 = vor.u32 %v9867, %v9870
  %v9872 = vrot.slane %v9871, 2
  %v9874 = vshll.u32 %v9765, 16
  %v9876 = vrot.slane %v9874, 7
  %v9877 = vsel %vm8211, %v9872, %v9876
  %9886 = vst [vmem:[#allocation5 + $0x1e] sm:$0x3] %v9779
  %9887 = vst [vmem:[#allocation5 + $0x3e] sm:$0x3] %v9793
  %9888 = vst [vmem:[#allocation5 + $0x5e] sm:$0x3] %v9807
  %9889 = vst [vmem:[#allocation5 + $0x7e] sm:$0x3] %v9821
  %9890 = vst [vmem:[#allocation5 + $0x9e] sm:$0x3] %v9835
  %9891 = vst [vmem:[#allocation5 + $0xbe] sm:$0x3] %v9849
  %9892 = vst [vmem:[#allocation5 + $0xde] sm:$0x3] %v9863
  %9893 = vst [vmem:[#allocation5 + $0xfe] sm:$0x3] %v9877
  %v9894 = vld [vmem:[#allocation5] sm:$0xff]
  %v9895 = vld [vmem:[#allocation5 + $0x8] sm:$0xff]
  %v9896 = vld [vmem:[#allocation5 + $0x10] sm:$0xff]
  %v9897 = vld [vmem:[#allocation5 + $0x18] sm:$0xff]
  %v9898 = vld [vmem:[#allocation5 + $0x20] sm:$0xff]
  %v9899 = vld [vmem:[#allocation5 + $0x28] sm:$0xff]
  %v9900 = vld [vmem:[#allocation5 + $0x30] sm:$0xff]
  %v9901 = vld [vmem:[#allocation5 + $0x38] sm:$0xff]
  %v9902 = vld [vmem:[#allocation5 + $0x40] sm:$0xff]
  %v9903 = vld [vmem:[#allocation5 + $0x48] sm:$0xff]
  %v9904 = vld [vmem:[#allocation5 + $0x50] sm:$0xff]
  %v9905 = vld [vmem:[#allocation5 + $0x58] sm:$0xff]
  %v9906 = vld [vmem:[#allocation5 + $0x60] sm:$0xff]
  %v9907 = vld [vmem:[#allocation5 + $0x68] sm:$0xff]
  %v9908 = vld [vmem:[#allocation5 + $0x70] sm:$0xff]
  %v9909 = vld [vmem:[#allocation5 + $0x78] sm:$0xff]
  %v9910 = vld [vmem:[#allocation5 + $0x80] sm:$0xff]
  %v9911 = vld [vmem:[#allocation5 + $0x88] sm:$0xff]
  %v9912 = vld [vmem:[#allocation5 + $0x90] sm:$0xff]
  %v9913 = vld [vmem:[#allocation5 + $0x98] sm:$0xff]
  %v9914 = vld [vmem:[#allocation5 + $0xa0] sm:$0xff]
  %v9915 = vld [vmem:[#allocation5 + $0xa8] sm:$0xff]
  %v9916 = vld [vmem:[#allocation5 + $0xb0] sm:$0xff]
  %v9917 = vld [vmem:[#allocation5 + $0xb8] sm:$0xff]
  %v9918 = vld [vmem:[#allocation5 + $0xc0] sm:$0xff]
  %v9919 = vld [vmem:[#allocation5 + $0xc8] sm:$0xff]
  %v9920 = vld [vmem:[#allocation5 + $0xd0] sm:$0xff]
  %v9921 = vld [vmem:[#allocation5 + $0xd8] sm:$0xff]
  %v9922 = vld [vmem:[#allocation5 + $0xe0] sm:$0xff]
  %v9923 = vld [vmem:[#allocation5 + $0xe8] sm:$0xff]
  %v9924 = vld [vmem:[#allocation5 + $0xf0] sm:$0xff]
  %v9925 = vld [vmem:[#allocation5 + $0xf8] sm:$0xff]
  %v9926 = vld [vmem:[%s3] sm:$0xff]
  %v9927 = vld [vmem:[%s3 + $0x8] sm:$0xff]
  %v9928 = vld [vmem:[%s3 + $0x10] sm:$0xff]
  %v9929 = vld [vmem:[%s3 + $0x18] sm:$0xff]
  %v9930 = vld [vmem:[%s3 + $0x20] sm:$0xff]
  %v9931 = vld [vmem:[%s3 + $0x28] sm:$0xff]
  %v9932 = vld [vmem:[%s3 + $0x30] sm:$0xff]
  %v9933 = vld [vmem:[%s3 + $0x38] sm:$0xff]
  %v9934 = vld [vmem:[%s3 + $0x40] sm:$0xff]
  %v9935 = vld [vmem:[%s3 + $0x48] sm:$0xff]
  %v9936 = vld [vmem:[%s3 + $0x50] sm:$0xff]
  %v9937 = vld [vmem:[%s3 + $0x58] sm:$0xff]
  %v9938 = vld [vmem:[%s3 + $0x60] sm:$0xff]
  %v9939 = vld [vmem:[%s3 + $0x68] sm:$0xff]
  %v9940 = vld [vmem:[%s3 + $0x70] sm:$0xff]
  %v9941 = vld [vmem:[%s3 + $0x78] sm:$0xff]
  %v9942 = vld [vmem:[%s3 + $0x80] sm:$0xff]
  %v9943 = vld [vmem:[%s3 + $0x88] sm:$0xff]
  %v9944 = vld [vmem:[%s3 + $0x90] sm:$0xff]
  %v9945 = vld [vmem:[%s3 + $0x98] sm:$0xff]
  %v9946 = vld [vmem:[%s3 + $0xa0] sm:$0xff]
  %v9947 = vld [vmem:[%s3 + $0xa8] sm:$0xff]
  %v9948 = vld [vmem:[%s3 + $0xb0] sm:$0xff]
  %v9949 = vld [vmem:[%s3 + $0xb8] sm:$0xff]
  %v9950 = vld [vmem:[%s3 + $0xc0] sm:$0xff]
  %v9951 = vld [vmem:[%s3 + $0xc8] sm:$0xff]
  %v9952 = vld [vmem:[%s3 + $0xd0] sm:$0xff]
  %v9953 = vld [vmem:[%s3 + $0xd8] sm:$0xff]
  %v9954 = vld [vmem:[%s3 + $0xe0] sm:$0xff]
  %v9955 = vld [vmem:[%s3 + $0xe8] sm:$0xff]
  %v9956 = vld [vmem:[%s3 + $0xf0] sm:$0xff]
  %v9957 = vld [vmem:[%s3 + $0xf8] sm:$0xff]
  %v9958 = vld [vmem:[%s3 + $0x100] sm:$0xff]
  %v9959 = vld [vmem:[%s3 + $0x108] sm:$0xff]
  %v9960 = vld [vmem:[%s3 + $0x110] sm:$0xff]
  %v9961 = vld [vmem:[%s3 + $0x118] sm:$0xff]
  %v9962 = vld [vmem:[%s3 + $0x120] sm:$0xff]
  %v9963 = vld [vmem:[%s3 + $0x128] sm:$0xff]
  %v9964 = vld [vmem:[%s3 + $0x130] sm:$0xff]
  %v9965 = vld [vmem:[%s3 + $0x138] sm:$0xff]
  %v9966 = vld [vmem:[%s3 + $0x140] sm:$0xff]
  %v9967 = vld [vmem:[%s3 + $0x148] sm:$0xff]
  %v9968 = vld [vmem:[%s3 + $0x150] sm:$0xff]
  %v9969 = vld [vmem:[%s3 + $0x158] sm:$0xff]
  %v9970 = vld [vmem:[%s3 + $0x160] sm:$0xff]
  %v9971 = vld [vmem:[%s3 + $0x168] sm:$0xff]
  %v9972 = vld [vmem:[%s3 + $0x170] sm:$0xff]
  %v9973 = vld [vmem:[%s3 + $0x178] sm:$0xff]
  %v9974 = vld [vmem:[%s3 + $0x180] sm:$0xff]
  %v9975 = vld [vmem:[%s3 + $0x188] sm:$0xff]
  %v9976 = vld [vmem:[%s3 + $0x190] sm:$0xff]
  %v9977 = vld [vmem:[%s3 + $0x198] sm:$0xff]
  %v9978 = vld [vmem:[%s3 + $0x1a0] sm:$0xff]
  %v9979 = vld [vmem:[%s3 + $0x1a8] sm:$0xff]
  %v9980 = vld [vmem:[%s3 + $0x1b0] sm:$0xff]
  %v9981 = vld [vmem:[%s3 + $0x1b8] sm:$0xff]
  %v9982 = vld [vmem:[%s3 + $0x1c0] sm:$0xff]
  %v9983 = vld [vmem:[%s3 + $0x1c8] sm:$0xff]
  %v9984 = vld [vmem:[%s3 + $0x1d0] sm:$0xff]
  %v9985 = vld [vmem:[%s3 + $0x1d8] sm:$0xff]
  %v9986 = vld [vmem:[%s3 + $0x1e0] sm:$0xff]
  %v9987 = vld [vmem:[%s3 + $0x1e8] sm:$0xff]
  %v9988 = vld [vmem:[%s3 + $0x1f0] sm:$0xff]
  %v9989 = vld [vmem:[%s3 + $0x1f8] sm:$0xff]
  %v9990 = vld [vmem:[%s3 + $0x200] sm:$0xff]
  %v9991 = vld [vmem:[%s3 + $0x208] sm:$0xff]
  %v9992 = vld [vmem:[%s3 + $0x210] sm:$0xff]
  %v9993 = vld [vmem:[%s3 + $0x218] sm:$0xff]
  %v9994 = vld [vmem:[%s3 + $0x220] sm:$0xff]
  %v9995 = vld [vmem:[%s3 + $0x228] sm:$0xff]
  %v9996 = vld [vmem:[%s3 + $0x230] sm:$0xff]
  %v9997 = vld [vmem:[%s3 + $0x238] sm:$0xff]
  %v9998 = vld [vmem:[%s3 + $0x240] sm:$0xff]
  %v9999 = vld [vmem:[%s3 + $0x248] sm:$0xff]
  %v10000 = vld [vmem:[%s3 + $0x250] sm:$0xff]
  %v10001 = vld [vmem:[%s3 + $0x258] sm:$0xff]
  %v10002 = vld [vmem:[%s3 + $0x260] sm:$0xff]
  %v10003 = vld [vmem:[%s3 + $0x268] sm:$0xff]
  %v10004 = vld [vmem:[%s3 + $0x270] sm:$0xff]
  %v10005 = vld [vmem:[%s3 + $0x278] sm:$0xff]
  %v10006 = vld [vmem:[%s3 + $0x280] sm:$0xff]
  %v10007 = vld [vmem:[%s3 + $0x288] sm:$0xff]
  %v10008 = vld [vmem:[%s3 + $0x290] sm:$0xff]
  %v10009 = vld [vmem:[%s3 + $0x298] sm:$0xff]
  %v10010 = vld [vmem:[%s3 + $0x2a0] sm:$0xff]
  %v10011 = vld [vmem:[%s3 + $0x2a8] sm:$0xff]
  %v10012 = vld [vmem:[%s3 + $0x2b0] sm:$0xff]
  %v10013 = vld [vmem:[%s3 + $0x2b8] sm:$0xff]
  %v10014 = vld [vmem:[%s3 + $0x2c0] sm:$0xff]
  %v10015 = vld [vmem:[%s3 + $0x2c8] sm:$0xff]
  %v10016 = vld [vmem:[%s3 + $0x2d0] sm:$0xff]
  %v10017 = vld [vmem:[%s3 + $0x2d8] sm:$0xff]
  %v10018 = vld [vmem:[%s3 + $0x2e0] sm:$0xff]
  %v10019 = vld [vmem:[%s3 + $0x2e8] sm:$0xff]
  %v10020 = vld [vmem:[%s3 + $0x2f0] sm:$0xff]
  %v10021 = vld [vmem:[%s3 + $0x2f8] sm:$0xff]
  %v10022 = vld [vmem:[%s3 + $0x300] sm:$0xff]
  %v10023 = vld [vmem:[%s3 + $0x308] sm:$0xff]
  %v10024 = vld [vmem:[%s3 + $0x310] sm:$0xff]
  %v10025 = vld [vmem:[%s3 + $0x318] sm:$0xff]
  %v10026 = vld [vmem:[%s3 + $0x320] sm:$0xff]
  %v10027 = vld [vmem:[%s3 + $0x328] sm:$0xff]
  %v10028 = vld [vmem:[%s3 + $0x330] sm:$0xff]
  %v10029 = vld [vmem:[%s3 + $0x338] sm:$0xff]
  %v10030 = vld [vmem:[%s3 + $0x340] sm:$0xff]
  %v10031 = vld [vmem:[%s3 + $0x348] sm:$0xff]
  %v10032 = vld [vmem:[%s3 + $0x350] sm:$0xff]
  %v10033 = vld [vmem:[%s3 + $0x358] sm:$0xff]
  %v10034 = vld [vmem:[%s3 + $0x360] sm:$0xff]
  %v10035 = vld [vmem:[%s3 + $0x368] sm:$0xff]
  %v10036 = vld [vmem:[%s3 + $0x370] sm:$0xff]
  %v10037 = vld [vmem:[%s3 + $0x378] sm:$0xff]
  %v10038 = vld [vmem:[%s3 + $0x380] sm:$0xff]
  %v10039 = vld [vmem:[%s3 + $0x388] sm:$0xff]
  %v10040 = vld [vmem:[%s3 + $0x390] sm:$0xff]
  %v10041 = vld [vmem:[%s3 + $0x398] sm:$0xff]
  %v10042 = vld [vmem:[%s3 + $0x3a0] sm:$0xff]
  %v10043 = vld [vmem:[%s3 + $0x3a8] sm:$0xff]
  %v10044 = vld [vmem:[%s3 + $0x3b0] sm:$0xff]
  %v10045 = vld [vmem:[%s3 + $0x3b8] sm:$0xff]
  %v10046 = vld [vmem:[%s3 + $0x3c0] sm:$0xff]
  %v10047 = vld [vmem:[%s3 + $0x3c8] sm:$0xff]
  %v10048 = vld [vmem:[%s3 + $0x3d0] sm:$0xff]
  %v10049 = vld [vmem:[%s3 + $0x3d8] sm:$0xff]
  %v10050 = vld [vmem:[%s3 + $0x3e0] sm:$0xff]
  %v10051 = vld [vmem:[%s3 + $0x3e8] sm:$0xff]
  %v10052 = vld [vmem:[%s3 + $0x3f0] sm:$0xff]
  %v10053 = vld [vmem:[%s3 + $0x3f8] sm:$0xff]
  %v10054 = vld [vmem:[%s3 + $0x400] sm:$0xff]
  %v10055 = vld [vmem:[%s3 + $0x408] sm:$0xff]
  %v10056 = vld [vmem:[%s3 + $0x410] sm:$0xff]
  %v10057 = vld [vmem:[%s3 + $0x418] sm:$0xff]
  %v10058 = vld [vmem:[%s3 + $0x420] sm:$0xff]
  %v10059 = vld [vmem:[%s3 + $0x428] sm:$0xff]
  %v10060 = vld [vmem:[%s3 + $0x430] sm:$0xff]
  %v10061 = vld [vmem:[%s3 + $0x438] sm:$0xff]
  %v10062 = vld [vmem:[%s3 + $0x440] sm:$0xff]
  %v10063 = vld [vmem:[%s3 + $0x448] sm:$0xff]
  %v10064 = vld [vmem:[%s3 + $0x450] sm:$0xff]
  %v10065 = vld [vmem:[%s3 + $0x458] sm:$0xff]
  %v10066 = vld [vmem:[%s3 + $0x460] sm:$0xff]
  %v10067 = vld [vmem:[%s3 + $0x468] sm:$0xff]
  %v10068 = vld [vmem:[%s3 + $0x470] sm:$0xff]
  %v10069 = vld [vmem:[%s3 + $0x478] sm:$0xff]
  %v10070 = vld [vmem:[%s3 + $0x480] sm:$0xff]
  %v10071 = vld [vmem:[%s3 + $0x488] sm:$0xff]
  %v10072 = vld [vmem:[%s3 + $0x490] sm:$0xff]
  %v10073 = vld [vmem:[%s3 + $0x498] sm:$0xff]
  %v10074 = vld [vmem:[%s3 + $0x4a0] sm:$0xff]
  %v10075 = vld [vmem:[%s3 + $0x4a8] sm:$0xff]
  %v10076 = vld [vmem:[%s3 + $0x4b0] sm:$0xff]
  %v10077 = vld [vmem:[%s3 + $0x4b8] sm:$0xff]
  %v10078 = vld [vmem:[%s3 + $0x4c0] sm:$0xff]
  %v10079 = vld [vmem:[%s3 + $0x4c8] sm:$0xff]
  %v10080 = vld [vmem:[%s3 + $0x4d0] sm:$0xff]
  %v10081 = vld [vmem:[%s3 + $0x4d8] sm:$0xff]
  %v10082 = vld [vmem:[%s3 + $0x4e0] sm:$0xff]
  %v10083 = vld [vmem:[%s3 + $0x4e8] sm:$0xff]
  %v10084 = vld [vmem:[%s3 + $0x4f0] sm:$0xff]
  %v10085 = vld [vmem:[%s3 + $0x4f8] sm:$0xff]
  %v10086 = vld [vmem:[%s3 + $0x500] sm:$0xff]
  %v10087 = vld [vmem:[%s3 + $0x508] sm:$0xff]
  %v10088 = vld [vmem:[%s3 + $0x510] sm:$0xff]
  %v10089 = vld [vmem:[%s3 + $0x518] sm:$0xff]
  %v10090 = vld [vmem:[%s3 + $0x520] sm:$0xff]
  %v10091 = vld [vmem:[%s3 + $0x528] sm:$0xff]
  %v10092 = vld [vmem:[%s3 + $0x530] sm:$0xff]
  %v10093 = vld [vmem:[%s3 + $0x538] sm:$0xff]
  %v10094 = vld [vmem:[%s3 + $0x540] sm:$0xff]
  %v10095 = vld [vmem:[%s3 + $0x548] sm:$0xff]
  %v10096 = vld [vmem:[%s3 + $0x550] sm:$0xff]
  %v10097 = vld [vmem:[%s3 + $0x558] sm:$0xff]
  %v10098 = vld [vmem:[%s3 + $0x560] sm:$0xff]
  %v10099 = vld [vmem:[%s3 + $0x568] sm:$0xff]
  %v10100 = vld [vmem:[%s3 + $0x570] sm:$0xff]
  %v10101 = vld [vmem:[%s3 + $0x578] sm:$0xff]
  %v10102 = vld [vmem:[%s3 + $0x580] sm:$0xff]
  %v10103 = vld [vmem:[%s3 + $0x588] sm:$0xff]
  %v10104 = vld [vmem:[%s3 + $0x590] sm:$0xff]
  %v10105 = vld [vmem:[%s3 + $0x598] sm:$0xff]
  %v10106 = vld [vmem:[%s3 + $0x5a0] sm:$0xff]
  %v10107 = vld [vmem:[%s3 + $0x5a8] sm:$0xff]
  %v10108 = vld [vmem:[%s3 + $0x5b0] sm:$0xff]
  %v10109 = vld [vmem:[%s3 + $0x5b8] sm:$0xff]
  %v10110 = vld [vmem:[%s3 + $0x5c0] sm:$0xff]
  %v10111 = vld [vmem:[%s3 + $0x5c8] sm:$0xff]
  %v10112 = vld [vmem:[%s3 + $0x5d0] sm:$0xff]
  %v10113 = vld [vmem:[%s3 + $0x5d8] sm:$0xff]
  %v10114 = vld [vmem:[%s3 + $0x5e0] sm:$0xff]
  %v10115 = vld [vmem:[%s3 + $0x5e8] sm:$0xff]
  %v10116 = vld [vmem:[%s3 + $0x5f0] sm:$0xff]
  %v10117 = vld [vmem:[%s3 + $0x5f8] sm:$0xff]
  %v10118 = vld [vmem:[%s3 + $0x600] sm:$0xff]
  %v10119 = vld [vmem:[%s3 + $0x608] sm:$0xff]
  %v10120 = vld [vmem:[%s3 + $0x610] sm:$0xff]
  %v10121 = vld [vmem:[%s3 + $0x618] sm:$0xff]
  %v10122 = vld [vmem:[%s3 + $0x620] sm:$0xff]
  %v10123 = vld [vmem:[%s3 + $0x628] sm:$0xff]
  %v10124 = vld [vmem:[%s3 + $0x630] sm:$0xff]
  %v10125 = vld [vmem:[%s3 + $0x638] sm:$0xff]
  %v10126 = vld [vmem:[%s3 + $0x640] sm:$0xff]
  %v10127 = vld [vmem:[%s3 + $0x648] sm:$0xff]
  %v10128 = vld [vmem:[%s3 + $0x650] sm:$0xff]
  %v10129 = vld [vmem:[%s3 + $0x658] sm:$0xff]
  %v10130 = vld [vmem:[%s3 + $0x660] sm:$0xff]
  %v10131 = vld [vmem:[%s3 + $0x668] sm:$0xff]
  %v10132 = vld [vmem:[%s3 + $0x670] sm:$0xff]
  %v10133 = vld [vmem:[%s3 + $0x678] sm:$0xff]
  %v10134 = vld [vmem:[%s3 + $0x680] sm:$0xff]
  %v10135 = vld [vmem:[%s3 + $0x688] sm:$0xff]
  %v10136 = vld [vmem:[%s3 + $0x690] sm:$0xff]
  %v10137 = vld [vmem:[%s3 + $0x698] sm:$0xff]
  %v10138 = vld [vmem:[%s3 + $0x6a0] sm:$0xff]
  %v10139 = vld [vmem:[%s3 + $0x6a8] sm:$0xff]
  %v10140 = vld [vmem:[%s3 + $0x6b0] sm:$0xff]
  %v10141 = vld [vmem:[%s3 + $0x6b8] sm:$0xff]
  %v10142 = vld [vmem:[%s3 + $0x6c0] sm:$0xff]
  %v10143 = vld [vmem:[%s3 + $0x6c8] sm:$0xff]
  %v10144 = vld [vmem:[%s3 + $0x6d0] sm:$0xff]
  %v10145 = vld [vmem:[%s3 + $0x6d8] sm:$0xff]
  %v10146 = vld [vmem:[%s3 + $0x6e0] sm:$0xff]
  %v10147 = vld [vmem:[%s3 + $0x6e8] sm:$0xff]
  %v10148 = vld [vmem:[%s3 + $0x6f0] sm:$0xff]
  %v10149 = vld [vmem:[%s3 + $0x6f8] sm:$0xff]
  %v10150 = vld [vmem:[%s3 + $0x700] sm:$0xff]
  %v10151 = vld [vmem:[%s3 + $0x708] sm:$0xff]
  %v10152 = vld [vmem:[%s3 + $0x710] sm:$0xff]
  %v10153 = vld [vmem:[%s3 + $0x718] sm:$0xff]
  %v10154 = vld [vmem:[%s3 + $0x720] sm:$0xff]
  %v10155 = vld [vmem:[%s3 + $0x728] sm:$0xff]
  %v10156 = vld [vmem:[%s3 + $0x730] sm:$0xff]
  %v10157 = vld [vmem:[%s3 + $0x738] sm:$0xff]
  %v10158 = vld [vmem:[%s3 + $0x740] sm:$0xff]
  %v10159 = vld [vmem:[%s3 + $0x748] sm:$0xff]
  %v10160 = vld [vmem:[%s3 + $0x750] sm:$0xff]
  %v10161 = vld [vmem:[%s3 + $0x758] sm:$0xff]
  %v10162 = vld [vmem:[%s3 + $0x760] sm:$0xff]
  %v10163 = vld [vmem:[%s3 + $0x768] sm:$0xff]
  %v10164 = vld [vmem:[%s3 + $0x770] sm:$0xff]
  %v10165 = vld [vmem:[%s3 + $0x778] sm:$0xff]
  %v10166 = vld [vmem:[%s3 + $0x780] sm:$0xff]
  %v10167 = vld [vmem:[%s3 + $0x788] sm:$0xff]
  %v10168 = vld [vmem:[%s3 + $0x790] sm:$0xff]
  %v10169 = vld [vmem:[%s3 + $0x798] sm:$0xff]
  %v10170 = vld [vmem:[%s3 + $0x7a0] sm:$0xff]
  %v10171 = vld [vmem:[%s3 + $0x7a8] sm:$0xff]
  %v10172 = vld [vmem:[%s3 + $0x7b0] sm:$0xff]
  %v10173 = vld [vmem:[%s3 + $0x7b8] sm:$0xff]
  %v10174 = vld [vmem:[%s3 + $0x7c0] sm:$0xff]
  %v10175 = vld [vmem:[%s3 + $0x7c8] sm:$0xff]
  %v10176 = vld [vmem:[%s3 + $0x7d0] sm:$0xff]
  %v10177 = vld [vmem:[%s3 + $0x7d8] sm:$0xff]
  %v10178 = vld [vmem:[%s3 + $0x7e0] sm:$0xff]
  %v10179 = vld [vmem:[%s3 + $0x7e8] sm:$0xff]
  %v10180 = vld [vmem:[%s3 + $0x7f0] sm:$0xff]
  %v10181 = vld [vmem:[%s3 + $0x7f8] sm:$0xff]
  %v10214 = vcombine.low %v9894, %v9898
  %v10215 = vcombine.high %v9894, %v9898
  %v10216 = vcombine.low %v9902, %v9906
  %v10217 = vcombine.high %v9902, %v9906
  %v10219 = vunpack.c.l.s4 1983009808
  %v10220 = vunpack.c.0.s8 %v10219
  %v10221 = vlaneseq
  %v10222 = vshrl.u32 %v10221, 7
  %v10223 = vsub.s32 %v10220, %v10222
  %v10224 = vrot.slane %v10214, %v10223
  %v10226 = vunpack.c.l.s4 1983009808
  %v10227 = vunpack.c.0.s8 %v10226
  %v10228 = vlaneseq
  %v10229 = vshrl.u32 %v10228, 7
  %v10230 = vsub.s32 %v10227, %v10229
  %v10231 = vrot.slane %v10215, %v10230
  %v10233 = vunpack.c.l.s4 1983009808
  %v10234 = vunpack.c.0.s8 %v10233
  %v10235 = vlaneseq
  %v10236 = vshrl.u32 %v10235, 7
  %v10237 = vsub.s32 %v10234, %v10236
  %v10238 = vrot.slane %v10216, %v10237
  %v10240 = vunpack.c.l.s4 1983009808
  %v10241 = vunpack.c.0.s8 %v10240
  %v10242 = vlaneseq
  %v10243 = vshrl.u32 %v10242, 7
  %v10244 = vsub.s32 %v10241, %v10243
  %v10245 = vrot.slane %v10217, %v10244
  %v10246 = vcombine.low %v10224, %v10238
  %v10247 = vcombine.high %v10224, %v10238
  %v10248 = vcombine.low %v10231, %v10245
  %v10249 = vcombine.high %v10231, %v10245
  %v10250 = vcombine.low %v9895, %v9899
  %v10251 = vcombine.high %v9895, %v9899
  %v10252 = vcombine.low %v9903, %v9907
  %v10253 = vcombine.high %v9903, %v9907
  %v10255 = vunpack.c.l.s4 1983009808
  %v10256 = vunpack.c.0.s8 %v10255
  %v10257 = vlaneseq
  %v10258 = vshrl.u32 %v10257, 7
  %v10259 = vsub.s32 %v10256, %v10258
  %v10260 = vrot.slane %v10250, %v10259
  %v10262 = vunpack.c.l.s4 1983009808
  %v10263 = vunpack.c.0.s8 %v10262
  %v10264 = vlaneseq
  %v10265 = vshrl.u32 %v10264, 7
  %v10266 = vsub.s32 %v10263, %v10265
  %v10267 = vrot.slane %v10251, %v10266
  %v10269 = vunpack.c.l.s4 1983009808
  %v10270 = vunpack.c.0.s8 %v10269
  %v10271 = vlaneseq
  %v10272 = vshrl.u32 %v10271, 7
  %v10273 = vsub.s32 %v10270, %v10272
  %v10274 = vrot.slane %v10252, %v10273
  %v10276 = vunpack.c.l.s4 1983009808
  %v10277 = vunpack.c.0.s8 %v10276
  %v10278 = vlaneseq
  %v10279 = vshrl.u32 %v10278, 7
  %v10280 = vsub.s32 %v10277, %v10279
  %v10281 = vrot.slane %v10253, %v10280
  %v10282 = vcombine.low %v10260, %v10274
  %v10283 = vcombine.high %v10260, %v10274
  %v10284 = vcombine.low %v10267, %v10281
  %v10285 = vcombine.high %v10267, %v10281
  %v10286 = vcombine.low %v9896, %v9900
  %v10287 = vcombine.high %v9896, %v9900
  %v10288 = vcombine.low %v9904, %v9908
  %v10289 = vcombine.high %v9904, %v9908
  %v10291 = vunpack.c.l.s4 1983009808
  %v10292 = vunpack.c.0.s8 %v10291
  %v10293 = vlaneseq
  %v10294 = vshrl.u32 %v10293, 7
  %v10295 = vsub.s32 %v10292, %v10294
  %v10296 = vrot.slane %v10286, %v10295
  %v10298 = vunpack.c.l.s4 1983009808
  %v10299 = vunpack.c.0.s8 %v10298
  %v10300 = vlaneseq
  %v10301 = vshrl.u32 %v10300, 7
  %v10302 = vsub.s32 %v10299, %v10301
  %v10303 = vrot.slane %v10287, %v10302
  %v10305 = vunpack.c.l.s4 1983009808
  %v10306 = vunpack.c.0.s8 %v10305
  %v10307 = vlaneseq
  %v10308 = vshrl.u32 %v10307, 7
  %v10309 = vsub.s32 %v10306, %v10308
  %v10310 = vrot.slane %v10288, %v10309
  %v10312 = vunpack.c.l.s4 1983009808
  %v10313 = vunpack.c.0.s8 %v10312
  %v10314 = vlaneseq
  %v10315 = vshrl.u32 %v10314, 7
  %v10316 = vsub.s32 %v10313, %v10315
  %v10317 = vrot.slane %v10289, %v10316
  %v10318 = vcombine.low %v10296, %v10310
  %v10319 = vcombine.high %v10296, %v10310
  %v10320 = vcombine.low %v10303, %v10317
  %v10321 = vcombine.high %v10303, %v10317
  %v10322 = vcombine.low %v9897, %v9901
  %v10323 = vcombine.high %v9897, %v9901
  %v10324 = vcombine.low %v9905, %v9909
  %v10325 = vcombine.high %v9905, %v9909
  %v10327 = vunpack.c.l.s4 1983009808
  %v10328 = vunpack.c.0.s8 %v10327
  %v10329 = vlaneseq
  %v10330 = vshrl.u32 %v10329, 7
  %v10331 = vsub.s32 %v10328, %v10330
  %v10332 = vrot.slane %v10322, %v10331
  %v10334 = vunpack.c.l.s4 1983009808
  %v10335 = vunpack.c.0.s8 %v10334
  %v10336 = vlaneseq
  %v10337 = vshrl.u32 %v10336, 7
  %v10338 = vsub.s32 %v10335, %v10337
  %v10339 = vrot.slane %v10323, %v10338
  %v10341 = vunpack.c.l.s4 1983009808
  %v10342 = vunpack.c.0.s8 %v10341
  %v10343 = vlaneseq
  %v10344 = vshrl.u32 %v10343, 7
  %v10345 = vsub.s32 %v10342, %v10344
  %v10346 = vrot.slane %v10324, %v10345
  %v10348 = vunpack.c.l.s4 1983009808
  %v10349 = vunpack.c.0.s8 %v10348
  %v10350 = vlaneseq
  %v10351 = vshrl.u32 %v10350, 7
  %v10352 = vsub.s32 %v10349, %v10351
  %v10353 = vrot.slane %v10325, %v10352
  %v10354 = vcombine.low %v10332, %v10346
  %v10355 = vcombine.high %v10332, %v10346
  %v10356 = vcombine.low %v10339, %v10353
  %v10357 = vcombine.high %v10339, %v10353
  %v10358 = vcombine.low %v9910, %v9914
  %v10359 = vcombine.high %v9910, %v9914
  %v10360 = vcombine.low %v9918, %v9922
  %v10361 = vcombine.high %v9918, %v9922
  %v10363 = vunpack.c.l.s4 1983009808
  %v10364 = vunpack.c.0.s8 %v10363
  %v10365 = vlaneseq
  %v10366 = vshrl.u32 %v10365, 7
  %v10367 = vsub.s32 %v10364, %v10366
  %v10368 = vrot.slane %v10358, %v10367
  %v10370 = vunpack.c.l.s4 1983009808
  %v10371 = vunpack.c.0.s8 %v10370
  %v10372 = vlaneseq
  %v10373 = vshrl.u32 %v10372, 7
  %v10374 = vsub.s32 %v10371, %v10373
  %v10375 = vrot.slane %v10359, %v10374
  %v10377 = vunpack.c.l.s4 1983009808
  %v10378 = vunpack.c.0.s8 %v10377
  %v10379 = vlaneseq
  %v10380 = vshrl.u32 %v10379, 7
  %v10381 = vsub.s32 %v10378, %v10380
  %v10382 = vrot.slane %v10360, %v10381
  %v10384 = vunpack.c.l.s4 1983009808
  %v10385 = vunpack.c.0.s8 %v10384
  %v10386 = vlaneseq
  %v10387 = vshrl.u32 %v10386, 7
  %v10388 = vsub.s32 %v10385, %v10387
  %v10389 = vrot.slane %v10361, %v10388
  %v10390 = vcombine.low %v10368, %v10382
  %v10391 = vcombine.high %v10368, %v10382
  %v10392 = vcombine.low %v10375, %v10389
  %v10393 = vcombine.high %v10375, %v10389
  %v10394 = vcombine.low %v9911, %v9915
  %v10395 = vcombine.high %v9911, %v9915
  %v10396 = vcombine.low %v9919, %v9923
  %v10397 = vcombine.high %v9919, %v9923
  %v10399 = vunpack.c.l.s4 1983009808
  %v10400 = vunpack.c.0.s8 %v10399
  %v10401 = vlaneseq
  %v10402 = vshrl.u32 %v10401, 7
  %v10403 = vsub.s32 %v10400, %v10402
  %v10404 = vrot.slane %v10394, %v10403
  %v10406 = vunpack.c.l.s4 1983009808
  %v10407 = vunpack.c.0.s8 %v10406
  %v10408 = vlaneseq
  %v10409 = vshrl.u32 %v10408, 7
  %v10410 = vsub.s32 %v10407, %v10409
  %v10411 = vrot.slane %v10395, %v10410
  %v10413 = vunpack.c.l.s4 1983009808
  %v10414 = vunpack.c.0.s8 %v10413
  %v10415 = vlaneseq
  %v10416 = vshrl.u32 %v10415, 7
  %v10417 = vsub.s32 %v10414, %v10416
  %v10418 = vrot.slane %v10396, %v10417
  %v10420 = vunpack.c.l.s4 1983009808
  %v10421 = vunpack.c.0.s8 %v10420
  %v10422 = vlaneseq
  %v10423 = vshrl.u32 %v10422, 7
  %v10424 = vsub.s32 %v10421, %v10423
  %v10425 = vrot.slane %v10397, %v10424
  %v10426 = vcombine.low %v10404, %v10418
  %v10427 = vcombine.high %v10404, %v10418
  %v10428 = vcombine.low %v10411, %v10425
  %v10429 = vcombine.high %v10411, %v10425
  %v10430 = vcombine.low %v9912, %v9916
  %v10431 = vcombine.high %v9912, %v9916
  %v10432 = vcombine.low %v9920, %v9924
  %v10433 = vcombine.high %v9920, %v9924
  %v10435 = vunpack.c.l.s4 1983009808
  %v10436 = vunpack.c.0.s8 %v10435
  %v10437 = vlaneseq
  %v10438 = vshrl.u32 %v10437, 7
  %v10439 = vsub.s32 %v10436, %v10438
  %v10440 = vrot.slane %v10430, %v10439
  %v10442 = vunpack.c.l.s4 1983009808
  %v10443 = vunpack.c.0.s8 %v10442
  %v10444 = vlaneseq
  %v10445 = vshrl.u32 %v10444, 7
  %v10446 = vsub.s32 %v10443, %v10445
  %v10447 = vrot.slane %v10431, %v10446
  %v10449 = vunpack.c.l.s4 1983009808
  %v10450 = vunpack.c.0.s8 %v10449
  %v10451 = vlaneseq
  %v10452 = vshrl.u32 %v10451, 7
  %v10453 = vsub.s32 %v10450, %v10452
  %v10454 = vrot.slane %v10432, %v10453
  %v10456 = vunpack.c.l.s4 1983009808
  %v10457 = vunpack.c.0.s8 %v10456
  %v10458 = vlaneseq
  %v10459 = vshrl.u32 %v10458, 7
  %v10460 = vsub.s32 %v10457, %v10459
  %v10461 = vrot.slane %v10433, %v10460
  %v10462 = vcombine.low %v10440, %v10454
  %v10463 = vcombine.high %v10440, %v10454
  %v10464 = vcombine.low %v10447, %v10461
  %v10465 = vcombine.high %v10447, %v10461
  %v10466 = vcombine.low %v9913, %v9917
  %v10467 = vcombine.high %v9913, %v9917
  %v10468 = vcombine.low %v9921, %v9925
  %v10469 = vcombine.high %v9921, %v9925
  %v10471 = vunpack.c.l.s4 1983009808
  %v10472 = vunpack.c.0.s8 %v10471
  %v10473 = vlaneseq
  %v10474 = vshrl.u32 %v10473, 7
  %v10475 = vsub.s32 %v10472, %v10474
  %v10476 = vrot.slane %v10466, %v10475
  %v10478 = vunpack.c.l.s4 1983009808
  %v10479 = vunpack.c.0.s8 %v10478
  %v10480 = vlaneseq
  %v10481 = vshrl.u32 %v10480, 7
  %v10482 = vsub.s32 %v10479, %v10481
  %v10483 = vrot.slane %v10467, %v10482
  %v10485 = vunpack.c.l.s4 1983009808
  %v10486 = vunpack.c.0.s8 %v10485
  %v10487 = vlaneseq
  %v10488 = vshrl.u32 %v10487, 7
  %v10489 = vsub.s32 %v10486, %v10488
  %v10490 = vrot.slane %v10468, %v10489
  %v10492 = vunpack.c.l.s4 1983009808
  %v10493 = vunpack.c.0.s8 %v10492
  %v10494 = vlaneseq
  %v10495 = vshrl.u32 %v10494, 7
  %v10496 = vsub.s32 %v10493, %v10495
  %v10497 = vrot.slane %v10469, %v10496
  %v10498 = vcombine.low %v10476, %v10490
  %v10499 = vcombine.high %v10476, %v10490
  %v10500 = vcombine.low %v10483, %v10497
  %v10501 = vcombine.high %v10483, %v10497
  %v10790 = vunpack.c.l.b16 %v9926
  %v10791 = vunpack.c.h.b16 %v9926
  %v10792 = vunpack.c.l.b16 %v9927
  %v10793 = vunpack.c.h.b16 %v9927
  %v10794 = vunpack.c.l.b16 %v9928
  %v10795 = vunpack.c.h.b16 %v9928
  %v10796 = vunpack.c.l.b16 %v9929
  %v10797 = vunpack.c.h.b16 %v9929
  %v10798 = vunpack.c.l.b16 %v9930
  %v10799 = vunpack.c.h.b16 %v9930
  %v10800 = vunpack.c.l.b16 %v9931
  %v10801 = vunpack.c.h.b16 %v9931
  %v10802 = vunpack.c.l.b16 %v9932
  %v10803 = vunpack.c.h.b16 %v9932
  %v10804 = vunpack.c.l.b16 %v9933
  %v10805 = vunpack.c.h.b16 %v9933
  %v10806 = vunpack.c.l.b16 %v9934
  %v10807 = vunpack.c.h.b16 %v9934
  %v10808 = vunpack.c.l.b16 %v9935
  %v10809 = vunpack.c.h.b16 %v9935
  %v10810 = vunpack.c.l.b16 %v9936
  %v10811 = vunpack.c.h.b16 %v9936
  %v10812 = vunpack.c.l.b16 %v9937
  %v10813 = vunpack.c.h.b16 %v9937
  %v10814 = vunpack.c.l.b16 %v9938
  %v10815 = vunpack.c.h.b16 %v9938
  %v10816 = vunpack.c.l.b16 %v9939
  %v10817 = vunpack.c.h.b16 %v9939
  %v10818 = vunpack.c.l.b16 %v9940
  %v10819 = vunpack.c.h.b16 %v9940
  %v10820 = vunpack.c.l.b16 %v9941
  %v10821 = vunpack.c.h.b16 %v9941
  %v10822 = vunpack.c.l.b16 %v9942
  %v10823 = vunpack.c.h.b16 %v9942
  %v10824 = vunpack.c.l.b16 %v9943
  %v10825 = vunpack.c.h.b16 %v9943
  %v10826 = vunpack.c.l.b16 %v9944
  %v10827 = vunpack.c.h.b16 %v9944
  %v10828 = vunpack.c.l.b16 %v9945
  %v10829 = vunpack.c.h.b16 %v9945
  %v10830 = vunpack.c.l.b16 %v9946
  %v10831 = vunpack.c.h.b16 %v9946
  %v10832 = vunpack.c.l.b16 %v9947
  %v10833 = vunpack.c.h.b16 %v9947
  %v10834 = vunpack.c.l.b16 %v9948
  %v10835 = vunpack.c.h.b16 %v9948
  %v10836 = vunpack.c.l.b16 %v9949
  %v10837 = vunpack.c.h.b16 %v9949
  %v10838 = vunpack.c.l.b16 %v9950
  %v10839 = vunpack.c.h.b16 %v9950
  %v10840 = vunpack.c.l.b16 %v9951
  %v10841 = vunpack.c.h.b16 %v9951
  %v10842 = vunpack.c.l.b16 %v9952
  %v10843 = vunpack.c.h.b16 %v9952
  %v10844 = vunpack.c.l.b16 %v9953
  %v10845 = vunpack.c.h.b16 %v9953
  %v10846 = vunpack.c.l.b16 %v9954
  %v10847 = vunpack.c.h.b16 %v9954
  %v10848 = vunpack.c.l.b16 %v9955
  %v10849 = vunpack.c.h.b16 %v9955
  %v10850 = vunpack.c.l.b16 %v9956
  %v10851 = vunpack.c.h.b16 %v9956
  %v10852 = vunpack.c.l.b16 %v9957
  %v10853 = vunpack.c.h.b16 %v9957
  %v10854 = vunpack.c.l.b16 %v9958
  %v10855 = vunpack.c.h.b16 %v9958
  %v10856 = vunpack.c.l.b16 %v9959
  %v10857 = vunpack.c.h.b16 %v9959
  %v10858 = vunpack.c.l.b16 %v9960
  %v10859 = vunpack.c.h.b16 %v9960
  %v10860 = vunpack.c.l.b16 %v9961
  %v10861 = vunpack.c.h.b16 %v9961
  %v10862 = vunpack.c.l.b16 %v9962
  %v10863 = vunpack.c.h.b16 %v9962
  %v10864 = vunpack.c.l.b16 %v9963
  %v10865 = vunpack.c.h.b16 %v9963
  %v10866 = vunpack.c.l.b16 %v9964
  %v10867 = vunpack.c.h.b16 %v9964
  %v10868 = vunpack.c.l.b16 %v9965
  %v10869 = vunpack.c.h.b16 %v9965
  %v10870 = vunpack.c.l.b16 %v9966
  %v10871 = vunpack.c.h.b16 %v9966
  %v10872 = vunpack.c.l.b16 %v9967
  %v10873 = vunpack.c.h.b16 %v9967
  %v10874 = vunpack.c.l.b16 %v9968
  %v10875 = vunpack.c.h.b16 %v9968
  %v10876 = vunpack.c.l.b16 %v9969
  %v10877 = vunpack.c.h.b16 %v9969
  %v10878 = vunpack.c.l.b16 %v9970
  %v10879 = vunpack.c.h.b16 %v9970
  %v10880 = vunpack.c.l.b16 %v9971
  %v10881 = vunpack.c.h.b16 %v9971
  %v10882 = vunpack.c.l.b16 %v9972
  %v10883 = vunpack.c.h.b16 %v9972
  %v10884 = vunpack.c.l.b16 %v9973
  %v10885 = vunpack.c.h.b16 %v9973
  %v10886 = vunpack.c.l.b16 %v9974
  %v10887 = vunpack.c.h.b16 %v9974
  %v10888 = vunpack.c.l.b16 %v9975
  %v10889 = vunpack.c.h.b16 %v9975
  %v10890 = vunpack.c.l.b16 %v9976
  %v10891 = vunpack.c.h.b16 %v9976
  %v10892 = vunpack.c.l.b16 %v9977
  %v10893 = vunpack.c.h.b16 %v9977
  %v10894 = vunpack.c.l.b16 %v9978
  %v10895 = vunpack.c.h.b16 %v9978
  %v10896 = vunpack.c.l.b16 %v9979
  %v10897 = vunpack.c.h.b16 %v9979
  %v10898 = vunpack.c.l.b16 %v9980
  %v10899 = vunpack.c.h.b16 %v9980
  %v10900 = vunpack.c.l.b16 %v9981
  %v10901 = vunpack.c.h.b16 %v9981
  %v10902 = vunpack.c.l.b16 %v9982
  %v10903 = vunpack.c.h.b16 %v9982
  %v10904 = vunpack.c.l.b16 %v9983
  %v10905 = vunpack.c.h.b16 %v9983
  %v10906 = vunpack.c.l.b16 %v9984
  %v10907 = vunpack.c.h.b16 %v9984
  %v10908 = vunpack.c.l.b16 %v9985
  %v10909 = vunpack.c.h.b16 %v9985
  %v10910 = vunpack.c.l.b16 %v9986
  %v10911 = vunpack.c.h.b16 %v9986
  %v10912 = vunpack.c.l.b16 %v9987
  %v10913 = vunpack.c.h.b16 %v9987
  %v10914 = vunpack.c.l.b16 %v9988
  %v10915 = vunpack.c.h.b16 %v9988
  %v10916 = vunpack.c.l.b16 %v9989
  %v10917 = vunpack.c.h.b16 %v9989
  %v10918 = vunpack.c.l.b16 %v9990
  %v10919 = vunpack.c.h.b16 %v9990
  %v10920 = vunpack.c.l.b16 %v9991
  %v10921 = vunpack.c.h.b16 %v9991
  %v10922 = vunpack.c.l.b16 %v9992
  %v10923 = vunpack.c.h.b16 %v9992
  %v10924 = vunpack.c.l.b16 %v9993
  %v10925 = vunpack.c.h.b16 %v9993
  %v10926 = vunpack.c.l.b16 %v9994
  %v10927 = vunpack.c.h.b16 %v9994
  %v10928 = vunpack.c.l.b16 %v9995
  %v10929 = vunpack.c.h.b16 %v9995
  %v10930 = vunpack.c.l.b16 %v9996
  %v10931 = vunpack.c.h.b16 %v9996
  %v10932 = vunpack.c.l.b16 %v9997
  %v10933 = vunpack.c.h.b16 %v9997
  %v10934 = vunpack.c.l.b16 %v9998
  %v10935 = vunpack.c.h.b16 %v9998
  %v10936 = vunpack.c.l.b16 %v9999
  %v10937 = vunpack.c.h.b16 %v9999
  %v10938 = vunpack.c.l.b16 %v10000
  %v10939 = vunpack.c.h.b16 %v10000
  %v10940 = vunpack.c.l.b16 %v10001
  %v10941 = vunpack.c.h.b16 %v10001
  %v10942 = vunpack.c.l.b16 %v10002
  %v10943 = vunpack.c.h.b16 %v10002
  %v10944 = vunpack.c.l.b16 %v10003
  %v10945 = vunpack.c.h.b16 %v10003
  %v10946 = vunpack.c.l.b16 %v10004
  %v10947 = vunpack.c.h.b16 %v10004
  %v10948 = vunpack.c.l.b16 %v10005
  %v10949 = vunpack.c.h.b16 %v10005
  %v10950 = vunpack.c.l.b16 %v10006
  %v10951 = vunpack.c.h.b16 %v10006
  %v10952 = vunpack.c.l.b16 %v10007
  %v10953 = vunpack.c.h.b16 %v10007
  %v10954 = vunpack.c.l.b16 %v10008
  %v10955 = vunpack.c.h.b16 %v10008
  %v10956 = vunpack.c.l.b16 %v10009
  %v10957 = vunpack.c.h.b16 %v10009
  %v10958 = vunpack.c.l.b16 %v10010
  %v10959 = vunpack.c.h.b16 %v10010
  %v10960 = vunpack.c.l.b16 %v10011
  %v10961 = vunpack.c.h.b16 %v10011
  %v10962 = vunpack.c.l.b16 %v10012
  %v10963 = vunpack.c.h.b16 %v10012
  %v10964 = vunpack.c.l.b16 %v10013
  %v10965 = vunpack.c.h.b16 %v10013
  %v10966 = vunpack.c.l.b16 %v10014
  %v10967 = vunpack.c.h.b16 %v10014
  %v10968 = vunpack.c.l.b16 %v10015
  %v10969 = vunpack.c.h.b16 %v10015
  %v10970 = vunpack.c.l.b16 %v10016
  %v10971 = vunpack.c.h.b16 %v10016
  %v10972 = vunpack.c.l.b16 %v10017
  %v10973 = vunpack.c.h.b16 %v10017
  %v10974 = vunpack.c.l.b16 %v10018
  %v10975 = vunpack.c.h.b16 %v10018
  %v10976 = vunpack.c.l.b16 %v10019
  %v10977 = vunpack.c.h.b16 %v10019
  %v10978 = vunpack.c.l.b16 %v10020
  %v10979 = vunpack.c.h.b16 %v10020
  %v10980 = vunpack.c.l.b16 %v10021
  %v10981 = vunpack.c.h.b16 %v10021
  %v10982 = vunpack.c.l.b16 %v10022
  %v10983 = vunpack.c.h.b16 %v10022
  %v10984 = vunpack.c.l.b16 %v10023
  %v10985 = vunpack.c.h.b16 %v10023
  %v10986 = vunpack.c.l.b16 %v10024
  %v10987 = vunpack.c.h.b16 %v10024
  %v10988 = vunpack.c.l.b16 %v10025
  %v10989 = vunpack.c.h.b16 %v10025
  %v10990 = vunpack.c.l.b16 %v10026
  %v10991 = vunpack.c.h.b16 %v10026
  %v10992 = vunpack.c.l.b16 %v10027
  %v10993 = vunpack.c.h.b16 %v10027
  %v10994 = vunpack.c.l.b16 %v10028
  %v10995 = vunpack.c.h.b16 %v10028
  %v10996 = vunpack.c.l.b16 %v10029
  %v10997 = vunpack.c.h.b16 %v10029
  %v10998 = vunpack.c.l.b16 %v10030
  %v10999 = vunpack.c.h.b16 %v10030
  %v11000 = vunpack.c.l.b16 %v10031
  %v11001 = vunpack.c.h.b16 %v10031
  %v11002 = vunpack.c.l.b16 %v10032
  %v11003 = vunpack.c.h.b16 %v10032
  %v11004 = vunpack.c.l.b16 %v10033
  %v11005 = vunpack.c.h.b16 %v10033
  %v11006 = vunpack.c.l.b16 %v10034
  %v11007 = vunpack.c.h.b16 %v10034
  %v11008 = vunpack.c.l.b16 %v10035
  %v11009 = vunpack.c.h.b16 %v10035
  %v11010 = vunpack.c.l.b16 %v10036
  %v11011 = vunpack.c.h.b16 %v10036
  %v11012 = vunpack.c.l.b16 %v10037
  %v11013 = vunpack.c.h.b16 %v10037
  %v11014 = vunpack.c.l.b16 %v10038
  %v11015 = vunpack.c.h.b16 %v10038
  %v11016 = vunpack.c.l.b16 %v10039
  %v11017 = vunpack.c.h.b16 %v10039
  %v11018 = vunpack.c.l.b16 %v10040
  %v11019 = vunpack.c.h.b16 %v10040
  %v11020 = vunpack.c.l.b16 %v10041
  %v11021 = vunpack.c.h.b16 %v10041
  %v11022 = vunpack.c.l.b16 %v10042
  %v11023 = vunpack.c.h.b16 %v10042
  %v11024 = vunpack.c.l.b16 %v10043
  %v11025 = vunpack.c.h.b16 %v10043
  %v11026 = vunpack.c.l.b16 %v10044
  %v11027 = vunpack.c.h.b16 %v10044
  %v11028 = vunpack.c.l.b16 %v10045
  %v11029 = vunpack.c.h.b16 %v10045
  %v11030 = vunpack.c.l.b16 %v10046
  %v11031 = vunpack.c.h.b16 %v10046
  %v11032 = vunpack.c.l.b16 %v10047
  %v11033 = vunpack.c.h.b16 %v10047
  %v11034 = vunpack.c.l.b16 %v10048
  %v11035 = vunpack.c.h.b16 %v10048
  %v11036 = vunpack.c.l.b16 %v10049
  %v11037 = vunpack.c.h.b16 %v10049
  %v11038 = vunpack.c.l.b16 %v10050
  %v11039 = vunpack.c.h.b16 %v10050
  %v11040 = vunpack.c.l.b16 %v10051
  %v11041 = vunpack.c.h.b16 %v10051
  %v11042 = vunpack.c.l.b16 %v10052
  %v11043 = vunpack.c.h.b16 %v10052
  %v11044 = vunpack.c.l.b16 %v10053
  %v11045 = vunpack.c.h.b16 %v10053
  %v11046 = vunpack.c.l.b16 %v10054
  %v11047 = vunpack.c.h.b16 %v10054
  %v11048 = vunpack.c.l.b16 %v10055
  %v11049 = vunpack.c.h.b16 %v10055
  %v11050 = vunpack.c.l.b16 %v10056
  %v11051 = vunpack.c.h.b16 %v10056
  %v11052 = vunpack.c.l.b16 %v10057
  %v11053 = vunpack.c.h.b16 %v10057
  %v11054 = vunpack.c.l.b16 %v10058
  %v11055 = vunpack.c.h.b16 %v10058
  %v11056 = vunpack.c.l.b16 %v10059
  %v11057 = vunpack.c.h.b16 %v10059
  %v11058 = vunpack.c.l.b16 %v10060
  %v11059 = vunpack.c.h.b16 %v10060
  %v11060 = vunpack.c.l.b16 %v10061
  %v11061 = vunpack.c.h.b16 %v10061
  %v11062 = vunpack.c.l.b16 %v10062
  %v11063 = vunpack.c.h.b16 %v10062
  %v11064 = vunpack.c.l.b16 %v10063
  %v11065 = vunpack.c.h.b16 %v10063
  %v11066 = vunpack.c.l.b16 %v10064
  %v11067 = vunpack.c.h.b16 %v10064
  %v11068 = vunpack.c.l.b16 %v10065
  %v11069 = vunpack.c.h.b16 %v10065
  %v11070 = vunpack.c.l.b16 %v10066
  %v11071 = vunpack.c.h.b16 %v10066
  %v11072 = vunpack.c.l.b16 %v10067
  %v11073 = vunpack.c.h.b16 %v10067
  %v11074 = vunpack.c.l.b16 %v10068
  %v11075 = vunpack.c.h.b16 %v10068
  %v11076 = vunpack.c.l.b16 %v10069
  %v11077 = vunpack.c.h.b16 %v10069
  %v11078 = vunpack.c.l.b16 %v10070
  %v11079 = vunpack.c.h.b16 %v10070
  %v11080 = vunpack.c.l.b16 %v10071
  %v11081 = vunpack.c.h.b16 %v10071
  %v11082 = vunpack.c.l.b16 %v10072
  %v11083 = vunpack.c.h.b16 %v10072
  %v11084 = vunpack.c.l.b16 %v10073
  %v11085 = vunpack.c.h.b16 %v10073
  %v11086 = vunpack.c.l.b16 %v10074
  %v11087 = vunpack.c.h.b16 %v10074
  %v11088 = vunpack.c.l.b16 %v10075
  %v11089 = vunpack.c.h.b16 %v10075
  %v11090 = vunpack.c.l.b16 %v10076
  %v11091 = vunpack.c.h.b16 %v10076
  %v11092 = vunpack.c.l.b16 %v10077
  %v11093 = vunpack.c.h.b16 %v10077
  %v11094 = vunpack.c.l.b16 %v10078
  %v11095 = vunpack.c.h.b16 %v10078
  %v11096 = vunpack.c.l.b16 %v10079
  %v11097 = vunpack.c.h.b16 %v10079
  %v11098 = vunpack.c.l.b16 %v10080
  %v11099 = vunpack.c.h.b16 %v10080
  %v11100 = vunpack.c.l.b16 %v10081
  %v11101 = vunpack.c.h.b16 %v10081
  %v11102 = vunpack.c.l.b16 %v10082
  %v11103 = vunpack.c.h.b16 %v10082
  %v11104 = vunpack.c.l.b16 %v10083
  %v11105 = vunpack.c.h.b16 %v10083
  %v11106 = vunpack.c.l.b16 %v10084
  %v11107 = vunpack.c.h.b16 %v10084
  %v11108 = vunpack.c.l.b16 %v10085
  %v11109 = vunpack.c.h.b16 %v10085
  %v11110 = vunpack.c.l.b16 %v10086
  %v11111 = vunpack.c.h.b16 %v10086
  %v11112 = vunpack.c.l.b16 %v10087
  %v11113 = vunpack.c.h.b16 %v10087
  %v11114 = vunpack.c.l.b16 %v10088
  %v11115 = vunpack.c.h.b16 %v10088
  %v11116 = vunpack.c.l.b16 %v10089
  %v11117 = vunpack.c.h.b16 %v10089
  %v11118 = vunpack.c.l.b16 %v10090
  %v11119 = vunpack.c.h.b16 %v10090
  %v11120 = vunpack.c.l.b16 %v10091
  %v11121 = vunpack.c.h.b16 %v10091
  %v11122 = vunpack.c.l.b16 %v10092
  %v11123 = vunpack.c.h.b16 %v10092
  %v11124 = vunpack.c.l.b16 %v10093
  %v11125 = vunpack.c.h.b16 %v10093
  %v11126 = vunpack.c.l.b16 %v10094
  %v11127 = vunpack.c.h.b16 %v10094
  %v11128 = vunpack.c.l.b16 %v10095
  %v11129 = vunpack.c.h.b16 %v10095
  %v11130 = vunpack.c.l.b16 %v10096
  %v11131 = vunpack.c.h.b16 %v10096
  %v11132 = vunpack.c.l.b16 %v10097
  %v11133 = vunpack.c.h.b16 %v10097
  %v11134 = vunpack.c.l.b16 %v10098
  %v11135 = vunpack.c.h.b16 %v10098
  %v11136 = vunpack.c.l.b16 %v10099
  %v11137 = vunpack.c.h.b16 %v10099
  %v11138 = vunpack.c.l.b16 %v10100
  %v11139 = vunpack.c.h.b16 %v10100
  %v11140 = vunpack.c.l.b16 %v10101
  %v11141 = vunpack.c.h.b16 %v10101
  %v11142 = vunpack.c.l.b16 %v10102
  %v11143 = vunpack.c.h.b16 %v10102
  %v11144 = vunpack.c.l.b16 %v10103
  %v11145 = vunpack.c.h.b16 %v10103
  %v11146 = vunpack.c.l.b16 %v10104
  %v11147 = vunpack.c.h.b16 %v10104
  %v11148 = vunpack.c.l.b16 %v10105
  %v11149 = vunpack.c.h.b16 %v10105
  %v11150 = vunpack.c.l.b16 %v10106
  %v11151 = vunpack.c.h.b16 %v10106
  %v11152 = vunpack.c.l.b16 %v10107
  %v11153 = vunpack.c.h.b16 %v10107
  %v11154 = vunpack.c.l.b16 %v10108
  %v11155 = vunpack.c.h.b16 %v10108
  %v11156 = vunpack.c.l.b16 %v10109
  %v11157 = vunpack.c.h.b16 %v10109
  %v11158 = vunpack.c.l.b16 %v10110
  %v11159 = vunpack.c.h.b16 %v10110
  %v11160 = vunpack.c.l.b16 %v10111
  %v11161 = vunpack.c.h.b16 %v10111
  %v11162 = vunpack.c.l.b16 %v10112
  %v11163 = vunpack.c.h.b16 %v10112
  %v11164 = vunpack.c.l.b16 %v10113
  %v11165 = vunpack.c.h.b16 %v10113
  %v11166 = vunpack.c.l.b16 %v10114
  %v11167 = vunpack.c.h.b16 %v10114
  %v11168 = vunpack.c.l.b16 %v10115
  %v11169 = vunpack.c.h.b16 %v10115
  %v11170 = vunpack.c.l.b16 %v10116
  %v11171 = vunpack.c.h.b16 %v10116
  %v11172 = vunpack.c.l.b16 %v10117
  %v11173 = vunpack.c.h.b16 %v10117
  %v11174 = vunpack.c.l.b16 %v10118
  %v11175 = vunpack.c.h.b16 %v10118
  %v11176 = vunpack.c.l.b16 %v10119
  %v11177 = vunpack.c.h.b16 %v10119
  %v11178 = vunpack.c.l.b16 %v10120
  %v11179 = vunpack.c.h.b16 %v10120
  %v11180 = vunpack.c.l.b16 %v10121
  %v11181 = vunpack.c.h.b16 %v10121
  %v11182 = vunpack.c.l.b16 %v10122
  %v11183 = vunpack.c.h.b16 %v10122
  %v11184 = vunpack.c.l.b16 %v10123
  %v11185 = vunpack.c.h.b16 %v10123
  %v11186 = vunpack.c.l.b16 %v10124
  %v11187 = vunpack.c.h.b16 %v10124
  %v11188 = vunpack.c.l.b16 %v10125
  %v11189 = vunpack.c.h.b16 %v10125
  %v11190 = vunpack.c.l.b16 %v10126
  %v11191 = vunpack.c.h.b16 %v10126
  %v11192 = vunpack.c.l.b16 %v10127
  %v11193 = vunpack.c.h.b16 %v10127
  %v11194 = vunpack.c.l.b16 %v10128
  %v11195 = vunpack.c.h.b16 %v10128
  %v11196 = vunpack.c.l.b16 %v10129
  %v11197 = vunpack.c.h.b16 %v10129
  %v11198 = vunpack.c.l.b16 %v10130
  %v11199 = vunpack.c.h.b16 %v10130
  %v11200 = vunpack.c.l.b16 %v10131
  %v11201 = vunpack.c.h.b16 %v10131
  %v11202 = vunpack.c.l.b16 %v10132
  %v11203 = vunpack.c.h.b16 %v10132
  %v11204 = vunpack.c.l.b16 %v10133
  %v11205 = vunpack.c.h.b16 %v10133
  %v11206 = vunpack.c.l.b16 %v10134
  %v11207 = vunpack.c.h.b16 %v10134
  %v11208 = vunpack.c.l.b16 %v10135
  %v11209 = vunpack.c.h.b16 %v10135
  %v11210 = vunpack.c.l.b16 %v10136
  %v11211 = vunpack.c.h.b16 %v10136
  %v11212 = vunpack.c.l.b16 %v10137
  %v11213 = vunpack.c.h.b16 %v10137
  %v11214 = vunpack.c.l.b16 %v10138
  %v11215 = vunpack.c.h.b16 %v10138
  %v11216 = vunpack.c.l.b16 %v10139
  %v11217 = vunpack.c.h.b16 %v10139
  %v11218 = vunpack.c.l.b16 %v10140
  %v11219 = vunpack.c.h.b16 %v10140
  %v11220 = vunpack.c.l.b16 %v10141
  %v11221 = vunpack.c.h.b16 %v10141
  %v11222 = vunpack.c.l.b16 %v10142
  %v11223 = vunpack.c.h.b16 %v10142
  %v11224 = vunpack.c.l.b16 %v10143
  %v11225 = vunpack.c.h.b16 %v10143
  %v11226 = vunpack.c.l.b16 %v10144
  %v11227 = vunpack.c.h.b16 %v10144
  %v11228 = vunpack.c.l.b16 %v10145
  %v11229 = vunpack.c.h.b16 %v10145
  %v11230 = vunpack.c.l.b16 %v10146
  %v11231 = vunpack.c.h.b16 %v10146
  %v11232 = vunpack.c.l.b16 %v10147
  %v11233 = vunpack.c.h.b16 %v10147
  %v11234 = vunpack.c.l.b16 %v10148
  %v11235 = vunpack.c.h.b16 %v10148
  %v11236 = vunpack.c.l.b16 %v10149
  %v11237 = vunpack.c.h.b16 %v10149
  %v11238 = vunpack.c.l.b16 %v10150
  %v11239 = vunpack.c.h.b16 %v10150
  %v11240 = vunpack.c.l.b16 %v10151
  %v11241 = vunpack.c.h.b16 %v10151
  %v11242 = vunpack.c.l.b16 %v10152
  %v11243 = vunpack.c.h.b16 %v10152
  %v11244 = vunpack.c.l.b16 %v10153
  %v11245 = vunpack.c.h.b16 %v10153
  %v11246 = vunpack.c.l.b16 %v10154
  %v11247 = vunpack.c.h.b16 %v10154
  %v11248 = vunpack.c.l.b16 %v10155
  %v11249 = vunpack.c.h.b16 %v10155
  %v11250 = vunpack.c.l.b16 %v10156
  %v11251 = vunpack.c.h.b16 %v10156
  %v11252 = vunpack.c.l.b16 %v10157
  %v11253 = vunpack.c.h.b16 %v10157
  %v11254 = vunpack.c.l.b16 %v10158
  %v11255 = vunpack.c.h.b16 %v10158
  %v11256 = vunpack.c.l.b16 %v10159
  %v11257 = vunpack.c.h.b16 %v10159
  %v11258 = vunpack.c.l.b16 %v10160
  %v11259 = vunpack.c.h.b16 %v10160
  %v11260 = vunpack.c.l.b16 %v10161
  %v11261 = vunpack.c.h.b16 %v10161
  %v11262 = vunpack.c.l.b16 %v10162
  %v11263 = vunpack.c.h.b16 %v10162
  %v11264 = vunpack.c.l.b16 %v10163
  %v11265 = vunpack.c.h.b16 %v10163
  %v11266 = vunpack.c.l.b16 %v10164
  %v11267 = vunpack.c.h.b16 %v10164
  %v11268 = vunpack.c.l.b16 %v10165
  %v11269 = vunpack.c.h.b16 %v10165
  %v11270 = vunpack.c.l.b16 %v10166
  %v11271 = vunpack.c.h.b16 %v10166
  %v11272 = vunpack.c.l.b16 %v10167
  %v11273 = vunpack.c.h.b16 %v10167
  %v11274 = vunpack.c.l.b16 %v10168
  %v11275 = vunpack.c.h.b16 %v10168
  %v11276 = vunpack.c.l.b16 %v10169
  %v11277 = vunpack.c.h.b16 %v10169
  %v11278 = vunpack.c.l.b16 %v10170
  %v11279 = vunpack.c.h.b16 %v10170
  %v11280 = vunpack.c.l.b16 %v10171
  %v11281 = vunpack.c.h.b16 %v10171
  %v11282 = vunpack.c.l.b16 %v10172
  %v11283 = vunpack.c.h.b16 %v10172
  %v11284 = vunpack.c.l.b16 %v10173
  %v11285 = vunpack.c.h.b16 %v10173
  %v11286 = vunpack.c.l.b16 %v10174
  %v11287 = vunpack.c.h.b16 %v10174
  %v11288 = vunpack.c.l.b16 %v10175
  %v11289 = vunpack.c.h.b16 %v10175
  %v11290 = vunpack.c.l.b16 %v10176
  %v11291 = vunpack.c.h.b16 %v10176
  %v11292 = vunpack.c.l.b16 %v10177
  %v11293 = vunpack.c.h.b16 %v10177
  %v11294 = vunpack.c.l.b16 %v10178
  %v11295 = vunpack.c.h.b16 %v10178
  %v11296 = vunpack.c.l.b16 %v10179
  %v11297 = vunpack.c.h.b16 %v10179
  %v11298 = vunpack.c.l.b16 %v10180
  %v11299 = vunpack.c.h.b16 %v10180
  %v11300 = vunpack.c.l.b16 %v10181
  %v11301 = vunpack.c.h.b16 %v10181
  %v11302 = vpack.c.b16 %v10792, %v10790
  %v11303 = vpack.c.b16 %v10793, %v10791
  %v11304 = vpack.c.b16 %v10796, %v10794
  %v11305 = vpack.c.b16 %v10797, %v10795
  %v11306 = vpack.c.b16 %v10800, %v10798
  %v11307 = vpack.c.b16 %v10801, %v10799
  %v11308 = vpack.c.b16 %v10804, %v10802
  %v11309 = vpack.c.b16 %v10805, %v10803
  %v11310 = vpack.c.b16 %v10808, %v10806
  %v11311 = vpack.c.b16 %v10809, %v10807
  %v11312 = vpack.c.b16 %v10812, %v10810
  %v11313 = vpack.c.b16 %v10813, %v10811
  %v11314 = vpack.c.b16 %v10816, %v10814
  %v11315 = vpack.c.b16 %v10817, %v10815
  %v11316 = vpack.c.b16 %v10820, %v10818
  %v11317 = vpack.c.b16 %v10821, %v10819
  %v11318 = vpack.c.b16 %v10824, %v10822
  %v11319 = vpack.c.b16 %v10825, %v10823
  %v11320 = vpack.c.b16 %v10828, %v10826
  %v11321 = vpack.c.b16 %v10829, %v10827
  %v11322 = vpack.c.b16 %v10832, %v10830
  %v11323 = vpack.c.b16 %v10833, %v10831
  %v11324 = vpack.c.b16 %v10836, %v10834
  %v11325 = vpack.c.b16 %v10837, %v10835
  %v11326 = vpack.c.b16 %v10840, %v10838
  %v11327 = vpack.c.b16 %v10841, %v10839
  %v11328 = vpack.c.b16 %v10844, %v10842
  %v11329 = vpack.c.b16 %v10845, %v10843
  %v11330 = vpack.c.b16 %v10848, %v10846
  %v11331 = vpack.c.b16 %v10849, %v10847
  %v11332 = vpack.c.b16 %v10852, %v10850
  %v11333 = vpack.c.b16 %v10853, %v10851
  %v11334 = vpack.c.b16 %v10856, %v10854
  %v11335 = vpack.c.b16 %v10857, %v10855
  %v11336 = vpack.c.b16 %v10860, %v10858
  %v11337 = vpack.c.b16 %v10861, %v10859
  %v11338 = vpack.c.b16 %v10864, %v10862
  %v11339 = vpack.c.b16 %v10865, %v10863
  %v11340 = vpack.c.b16 %v10868, %v10866
  %v11341 = vpack.c.b16 %v10869, %v10867
  %v11342 = vpack.c.b16 %v10872, %v10870
  %v11343 = vpack.c.b16 %v10873, %v10871
  %v11344 = vpack.c.b16 %v10876, %v10874
  %v11345 = vpack.c.b16 %v10877, %v10875
  %v11346 = vpack.c.b16 %v10880, %v10878
  %v11347 = vpack.c.b16 %v10881, %v10879
  %v11348 = vpack.c.b16 %v10884, %v10882
  %v11349 = vpack.c.b16 %v10885, %v10883
  %v11350 = vpack.c.b16 %v10888, %v10886
  %v11351 = vpack.c.b16 %v10889, %v10887
  %v11352 = vpack.c.b16 %v10892, %v10890
  %v11353 = vpack.c.b16 %v10893, %v10891
  %v11354 = vpack.c.b16 %v10896, %v10894
  %v11355 = vpack.c.b16 %v10897, %v10895
  %v11356 = vpack.c.b16 %v10900, %v10898
  %v11357 = vpack.c.b16 %v10901, %v10899
  %v11358 = vpack.c.b16 %v10904, %v10902
  %v11359 = vpack.c.b16 %v10905, %v10903
  %v11360 = vpack.c.b16 %v10908, %v10906
  %v11361 = vpack.c.b16 %v10909, %v10907
  %v11362 = vpack.c.b16 %v10912, %v10910
  %v11363 = vpack.c.b16 %v10913, %v10911
  %v11364 = vpack.c.b16 %v10916, %v10914
  %v11365 = vpack.c.b16 %v10917, %v10915
  %v11366 = vpack.c.b16 %v10920, %v10918
  %v11367 = vpack.c.b16 %v10921, %v10919
  %v11368 = vpack.c.b16 %v10924, %v10922
  %v11369 = vpack.c.b16 %v10925, %v10923
  %v11370 = vpack.c.b16 %v10928, %v10926
  %v11371 = vpack.c.b16 %v10929, %v10927
  %v11372 = vpack.c.b16 %v10932, %v10930
  %v11373 = vpack.c.b16 %v10933, %v10931
  %v11374 = vpack.c.b16 %v10936, %v10934
  %v11375 = vpack.c.b16 %v10937, %v10935
  %v11376 = vpack.c.b16 %v10940, %v10938
  %v11377 = vpack.c.b16 %v10941, %v10939
  %v11378 = vpack.c.b16 %v10944, %v10942
  %v11379 = vpack.c.b16 %v10945, %v10943
  %v11380 = vpack.c.b16 %v10948, %v10946
  %v11381 = vpack.c.b16 %v10949, %v10947
  %v11382 = vpack.c.b16 %v10952, %v10950
  %v11383 = vpack.c.b16 %v10953, %v10951
  %v11384 = vpack.c.b16 %v10956, %v10954
  %v11385 = vpack.c.b16 %v10957, %v10955
  %v11386 = vpack.c.b16 %v10960, %v10958
  %v11387 = vpack.c.b16 %v10961, %v10959
  %v11388 = vpack.c.b16 %v10964, %v10962
  %v11389 = vpack.c.b16 %v10965, %v10963
  %v11390 = vpack.c.b16 %v10968, %v10966
  %v11391 = vpack.c.b16 %v10969, %v10967
  %v11392 = vpack.c.b16 %v10972, %v10970
  %v11393 = vpack.c.b16 %v10973, %v10971
  %v11394 = vpack.c.b16 %v10976, %v10974
  %v11395 = vpack.c.b16 %v10977, %v10975
  %v11396 = vpack.c.b16 %v10980, %v10978
  %v11397 = vpack.c.b16 %v10981, %v10979
  %v11398 = vpack.c.b16 %v10984, %v10982
  %v11399 = vpack.c.b16 %v10985, %v10983
  %v11400 = vpack.c.b16 %v10988, %v10986
  %v11401 = vpack.c.b16 %v10989, %v10987
  %v11402 = vpack.c.b16 %v10992, %v10990
  %v11403 = vpack.c.b16 %v10993, %v10991
  %v11404 = vpack.c.b16 %v10996, %v10994
  %v11405 = vpack.c.b16 %v10997, %v10995
  %v11406 = vpack.c.b16 %v11000, %v10998
  %v11407 = vpack.c.b16 %v11001, %v10999
  %v11408 = vpack.c.b16 %v11004, %v11002
  %v11409 = vpack.c.b16 %v11005, %v11003
  %v11410 = vpack.c.b16 %v11008, %v11006
  %v11411 = vpack.c.b16 %v11009, %v11007
  %v11412 = vpack.c.b16 %v11012, %v11010
  %v11413 = vpack.c.b16 %v11013, %v11011
  %v11414 = vpack.c.b16 %v11016, %v11014
  %v11415 = vpack.c.b16 %v11017, %v11015
  %v11416 = vpack.c.b16 %v11020, %v11018
  %v11417 = vpack.c.b16 %v11021, %v11019
  %v11418 = vpack.c.b16 %v11024, %v11022
  %v11419 = vpack.c.b16 %v11025, %v11023
  %v11420 = vpack.c.b16 %v11028, %v11026
  %v11421 = vpack.c.b16 %v11029, %v11027
  %v11422 = vpack.c.b16 %v11032, %v11030
  %v11423 = vpack.c.b16 %v11033, %v11031
  %v11424 = vpack.c.b16 %v11036, %v11034
  %v11425 = vpack.c.b16 %v11037, %v11035
  %v11426 = vpack.c.b16 %v11040, %v11038
  %v11427 = vpack.c.b16 %v11041, %v11039
  %v11428 = vpack.c.b16 %v11044, %v11042
  %v11429 = vpack.c.b16 %v11045, %v11043
  %v11430 = vpack.c.b16 %v11048, %v11046
  %v11431 = vpack.c.b16 %v11049, %v11047
  %v11432 = vpack.c.b16 %v11052, %v11050
  %v11433 = vpack.c.b16 %v11053, %v11051
  %v11434 = vpack.c.b16 %v11056, %v11054
  %v11435 = vpack.c.b16 %v11057, %v11055
  %v11436 = vpack.c.b16 %v11060, %v11058
  %v11437 = vpack.c.b16 %v11061, %v11059
  %v11438 = vpack.c.b16 %v11064, %v11062
  %v11439 = vpack.c.b16 %v11065, %v11063
  %v11440 = vpack.c.b16 %v11068, %v11066
  %v11441 = vpack.c.b16 %v11069, %v11067
  %v11442 = vpack.c.b16 %v11072, %v11070
  %v11443 = vpack.c.b16 %v11073, %v11071
  %v11444 = vpack.c.b16 %v11076, %v11074
  %v11445 = vpack.c.b16 %v11077, %v11075
  %v11446 = vpack.c.b16 %v11080, %v11078
  %v11447 = vpack.c.b16 %v11081, %v11079
  %v11448 = vpack.c.b16 %v11084, %v11082
  %v11449 = vpack.c.b16 %v11085, %v11083
  %v11450 = vpack.c.b16 %v11088, %v11086
  %v11451 = vpack.c.b16 %v11089, %v11087
  %v11452 = vpack.c.b16 %v11092, %v11090
  %v11453 = vpack.c.b16 %v11093, %v11091
  %v11454 = vpack.c.b16 %v11096, %v11094
  %v11455 = vpack.c.b16 %v11097, %v11095
  %v11456 = vpack.c.b16 %v11100, %v11098
  %v11457 = vpack.c.b16 %v11101, %v11099
  %v11458 = vpack.c.b16 %v11104, %v11102
  %v11459 = vpack.c.b16 %v11105, %v11103
  %v11460 = vpack.c.b16 %v11108, %v11106
  %v11461 = vpack.c.b16 %v11109, %v11107
  %v11462 = vpack.c.b16 %v11112, %v11110
  %v11463 = vpack.c.b16 %v11113, %v11111
  %v11464 = vpack.c.b16 %v11116, %v11114
  %v11465 = vpack.c.b16 %v11117, %v11115
  %v11466 = vpack.c.b16 %v11120, %v11118
  %v11467 = vpack.c.b16 %v11121, %v11119
  %v11468 = vpack.c.b16 %v11124, %v11122
  %v11469 = vpack.c.b16 %v11125, %v11123
  %v11470 = vpack.c.b16 %v11128, %v11126
  %v11471 = vpack.c.b16 %v11129, %v11127
  %v11472 = vpack.c.b16 %v11132, %v11130
  %v11473 = vpack.c.b16 %v11133, %v11131
  %v11474 = vpack.c.b16 %v11136, %v11134
  %v11475 = vpack.c.b16 %v11137, %v11135
  %v11476 = vpack.c.b16 %v11140, %v11138
  %v11477 = vpack.c.b16 %v11141, %v11139
  %v11478 = vpack.c.b16 %v11144, %v11142
  %v11479 = vpack.c.b16 %v11145, %v11143
  %v11480 = vpack.c.b16 %v11148, %v11146
  %v11481 = vpack.c.b16 %v11149, %v11147
  %v11482 = vpack.c.b16 %v11152, %v11150
  %v11483 = vpack.c.b16 %v11153, %v11151
  %v11484 = vpack.c.b16 %v11156, %v11154
  %v11485 = vpack.c.b16 %v11157, %v11155
  %v11486 = vpack.c.b16 %v11160, %v11158
  %v11487 = vpack.c.b16 %v11161, %v11159
  %v11488 = vpack.c.b16 %v11164, %v11162
  %v11489 = vpack.c.b16 %v11165, %v11163
  %v11490 = vpack.c.b16 %v11168, %v11166
  %v11491 = vpack.c.b16 %v11169, %v11167
  %v11492 = vpack.c.b16 %v11172, %v11170
  %v11493 = vpack.c.b16 %v11173, %v11171
  %v11494 = vpack.c.b16 %v11176, %v11174
  %v11495 = vpack.c.b16 %v11177, %v11175
  %v11496 = vpack.c.b16 %v11180, %v11178
  %v11497 = vpack.c.b16 %v11181, %v11179
  %v11498 = vpack.c.b16 %v11184, %v11182
  %v11499 = vpack.c.b16 %v11185, %v11183
  %v11500 = vpack.c.b16 %v11188, %v11186
  %v11501 = vpack.c.b16 %v11189, %v11187
  %v11502 = vpack.c.b16 %v11192, %v11190
  %v11503 = vpack.c.b16 %v11193, %v11191
  %v11504 = vpack.c.b16 %v11196, %v11194
  %v11505 = vpack.c.b16 %v11197, %v11195
  %v11506 = vpack.c.b16 %v11200, %v11198
  %v11507 = vpack.c.b16 %v11201, %v11199
  %v11508 = vpack.c.b16 %v11204, %v11202
  %v11509 = vpack.c.b16 %v11205, %v11203
  %v11510 = vpack.c.b16 %v11208, %v11206
  %v11511 = vpack.c.b16 %v11209, %v11207
  %v11512 = vpack.c.b16 %v11212, %v11210
  %v11513 = vpack.c.b16 %v11213, %v11211
  %v11514 = vpack.c.b16 %v11216, %v11214
  %v11515 = vpack.c.b16 %v11217, %v11215
  %v11516 = vpack.c.b16 %v11220, %v11218
  %v11517 = vpack.c.b16 %v11221, %v11219
  %v11518 = vpack.c.b16 %v11224, %v11222
  %v11519 = vpack.c.b16 %v11225, %v11223
  %v11520 = vpack.c.b16 %v11228, %v11226
  %v11521 = vpack.c.b16 %v11229, %v11227
  %v11522 = vpack.c.b16 %v11232, %v11230
  %v11523 = vpack.c.b16 %v11233, %v11231
  %v11524 = vpack.c.b16 %v11236, %v11234
  %v11525 = vpack.c.b16 %v11237, %v11235
  %v11526 = vpack.c.b16 %v11240, %v11238
  %v11527 = vpack.c.b16 %v11241, %v11239
  %v11528 = vpack.c.b16 %v11244, %v11242
  %v11529 = vpack.c.b16 %v11245, %v11243
  %v11530 = vpack.c.b16 %v11248, %v11246
  %v11531 = vpack.c.b16 %v11249, %v11247
  %v11532 = vpack.c.b16 %v11252, %v11250
  %v11533 = vpack.c.b16 %v11253, %v11251
  %v11534 = vpack.c.b16 %v11256, %v11254
  %v11535 = vpack.c.b16 %v11257, %v11255
  %v11536 = vpack.c.b16 %v11260, %v11258
  %v11537 = vpack.c.b16 %v11261, %v11259
  %v11538 = vpack.c.b16 %v11264, %v11262
  %v11539 = vpack.c.b16 %v11265, %v11263
  %v11540 = vpack.c.b16 %v11268, %v11266
  %v11541 = vpack.c.b16 %v11269, %v11267
  %v11542 = vpack.c.b16 %v11272, %v11270
  %v11543 = vpack.c.b16 %v11273, %v11271
  %v11544 = vpack.c.b16 %v11276, %v11274
  %v11545 = vpack.c.b16 %v11277, %v11275
  %v11546 = vpack.c.b16 %v11280, %v11278
  %v11547 = vpack.c.b16 %v11281, %v11279
  %v11548 = vpack.c.b16 %v11284, %v11282
  %v11549 = vpack.c.b16 %v11285, %v11283
  %v11550 = vpack.c.b16 %v11288, %v11286
  %v11551 = vpack.c.b16 %v11289, %v11287
  %v11552 = vpack.c.b16 %v11292, %v11290
  %v11553 = vpack.c.b16 %v11293, %v11291
  %v11554 = vpack.c.b16 %v11296, %v11294
  %v11555 = vpack.c.b16 %v11297, %v11295
  %v11556 = vpack.c.b16 %v11300, %v11298
  %v11557 = vpack.c.b16 %v11301, %v11299
  %11814 = vmatprep.subr.bf16.mxu0 %v11317
  %11815 = vmatpush1.bf16.msra.mxu0 %v11316
  %11816 = vmatprep.subr.bf16.mxu0 %v11315
  %11817 = vmatpush1.bf16.msra.mxu0 %v11314
  %11818 = vmatprep.subr.bf16.mxu0 %v11313
  %11819 = vmatpush1.bf16.msra.mxu0 %v11312
  %11820 = vmatprep.subr.bf16.mxu0 %v11311
  %11821 = vmatpush1.bf16.msra.mxu0 %v11310
  %11822 = vmatprep.subr.bf16.mxu0 %v11309
  %11823 = vmatpush1.bf16.msra.mxu0 %v11308
  %11824 = vmatprep.subr.bf16.mxu0 %v11307
  %11825 = vmatpush1.bf16.msra.mxu0 %v11306
  %11826 = vmatprep.subr.bf16.mxu0 %v11305
  %11827 = vmatpush1.bf16.msra.mxu0 %v11304
  %11828 = vmatprep.subr.bf16.mxu0 %v11303
  %11829 = vmatpush1.bf16.msra.mxu0 %v11302
  %11830 = vmatprep.subr.bf16.mxu0 %v11333
  %11831 = vmatpush2.bf16.msra.mxu0 %v11332
  %11832 = vmatprep.subr.bf16.mxu0 %v11331
  %11833 = vmatpush2.bf16.msra.mxu0 %v11330
  %11834 = vmatprep.subr.bf16.mxu0 %v11329
  %11835 = vmatpush2.bf16.msra.mxu0 %v11328
  %11836 = vmatprep.subr.bf16.mxu0 %v11327
  %11837 = vmatpush2.bf16.msra.mxu0 %v11326
  %11838 = vmatprep.subr.bf16.mxu0 %v11325
  %11839 = vmatpush2.bf16.msra.mxu0 %v11324
  %11840 = vmatprep.subr.bf16.mxu0 %v11323
  %11841 = vmatpush2.bf16.msra.mxu0 %v11322
  %11842 = vmatprep.subr.bf16.mxu0 %v11321
  %11843 = vmatpush2.bf16.msra.mxu0 %v11320
  %11844 = vmatprep.subr.bf16.mxu0 %v11319
  %11845 = vmatpush2.bf16.msra.mxu0 %v11318
  %11846 = vmatprep.mubr.bf16.mxu0 %v10247
  %11847 = vmatmul.mubr.bf16.gmra.mxu0 %v10246
  %v11848 = vpop.f32.mrf.mxu0
  %v11849 = vadd.f32 0.0, %v11848
  %v11850 = vpop.f32.mrf.mxu0
  %v11851 = vadd.f32 0.0, %v11850
  %v11852 = vpop.f32.mrf.mxu0
  %v11853 = vadd.f32 0.0, %v11852
  %v11854 = vpop.f32.mrf.mxu0
  %v11855 = vadd.f32 0.0, %v11854
  %11856 = vmatprep.mubr.bf16.mxu0 %v10391
  %11857 = vmatmul.mubr.bf16.gmra.mxu0 %v10390
  %v11858 = vpop.f32.mrf.mxu0
  %v11859 = vadd.f32 0.0, %v11858
  %v11860 = vpop.f32.mrf.mxu0
  %v11861 = vadd.f32 0.0, %v11860
  %v11862 = vpop.f32.mrf.mxu0
  %v11863 = vadd.f32 0.0, %v11862
  %v11864 = vpop.f32.mrf.mxu0
  %v11865 = vadd.f32 0.0, %v11864
  %11866 = vdwg.mxu0
  %11867 = vmatprep.subr.bf16.mxu0 %v11349
  %11868 = vmatpush1.bf16.msra.mxu0 %v11348
  %11869 = vmatprep.subr.bf16.mxu0 %v11347
  %11870 = vmatpush1.bf16.msra.mxu0 %v11346
  %11871 = vmatprep.subr.bf16.mxu0 %v11345
  %11872 = vmatpush1.bf16.msra.mxu0 %v11344
  %11873 = vmatprep.subr.bf16.mxu0 %v11343
  %11874 = vmatpush1.bf16.msra.mxu0 %v11342
  %11875 = vmatprep.subr.bf16.mxu0 %v11341
  %11876 = vmatpush1.bf16.msra.mxu0 %v11340
  %11877 = vmatprep.subr.bf16.mxu0 %v11339
  %11878 = vmatpush1.bf16.msra.mxu0 %v11338
  %11879 = vmatprep.subr.bf16.mxu0 %v11337
  %11880 = vmatpush1.bf16.msra.mxu0 %v11336
  %11881 = vmatprep.subr.bf16.mxu0 %v11335
  %11882 = vmatpush1.bf16.msra.mxu0 %v11334
  %11883 = vmatprep.subr.bf16.mxu0 %v11365
  %11884 = vmatpush2.bf16.msra.mxu0 %v11364
  %11885 = vmatprep.subr.bf16.mxu0 %v11363
  %11886 = vmatpush2.bf16.msra.mxu0 %v11362
  %11887 = vmatprep.subr.bf16.mxu0 %v11361
  %11888 = vmatpush2.bf16.msra.mxu0 %v11360
  %11889 = vmatprep.subr.bf16.mxu0 %v11359
  %11890 = vmatpush2.bf16.msra.mxu0 %v11358
  %11891 = vmatprep.subr.bf16.mxu0 %v11357
  %11892 = vmatpush2.bf16.msra.mxu0 %v11356
  %11893 = vmatprep.subr.bf16.mxu0 %v11355
  %11894 = vmatpush2.bf16.msra.mxu0 %v11354
  %11895 = vmatprep.subr.bf16.mxu0 %v11353
  %11896 = vmatpush2.bf16.msra.mxu0 %v11352
  %11897 = vmatprep.subr.bf16.mxu0 %v11351
  %11898 = vmatpush2.bf16.msra.mxu0 %v11350
  %11899 = vmatprep.mubr.bf16.mxu0 %v10249
  %11900 = vmatmul.mubr.bf16.gmra.mxu0 %v10248
  %v11901 = vpop.f32.mrf.mxu0
  %v11902 = vadd.f32 %v11849, %v11901
  %v11903 = vpop.f32.mrf.mxu0
  %v11904 = vadd.f32 %v11851, %v11903
  %v11905 = vpop.f32.mrf.mxu0
  %v11906 = vadd.f32 %v11853, %v11905
  %v11907 = vpop.f32.mrf.mxu0
  %v11908 = vadd.f32 %v11855, %v11907
  %11909 = vmatprep.mubr.bf16.mxu0 %v10393
  %11910 = vmatmul.mubr.bf16.gmra.mxu0 %v10392
  %v11911 = vpop.f32.mrf.mxu0
  %v11912 = vadd.f32 %v11859, %v11911
  %v11913 = vpop.f32.mrf.mxu0
  %v11914 = vadd.f32 %v11861, %v11913
  %v11915 = vpop.f32.mrf.mxu0
  %v11916 = vadd.f32 %v11863, %v11915
  %v11917 = vpop.f32.mrf.mxu0
  %v11918 = vadd.f32 %v11865, %v11917
  %11919 = vdwg.mxu0
  %11920 = vmatprep.subr.bf16.mxu0 %v11381
  %11921 = vmatpush1.bf16.msra.mxu0 %v11380
  %11922 = vmatprep.subr.bf16.mxu0 %v11379
  %11923 = vmatpush1.bf16.msra.mxu0 %v11378
  %11924 = vmatprep.subr.bf16.mxu0 %v11377
  %11925 = vmatpush1.bf16.msra.mxu0 %v11376
  %11926 = vmatprep.subr.bf16.mxu0 %v11375
  %11927 = vmatpush1.bf16.msra.mxu0 %v11374
  %11928 = vmatprep.subr.bf16.mxu0 %v11373
  %11929 = vmatpush1.bf16.msra.mxu0 %v11372
  %11930 = vmatprep.subr.bf16.mxu0 %v11371
  %11931 = vmatpush1.bf16.msra.mxu0 %v11370
  %11932 = vmatprep.subr.bf16.mxu0 %v11369
  %11933 = vmatpush1.bf16.msra.mxu0 %v11368
  %11934 = vmatprep.subr.bf16.mxu0 %v11367
  %11935 = vmatpush1.bf16.msra.mxu0 %v11366
  %11936 = vmatprep.subr.bf16.mxu0 %v11397
  %11937 = vmatpush2.bf16.msra.mxu0 %v11396
  %11938 = vmatprep.subr.bf16.mxu0 %v11395
  %11939 = vmatpush2.bf16.msra.mxu0 %v11394
  %11940 = vmatprep.subr.bf16.mxu0 %v11393
  %11941 = vmatpush2.bf16.msra.mxu0 %v11392
  %11942 = vmatprep.subr.bf16.mxu0 %v11391
  %11943 = vmatpush2.bf16.msra.mxu0 %v11390
  %11944 = vmatprep.subr.bf16.mxu0 %v11389
  %11945 = vmatpush2.bf16.msra.mxu0 %v11388
  %11946 = vmatprep.subr.bf16.mxu0 %v11387
  %11947 = vmatpush2.bf16.msra.mxu0 %v11386
  %11948 = vmatprep.subr.bf16.mxu0 %v11385
  %11949 = vmatpush2.bf16.msra.mxu0 %v11384
  %11950 = vmatprep.subr.bf16.mxu0 %v11383
  %11951 = vmatpush2.bf16.msra.mxu0 %v11382
  %11952 = vmatprep.mubr.bf16.mxu0 %v10283
  %11953 = vmatmul.mubr.bf16.gmra.mxu0 %v10282
  %v11954 = vpop.f32.mrf.mxu0
  %v11955 = vadd.f32 %v11902, %v11954
  %v11956 = vpop.f32.mrf.mxu0
  %v11957 = vadd.f32 %v11904, %v11956
  %v11958 = vpop.f32.mrf.mxu0
  %v11959 = vadd.f32 %v11906, %v11958
  %v11960 = vpop.f32.mrf.mxu0
  %v11961 = vadd.f32 %v11908, %v11960
  %11962 = vmatprep.mubr.bf16.mxu0 %v10427
  %11963 = vmatmul.mubr.bf16.gmra.mxu0 %v10426
  %v11964 = vpop.f32.mrf.mxu0
  %v11965 = vadd.f32 %v11912, %v11964
  %v11966 = vpop.f32.mrf.mxu0
  %v11967 = vadd.f32 %v11914, %v11966
  %v11968 = vpop.f32.mrf.mxu0
  %v11969 = vadd.f32 %v11916, %v11968
  %v11970 = vpop.f32.mrf.mxu0
  %v11971 = vadd.f32 %v11918, %v11970
  %11972 = vdwg.mxu0
  %11973 = vmatprep.subr.bf16.mxu0 %v11413
  %11974 = vmatpush1.bf16.msra.mxu0 %v11412
  %11975 = vmatprep.subr.bf16.mxu0 %v11411
  %11976 = vmatpush1.bf16.msra.mxu0 %v11410
  %11977 = vmatprep.subr.bf16.mxu0 %v11409
  %11978 = vmatpush1.bf16.msra.mxu0 %v11408
  %11979 = vmatprep.subr.bf16.mxu0 %v11407
  %11980 = vmatpush1.bf16.msra.mxu0 %v11406
  %11981 = vmatprep.subr.bf16.mxu0 %v11405
  %11982 = vmatpush1.bf16.msra.mxu0 %v11404
  %11983 = vmatprep.subr.bf16.mxu0 %v11403
  %11984 = vmatpush1.bf16.msra.mxu0 %v11402
  %11985 = vmatprep.subr.bf16.mxu0 %v11401
  %11986 = vmatpush1.bf16.msra.mxu0 %v11400
  %11987 = vmatprep.subr.bf16.mxu0 %v11399
  %11988 = vmatpush1.bf16.msra.mxu0 %v11398
  %11989 = vmatprep.subr.bf16.mxu0 %v11429
  %11990 = vmatpush2.bf16.msra.mxu0 %v11428
  %11991 = vmatprep.subr.bf16.mxu0 %v11427
  %11992 = vmatpush2.bf16.msra.mxu0 %v11426
  %11993 = vmatprep.subr.bf16.mxu0 %v11425
  %11994 = vmatpush2.bf16.msra.mxu0 %v11424
  %11995 = vmatprep.subr.bf16.mxu0 %v11423
  %11996 = vmatpush2.bf16.msra.mxu0 %v11422
  %11997 = vmatprep.subr.bf16.mxu0 %v11421
  %11998 = vmatpush2.bf16.msra.mxu0 %v11420
  %11999 = vmatprep.subr.bf16.mxu0 %v11419
  %12000 = vmatpush2.bf16.msra.mxu0 %v11418
  %12001 = vmatprep.subr.bf16.mxu0 %v11417
  %12002 = vmatpush2.bf16.msra.mxu0 %v11416
  %12003 = vmatprep.subr.bf16.mxu0 %v11415
  %12004 = vmatpush2.bf16.msra.mxu0 %v11414
  %12005 = vmatprep.mubr.bf16.mxu0 %v10285
  %12006 = vmatmul.mubr.bf16.gmra.mxu0 %v10284
  %v12007 = vpop.f32.mrf.mxu0
  %v12008 = vadd.f32 %v11955, %v12007
  %v12009 = vpop.f32.mrf.mxu0
  %v12010 = vadd.f32 %v11957, %v12009
  %v12011 = vpop.f32.mrf.mxu0
  %v12012 = vadd.f32 %v11959, %v12011
  %v12013 = vpop.f32.mrf.mxu0
  %v12014 = vadd.f32 %v11961, %v12013
  %12015 = vmatprep.mubr.bf16.mxu0 %v10429
  %12016 = vmatmul.mubr.bf16.gmra.mxu0 %v10428
  %v12017 = vpop.f32.mrf.mxu0
  %v12018 = vadd.f32 %v11965, %v12017
  %v12019 = vpop.f32.mrf.mxu0
  %v12020 = vadd.f32 %v11967, %v12019
  %v12021 = vpop.f32.mrf.mxu0
  %v12022 = vadd.f32 %v11969, %v12021
  %v12023 = vpop.f32.mrf.mxu0
  %v12024 = vadd.f32 %v11971, %v12023
  %12025 = vdwg.mxu0
  %12026 = vmatprep.subr.bf16.mxu0 %v11445
  %12027 = vmatpush1.bf16.msra.mxu0 %v11444
  %12028 = vmatprep.subr.bf16.mxu0 %v11443
  %12029 = vmatpush1.bf16.msra.mxu0 %v11442
  %12030 = vmatprep.subr.bf16.mxu0 %v11441
  %12031 = vmatpush1.bf16.msra.mxu0 %v11440
  %12032 = vmatprep.subr.bf16.mxu0 %v11439
  %12033 = vmatpush1.bf16.msra.mxu0 %v11438
  %12034 = vmatprep.subr.bf16.mxu0 %v11437
  %12035 = vmatpush1.bf16.msra.mxu0 %v11436
  %12036 = vmatprep.subr.bf16.mxu0 %v11435
  %12037 = vmatpush1.bf16.msra.mxu0 %v11434
  %12038 = vmatprep.subr.bf16.mxu0 %v11433
  %12039 = vmatpush1.bf16.msra.mxu0 %v11432
  %12040 = vmatprep.subr.bf16.mxu0 %v11431
  %12041 = vmatpush1.bf16.msra.mxu0 %v11430
  %12042 = vmatprep.subr.bf16.mxu0 %v11461
  %12043 = vmatpush2.bf16.msra.mxu0 %v11460
  %12044 = vmatprep.subr.bf16.mxu0 %v11459
  %12045 = vmatpush2.bf16.msra.mxu0 %v11458
  %12046 = vmatprep.subr.bf16.mxu0 %v11457
  %12047 = vmatpush2.bf16.msra.mxu0 %v11456
  %12048 = vmatprep.subr.bf16.mxu0 %v11455
  %12049 = vmatpush2.bf16.msra.mxu0 %v11454
  %12050 = vmatprep.subr.bf16.mxu0 %v11453
  %12051 = vmatpush2.bf16.msra.mxu0 %v11452
  %12052 = vmatprep.subr.bf16.mxu0 %v11451
  %12053 = vmatpush2.bf16.msra.mxu0 %v11450
  %12054 = vmatprep.subr.bf16.mxu0 %v11449
  %12055 = vmatpush2.bf16.msra.mxu0 %v11448
  %12056 = vmatprep.subr.bf16.mxu0 %v11447
  %12057 = vmatpush2.bf16.msra.mxu0 %v11446
  %12058 = vmatprep.mubr.bf16.mxu0 %v10319
  %12059 = vmatmul.mubr.bf16.gmra.mxu0 %v10318
  %v12060 = vpop.f32.mrf.mxu0
  %v12061 = vadd.f32 %v12008, %v12060
  %v12062 = vpop.f32.mrf.mxu0
  %v12063 = vadd.f32 %v12010, %v12062
  %v12064 = vpop.f32.mrf.mxu0
  %v12065 = vadd.f32 %v12012, %v12064
  %v12066 = vpop.f32.mrf.mxu0
  %v12067 = vadd.f32 %v12014, %v12066
  %12068 = vmatprep.mubr.bf16.mxu0 %v10463
  %12069 = vmatmul.mubr.bf16.gmra.mxu0 %v10462
  %v12070 = vpop.f32.mrf.mxu0
  %v12071 = vadd.f32 %v12018, %v12070
  %v12072 = vpop.f32.mrf.mxu0
  %v12073 = vadd.f32 %v12020, %v12072
  %v12074 = vpop.f32.mrf.mxu0
  %v12075 = vadd.f32 %v12022, %v12074
  %v12076 = vpop.f32.mrf.mxu0
  %v12077 = vadd.f32 %v12024, %v12076
  %12078 = vdwg.mxu0
  %12079 = vmatprep.subr.bf16.mxu0 %v11477
  %12080 = vmatpush1.bf16.msra.mxu0 %v11476
  %12081 = vmatprep.subr.bf16.mxu0 %v11475
  %12082 = vmatpush1.bf16.msra.mxu0 %v11474
  %12083 = vmatprep.subr.bf16.mxu0 %v11473
  %12084 = vmatpush1.bf16.msra.mxu0 %v11472
  %12085 = vmatprep.subr.bf16.mxu0 %v11471
  %12086 = vmatpush1.bf16.msra.mxu0 %v11470
  %12087 = vmatprep.subr.bf16.mxu0 %v11469
  %12088 = vmatpush1.bf16.msra.mxu0 %v11468
  %12089 = vmatprep.subr.bf16.mxu0 %v11467
  %12090 = vmatpush1.bf16.msra.mxu0 %v11466
  %12091 = vmatprep.subr.bf16.mxu0 %v11465
  %12092 = vmatpush1.bf16.msra.mxu0 %v11464
  %12093 = vmatprep.subr.bf16.mxu0 %v11463
  %12094 = vmatpush1.bf16.msra.mxu0 %v11462
  %12095 = vmatprep.subr.bf16.mxu0 %v11493
  %12096 = vmatpush2.bf16.msra.mxu0 %v11492
  %12097 = vmatprep.subr.bf16.mxu0 %v11491
  %12098 = vmatpush2.bf16.msra.mxu0 %v11490
  %12099 = vmatprep.subr.bf16.mxu0 %v11489
  %12100 = vmatpush2.bf16.msra.mxu0 %v11488
  %12101 = vmatprep.subr.bf16.mxu0 %v11487
  %12102 = vmatpush2.bf16.msra.mxu0 %v11486
  %12103 = vmatprep.subr.bf16.mxu0 %v11485
  %12104 = vmatpush2.bf16.msra.mxu0 %v11484
  %12105 = vmatprep.subr.bf16.mxu0 %v11483
  %12106 = vmatpush2.bf16.msra.mxu0 %v11482
  %12107 = vmatprep.subr.bf16.mxu0 %v11481
  %12108 = vmatpush2.bf16.msra.mxu0 %v11480
  %12109 = vmatprep.subr.bf16.mxu0 %v11479
  %12110 = vmatpush2.bf16.msra.mxu0 %v11478
  %12111 = vmatprep.mubr.bf16.mxu0 %v10321
  %12112 = vmatmul.mubr.bf16.gmra.mxu0 %v10320
  %v12113 = vpop.f32.mrf.mxu0
  %v12114 = vadd.f32 %v12061, %v12113
  %v12115 = vpop.f32.mrf.mxu0
  %v12116 = vadd.f32 %v12063, %v12115
  %v12117 = vpop.f32.mrf.mxu0
  %v12118 = vadd.f32 %v12065, %v12117
  %v12119 = vpop.f32.mrf.mxu0
  %v12120 = vadd.f32 %v12067, %v12119
  %12121 = vmatprep.mubr.bf16.mxu0 %v10465
  %12122 = vmatmul.mubr.bf16.gmra.mxu0 %v10464
  %v12123 = vpop.f32.mrf.mxu0
  %v12124 = vadd.f32 %v12071, %v12123
  %v12125 = vpop.f32.mrf.mxu0
  %v12126 = vadd.f32 %v12073, %v12125
  %v12127 = vpop.f32.mrf.mxu0
  %v12128 = vadd.f32 %v12075, %v12127
  %v12129 = vpop.f32.mrf.mxu0
  %v12130 = vadd.f32 %v12077, %v12129
  %12131 = vdwg.mxu0
  %12132 = vmatprep.subr.bf16.mxu0 %v11509
  %12133 = vmatpush1.bf16.msra.mxu0 %v11508
  %12134 = vmatprep.subr.bf16.mxu0 %v11507
  %12135 = vmatpush1.bf16.msra.mxu0 %v11506
  %12136 = vmatprep.subr.bf16.mxu0 %v11505
  %12137 = vmatpush1.bf16.msra.mxu0 %v11504
  %12138 = vmatprep.subr.bf16.mxu0 %v11503
  %12139 = vmatpush1.bf16.msra.mxu0 %v11502
  %12140 = vmatprep.subr.bf16.mxu0 %v11501
  %12141 = vmatpush1.bf16.msra.mxu0 %v11500
  %12142 = vmatprep.subr.bf16.mxu0 %v11499
  %12143 = vmatpush1.bf16.msra.mxu0 %v11498
  %12144 = vmatprep.subr.bf16.mxu0 %v11497
  %12145 = vmatpush1.bf16.msra.mxu0 %v11496
  %12146 = vmatprep.subr.bf16.mxu0 %v11495
  %12147 = vmatpush1.bf16.msra.mxu0 %v11494
  %12148 = vmatprep.subr.bf16.mxu0 %v11525
  %12149 = vmatpush2.bf16.msra.mxu0 %v11524
  %12150 = vmatprep.subr.bf16.mxu0 %v11523
  %12151 = vmatpush2.bf16.msra.mxu0 %v11522
  %12152 = vmatprep.subr.bf16.mxu0 %v11521
  %12153 = vmatpush2.bf16.msra.mxu0 %v11520
  %12154 = vmatprep.subr.bf16.mxu0 %v11519
  %12155 = vmatpush2.bf16.msra.mxu0 %v11518
  %12156 = vmatprep.subr.bf16.mxu0 %v11517
  %12157 = vmatpush2.bf16.msra.mxu0 %v11516
  %12158 = vmatprep.subr.bf16.mxu0 %v11515
  %12159 = vmatpush2.bf16.msra.mxu0 %v11514
  %12160 = vmatprep.subr.bf16.mxu0 %v11513
  %12161 = vmatpush2.bf16.msra.mxu0 %v11512
  %12162 = vmatprep.subr.bf16.mxu0 %v11511
  %12163 = vmatpush2.bf16.msra.mxu0 %v11510
  %12164 = vmatprep.mubr.bf16.mxu0 %v10355
  %12165 = vmatmul.mubr.bf16.gmra.mxu0 %v10354
  %v12166 = vpop.f32.mrf.mxu0
  %v12167 = vadd.f32 %v12114, %v12166
  %v12168 = vpop.f32.mrf.mxu0
  %v12169 = vadd.f32 %v12116, %v12168
  %v12170 = vpop.f32.mrf.mxu0
  %v12171 = vadd.f32 %v12118, %v12170
  %v12172 = vpop.f32.mrf.mxu0
  %v12173 = vadd.f32 %v12120, %v12172
  %12174 = vmatprep.mubr.bf16.mxu0 %v10499
  %12175 = vmatmul.mubr.bf16.gmra.mxu0 %v10498
  %v12176 = vpop.f32.mrf.mxu0
  %v12177 = vadd.f32 %v12124, %v12176
  %v12178 = vpop.f32.mrf.mxu0
  %v12179 = vadd.f32 %v12126, %v12178
  %v12180 = vpop.f32.mrf.mxu0
  %v12181 = vadd.f32 %v12128, %v12180
  %v12182 = vpop.f32.mrf.mxu0
  %v12183 = vadd.f32 %v12130, %v12182
  %12184 = vdwg.mxu0
  %12185 = vmatprep.subr.bf16.mxu0 %v11541
  %12186 = vmatpush1.bf16.msra.mxu0 %v11540
  %12187 = vmatprep.subr.bf16.mxu0 %v11539
  %12188 = vmatpush1.bf16.msra.mxu0 %v11538
  %12189 = vmatprep.subr.bf16.mxu0 %v11537
  %12190 = vmatpush1.bf16.msra.mxu0 %v11536
  %12191 = vmatprep.subr.bf16.mxu0 %v11535
  %12192 = vmatpush1.bf16.msra.mxu0 %v11534
  %12193 = vmatprep.subr.bf16.mxu0 %v11533
  %12194 = vmatpush1.bf16.msra.mxu0 %v11532
  %12195 = vmatprep.subr.bf16.mxu0 %v11531
  %12196 = vmatpush1.bf16.msra.mxu0 %v11530
  %12197 = vmatprep.subr.bf16.mxu0 %v11529
  %12198 = vmatpush1.bf16.msra.mxu0 %v11528
  %12199 = vmatprep.subr.bf16.mxu0 %v11527
  %12200 = vmatpush1.bf16.msra.mxu0 %v11526
  %12201 = vmatprep.subr.bf16.mxu0 %v11557
  %12202 = vmatpush2.bf16.msra.mxu0 %v11556
  %12203 = vmatprep.subr.bf16.mxu0 %v11555
  %12204 = vmatpush2.bf16.msra.mxu0 %v11554
  %12205 = vmatprep.subr.bf16.mxu0 %v11553
  %12206 = vmatpush2.bf16.msra.mxu0 %v11552
  %12207 = vmatprep.subr.bf16.mxu0 %v11551
  %12208 = vmatpush2.bf16.msra.mxu0 %v11550
  %12209 = vmatprep.subr.bf16.mxu0 %v11549
  %12210 = vmatpush2.bf16.msra.mxu0 %v11548
  %12211 = vmatprep.subr.bf16.mxu0 %v11547
  %12212 = vmatpush2.bf16.msra.mxu0 %v11546
  %12213 = vmatprep.subr.bf16.mxu0 %v11545
  %12214 = vmatpush2.bf16.msra.mxu0 %v11544
  %12215 = vmatprep.subr.bf16.mxu0 %v11543
  %12216 = vmatpush2.bf16.msra.mxu0 %v11542
  %12217 = vmatprep.mubr.bf16.mxu0 %v10357
  %12218 = vmatmul.mubr.bf16.gmra.mxu0 %v10356
  %v12219 = vpop.f32.mrf.mxu0
  %v12220 = vadd.f32 %v12167, %v12219
  %v12221 = vpop.f32.mrf.mxu0
  %v12222 = vadd.f32 %v12169, %v12221
  %v12223 = vpop.f32.mrf.mxu0
  %v12224 = vadd.f32 %v12171, %v12223
  %v12225 = vpop.f32.mrf.mxu0
  %v12226 = vadd.f32 %v12173, %v12225
  %12227 = vmatprep.mubr.bf16.mxu0 %v10501
  %12228 = vmatmul.mubr.bf16.gmra.mxu0 %v10500
  %v12229 = vpop.f32.mrf.mxu0
  %v12230 = vadd.f32 %v12177, %v12229
  %v12231 = vpop.f32.mrf.mxu0
  %v12232 = vadd.f32 %v12179, %v12231
  %v12233 = vpop.f32.mrf.mxu0
  %v12234 = vadd.f32 %v12181, %v12233
  %v12235 = vpop.f32.mrf.mxu0
  %v12236 = vadd.f32 %v12183, %v12235
  %12237 = vdwg.mxu0
  %v12238 = vadd.f32 %v12220, %v12224
  %v12239 = vadd.f32 %v12238, %v12230
  %v12240 = vadd.f32 %v12239, %v12234
  %v12241 = vrot.slane %v12240, 4
  %v12242 = vadd.f32 %v12240, %v12241
  %v12243 = vrot.slane %v12242, 2
  %v12244 = vadd.f32 %v12242, %v12243
  %v12245 = vrot.slane %v12244, 1
  %v12246 = vadd.f32 %v12244, %v12245
  %v12247 = vadd.f32 %v12222, %v12226
  %v12248 = vadd.f32 %v12247, %v12232
  %v12249 = vadd.f32 %v12248, %v12236
  %v12250 = vrot.slane %v12249, 4
  %v12251 = vadd.f32 %v12249, %v12250
  %v12252 = vrot.slane %v12251, 2
  %v12253 = vadd.f32 %v12251, %v12252
  %v12254 = vrot.slane %v12253, 1
  %v12255 = vadd.f32 %v12253, %v12254
  %v12256 = vrcp.pop 32.0
  %v12257 = vmul.f32 %v12246, %v12256
  %v12258 = vmul.f32 %v12255, %v12256
  %v12259 = vsub.f32 %v12220, %v12257
  %v12260 = vsub.f32 %v12222, %v12258
  %v12261 = vsub.f32 %v12224, %v12257
  %v12262 = vsub.f32 %v12226, %v12258
  %v12263 = vsub.f32 %v12230, %v12257
  %v12264 = vsub.f32 %v12232, %v12258
  %v12265 = vsub.f32 %v12234, %v12257
  %v12266 = vsub.f32 %v12236, %v12258
  %v12267 = vmul.f32 %v12259, %v12259
  %v12268 = vmul.f32 %v12260, %v12260
  %v12269 = vmul.f32 %v12261, %v12261
  %v12270 = vmul.f32 %v12262, %v12262
  %v12271 = vmul.f32 %v12263, %v12263
  %v12272 = vmul.f32 %v12264, %v12264
  %v12273 = vmul.f32 %v12265, %v12265
  %v12274 = vmul.f32 %v12266, %v12266
  %v12275 = vadd.f32 %v12267, %v12269
  %v12276 = vadd.f32 %v12275, %v12271
  %v12277 = vadd.f32 %v12276, %v12273
  %v12278 = vrot.slane %v12277, 4
  %v12279 = vadd.f32 %v12277, %v12278
  %v12280 = vrot.slane %v12279, 2
  %v12281 = vadd.f32 %v12279, %v12280
  %v12282 = vrot.slane %v12281, 1
  %v12283 = vadd.f32 %v12281, %v12282
  %v12284 = vadd.f32 %v12268, %v12270
  %v12285 = vadd.f32 %v12284, %v12272
  %v12286 = vadd.f32 %v12285, %v12274
  %v12287 = vrot.slane %v12286, 4
  %v12288 = vadd.f32 %v12286, %v12287
  %v12289 = vrot.slane %v12288, 2
  %v12290 = vadd.f32 %v12288, %v12289
  %v12291 = vrot.slane %v12290, 1
  %v12292 = vadd.f32 %v12290, %v12291
  %v12293 = vmul.f32 %v12283, %v12256
  %v12294 = vmul.f32 %v12292, %v12256
  %v12295 = vadd.f32 %v12293, 1e-05
  %v12296 = vadd.f32 %v12294, 1e-05
  %v12297 = vrsqrt.pop %v12295
  %v12298 = vrsqrt.pop %v12296
  %v12299 = vmul.f32 %v12259, %v12297
  %v12300 = vmul.f32 %v12260, %v12298
  %v12301 = vmul.f32 %v12261, %v12297
  %v12302 = vmul.f32 %v12262, %v12298
  %v12303 = vmul.f32 %v12263, %v12297
  %v12304 = vmul.f32 %v12264, %v12298
  %v12305 = vmul.f32 %v12265, %v12297
  %v12306 = vmul.f32 %v12266, %v12298
  %v12307 = vld [vmem:[%s6] sm:$0x3]
  %v12309 = vlaneseq
  %v12310 = vshrl.u32 %v12309, 7
  %v12311 = vsub.s32 0, %v12310
  %v12312 = vrot.slane %v12307, %v12311
  %v12313 = vlaneseq
  %v12314 = vshrl.u32 %v12313, 7
  %v12315 = vsub.s32 1, %v12314
  %v12316 = vrot.slane %v12307, %v12315
  %v12319 = vmul.f32 %v12299, %v12312
  %v12320 = vmul.f32 %v12300, %v12316
  %v12321 = vmul.f32 %v12301, %v12312
  %v12322 = vmul.f32 %v12302, %v12316
  %v12323 = vmul.f32 %v12303, %v12312
  %v12324 = vmul.f32 %v12304, %v12316
  %v12325 = vmul.f32 %v12305, %v12312
  %v12326 = vmul.f32 %v12306, %v12316
  %v12327 = vld [vmem:[%s7] sm:$0x3]
  %v12329 = vlaneseq
  %v12330 = vshrl.u32 %v12329, 7
  %v12331 = vsub.s32 0, %v12330
  %v12332 = vrot.slane %v12327, %v12331
  %v12333 = vlaneseq
  %v12334 = vshrl.u32 %v12333, 7
  %v12335 = vsub.s32 1, %v12334
  %v12336 = vrot.slane %v12327, %v12335
  %v12339 = vadd.f32 %v12319, %v12332
  %v12340 = vadd.f32 %v12320, %v12336
  %v12341 = vadd.f32 %v12321, %v12332
  %v12342 = vadd.f32 %v12322, %v12336
  %v12343 = vadd.f32 %v12323, %v12332
  %v12344 = vadd.f32 %v12324, %v12336
  %v12345 = vadd.f32 %v12325, %v12332
  %v12346 = vadd.f32 %v12326, %v12336
  %vm12347 = vcmp.gt.f32.partialorder %v12339, 0.0
  %vm12348 = vcmp.gt.f32.partialorder %v12340, 0.0
  %vm12349 = vcmp.gt.f32.partialorder %v12341, 0.0
  %vm12350 = vcmp.gt.f32.partialorder %v12342, 0.0
  %vm12351 = vcmp.gt.f32.partialorder %v12343, 0.0
  %vm12352 = vcmp.gt.f32.partialorder %v12344, 0.0
  %vm12353 = vcmp.gt.f32.partialorder %v12345, 0.0
  %vm12354 = vcmp.gt.f32.partialorder %v12346, 0.0
  %v12355 = vmul.f32 %v12339, 0.2
  %v12356 = vmul.f32 %v12340, 0.2
  %v12357 = vmul.f32 %v12341, 0.2
  %v12358 = vmul.f32 %v12342, 0.2
  %v12359 = vmul.f32 %v12343, 0.2
  %v12360 = vmul.f32 %v12344, 0.2
  %v12361 = vmul.f32 %v12345, 0.2
  %v12362 = vmul.f32 %v12346, 0.2
  %v12363 = vsel %vm12347, %v12339, %v12355
  %v12364 = vsel %vm12348, %v12340, %v12356
  %v12365 = vsel %vm12349, %v12341, %v12357
  %v12366 = vsel %vm12350, %v12342, %v12358
  %v12367 = vsel %vm12351, %v12343, %v12359
  %v12368 = vsel %vm12352, %v12344, %v12360
  %v12369 = vsel %vm12353, %v12345, %v12361
  %v12370 = vsel %vm12354, %v12346, %v12362
  %v12371 = vld [vmem:[%s8] sm:$0xff]
  %v12372 = vld [vmem:[%s8 + $0x8] sm:$0xff]
  %v12373 = vld [vmem:[%s8 + $0x10] sm:$0xff]
  %v12374 = vld [vmem:[%s8 + $0x18] sm:$0xff]
  %v12375 = vmul.f32 %v12363, %v12371
  %v12376 = vmul.f32 %v12364, %v12372
  %v12377 = vmul.f32 %v12365, %v12373
  %v12378 = vmul.f32 %v12366, %v12374
  %v12379 = vmul.f32 %v12367, %v12371
  %v12380 = vmul.f32 %v12368, %v12372
  %v12381 = vmul.f32 %v12369, %v12373
  %v12382 = vmul.f32 %v12370, %v12374
  %v12383 = vadd.f32 %v12375, %v12377
  %v12384 = vrot.slane %v12383, 4
  %v12385 = vadd.f32 %v12383, %v12384
  %v12386 = vrot.slane %v12385, 2
  %v12387 = vadd.f32 %v12385, %v12386
  %v12388 = vrot.slane %v12387, 1
  %v12389 = vadd.f32 %v12387, %v12388
  %v12390 = vadd.f32 %v12376, %v12378
  %v12391 = vrot.slane %v12390, 4
  %v12392 = vadd.f32 %v12390, %v12391
  %v12393 = vrot.slane %v12392, 2
  %v12394 = vadd.f32 %v12392, %v12393
  %v12395 = vrot.slane %v12394, 1
  %v12396 = vadd.f32 %v12394, %v12395
  %v12397 = vadd.f32 %v12379, %v12381
  %v12398 = vrot.slane %v12397, 4
  %v12399 = vadd.f32 %v12397, %v12398
  %v12400 = vrot.slane %v12399, 2
  %v12401 = vadd.f32 %v12399, %v12400
  %v12402 = vrot.slane %v12401, 1
  %v12403 = vadd.f32 %v12401, %v12402
  %v12404 = vadd.f32 %v12380, %v12382
  %v12405 = vrot.slane %v12404, 4
  %v12406 = vadd.f32 %v12404, %v12405
  %v12407 = vrot.slane %v12406, 2
  %v12408 = vadd.f32 %v12406, %v12407
  %v12409 = vrot.slane %v12408, 1
  %v12410 = vadd.f32 %v12408, %v12409
  %vm12415 = vcmask 1041409
  %v12416 = vsel %vm12415, %v12403, %v12389
  %v12417 = vsel %vm12415, %v12410, %v12396
  %vm12420 = vcmask 1041408
  %v12421 = vsel %vm12420, %v12416, 0.0
  %v12422 = vsel %vm12420, %v12417, 0.0
  %v12423 = vadd.f32 %v12421, %v12422
  %12424 = vadd.xlane.f32.xlu0 %v12423
  %v12425 = vpop.xlane.xlu0 %12424
  %v12426 = vand.u32 2147483647, %v12425
  %v12427 = vsub.f32 0.0, %v12426
  %v12428 = vmul.f32 %v12427, 1.442695
  %v12429 = vpow.pop %v12428
  %vm12430 = vcmp.ge.f32.partialorder %v12425, 0.0
  %v12431 = vadd.f32 %v12429, 1.0
  %v12432 = vrcp.pop %v12431
  %v12433 = vmul.f32 1.0, %v12432
  %v12434 = vmul.f32 %v12429, %v12432
  %v12435 = vsel %vm12430, %v12433, %v12434
  %v12436 = vadd.f32 %v12435, 0.0
  %12437 = vst [vmem:[%s9] sm:$0x3] %v12436
  // Predicated region
  $region38: #{discriminador_forward.1} parent=0 // pred_check
    _
  $region39: #{discriminador_forward.1} parent=0 // pred_check_branch
    %12439 = sbr.rel (0) target = $region41
  $region40: #{discriminador_forward.1} parent=0 // pred_region
    _
  $region41: #{discriminador_forward.1} parent=0 // pred_fallthru
    _
  // Predicated region
  $region42: #{discriminador_forward.1} parent=0 // pred_check
    _
  $region43: #{discriminador_forward.1} parent=0 // pred_check_branch
    %12441 = sbr.rel (0) target = $region45
  $region44: #{discriminador_forward.1} parent=0 // pred_region
    _
  $region45: #{discriminador_forward.1} parent=0 // pred_fallthru
    _

</llo_original>
